<compile_context>
chip_gen: v6e
topology: v6e:2x2x1
jax: 0.10.0
libtpu: 0.0.40
codegen_flags: <defaults>
</compile_context>

<pallas_src>
import jax
import jax.numpy as jnp
from jax.experimental import pallas as pl
from jax.experimental.pallas import tpu as pltpu


# -----------------------------------------------------------------------------
# Fused ORB kernel.  Grid = (batch, cab).  Scratch persists across cab steps.
# -----------------------------------------------------------------------------
def _zero_border(ref, H, W, C):
    """Zero the 1-pixel halo of a padded (H+2, W+2, C) scratch buffer."""
    zrow = jnp.zeros((1, W + 2, C), ref.dtype)
    zcol = jnp.zeros((H + 2, 1, C), ref.dtype)
    ref[0:1, :, :] = zrow
    ref[H + 1:H + 2, :, :] = zrow
    ref[:, 0:1, :] = zcol
    ref[:, W + 1:W + 2, :] = zcol


def _orb_kernel(x_ref, w1_ref, w2_ref, wd_ref, wu_ref, wl_ref, out_ref,
                apad_ref, mpad_ref):
    # x_ref:   (1, H, W, C)  f32   input block (fetched once per batch element)
    # w1_ref:  (1, 9, C, C)  bf16  conv1 taps of the current CAB
    # w2_ref:  (1, 9, C, C)  bf16  conv2 taps of the current CAB
    # wd_ref:  (1, C, C//r)  f32   CA squeeze 1x1
    # wu_ref:  (1, C//r, C)  f32   CA excite 1x1
    # wl_ref:  (C, C)        bf16  trailing 1x1 conv of the ORB
    # apad_ref: VMEM (H+2, W+2, C) f32  padded residual-stream activation
    # mpad_ref: VMEM (H+2, W+2, C) f32  padded conv1 output (staging)
    H = x_ref.shape[1]
    W = x_ref.shape[2]
    C = x_ref.shape[3]
    cab = pl.program_id(1)
    num_cab = pl.num_programs(1)

    @pl.when(cab == 0)
    def _init():
        _zero_border(apad_ref, H, W, C)
        _zero_border(mpad_ref, H, W, C)
        apad_ref[1:H + 1, 1:W + 1, :] = x_ref[0]

    def conv3x3(src_ref, w_ref_):
        # 3x3 "same" conv as 9 shifted matmuls reading the padded VMEM buffer.
        # bf16 operands on the MXU, f32 accumulation.
        acc = jnp.zeros((H * W, C), jnp.float32)
        for dy in range(3):
            for dx in range(3):
                patch = src_ref[dy:dy + H, dx:dx + W, :].reshape(H * W, C)
                acc = acc + jnp.dot(patch.astype(jnp.bfloat16),
                                    w_ref_[0, 3 * dy + dx],
                                    preferred_element_type=jnp.float32)
        return acc

    # ---- CAB body: conv3x3 -> ReLU -> conv3x3
    a1 = jnp.maximum(conv3x3(apad_ref, w1_ref), 0.0)
    mpad_ref[1:H + 1, 1:W + 1, :] = a1.reshape(H, W, C)
    r2 = conv3x3(mpad_ref, w2_ref)                                # (H*W, C) f32

    # ---- channel attention: GAP -> 1x1 (C->C/r) -> ReLU -> 1x1 -> sigmoid
    y = jnp.mean(r2, axis=0, keepdims=True)                       # (1, C)
    y = jnp.maximum(jnp.dot(y, wd_ref[0],
                            preferred_element_type=jnp.float32), 0.0)
    y = jax.nn.sigmoid(jnp.dot(y, wu_ref[0],
                               preferred_element_type=jnp.float32))

    # ---- CAB residual; keep the running activation in the padded scratch
    h = apad_ref[1:H + 1, 1:W + 1, :]
    h_new = (r2 * y).reshape(H, W, C) + h
    apad_ref[1:H + 1, 1:W + 1, :] = h_new

    # ---- last CAB step: fused trailing 1x1 conv + ORB residual + writeback
    @pl.when(cab == num_cab - 1)
    def _final():
        flat = apad_ref[1:H + 1, 1:W + 1, :].reshape(H * W, C)
        yf = jnp.dot(flat.astype(jnp.bfloat16), wl_ref[...],
                     preferred_element_type=jnp.float32)
        out_ref[0] = (yf.reshape(H, W, C) + x_ref[0]).astype(out_ref.dtype)


def orb_forward_nhwc(x, w1s, w2s, wds, wus, w_last):
    """x: (N, H, W, C) f32.  w1s/w2s: (num_cab, 9, C, C) bf16.
    wds: (num_cab, C, C//r) f32.  wus: (num_cab, C//r, C) f32.  w_last: (C, C) bf16."""
    N, H, W, C = x.shape
    num_cab = w1s.shape[0]
    Cr = wds.shape[2]
    return pl.pallas_call(
        _orb_kernel,
        out_shape=jax.ShapeDtypeStruct((N, H, W, C), x.dtype),
        grid=(N, num_cab),
        in_specs=[
            pl.BlockSpec((1, H, W, C), lambda n, c: (n, 0, 0, 0)),   # x (per n)
            pl.BlockSpec((1, 9, C, C), lambda n, c: (c, 0, 0, 0)),   # conv1 taps
            pl.BlockSpec((1, 9, C, C), lambda n, c: (c, 0, 0, 0)),   # conv2 taps
            pl.BlockSpec((1, C, Cr), lambda n, c: (c, 0, 0)),        # CA down
            pl.BlockSpec((1, Cr, C), lambda n, c: (c, 0, 0)),        # CA up
            pl.BlockSpec((C, C), lambda n, c: (0, 0)),               # 1x1 (once)
        ],
        out_specs=pl.BlockSpec((1, H, W, C), lambda n, c: (n, 0, 0, 0)),
        scratch_shapes=[
            pltpu.VMEM((H + 2, W + 2, C), jnp.float32),   # padded activation
            pltpu.VMEM((H + 2, W + 2, C), jnp.float32),   # padded conv1 staging
        ],
        compiler_params=pltpu.CompilerParams(
            dimension_semantics=("parallel", "arbitrary"),
            vmem_limit_bytes=48 * 1024 * 1024),
    )(x, w1s, w2s, wds, wus, w_last)


def pack_params(params):
    """Pack the per-CAB f32 params into the stacked arrays the kernel consumes."""
    C = params["w_last"].shape[0]
    w1s = jnp.stack([w1.reshape(9, C, C) for (w1, _, _, _) in params["cabs"]])
    w2s = jnp.stack([w2.reshape(9, C, C) for (_, w2, _, _) in params["cabs"]])
    wds = jnp.stack([wd for (_, _, wd, _) in params["cabs"]])
    wus = jnp.stack([wu for (_, _, _, wu) in params["cabs"]])
    return (w1s.astype(jnp.bfloat16), w2s.astype(jnp.bfloat16),
            wds, wus, params["w_last"].astype(jnp.bfloat16))


def orb_forward(x_nchw, params):
    x = jnp.transpose(x_nchw, (0, 2, 3, 1))                  # NCHW -> NHWC
    w1s, w2s, wds, wus, w_last = pack_params(params)
    out = orb_forward_nhwc(x, w1s, w2s, wds, wus, w_last)
    return jnp.transpose(out, (0, 3, 1, 2))                  # NHWC -> NCHW


# -----------------------------------------------------------------------------
# Pure-JAX reference (lax.conv), mirroring the kernel's bf16 matmul inputs.
# -----------------------------------------------------------------------------
def _conv_ref(x, w):
    return jax.lax.conv_general_dilated(
        x.astype(jnp.bfloat16), w.astype(jnp.bfloat16),
        window_strides=(1, 1), padding="SAME",
        dimension_numbers=("NHWC", "HWIO", "NHWC"),
        preferred_element_type=jnp.float32)


def orb_ref(x_nchw, params):
    x = jnp.transpose(x_nchw, (0, 2, 3, 1))
    h = x
    for (w1, w2, wd, wu) in params["cabs"]:
        res = _conv_ref(h, w1)
        res = jnp.maximum(res, 0.0)
        res = _conv_ref(res, w2)
        y = jnp.mean(res, axis=(1, 2), keepdims=True)
        y = jnp.maximum(jnp.einsum("nhwc,cd->nhwd", y, wd), 0.0)
        y = jax.nn.sigmoid(jnp.einsum("nhwc,cd->nhwd", y, wu))
        h = res * y + h
    out = jnp.einsum("nhwc,cd->nhwd",
                     h.astype(jnp.bfloat16),
                     params["w_last"].astype(jnp.bfloat16),
                     preferred_element_type=jnp.float32) + x
    return jnp.transpose(out, (0, 3, 1, 2))


# -----------------------------------------------------------------------------
# Deterministic synthetic parameters (same structure as the torch module).
# -----------------------------------------------------------------------------
def init_params(key, n_feat, kernel_size, reduction, num_cab):
    assert kernel_size == 3, "kernel is specialized for kernel_size=3"
    cabs = []
    keys = jax.random.split(key, 4 * num_cab + 1)
    cr = n_feat // reduction
    for i in range(num_cab):
        k1, k2, k3, k4 = keys[4 * i:4 * i + 4]
        w1 = 0.1 * jax.random.normal(k1, (3, 3, n_feat, n_feat), jnp.float32)
        w2 = 0.1 * jax.random.normal(k2, (3, 3, n_feat, n_feat), jnp.float32)
        wd = 0.1 * jax.random.normal(k3, (n_feat, cr), jnp.float32)
        wu = 0.1 * jax.random.normal(k4, (cr, n_feat), jnp.float32)
        cabs.append((w1, w2, wd, wu))
    w_last = 0.1 * jax.random.normal(keys[-1], (n_feat, n_feat), jnp.float32)
    return {"cabs": cabs, "w_last": w_last}


if __name__ == "__main__":
    n_feat, kernel_size, reduction, num_cab = 8, 3, 4, 2
    N, H, W = 2, 16, 16

    key = jax.random.PRNGKey(0)
    kx, kp = jax.random.split(key)
    x = jax.random.normal(kx, (N, n_feat, H, W), jnp.float32)   # NCHW like torch
    params = init_params(kp, n_feat, kernel_size, reduction, num_cab)

    out = jax.block_until_ready(orb_forward(x, params))
    ref = jax.block_until_ready(orb_ref(x, params))

    assert out.shape == x.shape and out.dtype == x.dtype
    max_err = float(jnp.max(jnp.abs(out - ref)))
    # bf16 MXU inputs (f32 accumulation) => slightly looser tolerance than pure f32.
    assert jnp.allclose(out, ref, atol=2e-2, rtol=2e-2), f"max_err={max_err}"

    print("KERNEL_OK")
</pallas_src>

<mosaic_0001>
module attributes {stable_mosaic.version = 11 : i64} {
  func.func @_orb_kernel(%arg0: i32, %arg1: i32, %arg2: memref<1x16x16x8xf32, #tpu.memory_space<vmem>>, %arg3: memref<1x9x8x8xbf16, #tpu.memory_space<vmem>>, %arg4: memref<1x9x8x8xbf16, #tpu.memory_space<vmem>>, %arg5: memref<1x8x2xf32, #tpu.memory_space<vmem>>, %arg6: memref<1x2x8xf32, #tpu.memory_space<vmem>>, %arg7: memref<8x8xbf16, #tpu.memory_space<vmem>>, %arg8: memref<1x16x16x8xf32, #tpu.memory_space<vmem>>, %arg9: memref<18x18x8xf32, #tpu.memory_space<vmem>>, %arg10: memref<18x18x8xf32, #tpu.memory_space<vmem>>) attributes {dimension_semantics = [#tpu.dimension_semantics<parallel>, #tpu.dimension_semantics<arbitrary>], iteration_bounds = array<i64: 2, 2>, scalar_prefetch = 0 : i64, scratch_operands = 2 : i64, tpu.core_type = #tpu.core_type<tc>, window_params = [{transform_indices = @transform_0, window_bounds = array<i64: 1, 16, 16, 8>}, {transform_indices = @transform_1, window_bounds = array<i64: 1, 9, 8, 8>}, {transform_indices = @transform_2, window_bounds = array<i64: 1, 9, 8, 8>}, {transform_indices = @transform_3, window_bounds = array<i64: 1, 8, 2>}, {transform_indices = @transform_4, window_bounds = array<i64: 1, 2, 8>}, {pipeline_mode = #tpu.pipeline_mode<synchronous>, transform_indices = @transform_5, window_bounds = array<i64: 8, 8>}, {transform_indices = @transform_6, window_bounds = array<i64: 1, 16, 16, 8>}]} {
    %c0_i32 = arith.constant 0 : i32
    %0 = arith.cmpi eq, %arg1, %c0_i32 : i32
    %1 = arith.extui %0 : i1 to i32
    %c0_i32_0 = arith.constant 0 : i32
    %2 = arith.cmpi ne, %1, %c0_i32_0 : i32
    scf.if %2 {
      %cst_160 = arith.constant 0.000000e+00 : f32
      %161 = vector.broadcast %cst_160 : f32 to vector<1x18x8xf32>
      %cst_161 = arith.constant 0.000000e+00 : f32
      %162 = vector.broadcast %cst_161 : f32 to vector<18x1x8xf32>
      %c0_162 = arith.constant 0 : index
      %c0_163 = arith.constant 0 : index
      %c0_164 = arith.constant 0 : index
      %163 = vector.load %arg9[%c0_162, %c0_163, %c0_164] : memref<18x18x8xf32, #tpu.memory_space<vmem>>, vector<1x18x8xf32>
      tpu.vector_store %arg9[%c0_162, %c0_163, %c0_164], %161 {strides = array<i32>} : memref<18x18x8xf32, #tpu.memory_space<vmem>>, vector<1x18x8xf32>,
      %c17 = arith.constant 17 : index
      %c0_165 = arith.constant 0 : index
      %c0_166 = arith.constant 0 : index
      %164 = vector.load %arg9[%c17, %c0_165, %c0_166] : memref<18x18x8xf32, #tpu.memory_space<vmem>>, vector<1x18x8xf32>
      tpu.vector_store %arg9[%c17, %c0_165, %c0_166], %161 {strides = array<i32>} : memref<18x18x8xf32, #tpu.memory_space<vmem>>, vector<1x18x8xf32>,
      %c0_167 = arith.constant 0 : index
      %c0_168 = arith.constant 0 : index
      %c0_169 = arith.constant 0 : index
      %165 = vector.load %arg9[%c0_167, %c0_168, %c0_169] : memref<18x18x8xf32, #tpu.memory_space<vmem>>, vector<18x1x8xf32>
      tpu.vector_store %arg9[%c0_167, %c0_168, %c0_169], %162 {strides = array<i32>} : memref<18x18x8xf32, #tpu.memory_space<vmem>>, vector<18x1x8xf32>,
      %c0_170 = arith.constant 0 : index
      %c17_171 = arith.constant 17 : index
      %c0_172 = arith.constant 0 : index
      %166 = vector.load %arg9[%c0_170, %c17_171, %c0_172] : memref<18x18x8xf32, #tpu.memory_space<vmem>>, vector<18x1x8xf32>
      tpu.vector_store %arg9[%c0_170, %c17_171, %c0_172], %162 {strides = array<i32>} : memref<18x18x8xf32, #tpu.memory_space<vmem>>, vector<18x1x8xf32>,
      %cst_173 = arith.constant 0.000000e+00 : f32
      %167 = vector.broadcast %cst_173 : f32 to vector<1x18x8xf32>
      %cst_174 = arith.constant 0.000000e+00 : f32
      %168 = vector.broadcast %cst_174 : f32 to vector<18x1x8xf32>
      %c0_175 = arith.constant 0 : index
      %c0_176 = arith.constant 0 : index
      %c0_177 = arith.constant 0 : index
      %169 = vector.load %arg10[%c0_175, %c0_176, %c0_177] : memref<18x18x8xf32, #tpu.memory_space<vmem>>, vector<1x18x8xf32>
      tpu.vector_store %arg10[%c0_175, %c0_176, %c0_177], %167 {strides = array<i32>} : memref<18x18x8xf32, #tpu.memory_space<vmem>>, vector<1x18x8xf32>,
      %c17_178 = arith.constant 17 : index
      %c0_179 = arith.constant 0 : index
      %c0_180 = arith.constant 0 : index
      %170 = vector.load %arg10[%c17_178, %c0_179, %c0_180] : memref<18x18x8xf32, #tpu.memory_space<vmem>>, vector<1x18x8xf32>
      tpu.vector_store %arg10[%c17_178, %c0_179, %c0_180], %167 {strides = array<i32>} : memref<18x18x8xf32, #tpu.memory_space<vmem>>, vector<1x18x8xf32>,
      %c0_181 = arith.constant 0 : index
      %c0_182 = arith.constant 0 : index
      %c0_183 = arith.constant 0 : index
      %171 = vector.load %arg10[%c0_181, %c0_182, %c0_183] : memref<18x18x8xf32, #tpu.memory_space<vmem>>, vector<18x1x8xf32>
      tpu.vector_store %arg10[%c0_181, %c0_182, %c0_183], %168 {strides = array<i32>} : memref<18x18x8xf32, #tpu.memory_space<vmem>>, vector<18x1x8xf32>,
      %c0_184 = arith.constant 0 : index
      %c17_185 = arith.constant 17 : index
      %c0_186 = arith.constant 0 : index
      %172 = vector.load %arg10[%c0_184, %c17_185, %c0_186] : memref<18x18x8xf32, #tpu.memory_space<vmem>>, vector<18x1x8xf32>
      tpu.vector_store %arg10[%c0_184, %c17_185, %c0_186], %168 {strides = array<i32>} : memref<18x18x8xf32, #tpu.memory_space<vmem>>, vector<18x1x8xf32>,
      %c0_187 = arith.constant 0 : index
      %c0_188 = arith.constant 0 : index
      %c0_189 = arith.constant 0 : index
      %c0_190 = arith.constant 0 : index
      %173 = vector.load %arg2[%c0_187, %c0_188, %c0_189, %c0_190] : memref<1x16x16x8xf32, #tpu.memory_space<vmem>>, vector<1x16x16x8xf32>
      %174 = vector.shape_cast %173 : vector<1x16x16x8xf32> to vector<16x16x8xf32>
      %c1_191 = arith.constant 1 : index
      %c1_192 = arith.constant 1 : index
      %c0_193 = arith.constant 0 : index
      %175 = vector.load %arg9[%c1_191, %c1_192, %c0_193] : memref<18x18x8xf32, #tpu.memory_space<vmem>>, vector<16x16x8xf32>
      tpu.vector_store %arg9[%c1_191, %c1_192, %c0_193], %174 {strides = array<i32>} : memref<18x18x8xf32, #tpu.memory_space<vmem>>, vector<16x16x8xf32>,
    } else {
    }
    %cst = arith.constant 0.000000e+00 : f32
    %3 = vector.broadcast %cst : f32 to vector<256x8xf32>
    %c0 = arith.constant 0 : index
    %c0_1 = arith.constant 0 : index
    %c0_2 = arith.constant 0 : index
    %4 = vector.load %arg9[%c0, %c0_1, %c0_2] : memref<18x18x8xf32, #tpu.memory_space<vmem>>, vector<16x16x8xf32>
    %5 = vector.shape_cast %4 : vector<16x16x8xf32> to vector<256x8xf32>
    %6 = arith.truncf %5 : vector<256x8xf32> to vector<256x8xbf16>
    %c0_3 = arith.constant 0 : index
    %c0_4 = arith.constant 0 : index
    %c0_5 = arith.constant 0 : index
    %c0_6 = arith.constant 0 : index
    %7 = vector.load %arg3[%c0_3, %c0_4, %c0_5, %c0_6] : memref<1x9x8x8xbf16, #tpu.memory_space<vmem>>, vector<1x1x8x8xbf16>
    %8 = vector.shape_cast %7 : vector<1x1x8x8xbf16> to vector<8x8xbf16>
    %cst_7 = arith.constant dense<0.000000e+00> : vector<256x8xf32>
    %9 = tpu.matmul %6, %8, %cst_7 {dimension_numbers = #tpu.dot_dimension_numbers<[1], [0], [0], [1], [0, 0, 1, 1], [], []>} : vector<256x8xbf16>, vector<8x8xbf16>, vector<256x8xf32> -> vector<256x8xf32>
    %10 = arith.addf %3, %9 : vector<256x8xf32>
    %c0_8 = arith.constant 0 : index
    %c1 = arith.constant 1 : index
    %c0_9 = arith.constant 0 : index
    %11 = vector.load %arg9[%c0_8, %c1, %c0_9] : memref<18x18x8xf32, #tpu.memory_space<vmem>>, vector<16x16x8xf32>
    %12 = vector.shape_cast %11 : vector<16x16x8xf32> to vector<256x8xf32>
    %13 = arith.truncf %12 : vector<256x8xf32> to vector<256x8xbf16>
    %c0_10 = arith.constant 0 : index
    %c1_11 = arith.constant 1 : index
    %c0_12 = arith.constant 0 : index
    %c0_13 = arith.constant 0 : index
    %14 = vector.load %arg3[%c0_10, %c1_11, %c0_12, %c0_13] : memref<1x9x8x8xbf16, #tpu.memory_space<vmem>>, vector<1x1x8x8xbf16>
    %15 = vector.shape_cast %14 : vector<1x1x8x8xbf16> to vector<8x8xbf16>
    %cst_14 = arith.constant dense<0.000000e+00> : vector<256x8xf32>
    %16 = tpu.matmul %13, %15, %cst_14 {dimension_numbers = #tpu.dot_dimension_numbers<[1], [0], [0], [1], [0, 0, 1, 1], [], []>} : vector<256x8xbf16>, vector<8x8xbf16>, vector<256x8xf32> -> vector<256x8xf32>
    %17 = arith.addf %10, %16 : vector<256x8xf32>
    %c0_15 = arith.constant 0 : index
    %c2 = arith.constant 2 : index
    %c0_16 = arith.constant 0 : index
    %18 = vector.load %arg9[%c0_15, %c2, %c0_16] : memref<18x18x8xf32, #tpu.memory_space<vmem>>, vector<16x16x8xf32>
    %19 = vector.shape_cast %18 : vector<16x16x8xf32> to vector<256x8xf32>
    %20 = arith.truncf %19 : vector<256x8xf32> to vector<256x8xbf16>
    %c0_17 = arith.constant 0 : index
    %c2_18 = arith.constant 2 : index
    %c0_19 = arith.constant 0 : index
    %c0_20 = arith.constant 0 : index
    %21 = vector.load %arg3[%c0_17, %c2_18, %c0_19, %c0_20] : memref<1x9x8x8xbf16, #tpu.memory_space<vmem>>, vector<1x1x8x8xbf16>
    %22 = vector.shape_cast %21 : vector<1x1x8x8xbf16> to vector<8x8xbf16>
    %cst_21 = arith.constant dense<0.000000e+00> : vector<256x8xf32>
    %23 = tpu.matmul %20, %22, %cst_21 {dimension_numbers = #tpu.dot_dimension_numbers<[1], [0], [0], [1], [0, 0, 1, 1], [], []>} : vector<256x8xbf16>, vector<8x8xbf16>, vector<256x8xf32> -> vector<256x8xf32>
    %24 = arith.addf %17, %23 : vector<256x8xf32>
    %c1_22 = arith.constant 1 : index
    %c0_23 = arith.constant 0 : index
    %c0_24 = arith.constant 0 : index
    %25 = vector.load %arg9[%c1_22, %c0_23, %c0_24] : memref<18x18x8xf32, #tpu.memory_space<vmem>>, vector<16x16x8xf32>
    %26 = vector.shape_cast %25 : vector<16x16x8xf32> to vector<256x8xf32>
    %27 = arith.truncf %26 : vector<256x8xf32> to vector<256x8xbf16>
    %c0_25 = arith.constant 0 : index
    %c3 = arith.constant 3 : index
    %c0_26 = arith.constant 0 : index
    %c0_27 = arith.constant 0 : index
    %28 = vector.load %arg3[%c0_25, %c3, %c0_26, %c0_27] : memref<1x9x8x8xbf16, #tpu.memory_space<vmem>>, vector<1x1x8x8xbf16>
    %29 = vector.shape_cast %28 : vector<1x1x8x8xbf16> to vector<8x8xbf16>
    %cst_28 = arith.constant dense<0.000000e+00> : vector<256x8xf32>
    %30 = tpu.matmul %27, %29, %cst_28 {dimension_numbers = #tpu.dot_dimension_numbers<[1], [0], [0], [1], [0, 0, 1, 1], [], []>} : vector<256x8xbf16>, vector<8x8xbf16>, vector<256x8xf32> -> vector<256x8xf32>
    %31 = arith.addf %24, %30 : vector<256x8xf32>
    %c1_29 = arith.constant 1 : index
    %c1_30 = arith.constant 1 : index
    %c0_31 = arith.constant 0 : index
    %32 = vector.load %arg9[%c1_29, %c1_30, %c0_31] : memref<18x18x8xf32, #tpu.memory_space<vmem>>, vector<16x16x8xf32>
    %33 = vector.shape_cast %32 : vector<16x16x8xf32> to vector<256x8xf32>
    %34 = arith.truncf %33 : vector<256x8xf32> to vector<256x8xbf16>
    %c0_32 = arith.constant 0 : index
    %c4 = arith.constant 4 : index
    %c0_33 = arith.constant 0 : index
    %c0_34 = arith.constant 0 : index
    %35 = vector.load %arg3[%c0_32, %c4, %c0_33, %c0_34] : memref<1x9x8x8xbf16, #tpu.memory_space<vmem>>, vector<1x1x8x8xbf16>
    %36 = vector.shape_cast %35 : vector<1x1x8x8xbf16> to vector<8x8xbf16>
    %cst_35 = arith.constant dense<0.000000e+00> : vector<256x8xf32>
    %37 = tpu.matmul %34, %36, %cst_35 {dimension_numbers = #tpu.dot_dimension_numbers<[1], [0], [0], [1], [0, 0, 1, 1], [], []>} : vector<256x8xbf16>, vector<8x8xbf16>, vector<256x8xf32> -> vector<256x8xf32>
    %38 = arith.addf %31, %37 : vector<256x8xf32>
    %c1_36 = arith.constant 1 : index
    %c2_37 = arith.constant 2 : index
    %c0_38 = arith.constant 0 : index
    %39 = vector.load %arg9[%c1_36, %c2_37, %c0_38] : memref<18x18x8xf32, #tpu.memory_space<vmem>>, vector<16x16x8xf32>
    %40 = vector.shape_cast %39 : vector<16x16x8xf32> to vector<256x8xf32>
    %41 = arith.truncf %40 : vector<256x8xf32> to vector<256x8xbf16>
    %c0_39 = arith.constant 0 : index
    %c5 = arith.constant 5 : index
    %c0_40 = arith.constant 0 : index
    %c0_41 = arith.constant 0 : index
    %42 = vector.load %arg3[%c0_39, %c5, %c0_40, %c0_41] : memref<1x9x8x8xbf16, #tpu.memory_space<vmem>>, vector<1x1x8x8xbf16>
    %43 = vector.shape_cast %42 : vector<1x1x8x8xbf16> to vector<8x8xbf16>
    %cst_42 = arith.constant dense<0.000000e+00> : vector<256x8xf32>
    %44 = tpu.matmul %41, %43, %cst_42 {dimension_numbers = #tpu.dot_dimension_numbers<[1], [0], [0], [1], [0, 0, 1, 1], [], []>} : vector<256x8xbf16>, vector<8x8xbf16>, vector<256x8xf32> -> vector<256x8xf32>
    %45 = arith.addf %38, %44 : vector<256x8xf32>
    %c2_43 = arith.constant 2 : index
    %c0_44 = arith.constant 0 : index
    %c0_45 = arith.constant 0 : index
    %46 = vector.load %arg9[%c2_43, %c0_44, %c0_45] : memref<18x18x8xf32, #tpu.memory_space<vmem>>, vector<16x16x8xf32>
    %47 = vector.shape_cast %46 : vector<16x16x8xf32> to vector<256x8xf32>
    %48 = arith.truncf %47 : vector<256x8xf32> to vector<256x8xbf16>
    %c0_46 = arith.constant 0 : index
    %c6 = arith.constant 6 : index
    %c0_47 = arith.constant 0 : index
    %c0_48 = arith.constant 0 : index
    %49 = vector.load %arg3[%c0_46, %c6, %c0_47, %c0_48] : memref<1x9x8x8xbf16, #tpu.memory_space<vmem>>, vector<1x1x8x8xbf16>
    %50 = vector.shape_cast %49 : vector<1x1x8x8xbf16> to vector<8x8xbf16>
    %cst_49 = arith.constant dense<0.000000e+00> : vector<256x8xf32>
    %51 = tpu.matmul %48, %50, %cst_49 {dimension_numbers = #tpu.dot_dimension_numbers<[1], [0], [0], [1], [0, 0, 1, 1], [], []>} : vector<256x8xbf16>, vector<8x8xbf16>, vector<256x8xf32> -> vector<256x8xf32>
    %52 = arith.addf %45, %51 : vector<256x8xf32>
    %c2_50 = arith.constant 2 : index
    %c1_51 = arith.constant 1 : index
    %c0_52 = arith.constant 0 : index
    %53 = vector.load %arg9[%c2_50, %c1_51, %c0_52] : memref<18x18x8xf32, #tpu.memory_space<vmem>>, vector<16x16x8xf32>
    %54 = vector.shape_cast %53 : vector<16x16x8xf32> to vector<256x8xf32>
    %55 = arith.truncf %54 : vector<256x8xf32> to vector<256x8xbf16>
    %c0_53 = arith.constant 0 : index
    %c7 = arith.constant 7 : index
    %c0_54 = arith.constant 0 : index
    %c0_55 = arith.constant 0 : index
    %56 = vector.load %arg3[%c0_53, %c7, %c0_54, %c0_55] : memref<1x9x8x8xbf16, #tpu.memory_space<vmem>>, vector<1x1x8x8xbf16>
    %57 = vector.shape_cast %56 : vector<1x1x8x8xbf16> to vector<8x8xbf16>
    %cst_56 = arith.constant dense<0.000000e+00> : vector<256x8xf32>
    %58 = tpu.matmul %55, %57, %cst_56 {dimension_numbers = #tpu.dot_dimension_numbers<[1], [0], [0], [1], [0, 0, 1, 1], [], []>} : vector<256x8xbf16>, vector<8x8xbf16>, vector<256x8xf32> -> vector<256x8xf32>
    %59 = arith.addf %52, %58 : vector<256x8xf32>
    %c2_57 = arith.constant 2 : index
    %c2_58 = arith.constant 2 : index
    %c0_59 = arith.constant 0 : index
    %60 = vector.load %arg9[%c2_57, %c2_58, %c0_59] : memref<18x18x8xf32, #tpu.memory_space<vmem>>, vector<16x16x8xf32>
    %61 = vector.shape_cast %60 : vector<16x16x8xf32> to vector<256x8xf32>
    %62 = arith.truncf %61 : vector<256x8xf32> to vector<256x8xbf16>
    %c0_60 = arith.constant 0 : index
    %c8 = arith.constant 8 : index
    %c0_61 = arith.constant 0 : index
    %c0_62 = arith.constant 0 : index
    %63 = vector.load %arg3[%c0_60, %c8, %c0_61, %c0_62] : memref<1x9x8x8xbf16, #tpu.memory_space<vmem>>, vector<1x1x8x8xbf16>
    %64 = vector.shape_cast %63 : vector<1x1x8x8xbf16> to vector<8x8xbf16>
    %cst_63 = arith.constant dense<0.000000e+00> : vector<256x8xf32>
    %65 = tpu.matmul %62, %64, %cst_63 {dimension_numbers = #tpu.dot_dimension_numbers<[1], [0], [0], [1], [0, 0, 1, 1], [], []>} : vector<256x8xbf16>, vector<8x8xbf16>, vector<256x8xf32> -> vector<256x8xf32>
    %66 = arith.addf %59, %65 : vector<256x8xf32>
    %cst_64 = arith.constant 0.000000e+00 : f32
    %67 = vector.broadcast %cst_64 : f32 to vector<256x8xf32>
    %68 = arith.maximumf %66, %67 : vector<256x8xf32>
    %69 = vector.shape_cast %68 : vector<256x8xf32> to vector<16x16x8xf32>
    %c1_65 = arith.constant 1 : index
    %c1_66 = arith.constant 1 : index
    %c0_67 = arith.constant 0 : index
    %70 = vector.load %arg10[%c1_65, %c1_66, %c0_67] : memref<18x18x8xf32, #tpu.memory_space<vmem>>, vector<16x16x8xf32>
    tpu.vector_store %arg10[%c1_65, %c1_66, %c0_67], %69 {strides = array<i32>} : memref<18x18x8xf32, #tpu.memory_space<vmem>>, vector<16x16x8xf32>,
    %cst_68 = arith.constant 0.000000e+00 : f32
    %71 = vector.broadcast %cst_68 : f32 to vector<256x8xf32>
    %c0_69 = arith.constant 0 : index
    %c0_70 = arith.constant 0 : index
    %c0_71 = arith.constant 0 : index
    %72 = vector.load %arg10[%c0_69, %c0_70, %c0_71] : memref<18x18x8xf32, #tpu.memory_space<vmem>>, vector<16x16x8xf32>
    %73 = vector.shape_cast %72 : vector<16x16x8xf32> to vector<256x8xf32>
    %74 = arith.truncf %73 : vector<256x8xf32> to vector<256x8xbf16>
    %c0_72 = arith.constant 0 : index
    %c0_73 = arith.constant 0 : index
    %c0_74 = arith.constant 0 : index
    %c0_75 = arith.constant 0 : index
    %75 = vector.load %arg4[%c0_72, %c0_73, %c0_74, %c0_75] : memref<1x9x8x8xbf16, #tpu.memory_space<vmem>>, vector<1x1x8x8xbf16>
    %76 = vector.shape_cast %75 : vector<1x1x8x8xbf16> to vector<8x8xbf16>
    %cst_76 = arith.constant dense<0.000000e+00> : vector<256x8xf32>
    %77 = tpu.matmul %74, %76, %cst_76 {dimension_numbers = #tpu.dot_dimension_numbers<[1], [0], [0], [1], [0, 0, 1, 1], [], []>} : vector<256x8xbf16>, vector<8x8xbf16>, vector<256x8xf32> -> vector<256x8xf32>
    %78 = arith.addf %71, %77 : vector<256x8xf32>
    %c0_77 = arith.constant 0 : index
    %c1_78 = arith.constant 1 : index
    %c0_79 = arith.constant 0 : index
    %79 = vector.load %arg10[%c0_77, %c1_78, %c0_79] : memref<18x18x8xf32, #tpu.memory_space<vmem>>, vector<16x16x8xf32>
    %80 = vector.shape_cast %79 : vector<16x16x8xf32> to vector<256x8xf32>
    %81 = arith.truncf %80 : vector<256x8xf32> to vector<256x8xbf16>
    %c0_80 = arith.constant 0 : index
    %c1_81 = arith.constant 1 : index
    %c0_82 = arith.constant 0 : index
    %c0_83 = arith.constant 0 : index
    %82 = vector.load %arg4[%c0_80, %c1_81, %c0_82, %c0_83] : memref<1x9x8x8xbf16, #tpu.memory_space<vmem>>, vector<1x1x8x8xbf16>
    %83 = vector.shape_cast %82 : vector<1x1x8x8xbf16> to vector<8x8xbf16>
    %cst_84 = arith.constant dense<0.000000e+00> : vector<256x8xf32>
    %84 = tpu.matmul %81, %83, %cst_84 {dimension_numbers = #tpu.dot_dimension_numbers<[1], [0], [0], [1], [0, 0, 1, 1], [], []>} : vector<256x8xbf16>, vector<8x8xbf16>, vector<256x8xf32> -> vector<256x8xf32>
    %85 = arith.addf %78, %84 : vector<256x8xf32>
    %c0_85 = arith.constant 0 : index
    %c2_86 = arith.constant 2 : index
    %c0_87 = arith.constant 0 : index
    %86 = vector.load %arg10[%c0_85, %c2_86, %c0_87] : memref<18x18x8xf32, #tpu.memory_space<vmem>>, vector<16x16x8xf32>
    %87 = vector.shape_cast %86 : vector<16x16x8xf32> to vector<256x8xf32>
    %88 = arith.truncf %87 : vector<256x8xf32> to vector<256x8xbf16>
    %c0_88 = arith.constant 0 : index
    %c2_89 = arith.constant 2 : index
    %c0_90 = arith.constant 0 : index
    %c0_91 = arith.constant 0 : index
    %89 = vector.load %arg4[%c0_88, %c2_89, %c0_90, %c0_91] : memref<1x9x8x8xbf16, #tpu.memory_space<vmem>>, vector<1x1x8x8xbf16>
    %90 = vector.shape_cast %89 : vector<1x1x8x8xbf16> to vector<8x8xbf16>
    %cst_92 = arith.constant dense<0.000000e+00> : vector<256x8xf32>
    %91 = tpu.matmul %88, %90, %cst_92 {dimension_numbers = #tpu.dot_dimension_numbers<[1], [0], [0], [1], [0, 0, 1, 1], [], []>} : vector<256x8xbf16>, vector<8x8xbf16>, vector<256x8xf32> -> vector<256x8xf32>
    %92 = arith.addf %85, %91 : vector<256x8xf32>
    %c1_93 = arith.constant 1 : index
    %c0_94 = arith.constant 0 : index
    %c0_95 = arith.constant 0 : index
    %93 = vector.load %arg10[%c1_93, %c0_94, %c0_95] : memref<18x18x8xf32, #tpu.memory_space<vmem>>, vector<16x16x8xf32>
    %94 = vector.shape_cast %93 : vector<16x16x8xf32> to vector<256x8xf32>
    %95 = arith.truncf %94 : vector<256x8xf32> to vector<256x8xbf16>
    %c0_96 = arith.constant 0 : index
    %c3_97 = arith.constant 3 : index
    %c0_98 = arith.constant 0 : index
    %c0_99 = arith.constant 0 : index
    %96 = vector.load %arg4[%c0_96, %c3_97, %c0_98, %c0_99] : memref<1x9x8x8xbf16, #tpu.memory_space<vmem>>, vector<1x1x8x8xbf16>
    %97 = vector.shape_cast %96 : vector<1x1x8x8xbf16> to vector<8x8xbf16>
    %cst_100 = arith.constant dense<0.000000e+00> : vector<256x8xf32>
    %98 = tpu.matmul %95, %97, %cst_100 {dimension_numbers = #tpu.dot_dimension_numbers<[1], [0], [0], [1], [0, 0, 1, 1], [], []>} : vector<256x8xbf16>, vector<8x8xbf16>, vector<256x8xf32> -> vector<256x8xf32>
    %99 = arith.addf %92, %98 : vector<256x8xf32>
    %c1_101 = arith.constant 1 : index
    %c1_102 = arith.constant 1 : index
    %c0_103 = arith.constant 0 : index
    %100 = vector.load %arg10[%c1_101, %c1_102, %c0_103] : memref<18x18x8xf32, #tpu.memory_space<vmem>>, vector<16x16x8xf32>
    %101 = vector.shape_cast %100 : vector<16x16x8xf32> to vector<256x8xf32>
    %102 = arith.truncf %101 : vector<256x8xf32> to vector<256x8xbf16>
    %c0_104 = arith.constant 0 : index
    %c4_105 = arith.constant 4 : index
    %c0_106 = arith.constant 0 : index
    %c0_107 = arith.constant 0 : index
    %103 = vector.load %arg4[%c0_104, %c4_105, %c0_106, %c0_107] : memref<1x9x8x8xbf16, #tpu.memory_space<vmem>>, vector<1x1x8x8xbf16>
    %104 = vector.shape_cast %103 : vector<1x1x8x8xbf16> to vector<8x8xbf16>
    %cst_108 = arith.constant dense<0.000000e+00> : vector<256x8xf32>
    %105 = tpu.matmul %102, %104, %cst_108 {dimension_numbers = #tpu.dot_dimension_numbers<[1], [0], [0], [1], [0, 0, 1, 1], [], []>} : vector<256x8xbf16>, vector<8x8xbf16>, vector<256x8xf32> -> vector<256x8xf32>
    %106 = arith.addf %99, %105 : vector<256x8xf32>
    %c1_109 = arith.constant 1 : index
    %c2_110 = arith.constant 2 : index
    %c0_111 = arith.constant 0 : index
    %107 = vector.load %arg10[%c1_109, %c2_110, %c0_111] : memref<18x18x8xf32, #tpu.memory_space<vmem>>, vector<16x16x8xf32>
    %108 = vector.shape_cast %107 : vector<16x16x8xf32> to vector<256x8xf32>
    %109 = arith.truncf %108 : vector<256x8xf32> to vector<256x8xbf16>
    %c0_112 = arith.constant 0 : index
    %c5_113 = arith.constant 5 : index
    %c0_114 = arith.constant 0 : index
    %c0_115 = arith.constant 0 : index
    %110 = vector.load %arg4[%c0_112, %c5_113, %c0_114, %c0_115] : memref<1x9x8x8xbf16, #tpu.memory_space<vmem>>, vector<1x1x8x8xbf16>
    %111 = vector.shape_cast %110 : vector<1x1x8x8xbf16> to vector<8x8xbf16>
    %cst_116 = arith.constant dense<0.000000e+00> : vector<256x8xf32>
    %112 = tpu.matmul %109, %111, %cst_116 {dimension_numbers = #tpu.dot_dimension_numbers<[1], [0], [0], [1], [0, 0, 1, 1], [], []>} : vector<256x8xbf16>, vector<8x8xbf16>, vector<256x8xf32> -> vector<256x8xf32>
    %113 = arith.addf %106, %112 : vector<256x8xf32>
    %c2_117 = arith.constant 2 : index
    %c0_118 = arith.constant 0 : index
    %c0_119 = arith.constant 0 : index
    %114 = vector.load %arg10[%c2_117, %c0_118, %c0_119] : memref<18x18x8xf32, #tpu.memory_space<vmem>>, vector<16x16x8xf32>
    %115 = vector.shape_cast %114 : vector<16x16x8xf32> to vector<256x8xf32>
    %116 = arith.truncf %115 : vector<256x8xf32> to vector<256x8xbf16>
    %c0_120 = arith.constant 0 : index
    %c6_121 = arith.constant 6 : index
    %c0_122 = arith.constant 0 : index
    %c0_123 = arith.constant 0 : index
    %117 = vector.load %arg4[%c0_120, %c6_121, %c0_122, %c0_123] : memref<1x9x8x8xbf16, #tpu.memory_space<vmem>>, vector<1x1x8x8xbf16>
    %118 = vector.shape_cast %117 : vector<1x1x8x8xbf16> to vector<8x8xbf16>
    %cst_124 = arith.constant dense<0.000000e+00> : vector<256x8xf32>
    %119 = tpu.matmul %116, %118, %cst_124 {dimension_numbers = #tpu.dot_dimension_numbers<[1], [0], [0], [1], [0, 0, 1, 1], [], []>} : vector<256x8xbf16>, vector<8x8xbf16>, vector<256x8xf32> -> vector<256x8xf32>
    %120 = arith.addf %113, %119 : vector<256x8xf32>
    %c2_125 = arith.constant 2 : index
    %c1_126 = arith.constant 1 : index
    %c0_127 = arith.constant 0 : index
    %121 = vector.load %arg10[%c2_125, %c1_126, %c0_127] : memref<18x18x8xf32, #tpu.memory_space<vmem>>, vector<16x16x8xf32>
    %122 = vector.shape_cast %121 : vector<16x16x8xf32> to vector<256x8xf32>
    %123 = arith.truncf %122 : vector<256x8xf32> to vector<256x8xbf16>
    %c0_128 = arith.constant 0 : index
    %c7_129 = arith.constant 7 : index
    %c0_130 = arith.constant 0 : index
    %c0_131 = arith.constant 0 : index
    %124 = vector.load %arg4[%c0_128, %c7_129, %c0_130, %c0_131] : memref<1x9x8x8xbf16, #tpu.memory_space<vmem>>, vector<1x1x8x8xbf16>
    %125 = vector.shape_cast %124 : vector<1x1x8x8xbf16> to vector<8x8xbf16>
    %cst_132 = arith.constant dense<0.000000e+00> : vector<256x8xf32>
    %126 = tpu.matmul %123, %125, %cst_132 {dimension_numbers = #tpu.dot_dimension_numbers<[1], [0], [0], [1], [0, 0, 1, 1], [], []>} : vector<256x8xbf16>, vector<8x8xbf16>, vector<256x8xf32> -> vector<256x8xf32>
    %127 = arith.addf %120, %126 : vector<256x8xf32>
    %c2_133 = arith.constant 2 : index
    %c2_134 = arith.constant 2 : index
    %c0_135 = arith.constant 0 : index
    %128 = vector.load %arg10[%c2_133, %c2_134, %c0_135] : memref<18x18x8xf32, #tpu.memory_space<vmem>>, vector<16x16x8xf32>
    %129 = vector.shape_cast %128 : vector<16x16x8xf32> to vector<256x8xf32>
    %130 = arith.truncf %129 : vector<256x8xf32> to vector<256x8xbf16>
    %c0_136 = arith.constant 0 : index
    %c8_137 = arith.constant 8 : index
    %c0_138 = arith.constant 0 : index
    %c0_139 = arith.constant 0 : index
    %131 = vector.load %arg4[%c0_136, %c8_137, %c0_138, %c0_139] : memref<1x9x8x8xbf16, #tpu.memory_space<vmem>>, vector<1x1x8x8xbf16>
    %132 = vector.shape_cast %131 : vector<1x1x8x8xbf16> to vector<8x8xbf16>
    %cst_140 = arith.constant dense<0.000000e+00> : vector<256x8xf32>
    %133 = tpu.matmul %130, %132, %cst_140 {dimension_numbers = #tpu.dot_dimension_numbers<[1], [0], [0], [1], [0, 0, 1, 1], [], []>} : vector<256x8xbf16>, vector<8x8xbf16>, vector<256x8xf32> -> vector<256x8xf32>
    %134 = arith.addf %127, %133 : vector<256x8xf32>
    %cst_141 = arith.constant dense<0.000000e+00> : vector<8xf32>
    %135 = vector.multi_reduction <add>, %134, %cst_141 [0] : vector<256x8xf32> to vector<8xf32>
    %136 = vector.shape_cast %135 : vector<8xf32> to vector<1x8xf32>
    %cst_142 = arith.constant 2.560000e+02 : f32
    %137 = vector.broadcast %cst_142 : f32 to vector<1x8xf32>
    %138 = arith.divf %136, %137 : vector<1x8xf32>
    %c0_143 = arith.constant 0 : index
    %c0_144 = arith.constant 0 : index
    %c0_145 = arith.constant 0 : index
    %139 = vector.load %arg5[%c0_143, %c0_144, %c0_145] : memref<1x8x2xf32, #tpu.memory_space<vmem>>, vector<1x8x2xf32>
    %140 = vector.shape_cast %139 : vector<1x8x2xf32> to vector<8x2xf32>
    %cst_146 = arith.constant dense<0.000000e+00> : vector<1x2xf32>
    %141 = tpu.matmul %138, %140, %cst_146 {dimension_numbers = #tpu.dot_dimension_numbers<[1], [0], [0], [1], [0, 0, 1, 1], [], []>} : vector<1x8xf32>, vector<8x2xf32>, vector<1x2xf32> -> vector<1x2xf32>
    %cst_147 = arith.constant 0.000000e+00 : f32
    %142 = vector.broadcast %cst_147 : f32 to vector<1x2xf32>
    %143 = arith.maximumf %141, %142 : vector<1x2xf32>
    %c0_148 = arith.constant 0 : index
    %c0_149 = arith.constant 0 : index
    %c0_150 = arith.constant 0 : index
    %144 = vector.load %arg6[%c0_148, %c0_149, %c0_150] : memref<1x2x8xf32, #tpu.memory_space<vmem>>, vector<1x2x8xf32>
    %145 = vector.shape_cast %144 : vector<1x2x8xf32> to vector<2x8xf32>
    %cst_151 = arith.constant dense<0.000000e+00> : vector<1x8xf32>
    %146 = tpu.matmul %143, %145, %cst_151 {dimension_numbers = #tpu.dot_dimension_numbers<[1], [0], [0], [1], [0, 0, 1, 1], [], []>} : vector<1x2xf32>, vector<2x8xf32>, vector<1x8xf32> -> vector<1x8xf32>
    %147 = arith.negf %146 : vector<1x8xf32>
    %148 = math.exp %147 : vector<1x8xf32>
    %cst_152 = arith.constant 1.000000e+00 : f32
    %149 = vector.broadcast %cst_152 : f32 to vector<1x8xf32>
    %150 = arith.addf %149, %148 : vector<1x8xf32>
    %151 = arith.divf %149, %150 : vector<1x8xf32>
    %c1_153 = arith.constant 1 : index
    %c1_154 = arith.constant 1 : index
    %c0_155 = arith.constant 0 : index
    %152 = vector.load %arg9[%c1_153, %c1_154, %c0_155] : memref<18x18x8xf32, #tpu.memory_space<vmem>>, vector<16x16x8xf32>
    %153 = vector.broadcast %151 : vector<1x8xf32> to vector<256x8xf32>
    %154 = arith.mulf %134, %153 : vector<256x8xf32>
    %155 = vector.shape_cast %154 : vector<256x8xf32> to vector<16x16x8xf32>
    %156 = arith.addf %155, %152 : vector<16x16x8xf32>
    %c1_156 = arith.constant 1 : index
    %c1_157 = arith.constant 1 : index
    %c0_158 = arith.constant 0 : index
    %157 = vector.load %arg9[%c1_156, %c1_157, %c0_158] : memref<18x18x8xf32, #tpu.memory_space<vmem>>, vector<16x16x8xf32>
    tpu.vector_store %arg9[%c1_156, %c1_157, %c0_158], %156 {strides = array<i32>} : memref<18x18x8xf32, #tpu.memory_space<vmem>>, vector<16x16x8xf32>,
    %c1_i32 = arith.constant 1 : i32
    %158 = arith.cmpi eq, %arg1, %c1_i32 : i32
    %159 = arith.extui %158 : i1 to i32
    %c0_i32_159 = arith.constant 0 : i32
    %160 = arith.cmpi ne, %159, %c0_i32_159 : i32
    scf.if %160 {
      %c1_160 = arith.constant 1 : index
      %c1_161 = arith.constant 1 : index
      %c0_162 = arith.constant 0 : index
      %161 = vector.load %arg9[%c1_160, %c1_161, %c0_162] : memref<18x18x8xf32, #tpu.memory_space<vmem>>, vector<16x16x8xf32>
      %162 = vector.shape_cast %161 : vector<16x16x8xf32> to vector<256x8xf32>
      %163 = arith.truncf %162 : vector<256x8xf32> to vector<256x8xbf16>
      %c0_163 = arith.constant 0 : index
      %c0_164 = arith.constant 0 : index
      %164 = vector.load %arg7[%c0_163, %c0_164] : memref<8x8xbf16, #tpu.memory_space<vmem>>, vector<8x8xbf16>
      %cst_165 = arith.constant dense<0.000000e+00> : vector<256x8xf32>
      %165 = tpu.matmul %163, %164, %cst_165 {dimension_numbers = #tpu.dot_dimension_numbers<[1], [0], [0], [1], [0, 0, 1, 1], [], []>} : vector<256x8xbf16>, vector<8x8xbf16>, vector<256x8xf32> -> vector<256x8xf32>
      %166 = vector.shape_cast %165 : vector<256x8xf32> to vector<16x16x8xf32>
      %c0_166 = arith.constant 0 : index
      %c0_167 = arith.constant 0 : index
      %c0_168 = arith.constant 0 : index
      %c0_169 = arith.constant 0 : index
      %167 = vector.load %arg2[%c0_166, %c0_167, %c0_168, %c0_169] : memref<1x16x16x8xf32, #tpu.memory_space<vmem>>, vector<1x16x16x8xf32>
      %168 = vector.shape_cast %167 : vector<1x16x16x8xf32> to vector<16x16x8xf32>
      %169 = arith.addf %166, %168 : vector<16x16x8xf32>
      %c0_170 = arith.constant 0 : index
      %c0_171 = arith.constant 0 : index
      %c0_172 = arith.constant 0 : index
      %c0_173 = arith.constant 0 : index
      %170 = vector.load %arg8[%c0_170, %c0_171, %c0_172, %c0_173] : memref<1x16x16x8xf32, #tpu.memory_space<vmem>>, vector<1x16x16x8xf32>
      %171 = vector.shape_cast %170 : vector<1x16x16x8xf32> to vector<16x16x8xf32>
      %172 = vector.shape_cast %169 : vector<16x16x8xf32> to vector<1x16x16x8xf32>
      tpu.vector_store %arg8[%c0_170, %c0_171, %c0_172, %c0_173], %172 {strides = array<i32>} : memref<1x16x16x8xf32, #tpu.memory_space<vmem>>, vector<1x16x16x8xf32>,
    } else {
    }
    return
  }
  func.func @transform_0(%arg0: i32, %arg1: i32) -> (i32, i32, i32, i32) {
    %c0_i32 = arith.constant 0 : i32
    %c0_i32_0 = arith.constant 0 : i32
    %c0_i32_1 = arith.constant 0 : i32
    %c0_i32_2 = arith.constant 0 : i32
    return %arg0, %c0_i32, %c0_i32_0, %c0_i32_1 : i32, i32, i32, i32
  }
  func.func @transform_1(%arg0: i32, %arg1: i32) -> (i32, i32, i32, i32) {
    %c0_i32 = arith.constant 0 : i32
    %c0_i32_0 = arith.constant 0 : i32
    %c0_i32_1 = arith.constant 0 : i32
    %c0_i32_2 = arith.constant 0 : i32
    return %arg1, %c0_i32, %c0_i32_0, %c0_i32_1 : i32, i32, i32, i32
  }
  func.func @transform_2(%arg0: i32, %arg1: i32) -> (i32, i32, i32, i32) {
    %c0_i32 = arith.constant 0 : i32
    %c0_i32_0 = arith.constant 0 : i32
    %c0_i32_1 = arith.constant 0 : i32
    %c0_i32_2 = arith.constant 0 : i32
    return %arg1, %c0_i32, %c0_i32_0, %c0_i32_1 : i32, i32, i32, i32
  }
  func.func @transform_3(%arg0: i32, %arg1: i32) -> (i32, i32, i32) {
    %c0_i32 = arith.constant 0 : i32
    %c0_i32_0 = arith.constant 0 : i32
    %c0_i32_1 = arith.constant 0 : i32
    return %arg1, %c0_i32, %c0_i32_0 : i32, i32, i32
  }
  func.func @transform_4(%arg0: i32, %arg1: i32) -> (i32, i32, i32) {
    %c0_i32 = arith.constant 0 : i32
    %c0_i32_0 = arith.constant 0 : i32
    %c0_i32_1 = arith.constant 0 : i32
    return %arg1, %c0_i32, %c0_i32_0 : i32, i32, i32
  }
  func.func @transform_5(%arg0: i32, %arg1: i32) -> (i32, i32) {
    %c0_i32 = arith.constant 0 : i32
    %c0_i32_0 = arith.constant 0 : i32
    %c0_i32_1 = arith.constant 0 : i32
    return %c0_i32, %c0_i32_0 : i32, i32
  }
  func.func @transform_6(%arg0: i32, %arg1: i32) -> (i32, i32, i32, i32) {
    %c0_i32 = arith.constant 0 : i32
    %c0_i32_0 = arith.constant 0 : i32
    %c0_i32_1 = arith.constant 0 : i32
    %c0_i32_2 = arith.constant 0 : i32
    return %arg0, %c0_i32, %c0_i32_0, %c0_i32_1 : i32, i32, i32, i32
  }
}

</mosaic_0001>

<llo_original>
// kernel: tpu_custom_call.1
$region0: #{tpu_custom_call.1}
  #allocation0 [shape = 'u32[]', space=smem, size = 0x4, offset = 0x4, fixed_abs, tag = 'smem constant byte address 0x4 - core index']
  #allocation1 [shape = 'u32[144,128]{1,0:T(1,128)}', space=vmem, size = 0x12000, scoped, tag = 'internal scratch']
  #allocation2 [shape = 'f32[18,18,8]{2,1,0:T(8,128)}', space=vmem, size = 0x36000, scoped, tag = 'scratch operand']
  #allocation3 [shape = 'f32[18,18,8]{2,1,0:T(8,128)}', space=vmem, size = 0x36000, scoped, tag = 'scratch operand']
  %s0 = inlined_call_operand.vmem [shape: f32[2,16,16,8], index: 0, kind: input, shape index: {}]
  %s1 = inlined_call_operand.vmem [shape: bf16[2,9,8,8], index: 1, kind: input, shape index: {}]
  %s2 = inlined_call_operand.vmem [shape: bf16[2,9,8,8], index: 2, kind: input, shape index: {}]
  %s3 = inlined_call_operand.vmem [shape: f32[2,8,2], index: 3, kind: input, shape index: {}]
  %s4 = inlined_call_operand.vmem [shape: f32[2,2,8], index: 4, kind: input, shape index: {}]
  %s5 = inlined_call_operand.vmem [shape: bf16[8,8], index: 5, kind: input, shape index: {}]
  %s6 = inlined_call_operand.vmem [shape: f32[2,16,16,8], index: 6, kind: output, shape index: {}]
  %s7 = sld [smem:[#allocation0]]
  $region65: #{tpu_custom_call.1} parent=0
    _
  %s9 = ssub.s32 1, %s7
  %s10 = scalar_select 0, %s9, %s7
  loop: start=0, step=1, limit=6
  $region2: #{tpu_custom_call.1} parent=0 // loop_pre_header
    _
  $region3: #{tpu_custom_call.1} parent=0 // loop_header
    %s12 = sphi 0, %s16
    %p13 = scmp.ge.s32.totalorder %s12, 6
    %s19 = sphi 0, %s31
    %s20 = sphi 0, %s27
    %s21 = sphi 0, %s19
    %s22 = sphi 0, %s20
    %s23 = sphi 0, %s21
    %s24 = sphi 0, %s22
    %s34 = sphi 0, %s36
    %s37 = sphi 0, %s34
    %s38 = sphi 0, %s37
    %s54 = sphi 0, %s38
    %s60 = sphi 0, %s62
    %s63 = sphi 0, %s60
    %s64 = sphi 0, %s63
    %s80 = sphi 0, %s64
    %s86 = sphi 0, %s88
    %s89 = sphi 0, %s86
    %s90 = sphi 0, %s89
    %s106 = sphi 0, %s90
    %s112 = sphi 0, %s114
    %s115 = sphi 0, %s112
    %s116 = sphi 0, %s115
    %s132 = sphi 0, %s116
    %s138 = sphi 0, %s140
    %s141 = sphi 0, %s138
    %s142 = sphi 0, %s141
    %s158 = sphi 0, %s142
    %s162 = sphi 0, %s162
    %s164 = sphi 0, %s162
    %s165 = sphi 0, %s164
    %s179 = sphi 0, %s165
    %s185 = sphi 0, %s187
    %s188 = sphi 0, %s185
    %s189 = sphi 0, %s188
    %s205 = sphi 0, %s189
  $region4: #{tpu_custom_call.1} parent=0 // loop_header_branch
    %15 = sbr.rel (%p13) target = $region8
  $region5: #{tpu_custom_call.1} parent=0 // loop_body
    %s17 = ssub.s32 %s12, 1
    %s18 = ssub.s32 %s12, 2
    %s25 = sadd.s32 1, %s20
    %p26 = scmp.ge.s32.totalorder %s25, 2
    %s27 = scalar_select %p26, 0, %s25
    %s28 = sadd.s32 1, %s19
    %s29 = scalar_select %p26, %s28, %s19
    %p30 = scmp.ge.s32.totalorder %s29, 2
    %s31 = scalar_select %p30, 0, %s29
    %s32 = ssub.s32 %s19, %s31
    %p33 = scmp.eq.s32.totalorder %s32, 0
    %s35 = sadd.s32 %s34, 1
    %s36 = scalar_select %p33, %s34, %s35
    %p39 = pneg %p33
    %p40 = scmp.eq.s32.totalorder %s12, 3
    %p41 = por %p39, %p40
    %p42 = scmp.ne.s32.totalorder %s34, %s37
    %p43 = scmp.eq.s32.totalorder %s12, 0
    %p44 = por %p42, %p43
    %p45 = scmp.ne.s32.totalorder %s34, %s37
    %p46 = scmp.eq.s32.totalorder %s17, 3
    %p47 = por %p45, %p46
    %p48 = scmp.ne.s32.totalorder %s37, %s38
    %p49 = scmp.eq.s32.totalorder %s17, 0
    %p50 = por %p48, %p49
    %p51 = scmp.ne.s32.totalorder %s37, %s38
    %p52 = scmp.eq.s32.totalorder %s18, 3
    %p53 = por %p51, %p52
    %p55 = scmp.ne.s32.totalorder %s38, %s54
    %p56 = scmp.eq.s32.totalorder %s18, 0
    %p57 = por %p55, %p56
    %s58 = ssub.s32 %s20, %s27
    %p59 = scmp.eq.s32.totalorder %s58, 0
    %s61 = sadd.s32 %s60, 1
    %s62 = scalar_select %p59, %s60, %s61
    %p65 = pneg %p59
    %p66 = scmp.eq.s32.totalorder %s12, 3
    %p67 = por %p65, %p66
    %p68 = scmp.ne.s32.totalorder %s60, %s63
    %p69 = scmp.eq.s32.totalorder %s12, 0
    %p70 = por %p68, %p69
    %p71 = scmp.ne.s32.totalorder %s60, %s63
    %p72 = scmp.eq.s32.totalorder %s17, 3
    %p73 = por %p71, %p72
    %p74 = scmp.ne.s32.totalorder %s63, %s64
    %p75 = scmp.eq.s32.totalorder %s17, 0
    %p76 = por %p74, %p75
    %p77 = scmp.ne.s32.totalorder %s63, %s64
    %p78 = scmp.eq.s32.totalorder %s18, 3
    %p79 = por %p77, %p78
    %p81 = scmp.ne.s32.totalorder %s64, %s80
    %p82 = scmp.eq.s32.totalorder %s18, 0
    %p83 = por %p81, %p82
    %s84 = ssub.s32 %s20, %s27
    %p85 = scmp.eq.s32.totalorder %s84, 0
    %s87 = sadd.s32 %s86, 1
    %s88 = scalar_select %p85, %s86, %s87
    %p91 = pneg %p85
    %p92 = scmp.eq.s32.totalorder %s12, 3
    %p93 = por %p91, %p92
    %p94 = scmp.ne.s32.totalorder %s86, %s89
    %p95 = scmp.eq.s32.totalorder %s12, 0
    %p96 = por %p94, %p95
    %p97 = scmp.ne.s32.totalorder %s86, %s89
    %p98 = scmp.eq.s32.totalorder %s17, 3
    %p99 = por %p97, %p98
    %p100 = scmp.ne.s32.totalorder %s89, %s90
    %p101 = scmp.eq.s32.totalorder %s17, 0
    %p102 = por %p100, %p101
    %p103 = scmp.ne.s32.totalorder %s89, %s90
    %p104 = scmp.eq.s32.totalorder %s18, 3
    %p105 = por %p103, %p104
    %p107 = scmp.ne.s32.totalorder %s90, %s106
    %p108 = scmp.eq.s32.totalorder %s18, 0
    %p109 = por %p107, %p108
    %s110 = ssub.s32 %s20, %s27
    %p111 = scmp.eq.s32.totalorder %s110, 0
    %s113 = sadd.s32 %s112, 1
    %s114 = scalar_select %p111, %s112, %s113
    %p117 = pneg %p111
    %p118 = scmp.eq.s32.totalorder %s12, 3
    %p119 = por %p117, %p118
    %p120 = scmp.ne.s32.totalorder %s112, %s115
    %p121 = scmp.eq.s32.totalorder %s12, 0
    %p122 = por %p120, %p121
    %p123 = scmp.ne.s32.totalorder %s112, %s115
    %p124 = scmp.eq.s32.totalorder %s17, 3
    %p125 = por %p123, %p124
    %p126 = scmp.ne.s32.totalorder %s115, %s116
    %p127 = scmp.eq.s32.totalorder %s17, 0
    %p128 = por %p126, %p127
    %p129 = scmp.ne.s32.totalorder %s115, %s116
    %p130 = scmp.eq.s32.totalorder %s18, 3
    %p131 = por %p129, %p130
    %p133 = scmp.ne.s32.totalorder %s116, %s132
    %p134 = scmp.eq.s32.totalorder %s18, 0
    %p135 = por %p133, %p134
    %s136 = ssub.s32 %s20, %s27
    %p137 = scmp.eq.s32.totalorder %s136, 0
    %s139 = sadd.s32 %s138, 1
    %s140 = scalar_select %p137, %s138, %s139
    %p143 = pneg %p137
    %p144 = scmp.eq.s32.totalorder %s12, 3
    %p145 = por %p143, %p144
    %p146 = scmp.ne.s32.totalorder %s138, %s141
    %p147 = scmp.eq.s32.totalorder %s12, 0
    %p148 = por %p146, %p147
    %p149 = scmp.ne.s32.totalorder %s138, %s141
    %p150 = scmp.eq.s32.totalorder %s17, 3
    %p151 = por %p149, %p150
    %p152 = scmp.ne.s32.totalorder %s141, %s142
    %p153 = scmp.eq.s32.totalorder %s17, 0
    %p154 = por %p152, %p153
    %p155 = scmp.ne.s32.totalorder %s141, %s142
    %p156 = scmp.eq.s32.totalorder %s18, 3
    %p157 = por %p155, %p156
    %p159 = scmp.ne.s32.totalorder %s142, %s158
    %p160 = scmp.eq.s32.totalorder %s18, 0
    %p161 = por %p159, %p160
    %s163 = sadd.s32 %s162, 1
    %p166 = scmp.eq.s32.totalorder %s12, 3
    %p167 = scmp.ne.s32.totalorder %s162, %s164
    %p168 = scmp.eq.s32.totalorder %s12, 0
    %p169 = por %p167, %p168
    %p170 = scmp.ne.s32.totalorder %s162, %s164
    %p171 = scmp.eq.s32.totalorder %s17, 3
    %p172 = por %p170, %p171
    %p173 = scmp.ne.s32.totalorder %s164, %s165
    %p174 = scmp.eq.s32.totalorder %s17, 0
    %p175 = por %p173, %p174
    %p176 = scmp.ne.s32.totalorder %s164, %s165
    %p177 = scmp.eq.s32.totalorder %s18, 3
    %p178 = por %p176, %p177
    %p180 = scmp.ne.s32.totalorder %s165, %s179
    %p181 = scmp.eq.s32.totalorder %s18, 0
    %p182 = por %p180, %p181
    %s183 = ssub.s32 %s19, %s31
    %p184 = scmp.eq.s32.totalorder %s183, 0
    %s186 = sadd.s32 %s185, 1
    %s187 = scalar_select %p184, %s185, %s186
    %p190 = pneg %p184
    %p191 = scmp.eq.s32.totalorder %s12, 3
    %p192 = por %p190, %p191
    %p193 = scmp.ne.s32.totalorder %s185, %s188
    %p194 = scmp.eq.s32.totalorder %s12, 0
    %p195 = por %p193, %p194
    %p196 = scmp.ne.s32.totalorder %s185, %s188
    %p197 = scmp.eq.s32.totalorder %s17, 3
    %p198 = por %p196, %p197
    %p199 = scmp.ne.s32.totalorder %s188, %s189
    %p200 = scmp.eq.s32.totalorder %s17, 0
    %p201 = por %p199, %p200
    %p202 = scmp.ne.s32.totalorder %s188, %s189
    %p203 = scmp.eq.s32.totalorder %s18, 3
    %p204 = por %p202, %p203
    %p206 = scmp.ne.s32.totalorder %s189, %s205
    %p207 = scmp.eq.s32.totalorder %s18, 0
    %p208 = por %p206, %p207
    %p209 = scmp.le.s32.totalorder 1, %s12
    %p210 = scmp.lt.s32.totalorder %s12, 5
    %p211 = pnand %p209, %p210
    %p212 = pneg %p211
    // Predicated region
    $region9: #{tpu_custom_call.1} parent=5 // pred_check
      _
    $region10: #{tpu_custom_call.1} parent=5 // pred_check_branch
      %214 = sbr.rel (%p211) target = $region12
    $region11: #{tpu_custom_call.1} parent=5 // pred_region
      %s215 = ssub.s32 %s12, 1
      // Predicated region
      $region13: #{tpu_custom_call.1} parent=11 // pred_check
        %p216 = pneg %p175
      $region14: #{tpu_custom_call.1} parent=11 // pred_check_branch
        %218 = sbr.rel (%p216) target = $region16
      $region15: #{tpu_custom_call.1} parent=11 // pred_region
        _
      $region16: #{tpu_custom_call.1} parent=11 // pred_fallthru
        _
    $region12: #{tpu_custom_call.1} parent=5 // pred_fallthru
      _
    %p219 = scmp.lt.s32.totalorder %s12, 4
    // Predicated region
    $region17: #{tpu_custom_call.1} parent=5 // pred_check
      %p220 = pneg %p219
    $region18: #{tpu_custom_call.1} parent=5 // pred_check_branch
      %222 = sbr.rel (%p220) target = $region20
    $region19: #{tpu_custom_call.1} parent=5 // pred_region
      // Predicated region
      $region21: #{tpu_custom_call.1} parent=19 // pred_check
        %p223 = pneg %p44
      $region22: #{tpu_custom_call.1} parent=19 // pred_check_branch
        %225 = sbr.rel (%p223) target = $region24
      $region23: #{tpu_custom_call.1} parent=19 // pred_region
        %p226 = scmp.lt.s32.totalorder %s19, 1
        %s227 = scalar_select %p226, %s19, 1
        %s228 = smul.addr %s227, 32
        %s229 = smul.addr %s228, 8
        %s230 = scalar_lea.vmem %s0, %s229
      $region24: #{tpu_custom_call.1} parent=19 // pred_fallthru
        _
      // Predicated region
      $region25: #{tpu_custom_call.1} parent=19 // pred_check
        %p231 = pneg %p70
      $region26: #{tpu_custom_call.1} parent=19 // pred_check_branch
        %233 = sbr.rel (%p231) target = $region28
      $region27: #{tpu_custom_call.1} parent=19 // pred_region
        %p234 = scmp.lt.s32.totalorder %s20, 1
        %s235 = scalar_select %p234, %s20, 1
        %s236 = smul.addr %s235, 9
        %s237 = smul.addr %s236, 4
        %s238 = scalar_lea.vmem %s1, %s237
      $region28: #{tpu_custom_call.1} parent=19 // pred_fallthru
        _
      // Predicated region
      $region29: #{tpu_custom_call.1} parent=19 // pred_check
        %p239 = pneg %p96
      $region30: #{tpu_custom_call.1} parent=19 // pred_check_branch
        %241 = sbr.rel (%p239) target = $region32
      $region31: #{tpu_custom_call.1} parent=19 // pred_region
        %p242 = scmp.lt.s32.totalorder %s20, 1
        %s243 = scalar_select %p242, %s20, 1
        %s244 = smul.addr %s243, 9
        %s245 = smul.addr %s244, 4
        %s246 = scalar_lea.vmem %s2, %s245
      $region32: #{tpu_custom_call.1} parent=19 // pred_fallthru
        _
      // Predicated region
      $region33: #{tpu_custom_call.1} parent=19 // pred_check
        %p247 = pneg %p122
      $region34: #{tpu_custom_call.1} parent=19 // pred_check_branch
        %249 = sbr.rel (%p247) target = $region36
      $region35: #{tpu_custom_call.1} parent=19 // pred_region
        %p250 = scmp.lt.s32.totalorder %s20, 1
        %s251 = scalar_select %p250, %s20, 1
        %s252 = smul.addr %s251, 8
        %s253 = scalar_lea.vmem %s3, %s252
      $region36: #{tpu_custom_call.1} parent=19 // pred_fallthru
        _
      // Predicated region
      $region37: #{tpu_custom_call.1} parent=19 // pred_check
        %p254 = pneg %p148
      $region38: #{tpu_custom_call.1} parent=19 // pred_check_branch
        %256 = sbr.rel (%p254) target = $region40
      $region39: #{tpu_custom_call.1} parent=19 // pred_region
        %p257 = scmp.lt.s32.totalorder %s20, 1
        %s258 = scalar_select %p257, %s20, 1
        %s259 = smul.addr %s258, 2
        %s260 = scalar_lea.vmem %s4, %s259
      $region40: #{tpu_custom_call.1} parent=19 // pred_fallthru
        _
    $region20: #{tpu_custom_call.1} parent=5 // pred_fallthru
      _
    %p261 = scmp.le.s32.totalorder 1, %s12
    %p262 = scmp.lt.s32.totalorder %s12, 5
    %p263 = pnand %p261, %p262
    %p264 = pneg %p263
    // Predicated region
    $region41: #{tpu_custom_call.1} parent=5 // pred_check
      _
    $region42: #{tpu_custom_call.1} parent=5 // pred_check_branch
      %266 = sbr.rel (%p263) target = $region44
    $region43: #{tpu_custom_call.1} parent=5 // pred_region
      %s267 = ssub.s32 %s12, 1
      %p268 = scmp.lt.s32.totalorder %s21, 1
      %s269 = scalar_select %p268, %s21, 1
      %s270 = smul.addr %s269, 32
      %s271 = smul.addr %s270, 8
      %s272 = scalar_lea.vmem %s0, %s271
      %p273 = pneg %p50
      %p274 = pneg %p47
      %p275 = scmp.lt.s32.totalorder %s22, 1
      %s276 = scalar_select %p275, %s22, 1
      %s277 = smul.addr %s276, 9
      %s278 = smul.addr %s277, 4
      %s279 = scalar_lea.vmem %s1, %s278
      %p280 = pneg %p76
      %p281 = pneg %p73
      %p282 = scmp.lt.s32.totalorder %s22, 1
      %s283 = scalar_select %p282, %s22, 1
      %s284 = smul.addr %s283, 9
      %s285 = smul.addr %s284, 4
      %s286 = scalar_lea.vmem %s2, %s285
      %p287 = pneg %p102
      %p288 = pneg %p99
      %p289 = scmp.lt.s32.totalorder %s22, 1
      %s290 = scalar_select %p289, %s22, 1
      %s291 = smul.addr %s290, 8
      %s292 = scalar_lea.vmem %s3, %s291
      %p293 = pneg %p128
      %p294 = pneg %p125
      %p295 = scmp.lt.s32.totalorder %s22, 1
      %s296 = scalar_select %p295, %s22, 1
      %s297 = smul.addr %s296, 2
      %s298 = scalar_lea.vmem %s4, %s297
      %p299 = pneg %p154
      %p300 = pneg %p151
      %p301 = pneg %p175
      %p302 = pneg %p172
      %p303 = pneg %p201
      %p304 = pneg %p198
      %p305 = scmp.lt.s32.totalorder %s21, 1
      %s306 = scalar_select %p305, %s21, 1
      %s307 = smul.addr %s306, 32
      %s308 = smul.addr %s307, 8
      %s309 = scalar_lea.vmem %s6, %s308
      %p310 = scmp.lt.s32.totalorder %s21, 1
      %s311 = scalar_select %p310, %s21, 1
      %s312 = smul.addr %s311, 32
      %s313 = smul.addr %s312, 8
      %s314 = scalar_lea.vmem %s0, %s313
      %p315 = scmp.lt.s32.totalorder %s22, 1
      %s316 = scalar_select %p315, %s22, 1
      %s317 = smul.addr %s316, 9
      %s318 = smul.addr %s317, 4
      %s319 = scalar_lea.vmem %s1, %s318
      %p320 = scmp.lt.s32.totalorder %s22, 1
      %s321 = scalar_select %p320, %s22, 1
      %s322 = smul.addr %s321, 9
      %s323 = smul.addr %s322, 4
      %s324 = scalar_lea.vmem %s2, %s323
      %p325 = scmp.lt.s32.totalorder %s22, 1
      %s326 = scalar_select %p325, %s22, 1
      %s327 = smul.addr %s326, 8
      %s328 = scalar_lea.vmem %s3, %s327
      %p329 = scmp.lt.s32.totalorder %s22, 1
      %s330 = scalar_select %p329, %s22, 1
      %s331 = smul.addr %s330, 2
      %s332 = scalar_lea.vmem %s4, %s331
      %p333 = scmp.lt.s32.totalorder %s21, 1
      %s334 = scalar_select %p333, %s21, 1
      %s335 = smul.addr %s334, 32
      %s336 = smul.addr %s335, 8
      %s337 = scalar_lea.vmem %s6, %s336
      %p339 = scmp.eq.s32.totalorder %s22, 0
      // Predicated region
      $region45: #{tpu_custom_call.1} parent=43 // pred_check
        %p340 = pneg %p339
      $region46: #{tpu_custom_call.1} parent=43 // pred_check_branch
        %342 = sbr.rel (%p340) target = $region48
      $region47: #{tpu_custom_call.1} parent=43 // pred_region
        %vm343 = vcmask 64512
        %344 = vst.msk [vmem:[#allocation2] sm:$0xff] %vm343, 0.0
        %345 = vst.msk [vmem:[#allocation2 + $0x8] sm:$0xff] %vm343, 0.0
        %vm346 = vcmask 58368
        %347 = vst.msk [vmem:[#allocation2 + $0x10] sm:$0x3] %vm346, 0.0
        %s348 = scalar_lea.vmem [#allocation2], 408
        %349 = vst.msk [vmem:[%s348] sm:$0xff] %vm343, 0.0
        %350 = vst.msk [vmem:[%s348 + $0x8] sm:$0xff] %vm343, 0.0
        %351 = vst.msk [vmem:[%s348 + $0x10] sm:$0x3] %vm346, 0.0
        %vm352 = vcmask 57344
        %353 = vst.msk [vmem:[#allocation2] sm:$0x1] %vm352, 0.0
        %354 = vst.msk [vmem:[#allocation2 + $0x18] sm:$0x1] %vm352, 0.0
        %355 = vst.msk [vmem:[#allocation2 + $0x30] sm:$0x1] %vm352, 0.0
        %356 = vst.msk [vmem:[#allocation2 + $0x48] sm:$0x1] %vm352, 0.0
        %357 = vst.msk [vmem:[#allocation2 + $0x60] sm:$0x1] %vm352, 0.0
        %358 = vst.msk [vmem:[#allocation2 + $0x78] sm:$0x1] %vm352, 0.0
        %359 = vst.msk [vmem:[#allocation2 + $0x90] sm:$0x1] %vm352, 0.0
        %360 = vst.msk [vmem:[#allocation2 + $0xa8] sm:$0x1] %vm352, 0.0
        %361 = vst.msk [vmem:[#allocation2 + $0xc0] sm:$0x1] %vm352, 0.0
        %362 = vst.msk [vmem:[#allocation2 + $0xd8] sm:$0x1] %vm352, 0.0
        %363 = vst.msk [vmem:[#allocation2 + $0xf0] sm:$0x1] %vm352, 0.0
        %364 = vst.msk [vmem:[#allocation2 + $0x108] sm:$0x1] %vm352, 0.0
        %365 = vst.msk [vmem:[#allocation2 + $0x120] sm:$0x1] %vm352, 0.0
        %366 = vst.msk [vmem:[#allocation2 + $0x138] sm:$0x1] %vm352, 0.0
        %367 = vst.msk [vmem:[#allocation2 + $0x150] sm:$0x1] %vm352, 0.0
        %368 = vst.msk [vmem:[#allocation2 + $0x168] sm:$0x1] %vm352, 0.0
        %369 = vst.msk [vmem:[#allocation2 + $0x180] sm:$0x1] %vm352, 0.0
        %370 = vst.msk [vmem:[#allocation2 + $0x198] sm:$0x1] %vm352, 0.0
        %371 = vst.msk [vmem:[#allocation2 + $0x11] sm:$0x1] %vm352, 0.0
        %372 = vst.msk [vmem:[#allocation2 + $0x29] sm:$0x1] %vm352, 0.0
        %373 = vst.msk [vmem:[#allocation2 + $0x41] sm:$0x1] %vm352, 0.0
        %374 = vst.msk [vmem:[#allocation2 + $0x59] sm:$0x1] %vm352, 0.0
        %375 = vst.msk [vmem:[#allocation2 + $0x71] sm:$0x1] %vm352, 0.0
        %376 = vst.msk [vmem:[#allocation2 + $0x89] sm:$0x1] %vm352, 0.0
        %377 = vst.msk [vmem:[#allocation2 + $0xa1] sm:$0x1] %vm352, 0.0
        %378 = vst.msk [vmem:[#allocation2 + $0xb9] sm:$0x1] %vm352, 0.0
        %379 = vst.msk [vmem:[#allocation2 + $0xd1] sm:$0x1] %vm352, 0.0
        %380 = vst.msk [vmem:[#allocation2 + $0xe9] sm:$0x1] %vm352, 0.0
        %381 = vst.msk [vmem:[#allocation2 + $0x101] sm:$0x1] %vm352, 0.0
        %382 = vst.msk [vmem:[#allocation2 + $0x119] sm:$0x1] %vm352, 0.0
        %383 = vst.msk [vmem:[#allocation2 + $0x131] sm:$0x1] %vm352, 0.0
        %384 = vst.msk [vmem:[#allocation2 + $0x149] sm:$0x1] %vm352, 0.0
        %385 = vst.msk [vmem:[#allocation2 + $0x161] sm:$0x1] %vm352, 0.0
        %386 = vst.msk [vmem:[#allocation2 + $0x179] sm:$0x1] %vm352, 0.0
        %387 = vst.msk [vmem:[#allocation2 + $0x191] sm:$0x1] %vm352, 0.0
        %388 = vst.msk [vmem:[#allocation2 + $0x1a9] sm:$0x1] %vm352, 0.0
        %389 = vst.msk [vmem:[#allocation3] sm:$0xff] %vm343, 0.0
        %390 = vst.msk [vmem:[#allocation3 + $0x8] sm:$0xff] %vm343, 0.0
        %391 = vst.msk [vmem:[#allocation3 + $0x10] sm:$0x3] %vm346, 0.0
        %s392 = scalar_lea.vmem [#allocation3], 408
        %393 = vst.msk [vmem:[%s392] sm:$0xff] %vm343, 0.0
        %394 = vst.msk [vmem:[%s392 + $0x8] sm:$0xff] %vm343, 0.0
        %395 = vst.msk [vmem:[%s392 + $0x10] sm:$0x3] %vm346, 0.0
        %396 = vst.msk [vmem:[#allocation3] sm:$0x1] %vm352, 0.0
        %397 = vst.msk [vmem:[#allocation3 + $0x18] sm:$0x1] %vm352, 0.0
        %398 = vst.msk [vmem:[#allocation3 + $0x30] sm:$0x1] %vm352, 0.0
        %399 = vst.msk [vmem:[#allocation3 + $0x48] sm:$0x1] %vm352, 0.0
        %400 = vst.msk [vmem:[#allocation3 + $0x60] sm:$0x1] %vm352, 0.0
        %401 = vst.msk [vmem:[#allocation3 + $0x78] sm:$0x1] %vm352, 0.0
        %402 = vst.msk [vmem:[#allocation3 + $0x90] sm:$0x1] %vm352, 0.0
        %403 = vst.msk [vmem:[#allocation3 + $0xa8] sm:$0x1] %vm352, 0.0
        %404 = vst.msk [vmem:[#allocation3 + $0xc0] sm:$0x1] %vm352, 0.0
        %405 = vst.msk [vmem:[#allocation3 + $0xd8] sm:$0x1] %vm352, 0.0
        %406 = vst.msk [vmem:[#allocation3 + $0xf0] sm:$0x1] %vm352, 0.0
        %407 = vst.msk [vmem:[#allocation3 + $0x108] sm:$0x1] %vm352, 0.0
        %408 = vst.msk [vmem:[#allocation3 + $0x120] sm:$0x1] %vm352, 0.0
        %409 = vst.msk [vmem:[#allocation3 + $0x138] sm:$0x1] %vm352, 0.0
        %410 = vst.msk [vmem:[#allocation3 + $0x150] sm:$0x1] %vm352, 0.0
        %411 = vst.msk [vmem:[#allocation3 + $0x168] sm:$0x1] %vm352, 0.0
        %412 = vst.msk [vmem:[#allocation3 + $0x180] sm:$0x1] %vm352, 0.0
        %413 = vst.msk [vmem:[#allocation3 + $0x198] sm:$0x1] %vm352, 0.0
        %414 = vst.msk [vmem:[#allocation3 + $0x11] sm:$0x1] %vm352, 0.0
        %415 = vst.msk [vmem:[#allocation3 + $0x29] sm:$0x1] %vm352, 0.0
        %416 = vst.msk [vmem:[#allocation3 + $0x41] sm:$0x1] %vm352, 0.0
        %417 = vst.msk [vmem:[#allocation3 + $0x59] sm:$0x1] %vm352, 0.0
        %418 = vst.msk [vmem:[#allocation3 + $0x71] sm:$0x1] %vm352, 0.0
        %419 = vst.msk [vmem:[#allocation3 + $0x89] sm:$0x1] %vm352, 0.0
        %420 = vst.msk [vmem:[#allocation3 + $0xa1] sm:$0x1] %vm352, 0.0
        %421 = vst.msk [vmem:[#allocation3 + $0xb9] sm:$0x1] %vm352, 0.0
        %422 = vst.msk [vmem:[#allocation3 + $0xd1] sm:$0x1] %vm352, 0.0
        %423 = vst.msk [vmem:[#allocation3 + $0xe9] sm:$0x1] %vm352, 0.0
        %424 = vst.msk [vmem:[#allocation3 + $0x101] sm:$0x1] %vm352, 0.0
        %425 = vst.msk [vmem:[#allocation3 + $0x119] sm:$0x1] %vm352, 0.0
        %426 = vst.msk [vmem:[#allocation3 + $0x131] sm:$0x1] %vm352, 0.0
        %427 = vst.msk [vmem:[#allocation3 + $0x149] sm:$0x1] %vm352, 0.0
        %428 = vst.msk [vmem:[#allocation3 + $0x161] sm:$0x1] %vm352, 0.0
        %429 = vst.msk [vmem:[#allocation3 + $0x179] sm:$0x1] %vm352, 0.0
        %430 = vst.msk [vmem:[#allocation3 + $0x191] sm:$0x1] %vm352, 0.0
        %431 = vst.msk [vmem:[#allocation3 + $0x1a9] sm:$0x1] %vm352, 0.0
        %v432 = vld [vmem:[%s314] sm:$0xff]
        %v433 = vld [vmem:[%s314 + $0x8] sm:$0xff]
        %v434 = vld [vmem:[%s314 + $0x10] sm:$0xff]
        %v435 = vld [vmem:[%s314 + $0x18] sm:$0xff]
        %v436 = vld [vmem:[%s314 + $0x20] sm:$0xff]
        %v437 = vld [vmem:[%s314 + $0x28] sm:$0xff]
        %v438 = vld [vmem:[%s314 + $0x30] sm:$0xff]
        %v439 = vld [vmem:[%s314 + $0x38] sm:$0xff]
        %v440 = vld [vmem:[%s314 + $0x40] sm:$0xff]
        %v441 = vld [vmem:[%s314 + $0x48] sm:$0xff]
        %v442 = vld [vmem:[%s314 + $0x50] sm:$0xff]
        %v443 = vld [vmem:[%s314 + $0x58] sm:$0xff]
        %v444 = vld [vmem:[%s314 + $0x60] sm:$0xff]
        %v445 = vld [vmem:[%s314 + $0x68] sm:$0xff]
        %v446 = vld [vmem:[%s314 + $0x70] sm:$0xff]
        %v447 = vld [vmem:[%s314 + $0x78] sm:$0xff]
        %v448 = vld [vmem:[%s314 + $0x80] sm:$0xff]
        %v449 = vld [vmem:[%s314 + $0x88] sm:$0xff]
        %v450 = vld [vmem:[%s314 + $0x90] sm:$0xff]
        %v451 = vld [vmem:[%s314 + $0x98] sm:$0xff]
        %v452 = vld [vmem:[%s314 + $0xa0] sm:$0xff]
        %v453 = vld [vmem:[%s314 + $0xa8] sm:$0xff]
        %v454 = vld [vmem:[%s314 + $0xb0] sm:$0xff]
        %v455 = vld [vmem:[%s314 + $0xb8] sm:$0xff]
        %v456 = vld [vmem:[%s314 + $0xc0] sm:$0xff]
        %v457 = vld [vmem:[%s314 + $0xc8] sm:$0xff]
        %v458 = vld [vmem:[%s314 + $0xd0] sm:$0xff]
        %v459 = vld [vmem:[%s314 + $0xd8] sm:$0xff]
        %v460 = vld [vmem:[%s314 + $0xe0] sm:$0xff]
        %v461 = vld [vmem:[%s314 + $0xe8] sm:$0xff]
        %v462 = vld [vmem:[%s314 + $0xf0] sm:$0xff]
        %v463 = vld [vmem:[%s314 + $0xf8] sm:$0xff]
        %s464 = scalar_lea.vmem [#allocation2], 24
        %465 = vst.msk [vmem:[%s464 + $0x1] sm:$0xff] %vm343, %v432
        %466 = vst.msk [vmem:[%s464 + $0x9] sm:$0xff] %vm343, %v433
        %467 = vst.msk [vmem:[%s464 + $0x19] sm:$0xff] %vm343, %v434
        %468 = vst.msk [vmem:[%s464 + $0x21] sm:$0xff] %vm343, %v435
        %469 = vst.msk [vmem:[%s464 + $0x31] sm:$0xff] %vm343, %v436
        %470 = vst.msk [vmem:[%s464 + $0x39] sm:$0xff] %vm343, %v437
        %471 = vst.msk [vmem:[%s464 + $0x49] sm:$0xff] %vm343, %v438
        %472 = vst.msk [vmem:[%s464 + $0x51] sm:$0xff] %vm343, %v439
        %473 = vst.msk [vmem:[%s464 + $0x61] sm:$0xff] %vm343, %v440
        %474 = vst.msk [vmem:[%s464 + $0x69] sm:$0xff] %vm343, %v441
        %475 = vst.msk [vmem:[%s464 + $0x79] sm:$0xff] %vm343, %v442
        %476 = vst.msk [vmem:[%s464 + $0x81] sm:$0xff] %vm343, %v443
        %477 = vst.msk [vmem:[%s464 + $0x91] sm:$0xff] %vm343, %v444
        %478 = vst.msk [vmem:[%s464 + $0x99] sm:$0xff] %vm343, %v445
        %479 = vst.msk [vmem:[%s464 + $0xa9] sm:$0xff] %vm343, %v446
        %480 = vst.msk [vmem:[%s464 + $0xb1] sm:$0xff] %vm343, %v447
        %481 = vst.msk [vmem:[%s464 + $0xc1] sm:$0xff] %vm343, %v448
        %482 = vst.msk [vmem:[%s464 + $0xc9] sm:$0xff] %vm343, %v449
        %483 = vst.msk [vmem:[%s464 + $0xd9] sm:$0xff] %vm343, %v450
        %484 = vst.msk [vmem:[%s464 + $0xe1] sm:$0xff] %vm343, %v451
        %485 = vst.msk [vmem:[%s464 + $0xf1] sm:$0xff] %vm343, %v452
        %486 = vst.msk [vmem:[%s464 + $0xf9] sm:$0xff] %vm343, %v453
        %487 = vst.msk [vmem:[%s464 + $0x109] sm:$0xff] %vm343, %v454
        %488 = vst.msk [vmem:[%s464 + $0x111] sm:$0xff] %vm343, %v455
        %489 = vst.msk [vmem:[%s464 + $0x121] sm:$0xff] %vm343, %v456
        %490 = vst.msk [vmem:[%s464 + $0x129] sm:$0xff] %vm343, %v457
        %491 = vst.msk [vmem:[%s464 + $0x139] sm:$0xff] %vm343, %v458
        %492 = vst.msk [vmem:[%s464 + $0x141] sm:$0xff] %vm343, %v459
        %493 = vst.msk [vmem:[%s464 + $0x151] sm:$0xff] %vm343, %v460
        %494 = vst.msk [vmem:[%s464 + $0x159] sm:$0xff] %vm343, %v461
        %495 = vst.msk [vmem:[%s464 + $0x169] sm:$0xff] %vm343, %v462
        %496 = vst.msk [vmem:[%s464 + $0x171] sm:$0xff] %vm343, %v463
      $region48: #{tpu_custom_call.1} parent=43 // pred_fallthru
        _
      %v497 = vld [vmem:[#allocation2] sm:$0xff]
      %v498 = vld [vmem:[#allocation2 + $0x8] sm:$0xff]
      %v499 = vld [vmem:[#allocation2 + $0x18] sm:$0xff]
      %v500 = vld [vmem:[#allocation2 + $0x20] sm:$0xff]
      %v501 = vld [vmem:[#allocation2 + $0x30] sm:$0xff]
      %v502 = vld [vmem:[#allocation2 + $0x38] sm:$0xff]
      %v503 = vld [vmem:[#allocation2 + $0x48] sm:$0xff]
      %v504 = vld [vmem:[#allocation2 + $0x50] sm:$0xff]
      %v505 = vld [vmem:[#allocation2 + $0x60] sm:$0xff]
      %v506 = vld [vmem:[#allocation2 + $0x68] sm:$0xff]
      %v507 = vld [vmem:[#allocation2 + $0x78] sm:$0xff]
      %v508 = vld [vmem:[#allocation2 + $0x80] sm:$0xff]
      %v509 = vld [vmem:[#allocation2 + $0x90] sm:$0xff]
      %v510 = vld [vmem:[#allocation2 + $0x98] sm:$0xff]
      %v511 = vld [vmem:[#allocation2 + $0xa8] sm:$0xff]
      %v512 = vld [vmem:[#allocation2 + $0xb0] sm:$0xff]
      %v513 = vld [vmem:[#allocation2 + $0xc0] sm:$0xff]
      %v514 = vld [vmem:[#allocation2 + $0xc8] sm:$0xff]
      %v515 = vld [vmem:[#allocation2 + $0xd8] sm:$0xff]
      %v516 = vld [vmem:[#allocation2 + $0xe0] sm:$0xff]
      %v517 = vld [vmem:[#allocation2 + $0xf0] sm:$0xff]
      %v518 = vld [vmem:[#allocation2 + $0xf8] sm:$0xff]
      %v519 = vld [vmem:[#allocation2 + $0x108] sm:$0xff]
      %v520 = vld [vmem:[#allocation2 + $0x110] sm:$0xff]
      %v521 = vld [vmem:[#allocation2 + $0x120] sm:$0xff]
      %v522 = vld [vmem:[#allocation2 + $0x128] sm:$0xff]
      %v523 = vld [vmem:[#allocation2 + $0x138] sm:$0xff]
      %v524 = vld [vmem:[#allocation2 + $0x140] sm:$0xff]
      %v525 = vld [vmem:[#allocation2 + $0x150] sm:$0xff]
      %v526 = vld [vmem:[#allocation2 + $0x158] sm:$0xff]
      %v527 = vld [vmem:[#allocation2 + $0x168] sm:$0xff]
      %v528 = vld [vmem:[#allocation2 + $0x170] sm:$0xff]
      %v529 = vpack.c.bf16 %v498, %v497
      %v530 = vpack.c.bf16 %v500, %v499
      %v531 = vpack.c.bf16 %v502, %v501
      %v532 = vpack.c.bf16 %v504, %v503
      %v533 = vpack.c.bf16 %v506, %v505
      %v534 = vpack.c.bf16 %v508, %v507
      %v535 = vpack.c.bf16 %v510, %v509
      %v536 = vpack.c.bf16 %v512, %v511
      %v537 = vpack.c.bf16 %v514, %v513
      %v538 = vpack.c.bf16 %v516, %v515
      %v539 = vpack.c.bf16 %v518, %v517
      %v540 = vpack.c.bf16 %v520, %v519
      %v541 = vpack.c.bf16 %v522, %v521
      %v542 = vpack.c.bf16 %v524, %v523
      %v543 = vpack.c.bf16 %v526, %v525
      %v544 = vpack.c.bf16 %v528, %v527
      %v545 = vld [vmem:[%s319] sm:$0xf]
      %v546 = vld [vmem:[#allocation2 + $0x1] sm:$0xff]
      %v547 = vld [vmem:[#allocation2 + $0x9] sm:$0xff]
      %v548 = vld [vmem:[#allocation2 + $0x19] sm:$0xff]
      %v549 = vld [vmem:[#allocation2 + $0x21] sm:$0xff]
      %v550 = vld [vmem:[#allocation2 + $0x31] sm:$0xff]
      %v551 = vld [vmem:[#allocation2 + $0x39] sm:$0xff]
      %v552 = vld [vmem:[#allocation2 + $0x49] sm:$0xff]
      %v553 = vld [vmem:[#allocation2 + $0x51] sm:$0xff]
      %v554 = vld [vmem:[#allocation2 + $0x61] sm:$0xff]
      %v555 = vld [vmem:[#allocation2 + $0x69] sm:$0xff]
      %v556 = vld [vmem:[#allocation2 + $0x79] sm:$0xff]
      %v557 = vld [vmem:[#allocation2 + $0x81] sm:$0xff]
      %v558 = vld [vmem:[#allocation2 + $0x91] sm:$0xff]
      %v559 = vld [vmem:[#allocation2 + $0x99] sm:$0xff]
      %v560 = vld [vmem:[#allocation2 + $0xa9] sm:$0xff]
      %v561 = vld [vmem:[#allocation2 + $0xb1] sm:$0xff]
      %v562 = vld [vmem:[#allocation2 + $0xc1] sm:$0xff]
      %v563 = vld [vmem:[#allocation2 + $0xc9] sm:$0xff]
      %v564 = vld [vmem:[#allocation2 + $0xd9] sm:$0xff]
      %v565 = vld [vmem:[#allocation2 + $0xe1] sm:$0xff]
      %v566 = vld [vmem:[#allocation2 + $0xf1] sm:$0xff]
      %v567 = vld [vmem:[#allocation2 + $0xf9] sm:$0xff]
      %v568 = vld [vmem:[#allocation2 + $0x109] sm:$0xff]
      %v569 = vld [vmem:[#allocation2 + $0x111] sm:$0xff]
      %v570 = vld [vmem:[#allocation2 + $0x121] sm:$0xff]
      %v571 = vld [vmem:[#allocation2 + $0x129] sm:$0xff]
      %v572 = vld [vmem:[#allocation2 + $0x139] sm:$0xff]
      %v573 = vld [vmem:[#allocation2 + $0x141] sm:$0xff]
      %v574 = vld [vmem:[#allocation2 + $0x151] sm:$0xff]
      %v575 = vld [vmem:[#allocation2 + $0x159] sm:$0xff]
      %v576 = vld [vmem:[#allocation2 + $0x169] sm:$0xff]
      %v577 = vld [vmem:[#allocation2 + $0x171] sm:$0xff]
      %v578 = vpack.c.bf16 %v547, %v546
      %v579 = vpack.c.bf16 %v549, %v548
      %v580 = vpack.c.bf16 %v551, %v550
      %v581 = vpack.c.bf16 %v553, %v552
      %v582 = vpack.c.bf16 %v555, %v554
      %v583 = vpack.c.bf16 %v557, %v556
      %v584 = vpack.c.bf16 %v559, %v558
      %v585 = vpack.c.bf16 %v561, %v560
      %v586 = vpack.c.bf16 %v563, %v562
      %v587 = vpack.c.bf16 %v565, %v564
      %v588 = vpack.c.bf16 %v567, %v566
      %v589 = vpack.c.bf16 %v569, %v568
      %v590 = vpack.c.bf16 %v571, %v570
      %v591 = vpack.c.bf16 %v573, %v572
      %v592 = vpack.c.bf16 %v575, %v574
      %v593 = vpack.c.bf16 %v577, %v576
      %s594 = scalar_lea.vmem %s319, 4
      %v595 = vld [vmem:[%s594] sm:$0xf]
      %vm596 = vcmask 64512
      %v598 = vsel %vm596, %v578, 0
      %v601 = vsel %vm596, %v579, 0
      %v604 = vsel %vm596, %v580, 0
      %v607 = vsel %vm596, %v581, 0
      %v610 = vsel %vm596, %v582, 0
      %v613 = vsel %vm596, %v583, 0
      %v616 = vsel %vm596, %v584, 0
      %v619 = vsel %vm596, %v585, 0
      %v622 = vsel %vm596, %v586, 0
      %v625 = vsel %vm596, %v587, 0
      %v628 = vsel %vm596, %v588, 0
      %v631 = vsel %vm596, %v589, 0
      %v634 = vsel %vm596, %v590, 0
      %v637 = vsel %vm596, %v591, 0
      %v640 = vsel %vm596, %v592, 0
      %v643 = vsel %vm596, %v593, 0
      %vm645 = vcmask 1043456
      %v647 = vsel %vm645, %v595, 0
      %649 = vmatprep.subr.bf16.mxu0 0
      %650 = vmatpush1.bf16.msra.mxu0 0
      %651 = vmatprep.subr.bf16.mxu0 0
      %652 = vmatpush1.bf16.msra.mxu0 0
      %653 = vmatprep.subr.bf16.mxu0 0
      %654 = vmatpush1.bf16.msra.mxu0 0
      %655 = vmatprep.subr.bf16.mxu0 0
      %656 = vmatpush1.bf16.msra.mxu0 0
      %657 = vmatprep.subr.bf16.mxu0 0
      %658 = vmatpush1.bf16.msra.mxu0 0
      %659 = vmatprep.subr.bf16.mxu0 0
      %660 = vmatpush1.bf16.msra.mxu0 0
      %661 = vmatprep.subr.bf16.mxu0 0
      %662 = vmatpush1.bf16.msra.mxu0 0
      %663 = vmatprep.subr.bf16.mxu0 0
      %664 = vmatpush1.bf16.msra.mxu0 %v647
      %665 = vmatprep.subr.bf16.mxu0 0
      %666 = vmatpush2.bf16.msra.mxu0 0
      %667 = vmatprep.subr.bf16.mxu0 0
      %668 = vmatpush2.bf16.msra.mxu0 0
      %669 = vmatprep.subr.bf16.mxu0 0
      %670 = vmatpush2.bf16.msra.mxu0 0
      %671 = vmatprep.subr.bf16.mxu0 0
      %672 = vmatpush2.bf16.msra.mxu0 0
      %673 = vmatprep.subr.bf16.mxu0 0
      %674 = vmatpush2.bf16.msra.mxu0 0
      %675 = vmatprep.subr.bf16.mxu0 0
      %676 = vmatpush2.bf16.msra.mxu0 0
      %677 = vmatprep.subr.bf16.mxu0 0
      %678 = vmatpush2.bf16.msra.mxu0 0
      %679 = vmatprep.subr.bf16.mxu0 0
      %680 = vmatpush2.bf16.msra.mxu0 0
      %681 = vmatprep.mubr.bf16.mxu0 0
      %682 = vmatmul.mubr.bf16.gmra.mxu0 %v598
      %v683 = vpop.f32.mrf.mxu0
      %v684 = vadd.f32 0.0, %v683
      %v685 = vpop.f32.mrf.mxu0
      %v686 = vpop.f32.mrf.mxu0
      %v687 = vadd.f32 0.0, %v686
      %v688 = vpop.f32.mrf.mxu0
      %689 = vmatprep.mubr.bf16.mxu0 0
      %690 = vmatmul.mubr.bf16.gmra.mxu0 %v601
      %v691 = vpop.f32.mrf.mxu0
      %v692 = vadd.f32 0.0, %v691
      %v693 = vpop.f32.mrf.mxu0
      %v694 = vpop.f32.mrf.mxu0
      %v695 = vadd.f32 0.0, %v694
      %v696 = vpop.f32.mrf.mxu0
      %697 = vmatprep.mubr.bf16.mxu0 0
      %698 = vmatmul.mubr.bf16.gmra.mxu0 %v604
      %v699 = vpop.f32.mrf.mxu0
      %v700 = vadd.f32 0.0, %v699
      %v701 = vpop.f32.mrf.mxu0
      %v702 = vpop.f32.mrf.mxu0
      %v703 = vadd.f32 0.0, %v702
      %v704 = vpop.f32.mrf.mxu0
      %705 = vmatprep.mubr.bf16.mxu0 0
      %706 = vmatmul.mubr.bf16.gmra.mxu0 %v607
      %v707 = vpop.f32.mrf.mxu0
      %v708 = vadd.f32 0.0, %v707
      %v709 = vpop.f32.mrf.mxu0
      %v710 = vpop.f32.mrf.mxu0
      %v711 = vadd.f32 0.0, %v710
      %v712 = vpop.f32.mrf.mxu0
      %713 = vmatprep.mubr.bf16.mxu0 0
      %714 = vmatmul.mubr.bf16.gmra.mxu0 %v610
      %v715 = vpop.f32.mrf.mxu0
      %v716 = vadd.f32 0.0, %v715
      %v717 = vpop.f32.mrf.mxu0
      %v718 = vpop.f32.mrf.mxu0
      %v719 = vadd.f32 0.0, %v718
      %v720 = vpop.f32.mrf.mxu0
      %721 = vmatprep.mubr.bf16.mxu0 0
      %722 = vmatmul.mubr.bf16.gmra.mxu0 %v613
      %v723 = vpop.f32.mrf.mxu0
      %v724 = vadd.f32 0.0, %v723
      %v725 = vpop.f32.mrf.mxu0
      %v726 = vpop.f32.mrf.mxu0
      %v727 = vadd.f32 0.0, %v726
      %v728 = vpop.f32.mrf.mxu0
      %729 = vmatprep.mubr.bf16.mxu0 0
      %730 = vmatmul.mubr.bf16.gmra.mxu0 %v616
      %v731 = vpop.f32.mrf.mxu0
      %v732 = vadd.f32 0.0, %v731
      %v733 = vpop.f32.mrf.mxu0
      %v734 = vpop.f32.mrf.mxu0
      %v735 = vadd.f32 0.0, %v734
      %v736 = vpop.f32.mrf.mxu0
      %737 = vmatprep.mubr.bf16.mxu0 0
      %738 = vmatmul.mubr.bf16.gmra.mxu0 %v619
      %v739 = vpop.f32.mrf.mxu0
      %v740 = vadd.f32 0.0, %v739
      %v741 = vpop.f32.mrf.mxu0
      %v742 = vpop.f32.mrf.mxu0
      %v743 = vadd.f32 0.0, %v742
      %v744 = vpop.f32.mrf.mxu0
      %745 = vmatprep.mubr.bf16.mxu0 0
      %746 = vmatmul.mubr.bf16.gmra.mxu0 %v622
      %v747 = vpop.f32.mrf.mxu0
      %v748 = vadd.f32 0.0, %v747
      %v749 = vpop.f32.mrf.mxu0
      %v750 = vpop.f32.mrf.mxu0
      %v751 = vadd.f32 0.0, %v750
      %v752 = vpop.f32.mrf.mxu0
      %753 = vmatprep.mubr.bf16.mxu0 0
      %754 = vmatmul.mubr.bf16.gmra.mxu0 %v625
      %v755 = vpop.f32.mrf.mxu0
      %v756 = vadd.f32 0.0, %v755
      %v757 = vpop.f32.mrf.mxu0
      %v758 = vpop.f32.mrf.mxu0
      %v759 = vadd.f32 0.0, %v758
      %v760 = vpop.f32.mrf.mxu0
      %761 = vmatprep.mubr.bf16.mxu0 0
      %762 = vmatmul.mubr.bf16.gmra.mxu0 %v628
      %v763 = vpop.f32.mrf.mxu0
      %v764 = vadd.f32 0.0, %v763
      %v765 = vpop.f32.mrf.mxu0
      %v766 = vpop.f32.mrf.mxu0
      %v767 = vadd.f32 0.0, %v766
      %v768 = vpop.f32.mrf.mxu0
      %769 = vmatprep.mubr.bf16.mxu0 0
      %770 = vmatmul.mubr.bf16.gmra.mxu0 %v631
      %v771 = vpop.f32.mrf.mxu0
      %v772 = vadd.f32 0.0, %v771
      %v773 = vpop.f32.mrf.mxu0
      %v774 = vpop.f32.mrf.mxu0
      %v775 = vadd.f32 0.0, %v774
      %v776 = vpop.f32.mrf.mxu0
      %777 = vmatprep.mubr.bf16.mxu0 0
      %778 = vmatmul.mubr.bf16.gmra.mxu0 %v634
      %v779 = vpop.f32.mrf.mxu0
      %v780 = vadd.f32 0.0, %v779
      %v781 = vpop.f32.mrf.mxu0
      %v782 = vpop.f32.mrf.mxu0
      %v783 = vadd.f32 0.0, %v782
      %v784 = vpop.f32.mrf.mxu0
      %785 = vmatprep.mubr.bf16.mxu0 0
      %786 = vmatmul.mubr.bf16.gmra.mxu0 %v637
      %v787 = vpop.f32.mrf.mxu0
      %v788 = vadd.f32 0.0, %v787
      %v789 = vpop.f32.mrf.mxu0
      %v790 = vpop.f32.mrf.mxu0
      %v791 = vadd.f32 0.0, %v790
      %v792 = vpop.f32.mrf.mxu0
      %793 = vmatprep.mubr.bf16.mxu0 0
      %794 = vmatmul.mubr.bf16.gmra.mxu0 %v640
      %v795 = vpop.f32.mrf.mxu0
      %v796 = vadd.f32 0.0, %v795
      %v797 = vpop.f32.mrf.mxu0
      %v798 = vpop.f32.mrf.mxu0
      %v799 = vadd.f32 0.0, %v798
      %v800 = vpop.f32.mrf.mxu0
      %801 = vmatprep.mubr.bf16.mxu0 0
      %802 = vmatmul.mubr.bf16.gmra.mxu0 %v643
      %v803 = vpop.f32.mrf.mxu0
      %v804 = vadd.f32 0.0, %v803
      %v805 = vpop.f32.mrf.mxu0
      %v806 = vpop.f32.mrf.mxu0
      %v807 = vadd.f32 0.0, %v806
      %v808 = vpop.f32.mrf.mxu0
      %809 = vdwg.mxu0
      %v811 = vsel %vm596, %v529, 0
      %v814 = vsel %vm596, %v530, 0
      %v817 = vsel %vm596, %v531, 0
      %v820 = vsel %vm596, %v532, 0
      %v823 = vsel %vm596, %v533, 0
      %v826 = vsel %vm596, %v534, 0
      %v829 = vsel %vm596, %v535, 0
      %v832 = vsel %vm596, %v536, 0
      %v835 = vsel %vm596, %v537, 0
      %v838 = vsel %vm596, %v538, 0
      %v841 = vsel %vm596, %v539, 0
      %v844 = vsel %vm596, %v540, 0
      %v847 = vsel %vm596, %v541, 0
      %v850 = vsel %vm596, %v542, 0
      %v853 = vsel %vm596, %v543, 0
      %v856 = vsel %vm596, %v544, 0
      %v859 = vsel %vm645, %v545, 0
      %861 = vmatprep.subr.bf16.mxu0 0
      %862 = vmatpush1.bf16.msra.mxu0 0
      %863 = vmatprep.subr.bf16.mxu0 0
      %864 = vmatpush1.bf16.msra.mxu0 0
      %865 = vmatprep.subr.bf16.mxu0 0
      %866 = vmatpush1.bf16.msra.mxu0 0
      %867 = vmatprep.subr.bf16.mxu0 0
      %868 = vmatpush1.bf16.msra.mxu0 0
      %869 = vmatprep.subr.bf16.mxu0 0
      %870 = vmatpush1.bf16.msra.mxu0 0
      %871 = vmatprep.subr.bf16.mxu0 0
      %872 = vmatpush1.bf16.msra.mxu0 0
      %873 = vmatprep.subr.bf16.mxu0 0
      %874 = vmatpush1.bf16.msra.mxu0 0
      %875 = vmatprep.subr.bf16.mxu0 0
      %876 = vmatpush1.bf16.msra.mxu0 %v859
      %877 = vmatprep.subr.bf16.mxu0 0
      %878 = vmatpush2.bf16.msra.mxu0 0
      %879 = vmatprep.subr.bf16.mxu0 0
      %880 = vmatpush2.bf16.msra.mxu0 0
      %881 = vmatprep.subr.bf16.mxu0 0
      %882 = vmatpush2.bf16.msra.mxu0 0
      %883 = vmatprep.subr.bf16.mxu0 0
      %884 = vmatpush2.bf16.msra.mxu0 0
      %885 = vmatprep.subr.bf16.mxu0 0
      %886 = vmatpush2.bf16.msra.mxu0 0
      %887 = vmatprep.subr.bf16.mxu0 0
      %888 = vmatpush2.bf16.msra.mxu0 0
      %889 = vmatprep.subr.bf16.mxu0 0
      %890 = vmatpush2.bf16.msra.mxu0 0
      %891 = vmatprep.subr.bf16.mxu0 0
      %892 = vmatpush2.bf16.msra.mxu0 0
      %893 = vmatprep.mubr.bf16.mxu0 0
      %894 = vmatmul.mubr.bf16.gmra.mxu0 %v811
      %v895 = vpop.f32.mrf.mxu0
      %v896 = vadd.f32 %v684, %v895
      %v897 = vpop.f32.mrf.mxu0
      %v898 = vpop.f32.mrf.mxu0
      %v899 = vadd.f32 %v687, %v898
      %v900 = vpop.f32.mrf.mxu0
      %901 = vmatprep.mubr.bf16.mxu0 0
      %902 = vmatmul.mubr.bf16.gmra.mxu0 %v814
      %v903 = vpop.f32.mrf.mxu0
      %v904 = vadd.f32 %v692, %v903
      %v905 = vpop.f32.mrf.mxu0
      %v906 = vpop.f32.mrf.mxu0
      %v907 = vadd.f32 %v695, %v906
      %v908 = vpop.f32.mrf.mxu0
      %909 = vmatprep.mubr.bf16.mxu0 0
      %910 = vmatmul.mubr.bf16.gmra.mxu0 %v817
      %v911 = vpop.f32.mrf.mxu0
      %v912 = vadd.f32 %v700, %v911
      %v913 = vpop.f32.mrf.mxu0
      %v914 = vpop.f32.mrf.mxu0
      %v915 = vadd.f32 %v703, %v914
      %v916 = vpop.f32.mrf.mxu0
      %917 = vmatprep.mubr.bf16.mxu0 0
      %918 = vmatmul.mubr.bf16.gmra.mxu0 %v820
      %v919 = vpop.f32.mrf.mxu0
      %v920 = vadd.f32 %v708, %v919
      %v921 = vpop.f32.mrf.mxu0
      %v922 = vpop.f32.mrf.mxu0
      %v923 = vadd.f32 %v711, %v922
      %v924 = vpop.f32.mrf.mxu0
      %925 = vmatprep.mubr.bf16.mxu0 0
      %926 = vmatmul.mubr.bf16.gmra.mxu0 %v823
      %v927 = vpop.f32.mrf.mxu0
      %v928 = vadd.f32 %v716, %v927
      %v929 = vpop.f32.mrf.mxu0
      %v930 = vpop.f32.mrf.mxu0
      %v931 = vadd.f32 %v719, %v930
      %v932 = vpop.f32.mrf.mxu0
      %933 = vmatprep.mubr.bf16.mxu0 0
      %934 = vmatmul.mubr.bf16.gmra.mxu0 %v826
      %v935 = vpop.f32.mrf.mxu0
      %v936 = vadd.f32 %v724, %v935
      %v937 = vpop.f32.mrf.mxu0
      %v938 = vpop.f32.mrf.mxu0
      %v939 = vadd.f32 %v727, %v938
      %v940 = vpop.f32.mrf.mxu0
      %941 = vmatprep.mubr.bf16.mxu0 0
      %942 = vmatmul.mubr.bf16.gmra.mxu0 %v829
      %v943 = vpop.f32.mrf.mxu0
      %v944 = vadd.f32 %v732, %v943
      %v945 = vpop.f32.mrf.mxu0
      %v946 = vpop.f32.mrf.mxu0
      %v947 = vadd.f32 %v735, %v946
      %v948 = vpop.f32.mrf.mxu0
      %949 = vmatprep.mubr.bf16.mxu0 0
      %950 = vmatmul.mubr.bf16.gmra.mxu0 %v832
      %v951 = vpop.f32.mrf.mxu0
      %v952 = vadd.f32 %v740, %v951
      %v953 = vpop.f32.mrf.mxu0
      %v954 = vpop.f32.mrf.mxu0
      %v955 = vadd.f32 %v743, %v954
      %v956 = vpop.f32.mrf.mxu0
      %957 = vmatprep.mubr.bf16.mxu0 0
      %958 = vmatmul.mubr.bf16.gmra.mxu0 %v835
      %v959 = vpop.f32.mrf.mxu0
      %v960 = vadd.f32 %v748, %v959
      %v961 = vpop.f32.mrf.mxu0
      %v962 = vpop.f32.mrf.mxu0
      %v963 = vadd.f32 %v751, %v962
      %v964 = vpop.f32.mrf.mxu0
      %965 = vmatprep.mubr.bf16.mxu0 0
      %966 = vmatmul.mubr.bf16.gmra.mxu0 %v838
      %v967 = vpop.f32.mrf.mxu0
      %v968 = vadd.f32 %v756, %v967
      %v969 = vpop.f32.mrf.mxu0
      %v970 = vpop.f32.mrf.mxu0
      %v971 = vadd.f32 %v759, %v970
      %v972 = vpop.f32.mrf.mxu0
      %973 = vmatprep.mubr.bf16.mxu0 0
      %974 = vmatmul.mubr.bf16.gmra.mxu0 %v841
      %v975 = vpop.f32.mrf.mxu0
      %v976 = vadd.f32 %v764, %v975
      %v977 = vpop.f32.mrf.mxu0
      %v978 = vpop.f32.mrf.mxu0
      %v979 = vadd.f32 %v767, %v978
      %v980 = vpop.f32.mrf.mxu0
      %981 = vmatprep.mubr.bf16.mxu0 0
      %982 = vmatmul.mubr.bf16.gmra.mxu0 %v844
      %v983 = vpop.f32.mrf.mxu0
      %v984 = vadd.f32 %v772, %v983
      %v985 = vpop.f32.mrf.mxu0
      %v986 = vpop.f32.mrf.mxu0
      %v987 = vadd.f32 %v775, %v986
      %v988 = vpop.f32.mrf.mxu0
      %989 = vmatprep.mubr.bf16.mxu0 0
      %990 = vmatmul.mubr.bf16.gmra.mxu0 %v847
      %v991 = vpop.f32.mrf.mxu0
      %v992 = vadd.f32 %v780, %v991
      %v993 = vpop.f32.mrf.mxu0
      %v994 = vpop.f32.mrf.mxu0
      %v995 = vadd.f32 %v783, %v994
      %v996 = vpop.f32.mrf.mxu0
      %997 = vmatprep.mubr.bf16.mxu0 0
      %998 = vmatmul.mubr.bf16.gmra.mxu0 %v850
      %v999 = vpop.f32.mrf.mxu0
      %v1000 = vadd.f32 %v788, %v999
      %v1001 = vpop.f32.mrf.mxu0
      %v1002 = vpop.f32.mrf.mxu0
      %v1003 = vadd.f32 %v791, %v1002
      %v1004 = vpop.f32.mrf.mxu0
      %1005 = vmatprep.mubr.bf16.mxu0 0
      %1006 = vmatmul.mubr.bf16.gmra.mxu0 %v853
      %v1007 = vpop.f32.mrf.mxu0
      %v1008 = vadd.f32 %v796, %v1007
      %v1009 = vpop.f32.mrf.mxu0
      %v1010 = vpop.f32.mrf.mxu0
      %v1011 = vadd.f32 %v799, %v1010
      %v1012 = vpop.f32.mrf.mxu0
      %1013 = vmatprep.mubr.bf16.mxu0 0
      %1014 = vmatmul.mubr.bf16.gmra.mxu0 %v856
      %v1015 = vpop.f32.mrf.mxu0
      %v1016 = vadd.f32 %v804, %v1015
      %v1017 = vpop.f32.mrf.mxu0
      %v1018 = vpop.f32.mrf.mxu0
      %v1019 = vadd.f32 %v807, %v1018
      %v1020 = vpop.f32.mrf.mxu0
      %1021 = vdwg.mxu0
      %v1022 = vld [vmem:[#allocation2 + $0x2] sm:$0xff]
      %v1023 = vld [vmem:[#allocation2 + $0xa] sm:$0xff]
      %v1024 = vld [vmem:[#allocation2 + $0x1a] sm:$0xff]
      %v1025 = vld [vmem:[#allocation2 + $0x22] sm:$0xff]
      %v1026 = vld [vmem:[#allocation2 + $0x32] sm:$0xff]
      %v1027 = vld [vmem:[#allocation2 + $0x3a] sm:$0xff]
      %v1028 = vld [vmem:[#allocation2 + $0x4a] sm:$0xff]
      %v1029 = vld [vmem:[#allocation2 + $0x52] sm:$0xff]
      %v1030 = vld [vmem:[#allocation2 + $0x62] sm:$0xff]
      %v1031 = vld [vmem:[#allocation2 + $0x6a] sm:$0xff]
      %v1032 = vld [vmem:[#allocation2 + $0x7a] sm:$0xff]
      %v1033 = vld [vmem:[#allocation2 + $0x82] sm:$0xff]
      %v1034 = vld [vmem:[#allocation2 + $0x92] sm:$0xff]
      %v1035 = vld [vmem:[#allocation2 + $0x9a] sm:$0xff]
      %v1036 = vld [vmem:[#allocation2 + $0xaa] sm:$0xff]
      %v1037 = vld [vmem:[#allocation2 + $0xb2] sm:$0xff]
      %v1038 = vld [vmem:[#allocation2 + $0xc2] sm:$0xff]
      %v1039 = vld [vmem:[#allocation2 + $0xca] sm:$0xff]
      %v1040 = vld [vmem:[#allocation2 + $0xda] sm:$0xff]
      %v1041 = vld [vmem:[#allocation2 + $0xe2] sm:$0xff]
      %v1042 = vld [vmem:[#allocation2 + $0xf2] sm:$0xff]
      %v1043 = vld [vmem:[#allocation2 + $0xfa] sm:$0xff]
      %v1044 = vld [vmem:[#allocation2 + $0x10a] sm:$0xff]
      %v1045 = vld [vmem:[#allocation2 + $0x112] sm:$0xff]
      %v1046 = vld [vmem:[#allocation2 + $0x122] sm:$0xff]
      %v1047 = vld [vmem:[#allocation2 + $0x12a] sm:$0xff]
      %v1048 = vld [vmem:[#allocation2 + $0x13a] sm:$0xff]
      %v1049 = vld [vmem:[#allocation2 + $0x142] sm:$0xff]
      %v1050 = vld [vmem:[#allocation2 + $0x152] sm:$0xff]
      %v1051 = vld [vmem:[#allocation2 + $0x15a] sm:$0xff]
      %v1052 = vld [vmem:[#allocation2 + $0x16a] sm:$0xff]
      %v1053 = vld [vmem:[#allocation2 + $0x172] sm:$0xff]
      %v1054 = vpack.c.bf16 %v1023, %v1022
      %v1055 = vpack.c.bf16 %v1025, %v1024
      %v1056 = vpack.c.bf16 %v1027, %v1026
      %v1057 = vpack.c.bf16 %v1029, %v1028
      %v1058 = vpack.c.bf16 %v1031, %v1030
      %v1059 = vpack.c.bf16 %v1033, %v1032
      %v1060 = vpack.c.bf16 %v1035, %v1034
      %v1061 = vpack.c.bf16 %v1037, %v1036
      %v1062 = vpack.c.bf16 %v1039, %v1038
      %v1063 = vpack.c.bf16 %v1041, %v1040
      %v1064 = vpack.c.bf16 %v1043, %v1042
      %v1065 = vpack.c.bf16 %v1045, %v1044
      %v1066 = vpack.c.bf16 %v1047, %v1046
      %v1067 = vpack.c.bf16 %v1049, %v1048
      %v1068 = vpack.c.bf16 %v1051, %v1050
      %v1069 = vpack.c.bf16 %v1053, %v1052
      %s1070 = scalar_lea.vmem %s319, 8
      %v1071 = vld [vmem:[%s1070] sm:$0xf]
      %v1073 = vsel %vm596, %v1054, 0
      %v1076 = vsel %vm596, %v1055, 0
      %v1079 = vsel %vm596, %v1056, 0
      %v1082 = vsel %vm596, %v1057, 0
      %v1085 = vsel %vm596, %v1058, 0
      %v1088 = vsel %vm596, %v1059, 0
      %v1091 = vsel %vm596, %v1060, 0
      %v1094 = vsel %vm596, %v1061, 0
      %v1097 = vsel %vm596, %v1062, 0
      %v1100 = vsel %vm596, %v1063, 0
      %v1103 = vsel %vm596, %v1064, 0
      %v1106 = vsel %vm596, %v1065, 0
      %v1109 = vsel %vm596, %v1066, 0
      %v1112 = vsel %vm596, %v1067, 0
      %v1115 = vsel %vm596, %v1068, 0
      %v1118 = vsel %vm596, %v1069, 0
      %v1121 = vsel %vm645, %v1071, 0
      %1123 = vmatprep.subr.bf16.mxu0 0
      %1124 = vmatpush1.bf16.msra.mxu0 0
      %1125 = vmatprep.subr.bf16.mxu0 0
      %1126 = vmatpush1.bf16.msra.mxu0 0
      %1127 = vmatprep.subr.bf16.mxu0 0
      %1128 = vmatpush1.bf16.msra.mxu0 0
      %1129 = vmatprep.subr.bf16.mxu0 0
      %1130 = vmatpush1.bf16.msra.mxu0 0
      %1131 = vmatprep.subr.bf16.mxu0 0
      %1132 = vmatpush1.bf16.msra.mxu0 0
      %1133 = vmatprep.subr.bf16.mxu0 0
      %1134 = vmatpush1.bf16.msra.mxu0 0
      %1135 = vmatprep.subr.bf16.mxu0 0
      %1136 = vmatpush1.bf16.msra.mxu0 0
      %1137 = vmatprep.subr.bf16.mxu0 0
      %1138 = vmatpush1.bf16.msra.mxu0 %v1121
      %1139 = vmatprep.subr.bf16.mxu0 0
      %1140 = vmatpush2.bf16.msra.mxu0 0
      %1141 = vmatprep.subr.bf16.mxu0 0
      %1142 = vmatpush2.bf16.msra.mxu0 0
      %1143 = vmatprep.subr.bf16.mxu0 0
      %1144 = vmatpush2.bf16.msra.mxu0 0
      %1145 = vmatprep.subr.bf16.mxu0 0
      %1146 = vmatpush2.bf16.msra.mxu0 0
      %1147 = vmatprep.subr.bf16.mxu0 0
      %1148 = vmatpush2.bf16.msra.mxu0 0
      %1149 = vmatprep.subr.bf16.mxu0 0
      %1150 = vmatpush2.bf16.msra.mxu0 0
      %1151 = vmatprep.subr.bf16.mxu0 0
      %1152 = vmatpush2.bf16.msra.mxu0 0
      %1153 = vmatprep.subr.bf16.mxu0 0
      %1154 = vmatpush2.bf16.msra.mxu0 0
      %1155 = vmatprep.mubr.bf16.mxu0 0
      %1156 = vmatmul.mubr.bf16.gmra.mxu0 %v1073
      %v1157 = vpop.f32.mrf.mxu0
      %v1158 = vadd.f32 0.0, %v1157
      %v1159 = vpop.f32.mrf.mxu0
      %v1160 = vpop.f32.mrf.mxu0
      %v1161 = vadd.f32 0.0, %v1160
      %v1162 = vpop.f32.mrf.mxu0
      %1163 = vmatprep.mubr.bf16.mxu0 0
      %1164 = vmatmul.mubr.bf16.gmra.mxu0 %v1076
      %v1165 = vpop.f32.mrf.mxu0
      %v1166 = vadd.f32 0.0, %v1165
      %v1167 = vpop.f32.mrf.mxu0
      %v1168 = vpop.f32.mrf.mxu0
      %v1169 = vadd.f32 0.0, %v1168
      %v1170 = vpop.f32.mrf.mxu0
      %1171 = vmatprep.mubr.bf16.mxu0 0
      %1172 = vmatmul.mubr.bf16.gmra.mxu0 %v1079
      %v1173 = vpop.f32.mrf.mxu0
      %v1174 = vadd.f32 0.0, %v1173
      %v1175 = vpop.f32.mrf.mxu0
      %v1176 = vpop.f32.mrf.mxu0
      %v1177 = vadd.f32 0.0, %v1176
      %v1178 = vpop.f32.mrf.mxu0
      %1179 = vmatprep.mubr.bf16.mxu0 0
      %1180 = vmatmul.mubr.bf16.gmra.mxu0 %v1082
      %v1181 = vpop.f32.mrf.mxu0
      %v1182 = vadd.f32 0.0, %v1181
      %v1183 = vpop.f32.mrf.mxu0
      %v1184 = vpop.f32.mrf.mxu0
      %v1185 = vadd.f32 0.0, %v1184
      %v1186 = vpop.f32.mrf.mxu0
      %1187 = vmatprep.mubr.bf16.mxu0 0
      %1188 = vmatmul.mubr.bf16.gmra.mxu0 %v1085
      %v1189 = vpop.f32.mrf.mxu0
      %v1190 = vadd.f32 0.0, %v1189
      %v1191 = vpop.f32.mrf.mxu0
      %v1192 = vpop.f32.mrf.mxu0
      %v1193 = vadd.f32 0.0, %v1192
      %v1194 = vpop.f32.mrf.mxu0
      %1195 = vmatprep.mubr.bf16.mxu0 0
      %1196 = vmatmul.mubr.bf16.gmra.mxu0 %v1088
      %v1197 = vpop.f32.mrf.mxu0
      %v1198 = vadd.f32 0.0, %v1197
      %v1199 = vpop.f32.mrf.mxu0
      %v1200 = vpop.f32.mrf.mxu0
      %v1201 = vadd.f32 0.0, %v1200
      %v1202 = vpop.f32.mrf.mxu0
      %1203 = vmatprep.mubr.bf16.mxu0 0
      %1204 = vmatmul.mubr.bf16.gmra.mxu0 %v1091
      %v1205 = vpop.f32.mrf.mxu0
      %v1206 = vadd.f32 0.0, %v1205
      %v1207 = vpop.f32.mrf.mxu0
      %v1208 = vpop.f32.mrf.mxu0
      %v1209 = vadd.f32 0.0, %v1208
      %v1210 = vpop.f32.mrf.mxu0
      %1211 = vmatprep.mubr.bf16.mxu0 0
      %1212 = vmatmul.mubr.bf16.gmra.mxu0 %v1094
      %v1213 = vpop.f32.mrf.mxu0
      %v1214 = vadd.f32 0.0, %v1213
      %v1215 = vpop.f32.mrf.mxu0
      %v1216 = vpop.f32.mrf.mxu0
      %v1217 = vadd.f32 0.0, %v1216
      %v1218 = vpop.f32.mrf.mxu0
      %1219 = vmatprep.mubr.bf16.mxu0 0
      %1220 = vmatmul.mubr.bf16.gmra.mxu0 %v1097
      %v1221 = vpop.f32.mrf.mxu0
      %v1222 = vadd.f32 0.0, %v1221
      %v1223 = vpop.f32.mrf.mxu0
      %v1224 = vpop.f32.mrf.mxu0
      %v1225 = vadd.f32 0.0, %v1224
      %v1226 = vpop.f32.mrf.mxu0
      %1227 = vmatprep.mubr.bf16.mxu0 0
      %1228 = vmatmul.mubr.bf16.gmra.mxu0 %v1100
      %v1229 = vpop.f32.mrf.mxu0
      %v1230 = vadd.f32 0.0, %v1229
      %v1231 = vpop.f32.mrf.mxu0
      %v1232 = vpop.f32.mrf.mxu0
      %v1233 = vadd.f32 0.0, %v1232
      %v1234 = vpop.f32.mrf.mxu0
      %1235 = vmatprep.mubr.bf16.mxu0 0
      %1236 = vmatmul.mubr.bf16.gmra.mxu0 %v1103
      %v1237 = vpop.f32.mrf.mxu0
      %v1238 = vadd.f32 0.0, %v1237
      %v1239 = vpop.f32.mrf.mxu0
      %v1240 = vpop.f32.mrf.mxu0
      %v1241 = vadd.f32 0.0, %v1240
      %v1242 = vpop.f32.mrf.mxu0
      %1243 = vmatprep.mubr.bf16.mxu0 0
      %1244 = vmatmul.mubr.bf16.gmra.mxu0 %v1106
      %v1245 = vpop.f32.mrf.mxu0
      %v1246 = vadd.f32 0.0, %v1245
      %v1247 = vpop.f32.mrf.mxu0
      %v1248 = vpop.f32.mrf.mxu0
      %v1249 = vadd.f32 0.0, %v1248
      %v1250 = vpop.f32.mrf.mxu0
      %1251 = vmatprep.mubr.bf16.mxu0 0
      %1252 = vmatmul.mubr.bf16.gmra.mxu0 %v1109
      %v1253 = vpop.f32.mrf.mxu0
      %v1254 = vadd.f32 0.0, %v1253
      %v1255 = vpop.f32.mrf.mxu0
      %v1256 = vpop.f32.mrf.mxu0
      %v1257 = vadd.f32 0.0, %v1256
      %v1258 = vpop.f32.mrf.mxu0
      %1259 = vmatprep.mubr.bf16.mxu0 0
      %1260 = vmatmul.mubr.bf16.gmra.mxu0 %v1112
      %v1261 = vpop.f32.mrf.mxu0
      %v1262 = vadd.f32 0.0, %v1261
      %v1263 = vpop.f32.mrf.mxu0
      %v1264 = vpop.f32.mrf.mxu0
      %v1265 = vadd.f32 0.0, %v1264
      %v1266 = vpop.f32.mrf.mxu0
      %1267 = vmatprep.mubr.bf16.mxu0 0
      %1268 = vmatmul.mubr.bf16.gmra.mxu0 %v1115
      %v1269 = vpop.f32.mrf.mxu0
      %v1270 = vadd.f32 0.0, %v1269
      %v1271 = vpop.f32.mrf.mxu0
      %v1272 = vpop.f32.mrf.mxu0
      %v1273 = vadd.f32 0.0, %v1272
      %v1274 = vpop.f32.mrf.mxu0
      %1275 = vmatprep.mubr.bf16.mxu0 0
      %1276 = vmatmul.mubr.bf16.gmra.mxu0 %v1118
      %v1277 = vpop.f32.mrf.mxu0
      %v1278 = vadd.f32 0.0, %v1277
      %v1279 = vpop.f32.mrf.mxu0
      %v1280 = vpop.f32.mrf.mxu0
      %v1281 = vadd.f32 0.0, %v1280
      %v1282 = vpop.f32.mrf.mxu0
      %1283 = vdwg.mxu0
      %v1284 = vadd.f32 %v896, %v1158
      %v1285 = vadd.f32 %v899, %v1161
      %v1286 = vadd.f32 %v904, %v1166
      %v1287 = vadd.f32 %v907, %v1169
      %v1288 = vadd.f32 %v912, %v1174
      %v1289 = vadd.f32 %v915, %v1177
      %v1290 = vadd.f32 %v920, %v1182
      %v1291 = vadd.f32 %v923, %v1185
      %v1292 = vadd.f32 %v928, %v1190
      %v1293 = vadd.f32 %v931, %v1193
      %v1294 = vadd.f32 %v936, %v1198
      %v1295 = vadd.f32 %v939, %v1201
      %v1296 = vadd.f32 %v944, %v1206
      %v1297 = vadd.f32 %v947, %v1209
      %v1298 = vadd.f32 %v952, %v1214
      %v1299 = vadd.f32 %v955, %v1217
      %v1300 = vadd.f32 %v960, %v1222
      %v1301 = vadd.f32 %v963, %v1225
      %v1302 = vadd.f32 %v968, %v1230
      %v1303 = vadd.f32 %v971, %v1233
      %v1304 = vadd.f32 %v976, %v1238
      %v1305 = vadd.f32 %v979, %v1241
      %v1306 = vadd.f32 %v984, %v1246
      %v1307 = vadd.f32 %v987, %v1249
      %v1308 = vadd.f32 %v992, %v1254
      %v1309 = vadd.f32 %v995, %v1257
      %v1310 = vadd.f32 %v1000, %v1262
      %v1311 = vadd.f32 %v1003, %v1265
      %v1312 = vadd.f32 %v1008, %v1270
      %v1313 = vadd.f32 %v1011, %v1273
      %v1314 = vadd.f32 %v1016, %v1278
      %v1315 = vadd.f32 %v1019, %v1281
      %s1316 = scalar_lea.vmem [#allocation2], 24
      %v1317 = vld [vmem:[%s1316] sm:$0xff]
      %v1318 = vld [vmem:[%s1316 + $0x8] sm:$0xff]
      %v1319 = vld [vmem:[%s1316 + $0x18] sm:$0xff]
      %v1320 = vld [vmem:[%s1316 + $0x20] sm:$0xff]
      %v1321 = vld [vmem:[%s1316 + $0x30] sm:$0xff]
      %v1322 = vld [vmem:[%s1316 + $0x38] sm:$0xff]
      %v1323 = vld [vmem:[%s1316 + $0x48] sm:$0xff]
      %v1324 = vld [vmem:[%s1316 + $0x50] sm:$0xff]
      %v1325 = vld [vmem:[%s1316 + $0x60] sm:$0xff]
      %v1326 = vld [vmem:[%s1316 + $0x68] sm:$0xff]
      %v1327 = vld [vmem:[%s1316 + $0x78] sm:$0xff]
      %v1328 = vld [vmem:[%s1316 + $0x80] sm:$0xff]
      %v1329 = vld [vmem:[%s1316 + $0x90] sm:$0xff]
      %v1330 = vld [vmem:[%s1316 + $0x98] sm:$0xff]
      %v1331 = vld [vmem:[%s1316 + $0xa8] sm:$0xff]
      %v1332 = vld [vmem:[%s1316 + $0xb0] sm:$0xff]
      %v1333 = vld [vmem:[%s1316 + $0xc0] sm:$0xff]
      %v1334 = vld [vmem:[%s1316 + $0xc8] sm:$0xff]
      %v1335 = vld [vmem:[%s1316 + $0xd8] sm:$0xff]
      %v1336 = vld [vmem:[%s1316 + $0xe0] sm:$0xff]
      %v1337 = vld [vmem:[%s1316 + $0xf0] sm:$0xff]
      %v1338 = vld [vmem:[%s1316 + $0xf8] sm:$0xff]
      %v1339 = vld [vmem:[%s1316 + $0x108] sm:$0xff]
      %v1340 = vld [vmem:[%s1316 + $0x110] sm:$0xff]
      %v1341 = vld [vmem:[%s1316 + $0x120] sm:$0xff]
      %v1342 = vld [vmem:[%s1316 + $0x128] sm:$0xff]
      %v1343 = vld [vmem:[%s1316 + $0x138] sm:$0xff]
      %v1344 = vld [vmem:[%s1316 + $0x140] sm:$0xff]
      %v1345 = vld [vmem:[%s1316 + $0x150] sm:$0xff]
      %v1346 = vld [vmem:[%s1316 + $0x158] sm:$0xff]
      %v1347 = vld [vmem:[%s1316 + $0x168] sm:$0xff]
      %v1348 = vld [vmem:[%s1316 + $0x170] sm:$0xff]
      %v1349 = vpack.c.bf16 %v1318, %v1317
      %v1350 = vpack.c.bf16 %v1320, %v1319
      %v1351 = vpack.c.bf16 %v1322, %v1321
      %v1352 = vpack.c.bf16 %v1324, %v1323
      %v1353 = vpack.c.bf16 %v1326, %v1325
      %v1354 = vpack.c.bf16 %v1328, %v1327
      %v1355 = vpack.c.bf16 %v1330, %v1329
      %v1356 = vpack.c.bf16 %v1332, %v1331
      %v1357 = vpack.c.bf16 %v1334, %v1333
      %v1358 = vpack.c.bf16 %v1336, %v1335
      %v1359 = vpack.c.bf16 %v1338, %v1337
      %v1360 = vpack.c.bf16 %v1340, %v1339
      %v1361 = vpack.c.bf16 %v1342, %v1341
      %v1362 = vpack.c.bf16 %v1344, %v1343
      %v1363 = vpack.c.bf16 %v1346, %v1345
      %v1364 = vpack.c.bf16 %v1348, %v1347
      %s1365 = scalar_lea.vmem %s319, 12
      %v1366 = vld [vmem:[%s1365] sm:$0xf]
      %v1368 = vsel %vm596, %v1349, 0
      %v1371 = vsel %vm596, %v1350, 0
      %v1374 = vsel %vm596, %v1351, 0
      %v1377 = vsel %vm596, %v1352, 0
      %v1380 = vsel %vm596, %v1353, 0
      %v1383 = vsel %vm596, %v1354, 0
      %v1386 = vsel %vm596, %v1355, 0
      %v1389 = vsel %vm596, %v1356, 0
      %v1392 = vsel %vm596, %v1357, 0
      %v1395 = vsel %vm596, %v1358, 0
      %v1398 = vsel %vm596, %v1359, 0
      %v1401 = vsel %vm596, %v1360, 0
      %v1404 = vsel %vm596, %v1361, 0
      %v1407 = vsel %vm596, %v1362, 0
      %v1410 = vsel %vm596, %v1363, 0
      %v1413 = vsel %vm596, %v1364, 0
      %v1416 = vsel %vm645, %v1366, 0
      %1418 = vmatprep.subr.bf16.mxu0 0
      %1419 = vmatpush1.bf16.msra.mxu0 0
      %1420 = vmatprep.subr.bf16.mxu0 0
      %1421 = vmatpush1.bf16.msra.mxu0 0
      %1422 = vmatprep.subr.bf16.mxu0 0
      %1423 = vmatpush1.bf16.msra.mxu0 0
      %1424 = vmatprep.subr.bf16.mxu0 0
      %1425 = vmatpush1.bf16.msra.mxu0 0
      %1426 = vmatprep.subr.bf16.mxu0 0
      %1427 = vmatpush1.bf16.msra.mxu0 0
      %1428 = vmatprep.subr.bf16.mxu0 0
      %1429 = vmatpush1.bf16.msra.mxu0 0
      %1430 = vmatprep.subr.bf16.mxu0 0
      %1431 = vmatpush1.bf16.msra.mxu0 0
      %1432 = vmatprep.subr.bf16.mxu0 0
      %1433 = vmatpush1.bf16.msra.mxu0 %v1416
      %1434 = vmatprep.subr.bf16.mxu0 0
      %1435 = vmatpush2.bf16.msra.mxu0 0
      %1436 = vmatprep.subr.bf16.mxu0 0
      %1437 = vmatpush2.bf16.msra.mxu0 0
      %1438 = vmatprep.subr.bf16.mxu0 0
      %1439 = vmatpush2.bf16.msra.mxu0 0
      %1440 = vmatprep.subr.bf16.mxu0 0
      %1441 = vmatpush2.bf16.msra.mxu0 0
      %1442 = vmatprep.subr.bf16.mxu0 0
      %1443 = vmatpush2.bf16.msra.mxu0 0
      %1444 = vmatprep.subr.bf16.mxu0 0
      %1445 = vmatpush2.bf16.msra.mxu0 0
      %1446 = vmatprep.subr.bf16.mxu0 0
      %1447 = vmatpush2.bf16.msra.mxu0 0
      %1448 = vmatprep.subr.bf16.mxu0 0
      %1449 = vmatpush2.bf16.msra.mxu0 0
      %1450 = vmatprep.mubr.bf16.mxu0 0
      %1451 = vmatmul.mubr.bf16.gmra.mxu0 %v1368
      %v1452 = vpop.f32.mrf.mxu0
      %v1453 = vadd.f32 0.0, %v1452
      %v1454 = vpop.f32.mrf.mxu0
      %v1455 = vpop.f32.mrf.mxu0
      %v1456 = vadd.f32 0.0, %v1455
      %v1457 = vpop.f32.mrf.mxu0
      %1458 = vmatprep.mubr.bf16.mxu0 0
      %1459 = vmatmul.mubr.bf16.gmra.mxu0 %v1371
      %v1460 = vpop.f32.mrf.mxu0
      %v1461 = vadd.f32 0.0, %v1460
      %v1462 = vpop.f32.mrf.mxu0
      %v1463 = vpop.f32.mrf.mxu0
      %v1464 = vadd.f32 0.0, %v1463
      %v1465 = vpop.f32.mrf.mxu0
      %1466 = vmatprep.mubr.bf16.mxu0 0
      %1467 = vmatmul.mubr.bf16.gmra.mxu0 %v1374
      %v1468 = vpop.f32.mrf.mxu0
      %v1469 = vadd.f32 0.0, %v1468
      %v1470 = vpop.f32.mrf.mxu0
      %v1471 = vpop.f32.mrf.mxu0
      %v1472 = vadd.f32 0.0, %v1471
      %v1473 = vpop.f32.mrf.mxu0
      %1474 = vmatprep.mubr.bf16.mxu0 0
      %1475 = vmatmul.mubr.bf16.gmra.mxu0 %v1377
      %v1476 = vpop.f32.mrf.mxu0
      %v1477 = vadd.f32 0.0, %v1476
      %v1478 = vpop.f32.mrf.mxu0
      %v1479 = vpop.f32.mrf.mxu0
      %v1480 = vadd.f32 0.0, %v1479
      %v1481 = vpop.f32.mrf.mxu0
      %1482 = vmatprep.mubr.bf16.mxu0 0
      %1483 = vmatmul.mubr.bf16.gmra.mxu0 %v1380
      %v1484 = vpop.f32.mrf.mxu0
      %v1485 = vadd.f32 0.0, %v1484
      %v1486 = vpop.f32.mrf.mxu0
      %v1487 = vpop.f32.mrf.mxu0
      %v1488 = vadd.f32 0.0, %v1487
      %v1489 = vpop.f32.mrf.mxu0
      %1490 = vmatprep.mubr.bf16.mxu0 0
      %1491 = vmatmul.mubr.bf16.gmra.mxu0 %v1383
      %v1492 = vpop.f32.mrf.mxu0
      %v1493 = vadd.f32 0.0, %v1492
      %v1494 = vpop.f32.mrf.mxu0
      %v1495 = vpop.f32.mrf.mxu0
      %v1496 = vadd.f32 0.0, %v1495
      %v1497 = vpop.f32.mrf.mxu0
      %1498 = vmatprep.mubr.bf16.mxu0 0
      %1499 = vmatmul.mubr.bf16.gmra.mxu0 %v1386
      %v1500 = vpop.f32.mrf.mxu0
      %v1501 = vadd.f32 0.0, %v1500
      %v1502 = vpop.f32.mrf.mxu0
      %v1503 = vpop.f32.mrf.mxu0
      %v1504 = vadd.f32 0.0, %v1503
      %v1505 = vpop.f32.mrf.mxu0
      %1506 = vmatprep.mubr.bf16.mxu0 0
      %1507 = vmatmul.mubr.bf16.gmra.mxu0 %v1389
      %v1508 = vpop.f32.mrf.mxu0
      %v1509 = vadd.f32 0.0, %v1508
      %v1510 = vpop.f32.mrf.mxu0
      %v1511 = vpop.f32.mrf.mxu0
      %v1512 = vadd.f32 0.0, %v1511
      %v1513 = vpop.f32.mrf.mxu0
      %1514 = vmatprep.mubr.bf16.mxu0 0
      %1515 = vmatmul.mubr.bf16.gmra.mxu0 %v1392
      %v1516 = vpop.f32.mrf.mxu0
      %v1517 = vadd.f32 0.0, %v1516
      %v1518 = vpop.f32.mrf.mxu0
      %v1519 = vpop.f32.mrf.mxu0
      %v1520 = vadd.f32 0.0, %v1519
      %v1521 = vpop.f32.mrf.mxu0
      %1522 = vmatprep.mubr.bf16.mxu0 0
      %1523 = vmatmul.mubr.bf16.gmra.mxu0 %v1395
      %v1524 = vpop.f32.mrf.mxu0
      %v1525 = vadd.f32 0.0, %v1524
      %v1526 = vpop.f32.mrf.mxu0
      %v1527 = vpop.f32.mrf.mxu0
      %v1528 = vadd.f32 0.0, %v1527
      %v1529 = vpop.f32.mrf.mxu0
      %1530 = vmatprep.mubr.bf16.mxu0 0
      %1531 = vmatmul.mubr.bf16.gmra.mxu0 %v1398
      %v1532 = vpop.f32.mrf.mxu0
      %v1533 = vadd.f32 0.0, %v1532
      %v1534 = vpop.f32.mrf.mxu0
      %v1535 = vpop.f32.mrf.mxu0
      %v1536 = vadd.f32 0.0, %v1535
      %v1537 = vpop.f32.mrf.mxu0
      %1538 = vmatprep.mubr.bf16.mxu0 0
      %1539 = vmatmul.mubr.bf16.gmra.mxu0 %v1401
      %v1540 = vpop.f32.mrf.mxu0
      %v1541 = vadd.f32 0.0, %v1540
      %v1542 = vpop.f32.mrf.mxu0
      %v1543 = vpop.f32.mrf.mxu0
      %v1544 = vadd.f32 0.0, %v1543
      %v1545 = vpop.f32.mrf.mxu0
      %1546 = vmatprep.mubr.bf16.mxu0 0
      %1547 = vmatmul.mubr.bf16.gmra.mxu0 %v1404
      %v1548 = vpop.f32.mrf.mxu0
      %v1549 = vadd.f32 0.0, %v1548
      %v1550 = vpop.f32.mrf.mxu0
      %v1551 = vpop.f32.mrf.mxu0
      %v1552 = vadd.f32 0.0, %v1551
      %v1553 = vpop.f32.mrf.mxu0
      %1554 = vmatprep.mubr.bf16.mxu0 0
      %1555 = vmatmul.mubr.bf16.gmra.mxu0 %v1407
      %v1556 = vpop.f32.mrf.mxu0
      %v1557 = vadd.f32 0.0, %v1556
      %v1558 = vpop.f32.mrf.mxu0
      %v1559 = vpop.f32.mrf.mxu0
      %v1560 = vadd.f32 0.0, %v1559
      %v1561 = vpop.f32.mrf.mxu0
      %1562 = vmatprep.mubr.bf16.mxu0 0
      %1563 = vmatmul.mubr.bf16.gmra.mxu0 %v1410
      %v1564 = vpop.f32.mrf.mxu0
      %v1565 = vadd.f32 0.0, %v1564
      %v1566 = vpop.f32.mrf.mxu0
      %v1567 = vpop.f32.mrf.mxu0
      %v1568 = vadd.f32 0.0, %v1567
      %v1569 = vpop.f32.mrf.mxu0
      %1570 = vmatprep.mubr.bf16.mxu0 0
      %1571 = vmatmul.mubr.bf16.gmra.mxu0 %v1413
      %v1572 = vpop.f32.mrf.mxu0
      %v1573 = vadd.f32 0.0, %v1572
      %v1574 = vpop.f32.mrf.mxu0
      %v1575 = vpop.f32.mrf.mxu0
      %v1576 = vadd.f32 0.0, %v1575
      %v1577 = vpop.f32.mrf.mxu0
      %1578 = vdwg.mxu0
      %v1579 = vadd.f32 %v1284, %v1453
      %v1580 = vadd.f32 %v1285, %v1456
      %v1581 = vadd.f32 %v1286, %v1461
      %v1582 = vadd.f32 %v1287, %v1464
      %v1583 = vadd.f32 %v1288, %v1469
      %v1584 = vadd.f32 %v1289, %v1472
      %v1585 = vadd.f32 %v1290, %v1477
      %v1586 = vadd.f32 %v1291, %v1480
      %v1587 = vadd.f32 %v1292, %v1485
      %v1588 = vadd.f32 %v1293, %v1488
      %v1589 = vadd.f32 %v1294, %v1493
      %v1590 = vadd.f32 %v1295, %v1496
      %v1591 = vadd.f32 %v1296, %v1501
      %v1592 = vadd.f32 %v1297, %v1504
      %v1593 = vadd.f32 %v1298, %v1509
      %v1594 = vadd.f32 %v1299, %v1512
      %v1595 = vadd.f32 %v1300, %v1517
      %v1596 = vadd.f32 %v1301, %v1520
      %v1597 = vadd.f32 %v1302, %v1525
      %v1598 = vadd.f32 %v1303, %v1528
      %v1599 = vadd.f32 %v1304, %v1533
      %v1600 = vadd.f32 %v1305, %v1536
      %v1601 = vadd.f32 %v1306, %v1541
      %v1602 = vadd.f32 %v1307, %v1544
      %v1603 = vadd.f32 %v1308, %v1549
      %v1604 = vadd.f32 %v1309, %v1552
      %v1605 = vadd.f32 %v1310, %v1557
      %v1606 = vadd.f32 %v1311, %v1560
      %v1607 = vadd.f32 %v1312, %v1565
      %v1608 = vadd.f32 %v1313, %v1568
      %v1609 = vadd.f32 %v1314, %v1573
      %v1610 = vadd.f32 %v1315, %v1576
      %v1611 = vld [vmem:[%s1316 + $0x1] sm:$0xff]
      %v1612 = vld [vmem:[%s1316 + $0x9] sm:$0xff]
      %v1613 = vld [vmem:[%s1316 + $0x19] sm:$0xff]
      %v1614 = vld [vmem:[%s1316 + $0x21] sm:$0xff]
      %v1615 = vld [vmem:[%s1316 + $0x31] sm:$0xff]
      %v1616 = vld [vmem:[%s1316 + $0x39] sm:$0xff]
      %v1617 = vld [vmem:[%s1316 + $0x49] sm:$0xff]
      %v1618 = vld [vmem:[%s1316 + $0x51] sm:$0xff]
      %v1619 = vld [vmem:[%s1316 + $0x61] sm:$0xff]
      %v1620 = vld [vmem:[%s1316 + $0x69] sm:$0xff]
      %v1621 = vld [vmem:[%s1316 + $0x79] sm:$0xff]
      %v1622 = vld [vmem:[%s1316 + $0x81] sm:$0xff]
      %v1623 = vld [vmem:[%s1316 + $0x91] sm:$0xff]
      %v1624 = vld [vmem:[%s1316 + $0x99] sm:$0xff]
      %v1625 = vld [vmem:[%s1316 + $0xa9] sm:$0xff]
      %v1626 = vld [vmem:[%s1316 + $0xb1] sm:$0xff]
      %v1627 = vld [vmem:[%s1316 + $0xc1] sm:$0xff]
      %v1628 = vld [vmem:[%s1316 + $0xc9] sm:$0xff]
      %v1629 = vld [vmem:[%s1316 + $0xd9] sm:$0xff]
      %v1630 = vld [vmem:[%s1316 + $0xe1] sm:$0xff]
      %v1631 = vld [vmem:[%s1316 + $0xf1] sm:$0xff]
      %v1632 = vld [vmem:[%s1316 + $0xf9] sm:$0xff]
      %v1633 = vld [vmem:[%s1316 + $0x109] sm:$0xff]
      %v1634 = vld [vmem:[%s1316 + $0x111] sm:$0xff]
      %v1635 = vld [vmem:[%s1316 + $0x121] sm:$0xff]
      %v1636 = vld [vmem:[%s1316 + $0x129] sm:$0xff]
      %v1637 = vld [vmem:[%s1316 + $0x139] sm:$0xff]
      %v1638 = vld [vmem:[%s1316 + $0x141] sm:$0xff]
      %v1639 = vld [vmem:[%s1316 + $0x151] sm:$0xff]
      %v1640 = vld [vmem:[%s1316 + $0x159] sm:$0xff]
      %v1641 = vld [vmem:[%s1316 + $0x169] sm:$0xff]
      %v1642 = vld [vmem:[%s1316 + $0x171] sm:$0xff]
      %v1643 = vpack.c.bf16 %v1612, %v1611
      %v1644 = vpack.c.bf16 %v1614, %v1613
      %v1645 = vpack.c.bf16 %v1616, %v1615
      %v1646 = vpack.c.bf16 %v1618, %v1617
      %v1647 = vpack.c.bf16 %v1620, %v1619
      %v1648 = vpack.c.bf16 %v1622, %v1621
      %v1649 = vpack.c.bf16 %v1624, %v1623
      %v1650 = vpack.c.bf16 %v1626, %v1625
      %v1651 = vpack.c.bf16 %v1628, %v1627
      %v1652 = vpack.c.bf16 %v1630, %v1629
      %v1653 = vpack.c.bf16 %v1632, %v1631
      %v1654 = vpack.c.bf16 %v1634, %v1633
      %v1655 = vpack.c.bf16 %v1636, %v1635
      %v1656 = vpack.c.bf16 %v1638, %v1637
      %v1657 = vpack.c.bf16 %v1640, %v1639
      %v1658 = vpack.c.bf16 %v1642, %v1641
      %s1659 = scalar_lea.vmem %s319, 16
      %v1660 = vld [vmem:[%s1659] sm:$0xf]
      %v1662 = vsel %vm596, %v1643, 0
      %v1665 = vsel %vm596, %v1644, 0
      %v1668 = vsel %vm596, %v1645, 0
      %v1671 = vsel %vm596, %v1646, 0
      %v1674 = vsel %vm596, %v1647, 0
      %v1677 = vsel %vm596, %v1648, 0
      %v1680 = vsel %vm596, %v1649, 0
      %v1683 = vsel %vm596, %v1650, 0
      %v1686 = vsel %vm596, %v1651, 0
      %v1689 = vsel %vm596, %v1652, 0
      %v1692 = vsel %vm596, %v1653, 0
      %v1695 = vsel %vm596, %v1654, 0
      %v1698 = vsel %vm596, %v1655, 0
      %v1701 = vsel %vm596, %v1656, 0
      %v1704 = vsel %vm596, %v1657, 0
      %v1707 = vsel %vm596, %v1658, 0
      %v1710 = vsel %vm645, %v1660, 0
      %1712 = vmatprep.subr.bf16.mxu0 0
      %1713 = vmatpush1.bf16.msra.mxu0 0
      %1714 = vmatprep.subr.bf16.mxu0 0
      %1715 = vmatpush1.bf16.msra.mxu0 0
      %1716 = vmatprep.subr.bf16.mxu0 0
      %1717 = vmatpush1.bf16.msra.mxu0 0
      %1718 = vmatprep.subr.bf16.mxu0 0
      %1719 = vmatpush1.bf16.msra.mxu0 0
      %1720 = vmatprep.subr.bf16.mxu0 0
      %1721 = vmatpush1.bf16.msra.mxu0 0
      %1722 = vmatprep.subr.bf16.mxu0 0
      %1723 = vmatpush1.bf16.msra.mxu0 0
      %1724 = vmatprep.subr.bf16.mxu0 0
      %1725 = vmatpush1.bf16.msra.mxu0 0
      %1726 = vmatprep.subr.bf16.mxu0 0
      %1727 = vmatpush1.bf16.msra.mxu0 %v1710
      %1728 = vmatprep.subr.bf16.mxu0 0
      %1729 = vmatpush2.bf16.msra.mxu0 0
      %1730 = vmatprep.subr.bf16.mxu0 0
      %1731 = vmatpush2.bf16.msra.mxu0 0
      %1732 = vmatprep.subr.bf16.mxu0 0
      %1733 = vmatpush2.bf16.msra.mxu0 0
      %1734 = vmatprep.subr.bf16.mxu0 0
      %1735 = vmatpush2.bf16.msra.mxu0 0
      %1736 = vmatprep.subr.bf16.mxu0 0
      %1737 = vmatpush2.bf16.msra.mxu0 0
      %1738 = vmatprep.subr.bf16.mxu0 0
      %1739 = vmatpush2.bf16.msra.mxu0 0
      %1740 = vmatprep.subr.bf16.mxu0 0
      %1741 = vmatpush2.bf16.msra.mxu0 0
      %1742 = vmatprep.subr.bf16.mxu0 0
      %1743 = vmatpush2.bf16.msra.mxu0 0
      %1744 = vmatprep.mubr.bf16.mxu0 0
      %1745 = vmatmul.mubr.bf16.gmra.mxu0 %v1662
      %v1746 = vpop.f32.mrf.mxu0
      %v1747 = vadd.f32 0.0, %v1746
      %v1748 = vpop.f32.mrf.mxu0
      %v1749 = vpop.f32.mrf.mxu0
      %v1750 = vadd.f32 0.0, %v1749
      %v1751 = vpop.f32.mrf.mxu0
      %1752 = vmatprep.mubr.bf16.mxu0 0
      %1753 = vmatmul.mubr.bf16.gmra.mxu0 %v1665
      %v1754 = vpop.f32.mrf.mxu0
      %v1755 = vadd.f32 0.0, %v1754
      %v1756 = vpop.f32.mrf.mxu0
      %v1757 = vpop.f32.mrf.mxu0
      %v1758 = vadd.f32 0.0, %v1757
      %v1759 = vpop.f32.mrf.mxu0
      %1760 = vmatprep.mubr.bf16.mxu0 0
      %1761 = vmatmul.mubr.bf16.gmra.mxu0 %v1668
      %v1762 = vpop.f32.mrf.mxu0
      %v1763 = vadd.f32 0.0, %v1762
      %v1764 = vpop.f32.mrf.mxu0
      %v1765 = vpop.f32.mrf.mxu0
      %v1766 = vadd.f32 0.0, %v1765
      %v1767 = vpop.f32.mrf.mxu0
      %1768 = vmatprep.mubr.bf16.mxu0 0
      %1769 = vmatmul.mubr.bf16.gmra.mxu0 %v1671
      %v1770 = vpop.f32.mrf.mxu0
      %v1771 = vadd.f32 0.0, %v1770
      %v1772 = vpop.f32.mrf.mxu0
      %v1773 = vpop.f32.mrf.mxu0
      %v1774 = vadd.f32 0.0, %v1773
      %v1775 = vpop.f32.mrf.mxu0
      %1776 = vmatprep.mubr.bf16.mxu0 0
      %1777 = vmatmul.mubr.bf16.gmra.mxu0 %v1674
      %v1778 = vpop.f32.mrf.mxu0
      %v1779 = vadd.f32 0.0, %v1778
      %v1780 = vpop.f32.mrf.mxu0
      %v1781 = vpop.f32.mrf.mxu0
      %v1782 = vadd.f32 0.0, %v1781
      %v1783 = vpop.f32.mrf.mxu0
      %1784 = vmatprep.mubr.bf16.mxu0 0
      %1785 = vmatmul.mubr.bf16.gmra.mxu0 %v1677
      %v1786 = vpop.f32.mrf.mxu0
      %v1787 = vadd.f32 0.0, %v1786
      %v1788 = vpop.f32.mrf.mxu0
      %v1789 = vpop.f32.mrf.mxu0
      %v1790 = vadd.f32 0.0, %v1789
      %v1791 = vpop.f32.mrf.mxu0
      %1792 = vmatprep.mubr.bf16.mxu0 0
      %1793 = vmatmul.mubr.bf16.gmra.mxu0 %v1680
      %v1794 = vpop.f32.mrf.mxu0
      %v1795 = vadd.f32 0.0, %v1794
      %v1796 = vpop.f32.mrf.mxu0
      %v1797 = vpop.f32.mrf.mxu0
      %v1798 = vadd.f32 0.0, %v1797
      %v1799 = vpop.f32.mrf.mxu0
      %1800 = vmatprep.mubr.bf16.mxu0 0
      %1801 = vmatmul.mubr.bf16.gmra.mxu0 %v1683
      %v1802 = vpop.f32.mrf.mxu0
      %v1803 = vadd.f32 0.0, %v1802
      %v1804 = vpop.f32.mrf.mxu0
      %v1805 = vpop.f32.mrf.mxu0
      %v1806 = vadd.f32 0.0, %v1805
      %v1807 = vpop.f32.mrf.mxu0
      %1808 = vmatprep.mubr.bf16.mxu0 0
      %1809 = vmatmul.mubr.bf16.gmra.mxu0 %v1686
      %v1810 = vpop.f32.mrf.mxu0
      %v1811 = vadd.f32 0.0, %v1810
      %v1812 = vpop.f32.mrf.mxu0
      %v1813 = vpop.f32.mrf.mxu0
      %v1814 = vadd.f32 0.0, %v1813
      %v1815 = vpop.f32.mrf.mxu0
      %1816 = vmatprep.mubr.bf16.mxu0 0
      %1817 = vmatmul.mubr.bf16.gmra.mxu0 %v1689
      %v1818 = vpop.f32.mrf.mxu0
      %v1819 = vadd.f32 0.0, %v1818
      %v1820 = vpop.f32.mrf.mxu0
      %v1821 = vpop.f32.mrf.mxu0
      %v1822 = vadd.f32 0.0, %v1821
      %v1823 = vpop.f32.mrf.mxu0
      %1824 = vmatprep.mubr.bf16.mxu0 0
      %1825 = vmatmul.mubr.bf16.gmra.mxu0 %v1692
      %v1826 = vpop.f32.mrf.mxu0
      %v1827 = vadd.f32 0.0, %v1826
      %v1828 = vpop.f32.mrf.mxu0
      %v1829 = vpop.f32.mrf.mxu0
      %v1830 = vadd.f32 0.0, %v1829
      %v1831 = vpop.f32.mrf.mxu0
      %1832 = vmatprep.mubr.bf16.mxu0 0
      %1833 = vmatmul.mubr.bf16.gmra.mxu0 %v1695
      %v1834 = vpop.f32.mrf.mxu0
      %v1835 = vadd.f32 0.0, %v1834
      %v1836 = vpop.f32.mrf.mxu0
      %v1837 = vpop.f32.mrf.mxu0
      %v1838 = vadd.f32 0.0, %v1837
      %v1839 = vpop.f32.mrf.mxu0
      %1840 = vmatprep.mubr.bf16.mxu0 0
      %1841 = vmatmul.mubr.bf16.gmra.mxu0 %v1698
      %v1842 = vpop.f32.mrf.mxu0
      %v1843 = vadd.f32 0.0, %v1842
      %v1844 = vpop.f32.mrf.mxu0
      %v1845 = vpop.f32.mrf.mxu0
      %v1846 = vadd.f32 0.0, %v1845
      %v1847 = vpop.f32.mrf.mxu0
      %1848 = vmatprep.mubr.bf16.mxu0 0
      %1849 = vmatmul.mubr.bf16.gmra.mxu0 %v1701
      %v1850 = vpop.f32.mrf.mxu0
      %v1851 = vadd.f32 0.0, %v1850
      %v1852 = vpop.f32.mrf.mxu0
      %v1853 = vpop.f32.mrf.mxu0
      %v1854 = vadd.f32 0.0, %v1853
      %v1855 = vpop.f32.mrf.mxu0
      %1856 = vmatprep.mubr.bf16.mxu0 0
      %1857 = vmatmul.mubr.bf16.gmra.mxu0 %v1704
      %v1858 = vpop.f32.mrf.mxu0
      %v1859 = vadd.f32 0.0, %v1858
      %v1860 = vpop.f32.mrf.mxu0
      %v1861 = vpop.f32.mrf.mxu0
      %v1862 = vadd.f32 0.0, %v1861
      %v1863 = vpop.f32.mrf.mxu0
      %1864 = vmatprep.mubr.bf16.mxu0 0
      %1865 = vmatmul.mubr.bf16.gmra.mxu0 %v1707
      %v1866 = vpop.f32.mrf.mxu0
      %v1867 = vadd.f32 0.0, %v1866
      %v1868 = vpop.f32.mrf.mxu0
      %v1869 = vpop.f32.mrf.mxu0
      %v1870 = vadd.f32 0.0, %v1869
      %v1871 = vpop.f32.mrf.mxu0
      %1872 = vdwg.mxu0
      %v1873 = vadd.f32 %v1579, %v1747
      %v1874 = vadd.f32 %v1580, %v1750
      %v1875 = vadd.f32 %v1581, %v1755
      %v1876 = vadd.f32 %v1582, %v1758
      %v1877 = vadd.f32 %v1583, %v1763
      %v1878 = vadd.f32 %v1584, %v1766
      %v1879 = vadd.f32 %v1585, %v1771
      %v1880 = vadd.f32 %v1586, %v1774
      %v1881 = vadd.f32 %v1587, %v1779
      %v1882 = vadd.f32 %v1588, %v1782
      %v1883 = vadd.f32 %v1589, %v1787
      %v1884 = vadd.f32 %v1590, %v1790
      %v1885 = vadd.f32 %v1591, %v1795
      %v1886 = vadd.f32 %v1592, %v1798
      %v1887 = vadd.f32 %v1593, %v1803
      %v1888 = vadd.f32 %v1594, %v1806
      %v1889 = vadd.f32 %v1595, %v1811
      %v1890 = vadd.f32 %v1596, %v1814
      %v1891 = vadd.f32 %v1597, %v1819
      %v1892 = vadd.f32 %v1598, %v1822
      %v1893 = vadd.f32 %v1599, %v1827
      %v1894 = vadd.f32 %v1600, %v1830
      %v1895 = vadd.f32 %v1601, %v1835
      %v1896 = vadd.f32 %v1602, %v1838
      %v1897 = vadd.f32 %v1603, %v1843
      %v1898 = vadd.f32 %v1604, %v1846
      %v1899 = vadd.f32 %v1605, %v1851
      %v1900 = vadd.f32 %v1606, %v1854
      %v1901 = vadd.f32 %v1607, %v1859
      %v1902 = vadd.f32 %v1608, %v1862
      %v1903 = vadd.f32 %v1609, %v1867
      %v1904 = vadd.f32 %v1610, %v1870
      %v1905 = vld [vmem:[%s1316 + $0x2] sm:$0xff]
      %v1906 = vld [vmem:[%s1316 + $0xa] sm:$0xff]
      %v1907 = vld [vmem:[%s1316 + $0x1a] sm:$0xff]
      %v1908 = vld [vmem:[%s1316 + $0x22] sm:$0xff]
      %v1909 = vld [vmem:[%s1316 + $0x32] sm:$0xff]
      %v1910 = vld [vmem:[%s1316 + $0x3a] sm:$0xff]
      %v1911 = vld [vmem:[%s1316 + $0x4a] sm:$0xff]
      %v1912 = vld [vmem:[%s1316 + $0x52] sm:$0xff]
      %v1913 = vld [vmem:[%s1316 + $0x62] sm:$0xff]
      %v1914 = vld [vmem:[%s1316 + $0x6a] sm:$0xff]
      %v1915 = vld [vmem:[%s1316 + $0x7a] sm:$0xff]
      %v1916 = vld [vmem:[%s1316 + $0x82] sm:$0xff]
      %v1917 = vld [vmem:[%s1316 + $0x92] sm:$0xff]
      %v1918 = vld [vmem:[%s1316 + $0x9a] sm:$0xff]
      %v1919 = vld [vmem:[%s1316 + $0xaa] sm:$0xff]
      %v1920 = vld [vmem:[%s1316 + $0xb2] sm:$0xff]
      %v1921 = vld [vmem:[%s1316 + $0xc2] sm:$0xff]
      %v1922 = vld [vmem:[%s1316 + $0xca] sm:$0xff]
      %v1923 = vld [vmem:[%s1316 + $0xda] sm:$0xff]
      %v1924 = vld [vmem:[%s1316 + $0xe2] sm:$0xff]
      %v1925 = vld [vmem:[%s1316 + $0xf2] sm:$0xff]
      %v1926 = vld [vmem:[%s1316 + $0xfa] sm:$0xff]
      %v1927 = vld [vmem:[%s1316 + $0x10a] sm:$0xff]
      %v1928 = vld [vmem:[%s1316 + $0x112] sm:$0xff]
      %v1929 = vld [vmem:[%s1316 + $0x122] sm:$0xff]
      %v1930 = vld [vmem:[%s1316 + $0x12a] sm:$0xff]
      %v1931 = vld [vmem:[%s1316 + $0x13a] sm:$0xff]
      %v1932 = vld [vmem:[%s1316 + $0x142] sm:$0xff]
      %v1933 = vld [vmem:[%s1316 + $0x152] sm:$0xff]
      %v1934 = vld [vmem:[%s1316 + $0x15a] sm:$0xff]
      %v1935 = vld [vmem:[%s1316 + $0x16a] sm:$0xff]
      %v1936 = vld [vmem:[%s1316 + $0x172] sm:$0xff]
      %v1937 = vpack.c.bf16 %v1906, %v1905
      %v1938 = vpack.c.bf16 %v1908, %v1907
      %v1939 = vpack.c.bf16 %v1910, %v1909
      %v1940 = vpack.c.bf16 %v1912, %v1911
      %v1941 = vpack.c.bf16 %v1914, %v1913
      %v1942 = vpack.c.bf16 %v1916, %v1915
      %v1943 = vpack.c.bf16 %v1918, %v1917
      %v1944 = vpack.c.bf16 %v1920, %v1919
      %v1945 = vpack.c.bf16 %v1922, %v1921
      %v1946 = vpack.c.bf16 %v1924, %v1923
      %v1947 = vpack.c.bf16 %v1926, %v1925
      %v1948 = vpack.c.bf16 %v1928, %v1927
      %v1949 = vpack.c.bf16 %v1930, %v1929
      %v1950 = vpack.c.bf16 %v1932, %v1931
      %v1951 = vpack.c.bf16 %v1934, %v1933
      %v1952 = vpack.c.bf16 %v1936, %v1935
      %s1953 = scalar_lea.vmem %s319, 20
      %v1954 = vld [vmem:[%s1953] sm:$0xf]
      %v1956 = vsel %vm596, %v1937, 0
      %v1959 = vsel %vm596, %v1938, 0
      %v1962 = vsel %vm596, %v1939, 0
      %v1965 = vsel %vm596, %v1940, 0
      %v1968 = vsel %vm596, %v1941, 0
      %v1971 = vsel %vm596, %v1942, 0
      %v1974 = vsel %vm596, %v1943, 0
      %v1977 = vsel %vm596, %v1944, 0
      %v1980 = vsel %vm596, %v1945, 0
      %v1983 = vsel %vm596, %v1946, 0
      %v1986 = vsel %vm596, %v1947, 0
      %v1989 = vsel %vm596, %v1948, 0
      %v1992 = vsel %vm596, %v1949, 0
      %v1995 = vsel %vm596, %v1950, 0
      %v1998 = vsel %vm596, %v1951, 0
      %v2001 = vsel %vm596, %v1952, 0
      %v2004 = vsel %vm645, %v1954, 0
      %2006 = vmatprep.subr.bf16.mxu0 0
      %2007 = vmatpush1.bf16.msra.mxu0 0
      %2008 = vmatprep.subr.bf16.mxu0 0
      %2009 = vmatpush1.bf16.msra.mxu0 0
      %2010 = vmatprep.subr.bf16.mxu0 0
      %2011 = vmatpush1.bf16.msra.mxu0 0
      %2012 = vmatprep.subr.bf16.mxu0 0
      %2013 = vmatpush1.bf16.msra.mxu0 0
      %2014 = vmatprep.subr.bf16.mxu0 0
      %2015 = vmatpush1.bf16.msra.mxu0 0
      %2016 = vmatprep.subr.bf16.mxu0 0
      %2017 = vmatpush1.bf16.msra.mxu0 0
      %2018 = vmatprep.subr.bf16.mxu0 0
      %2019 = vmatpush1.bf16.msra.mxu0 0
      %2020 = vmatprep.subr.bf16.mxu0 0
      %2021 = vmatpush1.bf16.msra.mxu0 %v2004
      %2022 = vmatprep.subr.bf16.mxu0 0
      %2023 = vmatpush2.bf16.msra.mxu0 0
      %2024 = vmatprep.subr.bf16.mxu0 0
      %2025 = vmatpush2.bf16.msra.mxu0 0
      %2026 = vmatprep.subr.bf16.mxu0 0
      %2027 = vmatpush2.bf16.msra.mxu0 0
      %2028 = vmatprep.subr.bf16.mxu0 0
      %2029 = vmatpush2.bf16.msra.mxu0 0
      %2030 = vmatprep.subr.bf16.mxu0 0
      %2031 = vmatpush2.bf16.msra.mxu0 0
      %2032 = vmatprep.subr.bf16.mxu0 0
      %2033 = vmatpush2.bf16.msra.mxu0 0
      %2034 = vmatprep.subr.bf16.mxu0 0
      %2035 = vmatpush2.bf16.msra.mxu0 0
      %2036 = vmatprep.subr.bf16.mxu0 0
      %2037 = vmatpush2.bf16.msra.mxu0 0
      %2038 = vmatprep.mubr.bf16.mxu0 0
      %2039 = vmatmul.mubr.bf16.gmra.mxu0 %v1956
      %v2040 = vpop.f32.mrf.mxu0
      %v2041 = vadd.f32 0.0, %v2040
      %v2042 = vpop.f32.mrf.mxu0
      %v2043 = vpop.f32.mrf.mxu0
      %v2044 = vadd.f32 0.0, %v2043
      %v2045 = vpop.f32.mrf.mxu0
      %2046 = vmatprep.mubr.bf16.mxu0 0
      %2047 = vmatmul.mubr.bf16.gmra.mxu0 %v1959
      %v2048 = vpop.f32.mrf.mxu0
      %v2049 = vadd.f32 0.0, %v2048
      %v2050 = vpop.f32.mrf.mxu0
      %v2051 = vpop.f32.mrf.mxu0
      %v2052 = vadd.f32 0.0, %v2051
      %v2053 = vpop.f32.mrf.mxu0
      %2054 = vmatprep.mubr.bf16.mxu0 0
      %2055 = vmatmul.mubr.bf16.gmra.mxu0 %v1962
      %v2056 = vpop.f32.mrf.mxu0
      %v2057 = vadd.f32 0.0, %v2056
      %v2058 = vpop.f32.mrf.mxu0
      %v2059 = vpop.f32.mrf.mxu0
      %v2060 = vadd.f32 0.0, %v2059
      %v2061 = vpop.f32.mrf.mxu0
      %2062 = vmatprep.mubr.bf16.mxu0 0
      %2063 = vmatmul.mubr.bf16.gmra.mxu0 %v1965
      %v2064 = vpop.f32.mrf.mxu0
      %v2065 = vadd.f32 0.0, %v2064
      %v2066 = vpop.f32.mrf.mxu0
      %v2067 = vpop.f32.mrf.mxu0
      %v2068 = vadd.f32 0.0, %v2067
      %v2069 = vpop.f32.mrf.mxu0
      %2070 = vmatprep.mubr.bf16.mxu0 0
      %2071 = vmatmul.mubr.bf16.gmra.mxu0 %v1968
      %v2072 = vpop.f32.mrf.mxu0
      %v2073 = vadd.f32 0.0, %v2072
      %v2074 = vpop.f32.mrf.mxu0
      %v2075 = vpop.f32.mrf.mxu0
      %v2076 = vadd.f32 0.0, %v2075
      %v2077 = vpop.f32.mrf.mxu0
      %2078 = vmatprep.mubr.bf16.mxu0 0
      %2079 = vmatmul.mubr.bf16.gmra.mxu0 %v1971
      %v2080 = vpop.f32.mrf.mxu0
      %v2081 = vadd.f32 0.0, %v2080
      %v2082 = vpop.f32.mrf.mxu0
      %v2083 = vpop.f32.mrf.mxu0
      %v2084 = vadd.f32 0.0, %v2083
      %v2085 = vpop.f32.mrf.mxu0
      %2086 = vmatprep.mubr.bf16.mxu0 0
      %2087 = vmatmul.mubr.bf16.gmra.mxu0 %v1974
      %v2088 = vpop.f32.mrf.mxu0
      %v2089 = vadd.f32 0.0, %v2088
      %v2090 = vpop.f32.mrf.mxu0
      %v2091 = vpop.f32.mrf.mxu0
      %v2092 = vadd.f32 0.0, %v2091
      %v2093 = vpop.f32.mrf.mxu0
      %2094 = vmatprep.mubr.bf16.mxu0 0
      %2095 = vmatmul.mubr.bf16.gmra.mxu0 %v1977
      %v2096 = vpop.f32.mrf.mxu0
      %v2097 = vadd.f32 0.0, %v2096
      %v2098 = vpop.f32.mrf.mxu0
      %v2099 = vpop.f32.mrf.mxu0
      %v2100 = vadd.f32 0.0, %v2099
      %v2101 = vpop.f32.mrf.mxu0
      %2102 = vmatprep.mubr.bf16.mxu0 0
      %2103 = vmatmul.mubr.bf16.gmra.mxu0 %v1980
      %v2104 = vpop.f32.mrf.mxu0
      %v2105 = vadd.f32 0.0, %v2104
      %v2106 = vpop.f32.mrf.mxu0
      %v2107 = vpop.f32.mrf.mxu0
      %v2108 = vadd.f32 0.0, %v2107
      %v2109 = vpop.f32.mrf.mxu0
      %2110 = vmatprep.mubr.bf16.mxu0 0
      %2111 = vmatmul.mubr.bf16.gmra.mxu0 %v1983
      %v2112 = vpop.f32.mrf.mxu0
      %v2113 = vadd.f32 0.0, %v2112
      %v2114 = vpop.f32.mrf.mxu0
      %v2115 = vpop.f32.mrf.mxu0
      %v2116 = vadd.f32 0.0, %v2115
      %v2117 = vpop.f32.mrf.mxu0
      %2118 = vmatprep.mubr.bf16.mxu0 0
      %2119 = vmatmul.mubr.bf16.gmra.mxu0 %v1986
      %v2120 = vpop.f32.mrf.mxu0
      %v2121 = vadd.f32 0.0, %v2120
      %v2122 = vpop.f32.mrf.mxu0
      %v2123 = vpop.f32.mrf.mxu0
      %v2124 = vadd.f32 0.0, %v2123
      %v2125 = vpop.f32.mrf.mxu0
      %2126 = vmatprep.mubr.bf16.mxu0 0
      %2127 = vmatmul.mubr.bf16.gmra.mxu0 %v1989
      %v2128 = vpop.f32.mrf.mxu0
      %v2129 = vadd.f32 0.0, %v2128
      %v2130 = vpop.f32.mrf.mxu0
      %v2131 = vpop.f32.mrf.mxu0
      %v2132 = vadd.f32 0.0, %v2131
      %v2133 = vpop.f32.mrf.mxu0
      %2134 = vmatprep.mubr.bf16.mxu0 0
      %2135 = vmatmul.mubr.bf16.gmra.mxu0 %v1992
      %v2136 = vpop.f32.mrf.mxu0
      %v2137 = vadd.f32 0.0, %v2136
      %v2138 = vpop.f32.mrf.mxu0
      %v2139 = vpop.f32.mrf.mxu0
      %v2140 = vadd.f32 0.0, %v2139
      %v2141 = vpop.f32.mrf.mxu0
      %2142 = vmatprep.mubr.bf16.mxu0 0
      %2143 = vmatmul.mubr.bf16.gmra.mxu0 %v1995
      %v2144 = vpop.f32.mrf.mxu0
      %v2145 = vadd.f32 0.0, %v2144
      %v2146 = vpop.f32.mrf.mxu0
      %v2147 = vpop.f32.mrf.mxu0
      %v2148 = vadd.f32 0.0, %v2147
      %v2149 = vpop.f32.mrf.mxu0
      %2150 = vmatprep.mubr.bf16.mxu0 0
      %2151 = vmatmul.mubr.bf16.gmra.mxu0 %v1998
      %v2152 = vpop.f32.mrf.mxu0
      %v2153 = vadd.f32 0.0, %v2152
      %v2154 = vpop.f32.mrf.mxu0
      %v2155 = vpop.f32.mrf.mxu0
      %v2156 = vadd.f32 0.0, %v2155
      %v2157 = vpop.f32.mrf.mxu0
      %2158 = vmatprep.mubr.bf16.mxu0 0
      %2159 = vmatmul.mubr.bf16.gmra.mxu0 %v2001
      %v2160 = vpop.f32.mrf.mxu0
      %v2161 = vadd.f32 0.0, %v2160
      %v2162 = vpop.f32.mrf.mxu0
      %v2163 = vpop.f32.mrf.mxu0
      %v2164 = vadd.f32 0.0, %v2163
      %v2165 = vpop.f32.mrf.mxu0
      %2166 = vdwg.mxu0
      %v2167 = vadd.f32 %v1873, %v2041
      %v2168 = vadd.f32 %v1874, %v2044
      %v2169 = vadd.f32 %v1875, %v2049
      %v2170 = vadd.f32 %v1876, %v2052
      %v2171 = vadd.f32 %v1877, %v2057
      %v2172 = vadd.f32 %v1878, %v2060
      %v2173 = vadd.f32 %v1879, %v2065
      %v2174 = vadd.f32 %v1880, %v2068
      %v2175 = vadd.f32 %v1881, %v2073
      %v2176 = vadd.f32 %v1882, %v2076
      %v2177 = vadd.f32 %v1883, %v2081
      %v2178 = vadd.f32 %v1884, %v2084
      %v2179 = vadd.f32 %v1885, %v2089
      %v2180 = vadd.f32 %v1886, %v2092
      %v2181 = vadd.f32 %v1887, %v2097
      %v2182 = vadd.f32 %v1888, %v2100
      %v2183 = vadd.f32 %v1889, %v2105
      %v2184 = vadd.f32 %v1890, %v2108
      %v2185 = vadd.f32 %v1891, %v2113
      %v2186 = vadd.f32 %v1892, %v2116
      %v2187 = vadd.f32 %v1893, %v2121
      %v2188 = vadd.f32 %v1894, %v2124
      %v2189 = vadd.f32 %v1895, %v2129
      %v2190 = vadd.f32 %v1896, %v2132
      %v2191 = vadd.f32 %v1897, %v2137
      %v2192 = vadd.f32 %v1898, %v2140
      %v2193 = vadd.f32 %v1899, %v2145
      %v2194 = vadd.f32 %v1900, %v2148
      %v2195 = vadd.f32 %v1901, %v2153
      %v2196 = vadd.f32 %v1902, %v2156
      %v2197 = vadd.f32 %v1903, %v2161
      %v2198 = vadd.f32 %v1904, %v2164
      %s2199 = scalar_lea.vmem [#allocation2], 48
      %v2200 = vld [vmem:[%s2199] sm:$0xff]
      %v2201 = vld [vmem:[%s2199 + $0x8] sm:$0xff]
      %v2202 = vld [vmem:[%s2199 + $0x18] sm:$0xff]
      %v2203 = vld [vmem:[%s2199 + $0x20] sm:$0xff]
      %v2204 = vld [vmem:[%s2199 + $0x30] sm:$0xff]
      %v2205 = vld [vmem:[%s2199 + $0x38] sm:$0xff]
      %v2206 = vld [vmem:[%s2199 + $0x48] sm:$0xff]
      %v2207 = vld [vmem:[%s2199 + $0x50] sm:$0xff]
      %v2208 = vld [vmem:[%s2199 + $0x60] sm:$0xff]
      %v2209 = vld [vmem:[%s2199 + $0x68] sm:$0xff]
      %v2210 = vld [vmem:[%s2199 + $0x78] sm:$0xff]
      %v2211 = vld [vmem:[%s2199 + $0x80] sm:$0xff]
      %v2212 = vld [vmem:[%s2199 + $0x90] sm:$0xff]
      %v2213 = vld [vmem:[%s2199 + $0x98] sm:$0xff]
      %v2214 = vld [vmem:[%s2199 + $0xa8] sm:$0xff]
      %v2215 = vld [vmem:[%s2199 + $0xb0] sm:$0xff]
      %v2216 = vld [vmem:[%s2199 + $0xc0] sm:$0xff]
      %v2217 = vld [vmem:[%s2199 + $0xc8] sm:$0xff]
      %v2218 = vld [vmem:[%s2199 + $0xd8] sm:$0xff]
      %v2219 = vld [vmem:[%s2199 + $0xe0] sm:$0xff]
      %v2220 = vld [vmem:[%s2199 + $0xf0] sm:$0xff]
      %v2221 = vld [vmem:[%s2199 + $0xf8] sm:$0xff]
      %v2222 = vld [vmem:[%s2199 + $0x108] sm:$0xff]
      %v2223 = vld [vmem:[%s2199 + $0x110] sm:$0xff]
      %v2224 = vld [vmem:[%s2199 + $0x120] sm:$0xff]
      %v2225 = vld [vmem:[%s2199 + $0x128] sm:$0xff]
      %v2226 = vld [vmem:[%s2199 + $0x138] sm:$0xff]
      %v2227 = vld [vmem:[%s2199 + $0x140] sm:$0xff]
      %v2228 = vld [vmem:[%s2199 + $0x150] sm:$0xff]
      %v2229 = vld [vmem:[%s2199 + $0x158] sm:$0xff]
      %v2230 = vld [vmem:[%s2199 + $0x168] sm:$0xff]
      %v2231 = vld [vmem:[%s2199 + $0x170] sm:$0xff]
      %v2232 = vpack.c.bf16 %v2201, %v2200
      %v2233 = vpack.c.bf16 %v2203, %v2202
      %v2234 = vpack.c.bf16 %v2205, %v2204
      %v2235 = vpack.c.bf16 %v2207, %v2206
      %v2236 = vpack.c.bf16 %v2209, %v2208
      %v2237 = vpack.c.bf16 %v2211, %v2210
      %v2238 = vpack.c.bf16 %v2213, %v2212
      %v2239 = vpack.c.bf16 %v2215, %v2214
      %v2240 = vpack.c.bf16 %v2217, %v2216
      %v2241 = vpack.c.bf16 %v2219, %v2218
      %v2242 = vpack.c.bf16 %v2221, %v2220
      %v2243 = vpack.c.bf16 %v2223, %v2222
      %v2244 = vpack.c.bf16 %v2225, %v2224
      %v2245 = vpack.c.bf16 %v2227, %v2226
      %v2246 = vpack.c.bf16 %v2229, %v2228
      %v2247 = vpack.c.bf16 %v2231, %v2230
      %s2248 = scalar_lea.vmem %s319, 24
      %v2249 = vld [vmem:[%s2248] sm:$0xf]
      %v2251 = vsel %vm596, %v2232, 0
      %v2254 = vsel %vm596, %v2233, 0
      %v2257 = vsel %vm596, %v2234, 0
      %v2260 = vsel %vm596, %v2235, 0
      %v2263 = vsel %vm596, %v2236, 0
      %v2266 = vsel %vm596, %v2237, 0
      %v2269 = vsel %vm596, %v2238, 0
      %v2272 = vsel %vm596, %v2239, 0
      %v2275 = vsel %vm596, %v2240, 0
      %v2278 = vsel %vm596, %v2241, 0
      %v2281 = vsel %vm596, %v2242, 0
      %v2284 = vsel %vm596, %v2243, 0
      %v2287 = vsel %vm596, %v2244, 0
      %v2290 = vsel %vm596, %v2245, 0
      %v2293 = vsel %vm596, %v2246, 0
      %v2296 = vsel %vm596, %v2247, 0
      %v2299 = vsel %vm645, %v2249, 0
      %2301 = vmatprep.subr.bf16.mxu0 0
      %2302 = vmatpush1.bf16.msra.mxu0 0
      %2303 = vmatprep.subr.bf16.mxu0 0
      %2304 = vmatpush1.bf16.msra.mxu0 0
      %2305 = vmatprep.subr.bf16.mxu0 0
      %2306 = vmatpush1.bf16.msra.mxu0 0
      %2307 = vmatprep.subr.bf16.mxu0 0
      %2308 = vmatpush1.bf16.msra.mxu0 0
      %2309 = vmatprep.subr.bf16.mxu0 0
      %2310 = vmatpush1.bf16.msra.mxu0 0
      %2311 = vmatprep.subr.bf16.mxu0 0
      %2312 = vmatpush1.bf16.msra.mxu0 0
      %2313 = vmatprep.subr.bf16.mxu0 0
      %2314 = vmatpush1.bf16.msra.mxu0 0
      %2315 = vmatprep.subr.bf16.mxu0 0
      %2316 = vmatpush1.bf16.msra.mxu0 %v2299
      %2317 = vmatprep.subr.bf16.mxu0 0
      %2318 = vmatpush2.bf16.msra.mxu0 0
      %2319 = vmatprep.subr.bf16.mxu0 0
      %2320 = vmatpush2.bf16.msra.mxu0 0
      %2321 = vmatprep.subr.bf16.mxu0 0
      %2322 = vmatpush2.bf16.msra.mxu0 0
      %2323 = vmatprep.subr.bf16.mxu0 0
      %2324 = vmatpush2.bf16.msra.mxu0 0
      %2325 = vmatprep.subr.bf16.mxu0 0
      %2326 = vmatpush2.bf16.msra.mxu0 0
      %2327 = vmatprep.subr.bf16.mxu0 0
      %2328 = vmatpush2.bf16.msra.mxu0 0
      %2329 = vmatprep.subr.bf16.mxu0 0
      %2330 = vmatpush2.bf16.msra.mxu0 0
      %2331 = vmatprep.subr.bf16.mxu0 0
      %2332 = vmatpush2.bf16.msra.mxu0 0
      %2333 = vmatprep.mubr.bf16.mxu0 0
      %2334 = vmatmul.mubr.bf16.gmra.mxu0 %v2251
      %v2335 = vpop.f32.mrf.mxu0
      %v2336 = vadd.f32 0.0, %v2335
      %v2337 = vpop.f32.mrf.mxu0
      %v2338 = vpop.f32.mrf.mxu0
      %v2339 = vadd.f32 0.0, %v2338
      %v2340 = vpop.f32.mrf.mxu0
      %2341 = vmatprep.mubr.bf16.mxu0 0
      %2342 = vmatmul.mubr.bf16.gmra.mxu0 %v2254
      %v2343 = vpop.f32.mrf.mxu0
      %v2344 = vadd.f32 0.0, %v2343
      %v2345 = vpop.f32.mrf.mxu0
      %v2346 = vpop.f32.mrf.mxu0
      %v2347 = vadd.f32 0.0, %v2346
      %v2348 = vpop.f32.mrf.mxu0
      %2349 = vmatprep.mubr.bf16.mxu0 0
      %2350 = vmatmul.mubr.bf16.gmra.mxu0 %v2257
      %v2351 = vpop.f32.mrf.mxu0
      %v2352 = vadd.f32 0.0, %v2351
      %v2353 = vpop.f32.mrf.mxu0
      %v2354 = vpop.f32.mrf.mxu0
      %v2355 = vadd.f32 0.0, %v2354
      %v2356 = vpop.f32.mrf.mxu0
      %2357 = vmatprep.mubr.bf16.mxu0 0
      %2358 = vmatmul.mubr.bf16.gmra.mxu0 %v2260
      %v2359 = vpop.f32.mrf.mxu0
      %v2360 = vadd.f32 0.0, %v2359
      %v2361 = vpop.f32.mrf.mxu0
      %v2362 = vpop.f32.mrf.mxu0
      %v2363 = vadd.f32 0.0, %v2362
      %v2364 = vpop.f32.mrf.mxu0
      %2365 = vmatprep.mubr.bf16.mxu0 0
      %2366 = vmatmul.mubr.bf16.gmra.mxu0 %v2263
      %v2367 = vpop.f32.mrf.mxu0
      %v2368 = vadd.f32 0.0, %v2367
      %v2369 = vpop.f32.mrf.mxu0
      %v2370 = vpop.f32.mrf.mxu0
      %v2371 = vadd.f32 0.0, %v2370
      %v2372 = vpop.f32.mrf.mxu0
      %2373 = vmatprep.mubr.bf16.mxu0 0
      %2374 = vmatmul.mubr.bf16.gmra.mxu0 %v2266
      %v2375 = vpop.f32.mrf.mxu0
      %v2376 = vadd.f32 0.0, %v2375
      %v2377 = vpop.f32.mrf.mxu0
      %v2378 = vpop.f32.mrf.mxu0
      %v2379 = vadd.f32 0.0, %v2378
      %v2380 = vpop.f32.mrf.mxu0
      %2381 = vmatprep.mubr.bf16.mxu0 0
      %2382 = vmatmul.mubr.bf16.gmra.mxu0 %v2269
      %v2383 = vpop.f32.mrf.mxu0
      %v2384 = vadd.f32 0.0, %v2383
      %v2385 = vpop.f32.mrf.mxu0
      %v2386 = vpop.f32.mrf.mxu0
      %v2387 = vadd.f32 0.0, %v2386
      %v2388 = vpop.f32.mrf.mxu0
      %2389 = vmatprep.mubr.bf16.mxu0 0
      %2390 = vmatmul.mubr.bf16.gmra.mxu0 %v2272
      %v2391 = vpop.f32.mrf.mxu0
      %v2392 = vadd.f32 0.0, %v2391
      %v2393 = vpop.f32.mrf.mxu0
      %v2394 = vpop.f32.mrf.mxu0
      %v2395 = vadd.f32 0.0, %v2394
      %v2396 = vpop.f32.mrf.mxu0
      %2397 = vmatprep.mubr.bf16.mxu0 0
      %2398 = vmatmul.mubr.bf16.gmra.mxu0 %v2275
      %v2399 = vpop.f32.mrf.mxu0
      %v2400 = vadd.f32 0.0, %v2399
      %v2401 = vpop.f32.mrf.mxu0
      %v2402 = vpop.f32.mrf.mxu0
      %v2403 = vadd.f32 0.0, %v2402
      %v2404 = vpop.f32.mrf.mxu0
      %2405 = vmatprep.mubr.bf16.mxu0 0
      %2406 = vmatmul.mubr.bf16.gmra.mxu0 %v2278
      %v2407 = vpop.f32.mrf.mxu0
      %v2408 = vadd.f32 0.0, %v2407
      %v2409 = vpop.f32.mrf.mxu0
      %v2410 = vpop.f32.mrf.mxu0
      %v2411 = vadd.f32 0.0, %v2410
      %v2412 = vpop.f32.mrf.mxu0
      %2413 = vmatprep.mubr.bf16.mxu0 0
      %2414 = vmatmul.mubr.bf16.gmra.mxu0 %v2281
      %v2415 = vpop.f32.mrf.mxu0
      %v2416 = vadd.f32 0.0, %v2415
      %v2417 = vpop.f32.mrf.mxu0
      %v2418 = vpop.f32.mrf.mxu0
      %v2419 = vadd.f32 0.0, %v2418
      %v2420 = vpop.f32.mrf.mxu0
      %2421 = vmatprep.mubr.bf16.mxu0 0
      %2422 = vmatmul.mubr.bf16.gmra.mxu0 %v2284
      %v2423 = vpop.f32.mrf.mxu0
      %v2424 = vadd.f32 0.0, %v2423
      %v2425 = vpop.f32.mrf.mxu0
      %v2426 = vpop.f32.mrf.mxu0
      %v2427 = vadd.f32 0.0, %v2426
      %v2428 = vpop.f32.mrf.mxu0
      %2429 = vmatprep.mubr.bf16.mxu0 0
      %2430 = vmatmul.mubr.bf16.gmra.mxu0 %v2287
      %v2431 = vpop.f32.mrf.mxu0
      %v2432 = vadd.f32 0.0, %v2431
      %v2433 = vpop.f32.mrf.mxu0
      %v2434 = vpop.f32.mrf.mxu0
      %v2435 = vadd.f32 0.0, %v2434
      %v2436 = vpop.f32.mrf.mxu0
      %2437 = vmatprep.mubr.bf16.mxu0 0
      %2438 = vmatmul.mubr.bf16.gmra.mxu0 %v2290
      %v2439 = vpop.f32.mrf.mxu0
      %v2440 = vadd.f32 0.0, %v2439
      %v2441 = vpop.f32.mrf.mxu0
      %v2442 = vpop.f32.mrf.mxu0
      %v2443 = vadd.f32 0.0, %v2442
      %v2444 = vpop.f32.mrf.mxu0
      %2445 = vmatprep.mubr.bf16.mxu0 0
      %2446 = vmatmul.mubr.bf16.gmra.mxu0 %v2293
      %v2447 = vpop.f32.mrf.mxu0
      %v2448 = vadd.f32 0.0, %v2447
      %v2449 = vpop.f32.mrf.mxu0
      %v2450 = vpop.f32.mrf.mxu0
      %v2451 = vadd.f32 0.0, %v2450
      %v2452 = vpop.f32.mrf.mxu0
      %2453 = vmatprep.mubr.bf16.mxu0 0
      %2454 = vmatmul.mubr.bf16.gmra.mxu0 %v2296
      %v2455 = vpop.f32.mrf.mxu0
      %v2456 = vadd.f32 0.0, %v2455
      %v2457 = vpop.f32.mrf.mxu0
      %v2458 = vpop.f32.mrf.mxu0
      %v2459 = vadd.f32 0.0, %v2458
      %v2460 = vpop.f32.mrf.mxu0
      %2461 = vdwg.mxu0
      %v2462 = vadd.f32 %v2167, %v2336
      %v2463 = vadd.f32 %v2168, %v2339
      %v2464 = vadd.f32 %v2169, %v2344
      %v2465 = vadd.f32 %v2170, %v2347
      %v2466 = vadd.f32 %v2171, %v2352
      %v2467 = vadd.f32 %v2172, %v2355
      %v2468 = vadd.f32 %v2173, %v2360
      %v2469 = vadd.f32 %v2174, %v2363
      %v2470 = vadd.f32 %v2175, %v2368
      %v2471 = vadd.f32 %v2176, %v2371
      %v2472 = vadd.f32 %v2177, %v2376
      %v2473 = vadd.f32 %v2178, %v2379
      %v2474 = vadd.f32 %v2179, %v2384
      %v2475 = vadd.f32 %v2180, %v2387
      %v2476 = vadd.f32 %v2181, %v2392
      %v2477 = vadd.f32 %v2182, %v2395
      %v2478 = vadd.f32 %v2183, %v2400
      %v2479 = vadd.f32 %v2184, %v2403
      %v2480 = vadd.f32 %v2185, %v2408
      %v2481 = vadd.f32 %v2186, %v2411
      %v2482 = vadd.f32 %v2187, %v2416
      %v2483 = vadd.f32 %v2188, %v2419
      %v2484 = vadd.f32 %v2189, %v2424
      %v2485 = vadd.f32 %v2190, %v2427
      %v2486 = vadd.f32 %v2191, %v2432
      %v2487 = vadd.f32 %v2192, %v2435
      %v2488 = vadd.f32 %v2193, %v2440
      %v2489 = vadd.f32 %v2194, %v2443
      %v2490 = vadd.f32 %v2195, %v2448
      %v2491 = vadd.f32 %v2196, %v2451
      %v2492 = vadd.f32 %v2197, %v2456
      %v2493 = vadd.f32 %v2198, %v2459
      %v2494 = vld [vmem:[%s2199 + $0x1] sm:$0xff]
      %v2495 = vld [vmem:[%s2199 + $0x9] sm:$0xff]
      %v2496 = vld [vmem:[%s2199 + $0x19] sm:$0xff]
      %v2497 = vld [vmem:[%s2199 + $0x21] sm:$0xff]
      %v2498 = vld [vmem:[%s2199 + $0x31] sm:$0xff]
      %v2499 = vld [vmem:[%s2199 + $0x39] sm:$0xff]
      %v2500 = vld [vmem:[%s2199 + $0x49] sm:$0xff]
      %v2501 = vld [vmem:[%s2199 + $0x51] sm:$0xff]
      %v2502 = vld [vmem:[%s2199 + $0x61] sm:$0xff]
      %v2503 = vld [vmem:[%s2199 + $0x69] sm:$0xff]
      %v2504 = vld [vmem:[%s2199 + $0x79] sm:$0xff]
      %v2505 = vld [vmem:[%s2199 + $0x81] sm:$0xff]
      %v2506 = vld [vmem:[%s2199 + $0x91] sm:$0xff]
      %v2507 = vld [vmem:[%s2199 + $0x99] sm:$0xff]
      %v2508 = vld [vmem:[%s2199 + $0xa9] sm:$0xff]
      %v2509 = vld [vmem:[%s2199 + $0xb1] sm:$0xff]
      %v2510 = vld [vmem:[%s2199 + $0xc1] sm:$0xff]
      %v2511 = vld [vmem:[%s2199 + $0xc9] sm:$0xff]
      %v2512 = vld [vmem:[%s2199 + $0xd9] sm:$0xff]
      %v2513 = vld [vmem:[%s2199 + $0xe1] sm:$0xff]
      %v2514 = vld [vmem:[%s2199 + $0xf1] sm:$0xff]
      %v2515 = vld [vmem:[%s2199 + $0xf9] sm:$0xff]
      %v2516 = vld [vmem:[%s2199 + $0x109] sm:$0xff]
      %v2517 = vld [vmem:[%s2199 + $0x111] sm:$0xff]
      %v2518 = vld [vmem:[%s2199 + $0x121] sm:$0xff]
      %v2519 = vld [vmem:[%s2199 + $0x129] sm:$0xff]
      %v2520 = vld [vmem:[%s2199 + $0x139] sm:$0xff]
      %v2521 = vld [vmem:[%s2199 + $0x141] sm:$0xff]
      %v2522 = vld [vmem:[%s2199 + $0x151] sm:$0xff]
      %v2523 = vld [vmem:[%s2199 + $0x159] sm:$0xff]
      %v2524 = vld [vmem:[%s2199 + $0x169] sm:$0xff]
      %v2525 = vld [vmem:[%s2199 + $0x171] sm:$0xff]
      %v2526 = vpack.c.bf16 %v2495, %v2494
      %v2527 = vpack.c.bf16 %v2497, %v2496
      %v2528 = vpack.c.bf16 %v2499, %v2498
      %v2529 = vpack.c.bf16 %v2501, %v2500
      %v2530 = vpack.c.bf16 %v2503, %v2502
      %v2531 = vpack.c.bf16 %v2505, %v2504
      %v2532 = vpack.c.bf16 %v2507, %v2506
      %v2533 = vpack.c.bf16 %v2509, %v2508
      %v2534 = vpack.c.bf16 %v2511, %v2510
      %v2535 = vpack.c.bf16 %v2513, %v2512
      %v2536 = vpack.c.bf16 %v2515, %v2514
      %v2537 = vpack.c.bf16 %v2517, %v2516
      %v2538 = vpack.c.bf16 %v2519, %v2518
      %v2539 = vpack.c.bf16 %v2521, %v2520
      %v2540 = vpack.c.bf16 %v2523, %v2522
      %v2541 = vpack.c.bf16 %v2525, %v2524
      %s2542 = scalar_lea.vmem %s319, 28
      %v2543 = vld [vmem:[%s2542] sm:$0xf]
      %v2545 = vsel %vm596, %v2526, 0
      %v2548 = vsel %vm596, %v2527, 0
      %v2551 = vsel %vm596, %v2528, 0
      %v2554 = vsel %vm596, %v2529, 0
      %v2557 = vsel %vm596, %v2530, 0
      %v2560 = vsel %vm596, %v2531, 0
      %v2563 = vsel %vm596, %v2532, 0
      %v2566 = vsel %vm596, %v2533, 0
      %v2569 = vsel %vm596, %v2534, 0
      %v2572 = vsel %vm596, %v2535, 0
      %v2575 = vsel %vm596, %v2536, 0
      %v2578 = vsel %vm596, %v2537, 0
      %v2581 = vsel %vm596, %v2538, 0
      %v2584 = vsel %vm596, %v2539, 0
      %v2587 = vsel %vm596, %v2540, 0
      %v2590 = vsel %vm596, %v2541, 0
      %v2593 = vsel %vm645, %v2543, 0
      %2595 = vmatprep.subr.bf16.mxu0 0
      %2596 = vmatpush1.bf16.msra.mxu0 0
      %2597 = vmatprep.subr.bf16.mxu0 0
      %2598 = vmatpush1.bf16.msra.mxu0 0
      %2599 = vmatprep.subr.bf16.mxu0 0
      %2600 = vmatpush1.bf16.msra.mxu0 0
      %2601 = vmatprep.subr.bf16.mxu0 0
      %2602 = vmatpush1.bf16.msra.mxu0 0
      %2603 = vmatprep.subr.bf16.mxu0 0
      %2604 = vmatpush1.bf16.msra.mxu0 0
      %2605 = vmatprep.subr.bf16.mxu0 0
      %2606 = vmatpush1.bf16.msra.mxu0 0
      %2607 = vmatprep.subr.bf16.mxu0 0
      %2608 = vmatpush1.bf16.msra.mxu0 0
      %2609 = vmatprep.subr.bf16.mxu0 0
      %2610 = vmatpush1.bf16.msra.mxu0 %v2593
      %2611 = vmatprep.subr.bf16.mxu0 0
      %2612 = vmatpush2.bf16.msra.mxu0 0
      %2613 = vmatprep.subr.bf16.mxu0 0
      %2614 = vmatpush2.bf16.msra.mxu0 0
      %2615 = vmatprep.subr.bf16.mxu0 0
      %2616 = vmatpush2.bf16.msra.mxu0 0
      %2617 = vmatprep.subr.bf16.mxu0 0
      %2618 = vmatpush2.bf16.msra.mxu0 0
      %2619 = vmatprep.subr.bf16.mxu0 0
      %2620 = vmatpush2.bf16.msra.mxu0 0
      %2621 = vmatprep.subr.bf16.mxu0 0
      %2622 = vmatpush2.bf16.msra.mxu0 0
      %2623 = vmatprep.subr.bf16.mxu0 0
      %2624 = vmatpush2.bf16.msra.mxu0 0
      %2625 = vmatprep.subr.bf16.mxu0 0
      %2626 = vmatpush2.bf16.msra.mxu0 0
      %2627 = vmatprep.mubr.bf16.mxu0 0
      %2628 = vmatmul.mubr.bf16.gmra.mxu0 %v2545
      %v2629 = vpop.f32.mrf.mxu0
      %v2630 = vadd.f32 0.0, %v2629
      %v2631 = vpop.f32.mrf.mxu0
      %v2632 = vpop.f32.mrf.mxu0
      %v2633 = vadd.f32 0.0, %v2632
      %v2634 = vpop.f32.mrf.mxu0
      %2635 = vmatprep.mubr.bf16.mxu0 0
      %2636 = vmatmul.mubr.bf16.gmra.mxu0 %v2548
      %v2637 = vpop.f32.mrf.mxu0
      %v2638 = vadd.f32 0.0, %v2637
      %v2639 = vpop.f32.mrf.mxu0
      %v2640 = vpop.f32.mrf.mxu0
      %v2641 = vadd.f32 0.0, %v2640
      %v2642 = vpop.f32.mrf.mxu0
      %2643 = vmatprep.mubr.bf16.mxu0 0
      %2644 = vmatmul.mubr.bf16.gmra.mxu0 %v2551
      %v2645 = vpop.f32.mrf.mxu0
      %v2646 = vadd.f32 0.0, %v2645
      %v2647 = vpop.f32.mrf.mxu0
      %v2648 = vpop.f32.mrf.mxu0
      %v2649 = vadd.f32 0.0, %v2648
      %v2650 = vpop.f32.mrf.mxu0
      %2651 = vmatprep.mubr.bf16.mxu0 0
      %2652 = vmatmul.mubr.bf16.gmra.mxu0 %v2554
      %v2653 = vpop.f32.mrf.mxu0
      %v2654 = vadd.f32 0.0, %v2653
      %v2655 = vpop.f32.mrf.mxu0
      %v2656 = vpop.f32.mrf.mxu0
      %v2657 = vadd.f32 0.0, %v2656
      %v2658 = vpop.f32.mrf.mxu0
      %2659 = vmatprep.mubr.bf16.mxu0 0
      %2660 = vmatmul.mubr.bf16.gmra.mxu0 %v2557
      %v2661 = vpop.f32.mrf.mxu0
      %v2662 = vadd.f32 0.0, %v2661
      %v2663 = vpop.f32.mrf.mxu0
      %v2664 = vpop.f32.mrf.mxu0
      %v2665 = vadd.f32 0.0, %v2664
      %v2666 = vpop.f32.mrf.mxu0
      %2667 = vmatprep.mubr.bf16.mxu0 0
      %2668 = vmatmul.mubr.bf16.gmra.mxu0 %v2560
      %v2669 = vpop.f32.mrf.mxu0
      %v2670 = vadd.f32 0.0, %v2669
      %v2671 = vpop.f32.mrf.mxu0
      %v2672 = vpop.f32.mrf.mxu0
      %v2673 = vadd.f32 0.0, %v2672
      %v2674 = vpop.f32.mrf.mxu0
      %2675 = vmatprep.mubr.bf16.mxu0 0
      %2676 = vmatmul.mubr.bf16.gmra.mxu0 %v2563
      %v2677 = vpop.f32.mrf.mxu0
      %v2678 = vadd.f32 0.0, %v2677
      %v2679 = vpop.f32.mrf.mxu0
      %v2680 = vpop.f32.mrf.mxu0
      %v2681 = vadd.f32 0.0, %v2680
      %v2682 = vpop.f32.mrf.mxu0
      %2683 = vmatprep.mubr.bf16.mxu0 0
      %2684 = vmatmul.mubr.bf16.gmra.mxu0 %v2566
      %v2685 = vpop.f32.mrf.mxu0
      %v2686 = vadd.f32 0.0, %v2685
      %v2687 = vpop.f32.mrf.mxu0
      %v2688 = vpop.f32.mrf.mxu0
      %v2689 = vadd.f32 0.0, %v2688
      %v2690 = vpop.f32.mrf.mxu0
      %2691 = vmatprep.mubr.bf16.mxu0 0
      %2692 = vmatmul.mubr.bf16.gmra.mxu0 %v2569
      %v2693 = vpop.f32.mrf.mxu0
      %v2694 = vadd.f32 0.0, %v2693
      %v2695 = vpop.f32.mrf.mxu0
      %v2696 = vpop.f32.mrf.mxu0
      %v2697 = vadd.f32 0.0, %v2696
      %v2698 = vpop.f32.mrf.mxu0
      %2699 = vmatprep.mubr.bf16.mxu0 0
      %2700 = vmatmul.mubr.bf16.gmra.mxu0 %v2572
      %v2701 = vpop.f32.mrf.mxu0
      %v2702 = vadd.f32 0.0, %v2701
      %v2703 = vpop.f32.mrf.mxu0
      %v2704 = vpop.f32.mrf.mxu0
      %v2705 = vadd.f32 0.0, %v2704
      %v2706 = vpop.f32.mrf.mxu0
      %2707 = vmatprep.mubr.bf16.mxu0 0
      %2708 = vmatmul.mubr.bf16.gmra.mxu0 %v2575
      %v2709 = vpop.f32.mrf.mxu0
      %v2710 = vadd.f32 0.0, %v2709
      %v2711 = vpop.f32.mrf.mxu0
      %v2712 = vpop.f32.mrf.mxu0
      %v2713 = vadd.f32 0.0, %v2712
      %v2714 = vpop.f32.mrf.mxu0
      %2715 = vmatprep.mubr.bf16.mxu0 0
      %2716 = vmatmul.mubr.bf16.gmra.mxu0 %v2578
      %v2717 = vpop.f32.mrf.mxu0
      %v2718 = vadd.f32 0.0, %v2717
      %v2719 = vpop.f32.mrf.mxu0
      %v2720 = vpop.f32.mrf.mxu0
      %v2721 = vadd.f32 0.0, %v2720
      %v2722 = vpop.f32.mrf.mxu0
      %2723 = vmatprep.mubr.bf16.mxu0 0
      %2724 = vmatmul.mubr.bf16.gmra.mxu0 %v2581
      %v2725 = vpop.f32.mrf.mxu0
      %v2726 = vadd.f32 0.0, %v2725
      %v2727 = vpop.f32.mrf.mxu0
      %v2728 = vpop.f32.mrf.mxu0
      %v2729 = vadd.f32 0.0, %v2728
      %v2730 = vpop.f32.mrf.mxu0
      %2731 = vmatprep.mubr.bf16.mxu0 0
      %2732 = vmatmul.mubr.bf16.gmra.mxu0 %v2584
      %v2733 = vpop.f32.mrf.mxu0
      %v2734 = vadd.f32 0.0, %v2733
      %v2735 = vpop.f32.mrf.mxu0
      %v2736 = vpop.f32.mrf.mxu0
      %v2737 = vadd.f32 0.0, %v2736
      %v2738 = vpop.f32.mrf.mxu0
      %2739 = vmatprep.mubr.bf16.mxu0 0
      %2740 = vmatmul.mubr.bf16.gmra.mxu0 %v2587
      %v2741 = vpop.f32.mrf.mxu0
      %v2742 = vadd.f32 0.0, %v2741
      %v2743 = vpop.f32.mrf.mxu0
      %v2744 = vpop.f32.mrf.mxu0
      %v2745 = vadd.f32 0.0, %v2744
      %v2746 = vpop.f32.mrf.mxu0
      %2747 = vmatprep.mubr.bf16.mxu0 0
      %2748 = vmatmul.mubr.bf16.gmra.mxu0 %v2590
      %v2749 = vpop.f32.mrf.mxu0
      %v2750 = vadd.f32 0.0, %v2749
      %v2751 = vpop.f32.mrf.mxu0
      %v2752 = vpop.f32.mrf.mxu0
      %v2753 = vadd.f32 0.0, %v2752
      %v2754 = vpop.f32.mrf.mxu0
      %2755 = vdwg.mxu0
      %v2756 = vadd.f32 %v2462, %v2630
      %v2757 = vadd.f32 %v2463, %v2633
      %v2758 = vadd.f32 %v2464, %v2638
      %v2759 = vadd.f32 %v2465, %v2641
      %v2760 = vadd.f32 %v2466, %v2646
      %v2761 = vadd.f32 %v2467, %v2649
      %v2762 = vadd.f32 %v2468, %v2654
      %v2763 = vadd.f32 %v2469, %v2657
      %v2764 = vadd.f32 %v2470, %v2662
      %v2765 = vadd.f32 %v2471, %v2665
      %v2766 = vadd.f32 %v2472, %v2670
      %v2767 = vadd.f32 %v2473, %v2673
      %v2768 = vadd.f32 %v2474, %v2678
      %v2769 = vadd.f32 %v2475, %v2681
      %v2770 = vadd.f32 %v2476, %v2686
      %v2771 = vadd.f32 %v2477, %v2689
      %v2772 = vadd.f32 %v2478, %v2694
      %v2773 = vadd.f32 %v2479, %v2697
      %v2774 = vadd.f32 %v2480, %v2702
      %v2775 = vadd.f32 %v2481, %v2705
      %v2776 = vadd.f32 %v2482, %v2710
      %v2777 = vadd.f32 %v2483, %v2713
      %v2778 = vadd.f32 %v2484, %v2718
      %v2779 = vadd.f32 %v2485, %v2721
      %v2780 = vadd.f32 %v2486, %v2726
      %v2781 = vadd.f32 %v2487, %v2729
      %v2782 = vadd.f32 %v2488, %v2734
      %v2783 = vadd.f32 %v2489, %v2737
      %v2784 = vadd.f32 %v2490, %v2742
      %v2785 = vadd.f32 %v2491, %v2745
      %v2786 = vadd.f32 %v2492, %v2750
      %v2787 = vadd.f32 %v2493, %v2753
      %v2788 = vld [vmem:[%s2199 + $0x2] sm:$0xff]
      %v2789 = vld [vmem:[%s2199 + $0xa] sm:$0xff]
      %v2790 = vld [vmem:[%s2199 + $0x1a] sm:$0xff]
      %v2791 = vld [vmem:[%s2199 + $0x22] sm:$0xff]
      %v2792 = vld [vmem:[%s2199 + $0x32] sm:$0xff]
      %v2793 = vld [vmem:[%s2199 + $0x3a] sm:$0xff]
      %v2794 = vld [vmem:[%s2199 + $0x4a] sm:$0xff]
      %v2795 = vld [vmem:[%s2199 + $0x52] sm:$0xff]
      %v2796 = vld [vmem:[%s2199 + $0x62] sm:$0xff]
      %v2797 = vld [vmem:[%s2199 + $0x6a] sm:$0xff]
      %v2798 = vld [vmem:[%s2199 + $0x7a] sm:$0xff]
      %v2799 = vld [vmem:[%s2199 + $0x82] sm:$0xff]
      %v2800 = vld [vmem:[%s2199 + $0x92] sm:$0xff]
      %v2801 = vld [vmem:[%s2199 + $0x9a] sm:$0xff]
      %v2802 = vld [vmem:[%s2199 + $0xaa] sm:$0xff]
      %v2803 = vld [vmem:[%s2199 + $0xb2] sm:$0xff]
      %v2804 = vld [vmem:[%s2199 + $0xc2] sm:$0xff]
      %v2805 = vld [vmem:[%s2199 + $0xca] sm:$0xff]
      %v2806 = vld [vmem:[%s2199 + $0xda] sm:$0xff]
      %v2807 = vld [vmem:[%s2199 + $0xe2] sm:$0xff]
      %v2808 = vld [vmem:[%s2199 + $0xf2] sm:$0xff]
      %v2809 = vld [vmem:[%s2199 + $0xfa] sm:$0xff]
      %v2810 = vld [vmem:[%s2199 + $0x10a] sm:$0xff]
      %v2811 = vld [vmem:[%s2199 + $0x112] sm:$0xff]
      %v2812 = vld [vmem:[%s2199 + $0x122] sm:$0xff]
      %v2813 = vld [vmem:[%s2199 + $0x12a] sm:$0xff]
      %v2814 = vld [vmem:[%s2199 + $0x13a] sm:$0xff]
      %v2815 = vld [vmem:[%s2199 + $0x142] sm:$0xff]
      %v2816 = vld [vmem:[%s2199 + $0x152] sm:$0xff]
      %v2817 = vld [vmem:[%s2199 + $0x15a] sm:$0xff]
      %v2818 = vld [vmem:[%s2199 + $0x16a] sm:$0xff]
      %v2819 = vld [vmem:[%s2199 + $0x172] sm:$0xff]
      %v2820 = vpack.c.bf16 %v2789, %v2788
      %v2821 = vpack.c.bf16 %v2791, %v2790
      %v2822 = vpack.c.bf16 %v2793, %v2792
      %v2823 = vpack.c.bf16 %v2795, %v2794
      %v2824 = vpack.c.bf16 %v2797, %v2796
      %v2825 = vpack.c.bf16 %v2799, %v2798
      %v2826 = vpack.c.bf16 %v2801, %v2800
      %v2827 = vpack.c.bf16 %v2803, %v2802
      %v2828 = vpack.c.bf16 %v2805, %v2804
      %v2829 = vpack.c.bf16 %v2807, %v2806
      %v2830 = vpack.c.bf16 %v2809, %v2808
      %v2831 = vpack.c.bf16 %v2811, %v2810
      %v2832 = vpack.c.bf16 %v2813, %v2812
      %v2833 = vpack.c.bf16 %v2815, %v2814
      %v2834 = vpack.c.bf16 %v2817, %v2816
      %v2835 = vpack.c.bf16 %v2819, %v2818
      %s2836 = scalar_lea.vmem %s319, 32
      %v2837 = vld [vmem:[%s2836] sm:$0xf]
      %v2839 = vsel %vm596, %v2820, 0
      %v2842 = vsel %vm596, %v2821, 0
      %v2845 = vsel %vm596, %v2822, 0
      %v2848 = vsel %vm596, %v2823, 0
      %v2851 = vsel %vm596, %v2824, 0
      %v2854 = vsel %vm596, %v2825, 0
      %v2857 = vsel %vm596, %v2826, 0
      %v2860 = vsel %vm596, %v2827, 0
      %v2863 = vsel %vm596, %v2828, 0
      %v2866 = vsel %vm596, %v2829, 0
      %v2869 = vsel %vm596, %v2830, 0
      %v2872 = vsel %vm596, %v2831, 0
      %v2875 = vsel %vm596, %v2832, 0
      %v2878 = vsel %vm596, %v2833, 0
      %v2881 = vsel %vm596, %v2834, 0
      %v2884 = vsel %vm596, %v2835, 0
      %v2887 = vsel %vm645, %v2837, 0
      %2889 = vmatprep.subr.bf16.mxu0 0
      %2890 = vmatpush1.bf16.msra.mxu0 0
      %2891 = vmatprep.subr.bf16.mxu0 0
      %2892 = vmatpush1.bf16.msra.mxu0 0
      %2893 = vmatprep.subr.bf16.mxu0 0
      %2894 = vmatpush1.bf16.msra.mxu0 0
      %2895 = vmatprep.subr.bf16.mxu0 0
      %2896 = vmatpush1.bf16.msra.mxu0 0
      %2897 = vmatprep.subr.bf16.mxu0 0
      %2898 = vmatpush1.bf16.msra.mxu0 0
      %2899 = vmatprep.subr.bf16.mxu0 0
      %2900 = vmatpush1.bf16.msra.mxu0 0
      %2901 = vmatprep.subr.bf16.mxu0 0
      %2902 = vmatpush1.bf16.msra.mxu0 0
      %2903 = vmatprep.subr.bf16.mxu0 0
      %2904 = vmatpush1.bf16.msra.mxu0 %v2887
      %2905 = vmatprep.subr.bf16.mxu0 0
      %2906 = vmatpush2.bf16.msra.mxu0 0
      %2907 = vmatprep.subr.bf16.mxu0 0
      %2908 = vmatpush2.bf16.msra.mxu0 0
      %2909 = vmatprep.subr.bf16.mxu0 0
      %2910 = vmatpush2.bf16.msra.mxu0 0
      %2911 = vmatprep.subr.bf16.mxu0 0
      %2912 = vmatpush2.bf16.msra.mxu0 0
      %2913 = vmatprep.subr.bf16.mxu0 0
      %2914 = vmatpush2.bf16.msra.mxu0 0
      %2915 = vmatprep.subr.bf16.mxu0 0
      %2916 = vmatpush2.bf16.msra.mxu0 0
      %2917 = vmatprep.subr.bf16.mxu0 0
      %2918 = vmatpush2.bf16.msra.mxu0 0
      %2919 = vmatprep.subr.bf16.mxu0 0
      %2920 = vmatpush2.bf16.msra.mxu0 0
      %2921 = vmatprep.mubr.bf16.mxu0 0
      %2922 = vmatmul.mubr.bf16.gmra.mxu0 %v2839
      %v2923 = vpop.f32.mrf.mxu0
      %v2924 = vadd.f32 0.0, %v2923
      %v2925 = vpop.f32.mrf.mxu0
      %v2926 = vpop.f32.mrf.mxu0
      %v2927 = vadd.f32 0.0, %v2926
      %v2928 = vpop.f32.mrf.mxu0
      %2929 = vmatprep.mubr.bf16.mxu0 0
      %2930 = vmatmul.mubr.bf16.gmra.mxu0 %v2842
      %v2931 = vpop.f32.mrf.mxu0
      %v2932 = vadd.f32 0.0, %v2931
      %v2933 = vpop.f32.mrf.mxu0
      %v2934 = vpop.f32.mrf.mxu0
      %v2935 = vadd.f32 0.0, %v2934
      %v2936 = vpop.f32.mrf.mxu0
      %2937 = vmatprep.mubr.bf16.mxu0 0
      %2938 = vmatmul.mubr.bf16.gmra.mxu0 %v2845
      %v2939 = vpop.f32.mrf.mxu0
      %v2940 = vadd.f32 0.0, %v2939
      %v2941 = vpop.f32.mrf.mxu0
      %v2942 = vpop.f32.mrf.mxu0
      %v2943 = vadd.f32 0.0, %v2942
      %v2944 = vpop.f32.mrf.mxu0
      %2945 = vmatprep.mubr.bf16.mxu0 0
      %2946 = vmatmul.mubr.bf16.gmra.mxu0 %v2848
      %v2947 = vpop.f32.mrf.mxu0
      %v2948 = vadd.f32 0.0, %v2947
      %v2949 = vpop.f32.mrf.mxu0
      %v2950 = vpop.f32.mrf.mxu0
      %v2951 = vadd.f32 0.0, %v2950
      %v2952 = vpop.f32.mrf.mxu0
      %2953 = vmatprep.mubr.bf16.mxu0 0
      %2954 = vmatmul.mubr.bf16.gmra.mxu0 %v2851
      %v2955 = vpop.f32.mrf.mxu0
      %v2956 = vadd.f32 0.0, %v2955
      %v2957 = vpop.f32.mrf.mxu0
      %v2958 = vpop.f32.mrf.mxu0
      %v2959 = vadd.f32 0.0, %v2958
      %v2960 = vpop.f32.mrf.mxu0
      %2961 = vmatprep.mubr.bf16.mxu0 0
      %2962 = vmatmul.mubr.bf16.gmra.mxu0 %v2854
      %v2963 = vpop.f32.mrf.mxu0
      %v2964 = vadd.f32 0.0, %v2963
      %v2965 = vpop.f32.mrf.mxu0
      %v2966 = vpop.f32.mrf.mxu0
      %v2967 = vadd.f32 0.0, %v2966
      %v2968 = vpop.f32.mrf.mxu0
      %2969 = vmatprep.mubr.bf16.mxu0 0
      %2970 = vmatmul.mubr.bf16.gmra.mxu0 %v2857
      %v2971 = vpop.f32.mrf.mxu0
      %v2972 = vadd.f32 0.0, %v2971
      %v2973 = vpop.f32.mrf.mxu0
      %v2974 = vpop.f32.mrf.mxu0
      %v2975 = vadd.f32 0.0, %v2974
      %v2976 = vpop.f32.mrf.mxu0
      %2977 = vmatprep.mubr.bf16.mxu0 0
      %2978 = vmatmul.mubr.bf16.gmra.mxu0 %v2860
      %v2979 = vpop.f32.mrf.mxu0
      %v2980 = vadd.f32 0.0, %v2979
      %v2981 = vpop.f32.mrf.mxu0
      %v2982 = vpop.f32.mrf.mxu0
      %v2983 = vadd.f32 0.0, %v2982
      %v2984 = vpop.f32.mrf.mxu0
      %2985 = vmatprep.mubr.bf16.mxu0 0
      %2986 = vmatmul.mubr.bf16.gmra.mxu0 %v2863
      %v2987 = vpop.f32.mrf.mxu0
      %v2988 = vadd.f32 0.0, %v2987
      %v2989 = vpop.f32.mrf.mxu0
      %v2990 = vpop.f32.mrf.mxu0
      %v2991 = vadd.f32 0.0, %v2990
      %v2992 = vpop.f32.mrf.mxu0
      %2993 = vmatprep.mubr.bf16.mxu0 0
      %2994 = vmatmul.mubr.bf16.gmra.mxu0 %v2866
      %v2995 = vpop.f32.mrf.mxu0
      %v2996 = vadd.f32 0.0, %v2995
      %v2997 = vpop.f32.mrf.mxu0
      %v2998 = vpop.f32.mrf.mxu0
      %v2999 = vadd.f32 0.0, %v2998
      %v3000 = vpop.f32.mrf.mxu0
      %3001 = vmatprep.mubr.bf16.mxu0 0
      %3002 = vmatmul.mubr.bf16.gmra.mxu0 %v2869
      %v3003 = vpop.f32.mrf.mxu0
      %v3004 = vadd.f32 0.0, %v3003
      %v3005 = vpop.f32.mrf.mxu0
      %v3006 = vpop.f32.mrf.mxu0
      %v3007 = vadd.f32 0.0, %v3006
      %v3008 = vpop.f32.mrf.mxu0
      %3009 = vmatprep.mubr.bf16.mxu0 0
      %3010 = vmatmul.mubr.bf16.gmra.mxu0 %v2872
      %v3011 = vpop.f32.mrf.mxu0
      %v3012 = vadd.f32 0.0, %v3011
      %v3013 = vpop.f32.mrf.mxu0
      %v3014 = vpop.f32.mrf.mxu0
      %v3015 = vadd.f32 0.0, %v3014
      %v3016 = vpop.f32.mrf.mxu0
      %3017 = vmatprep.mubr.bf16.mxu0 0
      %3018 = vmatmul.mubr.bf16.gmra.mxu0 %v2875
      %v3019 = vpop.f32.mrf.mxu0
      %v3020 = vadd.f32 0.0, %v3019
      %v3021 = vpop.f32.mrf.mxu0
      %v3022 = vpop.f32.mrf.mxu0
      %v3023 = vadd.f32 0.0, %v3022
      %v3024 = vpop.f32.mrf.mxu0
      %3025 = vmatprep.mubr.bf16.mxu0 0
      %3026 = vmatmul.mubr.bf16.gmra.mxu0 %v2878
      %v3027 = vpop.f32.mrf.mxu0
      %v3028 = vadd.f32 0.0, %v3027
      %v3029 = vpop.f32.mrf.mxu0
      %v3030 = vpop.f32.mrf.mxu0
      %v3031 = vadd.f32 0.0, %v3030
      %v3032 = vpop.f32.mrf.mxu0
      %3033 = vmatprep.mubr.bf16.mxu0 0
      %3034 = vmatmul.mubr.bf16.gmra.mxu0 %v2881
      %v3035 = vpop.f32.mrf.mxu0
      %v3036 = vadd.f32 0.0, %v3035
      %v3037 = vpop.f32.mrf.mxu0
      %v3038 = vpop.f32.mrf.mxu0
      %v3039 = vadd.f32 0.0, %v3038
      %v3040 = vpop.f32.mrf.mxu0
      %3041 = vmatprep.mubr.bf16.mxu0 0
      %3042 = vmatmul.mubr.bf16.gmra.mxu0 %v2884
      %v3043 = vpop.f32.mrf.mxu0
      %v3044 = vadd.f32 0.0, %v3043
      %v3045 = vpop.f32.mrf.mxu0
      %v3046 = vpop.f32.mrf.mxu0
      %v3047 = vadd.f32 0.0, %v3046
      %v3048 = vpop.f32.mrf.mxu0
      %3049 = vdwg.mxu0
      %v3050 = vadd.f32 %v2756, %v2924
      %v3051 = vadd.f32 %v2757, %v2927
      %v3052 = vadd.f32 %v2758, %v2932
      %v3053 = vadd.f32 %v2759, %v2935
      %v3054 = vadd.f32 %v2760, %v2940
      %v3055 = vadd.f32 %v2761, %v2943
      %v3056 = vadd.f32 %v2762, %v2948
      %v3057 = vadd.f32 %v2763, %v2951
      %v3058 = vadd.f32 %v2764, %v2956
      %v3059 = vadd.f32 %v2765, %v2959
      %v3060 = vadd.f32 %v2766, %v2964
      %v3061 = vadd.f32 %v2767, %v2967
      %v3062 = vadd.f32 %v2768, %v2972
      %v3063 = vadd.f32 %v2769, %v2975
      %v3064 = vadd.f32 %v2770, %v2980
      %v3065 = vadd.f32 %v2771, %v2983
      %v3066 = vadd.f32 %v2772, %v2988
      %v3067 = vadd.f32 %v2773, %v2991
      %v3068 = vadd.f32 %v2774, %v2996
      %v3069 = vadd.f32 %v2775, %v2999
      %v3070 = vadd.f32 %v2776, %v3004
      %v3071 = vadd.f32 %v2777, %v3007
      %v3072 = vadd.f32 %v2778, %v3012
      %v3073 = vadd.f32 %v2779, %v3015
      %v3074 = vadd.f32 %v2780, %v3020
      %v3075 = vadd.f32 %v2781, %v3023
      %v3076 = vadd.f32 %v2782, %v3028
      %v3077 = vadd.f32 %v2783, %v3031
      %v3078 = vadd.f32 %v2784, %v3036
      %v3079 = vadd.f32 %v2785, %v3039
      %v3080 = vadd.f32 %v2786, %v3044
      %v3081 = vadd.f32 %v2787, %v3047
      %v3082 = vmax.f32 %v3050, 0.0
      %v3083 = vmax.f32 %v3051, 0.0
      %v3084 = vmax.f32 %v3052, 0.0
      %v3085 = vmax.f32 %v3053, 0.0
      %v3086 = vmax.f32 %v3054, 0.0
      %v3087 = vmax.f32 %v3055, 0.0
      %v3088 = vmax.f32 %v3056, 0.0
      %v3089 = vmax.f32 %v3057, 0.0
      %v3090 = vmax.f32 %v3058, 0.0
      %v3091 = vmax.f32 %v3059, 0.0
      %v3092 = vmax.f32 %v3060, 0.0
      %v3093 = vmax.f32 %v3061, 0.0
      %v3094 = vmax.f32 %v3062, 0.0
      %v3095 = vmax.f32 %v3063, 0.0
      %v3096 = vmax.f32 %v3064, 0.0
      %v3097 = vmax.f32 %v3065, 0.0
      %v3098 = vmax.f32 %v3066, 0.0
      %v3099 = vmax.f32 %v3067, 0.0
      %v3100 = vmax.f32 %v3068, 0.0
      %v3101 = vmax.f32 %v3069, 0.0
      %v3102 = vmax.f32 %v3070, 0.0
      %v3103 = vmax.f32 %v3071, 0.0
      %v3104 = vmax.f32 %v3072, 0.0
      %v3105 = vmax.f32 %v3073, 0.0
      %v3106 = vmax.f32 %v3074, 0.0
      %v3107 = vmax.f32 %v3075, 0.0
      %v3108 = vmax.f32 %v3076, 0.0
      %v3109 = vmax.f32 %v3077, 0.0
      %v3110 = vmax.f32 %v3078, 0.0
      %v3111 = vmax.f32 %v3079, 0.0
      %v3112 = vmax.f32 %v3080, 0.0
      %v3113 = vmax.f32 %v3081, 0.0
      %s3114 = scalar_lea.vmem [#allocation3], 24
      %3115 = vst.msk [vmem:[%s3114 + $0x1] sm:$0xff] %vm596, %v3082
      %3116 = vst.msk [vmem:[%s3114 + $0x9] sm:$0xff] %vm596, %v3083
      %3117 = vst.msk [vmem:[%s3114 + $0x19] sm:$0xff] %vm596, %v3084
      %3118 = vst.msk [vmem:[%s3114 + $0x21] sm:$0xff] %vm596, %v3085
      %3119 = vst.msk [vmem:[%s3114 + $0x31] sm:$0xff] %vm596, %v3086
      %3120 = vst.msk [vmem:[%s3114 + $0x39] sm:$0xff] %vm596, %v3087
      %3121 = vst.msk [vmem:[%s3114 + $0x49] sm:$0xff] %vm596, %v3088
      %3122 = vst.msk [vmem:[%s3114 + $0x51] sm:$0xff] %vm596, %v3089
      %3123 = vst.msk [vmem:[%s3114 + $0x61] sm:$0xff] %vm596, %v3090
      %3124 = vst.msk [vmem:[%s3114 + $0x69] sm:$0xff] %vm596, %v3091
      %3125 = vst.msk [vmem:[%s3114 + $0x79] sm:$0xff] %vm596, %v3092
      %3126 = vst.msk [vmem:[%s3114 + $0x81] sm:$0xff] %vm596, %v3093
      %3127 = vst.msk [vmem:[%s3114 + $0x91] sm:$0xff] %vm596, %v3094
      %3128 = vst.msk [vmem:[%s3114 + $0x99] sm:$0xff] %vm596, %v3095
      %3129 = vst.msk [vmem:[%s3114 + $0xa9] sm:$0xff] %vm596, %v3096
      %3130 = vst.msk [vmem:[%s3114 + $0xb1] sm:$0xff] %vm596, %v3097
      %3131 = vst.msk [vmem:[%s3114 + $0xc1] sm:$0xff] %vm596, %v3098
      %3132 = vst.msk [vmem:[%s3114 + $0xc9] sm:$0xff] %vm596, %v3099
      %3133 = vst.msk [vmem:[%s3114 + $0xd9] sm:$0xff] %vm596, %v3100
      %3134 = vst.msk [vmem:[%s3114 + $0xe1] sm:$0xff] %vm596, %v3101
      %3135 = vst.msk [vmem:[%s3114 + $0xf1] sm:$0xff] %vm596, %v3102
      %3136 = vst.msk [vmem:[%s3114 + $0xf9] sm:$0xff] %vm596, %v3103
      %3137 = vst.msk [vmem:[%s3114 + $0x109] sm:$0xff] %vm596, %v3104
      %3138 = vst.msk [vmem:[%s3114 + $0x111] sm:$0xff] %vm596, %v3105
      %3139 = vst.msk [vmem:[%s3114 + $0x121] sm:$0xff] %vm596, %v3106
      %3140 = vst.msk [vmem:[%s3114 + $0x129] sm:$0xff] %vm596, %v3107
      %3141 = vst.msk [vmem:[%s3114 + $0x139] sm:$0xff] %vm596, %v3108
      %3142 = vst.msk [vmem:[%s3114 + $0x141] sm:$0xff] %vm596, %v3109
      %3143 = vst.msk [vmem:[%s3114 + $0x151] sm:$0xff] %vm596, %v3110
      %3144 = vst.msk [vmem:[%s3114 + $0x159] sm:$0xff] %vm596, %v3111
      %3145 = vst.msk [vmem:[%s3114 + $0x169] sm:$0xff] %vm596, %v3112
      %3146 = vst.msk [vmem:[%s3114 + $0x171] sm:$0xff] %vm596, %v3113
      %v3147 = vld [vmem:[#allocation3] sm:$0xff]
      %v3148 = vld [vmem:[#allocation3 + $0x8] sm:$0xff]
      %v3149 = vld [vmem:[#allocation3 + $0x18] sm:$0xff]
      %v3150 = vld [vmem:[#allocation3 + $0x20] sm:$0xff]
      %v3151 = vld [vmem:[#allocation3 + $0x30] sm:$0xff]
      %v3152 = vld [vmem:[#allocation3 + $0x38] sm:$0xff]
      %v3153 = vld [vmem:[#allocation3 + $0x48] sm:$0xff]
      %v3154 = vld [vmem:[#allocation3 + $0x50] sm:$0xff]
      %v3155 = vld [vmem:[#allocation3 + $0x60] sm:$0xff]
      %v3156 = vld [vmem:[#allocation3 + $0x68] sm:$0xff]
      %v3157 = vld [vmem:[#allocation3 + $0x78] sm:$0xff]
      %v3158 = vld [vmem:[#allocation3 + $0x80] sm:$0xff]
      %v3159 = vld [vmem:[#allocation3 + $0x90] sm:$0xff]
      %v3160 = vld [vmem:[#allocation3 + $0x98] sm:$0xff]
      %v3161 = vld [vmem:[#allocation3 + $0xa8] sm:$0xff]
      %v3162 = vld [vmem:[#allocation3 + $0xb0] sm:$0xff]
      %v3163 = vld [vmem:[#allocation3 + $0xc0] sm:$0xff]
      %v3164 = vld [vmem:[#allocation3 + $0xc8] sm:$0xff]
      %v3165 = vld [vmem:[#allocation3 + $0xd8] sm:$0xff]
      %v3166 = vld [vmem:[#allocation3 + $0xe0] sm:$0xff]
      %v3167 = vld [vmem:[#allocation3 + $0xf0] sm:$0xff]
      %v3168 = vld [vmem:[#allocation3 + $0xf8] sm:$0xff]
      %v3169 = vld [vmem:[#allocation3 + $0x108] sm:$0xff]
      %v3170 = vld [vmem:[#allocation3 + $0x110] sm:$0xff]
      %v3171 = vld [vmem:[#allocation3 + $0x120] sm:$0xff]
      %v3172 = vld [vmem:[#allocation3 + $0x128] sm:$0xff]
      %v3173 = vld [vmem:[#allocation3 + $0x138] sm:$0xff]
      %v3174 = vld [vmem:[#allocation3 + $0x140] sm:$0xff]
      %v3175 = vld [vmem:[#allocation3 + $0x150] sm:$0xff]
      %v3176 = vld [vmem:[#allocation3 + $0x158] sm:$0xff]
      %v3177 = vld [vmem:[#allocation3 + $0x168] sm:$0xff]
      %v3178 = vld [vmem:[#allocation3 + $0x170] sm:$0xff]
      %v3179 = vpack.c.bf16 %v3148, %v3147
      %v3180 = vpack.c.bf16 %v3150, %v3149
      %v3181 = vpack.c.bf16 %v3152, %v3151
      %v3182 = vpack.c.bf16 %v3154, %v3153
      %v3183 = vpack.c.bf16 %v3156, %v3155
      %v3184 = vpack.c.bf16 %v3158, %v3157
      %v3185 = vpack.c.bf16 %v3160, %v3159
      %v3186 = vpack.c.bf16 %v3162, %v3161
      %v3187 = vpack.c.bf16 %v3164, %v3163
      %v3188 = vpack.c.bf16 %v3166, %v3165
      %v3189 = vpack.c.bf16 %v3168, %v3167
      %v3190 = vpack.c.bf16 %v3170, %v3169
      %v3191 = vpack.c.bf16 %v3172, %v3171
      %v3192 = vpack.c.bf16 %v3174, %v3173
      %v3193 = vpack.c.bf16 %v3176, %v3175
      %v3194 = vpack.c.bf16 %v3178, %v3177
      %v3195 = vld [vmem:[%s324] sm:$0xf]
      %v3196 = vld [vmem:[#allocation3 + $0x1] sm:$0xff]
      %v3197 = vld [vmem:[#allocation3 + $0x9] sm:$0xff]
      %v3198 = vld [vmem:[#allocation3 + $0x19] sm:$0xff]
      %v3199 = vld [vmem:[#allocation3 + $0x21] sm:$0xff]
      %v3200 = vld [vmem:[#allocation3 + $0x31] sm:$0xff]
      %v3201 = vld [vmem:[#allocation3 + $0x39] sm:$0xff]
      %v3202 = vld [vmem:[#allocation3 + $0x49] sm:$0xff]
      %v3203 = vld [vmem:[#allocation3 + $0x51] sm:$0xff]
      %v3204 = vld [vmem:[#allocation3 + $0x61] sm:$0xff]
      %v3205 = vld [vmem:[#allocation3 + $0x69] sm:$0xff]
      %v3206 = vld [vmem:[#allocation3 + $0x79] sm:$0xff]
      %v3207 = vld [vmem:[#allocation3 + $0x81] sm:$0xff]
      %v3208 = vld [vmem:[#allocation3 + $0x91] sm:$0xff]
      %v3209 = vld [vmem:[#allocation3 + $0x99] sm:$0xff]
      %v3210 = vld [vmem:[#allocation3 + $0xa9] sm:$0xff]
      %v3211 = vld [vmem:[#allocation3 + $0xb1] sm:$0xff]
      %v3212 = vld [vmem:[#allocation3 + $0xc1] sm:$0xff]
      %v3213 = vld [vmem:[#allocation3 + $0xc9] sm:$0xff]
      %v3214 = vld [vmem:[#allocation3 + $0xd9] sm:$0xff]
      %v3215 = vld [vmem:[#allocation3 + $0xe1] sm:$0xff]
      %v3216 = vld [vmem:[#allocation3 + $0xf1] sm:$0xff]
      %v3217 = vld [vmem:[#allocation3 + $0xf9] sm:$0xff]
      %v3218 = vld [vmem:[#allocation3 + $0x109] sm:$0xff]
      %v3219 = vld [vmem:[#allocation3 + $0x111] sm:$0xff]
      %v3220 = vld [vmem:[#allocation3 + $0x121] sm:$0xff]
      %v3221 = vld [vmem:[#allocation3 + $0x129] sm:$0xff]
      %v3222 = vld [vmem:[#allocation3 + $0x139] sm:$0xff]
      %v3223 = vld [vmem:[#allocation3 + $0x141] sm:$0xff]
      %v3224 = vld [vmem:[#allocation3 + $0x151] sm:$0xff]
      %v3225 = vld [vmem:[#allocation3 + $0x159] sm:$0xff]
      %v3226 = vld [vmem:[#allocation3 + $0x169] sm:$0xff]
      %v3227 = vld [vmem:[#allocation3 + $0x171] sm:$0xff]
      %v3228 = vpack.c.bf16 %v3197, %v3196
      %v3229 = vpack.c.bf16 %v3199, %v3198
      %v3230 = vpack.c.bf16 %v3201, %v3200
      %v3231 = vpack.c.bf16 %v3203, %v3202
      %v3232 = vpack.c.bf16 %v3205, %v3204
      %v3233 = vpack.c.bf16 %v3207, %v3206
      %v3234 = vpack.c.bf16 %v3209, %v3208
      %v3235 = vpack.c.bf16 %v3211, %v3210
      %v3236 = vpack.c.bf16 %v3213, %v3212
      %v3237 = vpack.c.bf16 %v3215, %v3214
      %v3238 = vpack.c.bf16 %v3217, %v3216
      %v3239 = vpack.c.bf16 %v3219, %v3218
      %v3240 = vpack.c.bf16 %v3221, %v3220
      %v3241 = vpack.c.bf16 %v3223, %v3222
      %v3242 = vpack.c.bf16 %v3225, %v3224
      %v3243 = vpack.c.bf16 %v3227, %v3226
      %s3244 = scalar_lea.vmem %s324, 4
      %v3245 = vld [vmem:[%s3244] sm:$0xf]
      %v3247 = vsel %vm596, %v3228, 0
      %v3250 = vsel %vm596, %v3229, 0
      %v3253 = vsel %vm596, %v3230, 0
      %v3256 = vsel %vm596, %v3231, 0
      %v3259 = vsel %vm596, %v3232, 0
      %v3262 = vsel %vm596, %v3233, 0
      %v3265 = vsel %vm596, %v3234, 0
      %v3268 = vsel %vm596, %v3235, 0
      %v3271 = vsel %vm596, %v3236, 0
      %v3274 = vsel %vm596, %v3237, 0
      %v3277 = vsel %vm596, %v3238, 0
      %v3280 = vsel %vm596, %v3239, 0
      %v3283 = vsel %vm596, %v3240, 0
      %v3286 = vsel %vm596, %v3241, 0
      %v3289 = vsel %vm596, %v3242, 0
      %v3292 = vsel %vm596, %v3243, 0
      %v3295 = vsel %vm645, %v3245, 0
      %3297 = vmatprep.subr.bf16.mxu0 0
      %3298 = vmatpush1.bf16.msra.mxu0 0
      %3299 = vmatprep.subr.bf16.mxu0 0
      %3300 = vmatpush1.bf16.msra.mxu0 0
      %3301 = vmatprep.subr.bf16.mxu0 0
      %3302 = vmatpush1.bf16.msra.mxu0 0
      %3303 = vmatprep.subr.bf16.mxu0 0
      %3304 = vmatpush1.bf16.msra.mxu0 0
      %3305 = vmatprep.subr.bf16.mxu0 0
      %3306 = vmatpush1.bf16.msra.mxu0 0
      %3307 = vmatprep.subr.bf16.mxu0 0
      %3308 = vmatpush1.bf16.msra.mxu0 0
      %3309 = vmatprep.subr.bf16.mxu0 0
      %3310 = vmatpush1.bf16.msra.mxu0 0
      %3311 = vmatprep.subr.bf16.mxu0 0
      %3312 = vmatpush1.bf16.msra.mxu0 %v3295
      %3313 = vmatprep.subr.bf16.mxu0 0
      %3314 = vmatpush2.bf16.msra.mxu0 0
      %3315 = vmatprep.subr.bf16.mxu0 0
      %3316 = vmatpush2.bf16.msra.mxu0 0
      %3317 = vmatprep.subr.bf16.mxu0 0
      %3318 = vmatpush2.bf16.msra.mxu0 0
      %3319 = vmatprep.subr.bf16.mxu0 0
      %3320 = vmatpush2.bf16.msra.mxu0 0
      %3321 = vmatprep.subr.bf16.mxu0 0
      %3322 = vmatpush2.bf16.msra.mxu0 0
      %3323 = vmatprep.subr.bf16.mxu0 0
      %3324 = vmatpush2.bf16.msra.mxu0 0
      %3325 = vmatprep.subr.bf16.mxu0 0
      %3326 = vmatpush2.bf16.msra.mxu0 0
      %3327 = vmatprep.subr.bf16.mxu0 0
      %3328 = vmatpush2.bf16.msra.mxu0 0
      %3329 = vmatprep.mubr.bf16.mxu0 0
      %3330 = vmatmul.mubr.bf16.gmra.mxu0 %v3247
      %v3331 = vpop.f32.mrf.mxu0
      %v3332 = vadd.f32 0.0, %v3331
      %v3333 = vpop.f32.mrf.mxu0
      %v3334 = vpop.f32.mrf.mxu0
      %v3335 = vadd.f32 0.0, %v3334
      %v3336 = vpop.f32.mrf.mxu0
      %3337 = vmatprep.mubr.bf16.mxu0 0
      %3338 = vmatmul.mubr.bf16.gmra.mxu0 %v3250
      %v3339 = vpop.f32.mrf.mxu0
      %v3340 = vadd.f32 0.0, %v3339
      %v3341 = vpop.f32.mrf.mxu0
      %v3342 = vpop.f32.mrf.mxu0
      %v3343 = vadd.f32 0.0, %v3342
      %v3344 = vpop.f32.mrf.mxu0
      %3345 = vmatprep.mubr.bf16.mxu0 0
      %3346 = vmatmul.mubr.bf16.gmra.mxu0 %v3253
      %v3347 = vpop.f32.mrf.mxu0
      %v3348 = vadd.f32 0.0, %v3347
      %v3349 = vpop.f32.mrf.mxu0
      %v3350 = vpop.f32.mrf.mxu0
      %v3351 = vadd.f32 0.0, %v3350
      %v3352 = vpop.f32.mrf.mxu0
      %3353 = vmatprep.mubr.bf16.mxu0 0
      %3354 = vmatmul.mubr.bf16.gmra.mxu0 %v3256
      %v3355 = vpop.f32.mrf.mxu0
      %v3356 = vadd.f32 0.0, %v3355
      %v3357 = vpop.f32.mrf.mxu0
      %v3358 = vpop.f32.mrf.mxu0
      %v3359 = vadd.f32 0.0, %v3358
      %v3360 = vpop.f32.mrf.mxu0
      %3361 = vmatprep.mubr.bf16.mxu0 0
      %3362 = vmatmul.mubr.bf16.gmra.mxu0 %v3259
      %v3363 = vpop.f32.mrf.mxu0
      %v3364 = vadd.f32 0.0, %v3363
      %v3365 = vpop.f32.mrf.mxu0
      %v3366 = vpop.f32.mrf.mxu0
      %v3367 = vadd.f32 0.0, %v3366
      %v3368 = vpop.f32.mrf.mxu0
      %3369 = vmatprep.mubr.bf16.mxu0 0
      %3370 = vmatmul.mubr.bf16.gmra.mxu0 %v3262
      %v3371 = vpop.f32.mrf.mxu0
      %v3372 = vadd.f32 0.0, %v3371
      %v3373 = vpop.f32.mrf.mxu0
      %v3374 = vpop.f32.mrf.mxu0
      %v3375 = vadd.f32 0.0, %v3374
      %v3376 = vpop.f32.mrf.mxu0
      %3377 = vmatprep.mubr.bf16.mxu0 0
      %3378 = vmatmul.mubr.bf16.gmra.mxu0 %v3265
      %v3379 = vpop.f32.mrf.mxu0
      %v3380 = vadd.f32 0.0, %v3379
      %v3381 = vpop.f32.mrf.mxu0
      %v3382 = vpop.f32.mrf.mxu0
      %v3383 = vadd.f32 0.0, %v3382
      %v3384 = vpop.f32.mrf.mxu0
      %3385 = vmatprep.mubr.bf16.mxu0 0
      %3386 = vmatmul.mubr.bf16.gmra.mxu0 %v3268
      %v3387 = vpop.f32.mrf.mxu0
      %v3388 = vadd.f32 0.0, %v3387
      %v3389 = vpop.f32.mrf.mxu0
      %v3390 = vpop.f32.mrf.mxu0
      %v3391 = vadd.f32 0.0, %v3390
      %v3392 = vpop.f32.mrf.mxu0
      %3393 = vmatprep.mubr.bf16.mxu0 0
      %3394 = vmatmul.mubr.bf16.gmra.mxu0 %v3271
      %v3395 = vpop.f32.mrf.mxu0
      %v3396 = vadd.f32 0.0, %v3395
      %v3397 = vpop.f32.mrf.mxu0
      %v3398 = vpop.f32.mrf.mxu0
      %v3399 = vadd.f32 0.0, %v3398
      %v3400 = vpop.f32.mrf.mxu0
      %3401 = vmatprep.mubr.bf16.mxu0 0
      %3402 = vmatmul.mubr.bf16.gmra.mxu0 %v3274
      %v3403 = vpop.f32.mrf.mxu0
      %v3404 = vadd.f32 0.0, %v3403
      %v3405 = vpop.f32.mrf.mxu0
      %v3406 = vpop.f32.mrf.mxu0
      %v3407 = vadd.f32 0.0, %v3406
      %v3408 = vpop.f32.mrf.mxu0
      %3409 = vmatprep.mubr.bf16.mxu0 0
      %3410 = vmatmul.mubr.bf16.gmra.mxu0 %v3277
      %v3411 = vpop.f32.mrf.mxu0
      %v3412 = vadd.f32 0.0, %v3411
      %v3413 = vpop.f32.mrf.mxu0
      %v3414 = vpop.f32.mrf.mxu0
      %v3415 = vadd.f32 0.0, %v3414
      %v3416 = vpop.f32.mrf.mxu0
      %3417 = vmatprep.mubr.bf16.mxu0 0
      %3418 = vmatmul.mubr.bf16.gmra.mxu0 %v3280
      %v3419 = vpop.f32.mrf.mxu0
      %v3420 = vadd.f32 0.0, %v3419
      %v3421 = vpop.f32.mrf.mxu0
      %v3422 = vpop.f32.mrf.mxu0
      %v3423 = vadd.f32 0.0, %v3422
      %v3424 = vpop.f32.mrf.mxu0
      %3425 = vmatprep.mubr.bf16.mxu0 0
      %3426 = vmatmul.mubr.bf16.gmra.mxu0 %v3283
      %v3427 = vpop.f32.mrf.mxu0
      %v3428 = vadd.f32 0.0, %v3427
      %v3429 = vpop.f32.mrf.mxu0
      %v3430 = vpop.f32.mrf.mxu0
      %v3431 = vadd.f32 0.0, %v3430
      %v3432 = vpop.f32.mrf.mxu0
      %3433 = vmatprep.mubr.bf16.mxu0 0
      %3434 = vmatmul.mubr.bf16.gmra.mxu0 %v3286
      %v3435 = vpop.f32.mrf.mxu0
      %v3436 = vadd.f32 0.0, %v3435
      %v3437 = vpop.f32.mrf.mxu0
      %v3438 = vpop.f32.mrf.mxu0
      %v3439 = vadd.f32 0.0, %v3438
      %v3440 = vpop.f32.mrf.mxu0
      %3441 = vmatprep.mubr.bf16.mxu0 0
      %3442 = vmatmul.mubr.bf16.gmra.mxu0 %v3289
      %v3443 = vpop.f32.mrf.mxu0
      %v3444 = vadd.f32 0.0, %v3443
      %v3445 = vpop.f32.mrf.mxu0
      %v3446 = vpop.f32.mrf.mxu0
      %v3447 = vadd.f32 0.0, %v3446
      %v3448 = vpop.f32.mrf.mxu0
      %3449 = vmatprep.mubr.bf16.mxu0 0
      %3450 = vmatmul.mubr.bf16.gmra.mxu0 %v3292
      %v3451 = vpop.f32.mrf.mxu0
      %v3452 = vadd.f32 0.0, %v3451
      %v3453 = vpop.f32.mrf.mxu0
      %v3454 = vpop.f32.mrf.mxu0
      %v3455 = vadd.f32 0.0, %v3454
      %v3456 = vpop.f32.mrf.mxu0
      %3457 = vdwg.mxu0
      %v3459 = vsel %vm596, %v3179, 0
      %v3462 = vsel %vm596, %v3180, 0
      %v3465 = vsel %vm596, %v3181, 0
      %v3468 = vsel %vm596, %v3182, 0
      %v3471 = vsel %vm596, %v3183, 0
      %v3474 = vsel %vm596, %v3184, 0
      %v3477 = vsel %vm596, %v3185, 0
      %v3480 = vsel %vm596, %v3186, 0
      %v3483 = vsel %vm596, %v3187, 0
      %v3486 = vsel %vm596, %v3188, 0
      %v3489 = vsel %vm596, %v3189, 0
      %v3492 = vsel %vm596, %v3190, 0
      %v3495 = vsel %vm596, %v3191, 0
      %v3498 = vsel %vm596, %v3192, 0
      %v3501 = vsel %vm596, %v3193, 0
      %v3504 = vsel %vm596, %v3194, 0
      %v3507 = vsel %vm645, %v3195, 0
      %3509 = vmatprep.subr.bf16.mxu0 0
      %3510 = vmatpush1.bf16.msra.mxu0 0
      %3511 = vmatprep.subr.bf16.mxu0 0
      %3512 = vmatpush1.bf16.msra.mxu0 0
      %3513 = vmatprep.subr.bf16.mxu0 0
      %3514 = vmatpush1.bf16.msra.mxu0 0
      %3515 = vmatprep.subr.bf16.mxu0 0
      %3516 = vmatpush1.bf16.msra.mxu0 0
      %3517 = vmatprep.subr.bf16.mxu0 0
      %3518 = vmatpush1.bf16.msra.mxu0 0
      %3519 = vmatprep.subr.bf16.mxu0 0
      %3520 = vmatpush1.bf16.msra.mxu0 0
      %3521 = vmatprep.subr.bf16.mxu0 0
      %3522 = vmatpush1.bf16.msra.mxu0 0
      %3523 = vmatprep.subr.bf16.mxu0 0
      %3524 = vmatpush1.bf16.msra.mxu0 %v3507
      %3525 = vmatprep.subr.bf16.mxu0 0
      %3526 = vmatpush2.bf16.msra.mxu0 0
      %3527 = vmatprep.subr.bf16.mxu0 0
      %3528 = vmatpush2.bf16.msra.mxu0 0
      %3529 = vmatprep.subr.bf16.mxu0 0
      %3530 = vmatpush2.bf16.msra.mxu0 0
      %3531 = vmatprep.subr.bf16.mxu0 0
      %3532 = vmatpush2.bf16.msra.mxu0 0
      %3533 = vmatprep.subr.bf16.mxu0 0
      %3534 = vmatpush2.bf16.msra.mxu0 0
      %3535 = vmatprep.subr.bf16.mxu0 0
      %3536 = vmatpush2.bf16.msra.mxu0 0
      %3537 = vmatprep.subr.bf16.mxu0 0
      %3538 = vmatpush2.bf16.msra.mxu0 0
      %3539 = vmatprep.subr.bf16.mxu0 0
      %3540 = vmatpush2.bf16.msra.mxu0 0
      %3541 = vmatprep.mubr.bf16.mxu0 0
      %3542 = vmatmul.mubr.bf16.gmra.mxu0 %v3459
      %v3543 = vpop.f32.mrf.mxu0
      %v3544 = vadd.f32 %v3332, %v3543
      %v3545 = vpop.f32.mrf.mxu0
      %v3546 = vpop.f32.mrf.mxu0
      %v3547 = vadd.f32 %v3335, %v3546
      %v3548 = vpop.f32.mrf.mxu0
      %3549 = vmatprep.mubr.bf16.mxu0 0
      %3550 = vmatmul.mubr.bf16.gmra.mxu0 %v3462
      %v3551 = vpop.f32.mrf.mxu0
      %v3552 = vadd.f32 %v3340, %v3551
      %v3553 = vpop.f32.mrf.mxu0
      %v3554 = vpop.f32.mrf.mxu0
      %v3555 = vadd.f32 %v3343, %v3554
      %v3556 = vpop.f32.mrf.mxu0
      %3557 = vmatprep.mubr.bf16.mxu0 0
      %3558 = vmatmul.mubr.bf16.gmra.mxu0 %v3465
      %v3559 = vpop.f32.mrf.mxu0
      %v3560 = vadd.f32 %v3348, %v3559
      %v3561 = vpop.f32.mrf.mxu0
      %v3562 = vpop.f32.mrf.mxu0
      %v3563 = vadd.f32 %v3351, %v3562
      %v3564 = vpop.f32.mrf.mxu0
      %3565 = vmatprep.mubr.bf16.mxu0 0
      %3566 = vmatmul.mubr.bf16.gmra.mxu0 %v3468
      %v3567 = vpop.f32.mrf.mxu0
      %v3568 = vadd.f32 %v3356, %v3567
      %v3569 = vpop.f32.mrf.mxu0
      %v3570 = vpop.f32.mrf.mxu0
      %v3571 = vadd.f32 %v3359, %v3570
      %v3572 = vpop.f32.mrf.mxu0
      %3573 = vmatprep.mubr.bf16.mxu0 0
      %3574 = vmatmul.mubr.bf16.gmra.mxu0 %v3471
      %v3575 = vpop.f32.mrf.mxu0
      %v3576 = vadd.f32 %v3364, %v3575
      %v3577 = vpop.f32.mrf.mxu0
      %v3578 = vpop.f32.mrf.mxu0
      %v3579 = vadd.f32 %v3367, %v3578
      %v3580 = vpop.f32.mrf.mxu0
      %3581 = vmatprep.mubr.bf16.mxu0 0
      %3582 = vmatmul.mubr.bf16.gmra.mxu0 %v3474
      %v3583 = vpop.f32.mrf.mxu0
      %v3584 = vadd.f32 %v3372, %v3583
      %v3585 = vpop.f32.mrf.mxu0
      %v3586 = vpop.f32.mrf.mxu0
      %v3587 = vadd.f32 %v3375, %v3586
      %v3588 = vpop.f32.mrf.mxu0
      %3589 = vmatprep.mubr.bf16.mxu0 0
      %3590 = vmatmul.mubr.bf16.gmra.mxu0 %v3477
      %v3591 = vpop.f32.mrf.mxu0
      %v3592 = vadd.f32 %v3380, %v3591
      %v3593 = vpop.f32.mrf.mxu0
      %v3594 = vpop.f32.mrf.mxu0
      %v3595 = vadd.f32 %v3383, %v3594
      %v3596 = vpop.f32.mrf.mxu0
      %3597 = vmatprep.mubr.bf16.mxu0 0
      %3598 = vmatmul.mubr.bf16.gmra.mxu0 %v3480
      %v3599 = vpop.f32.mrf.mxu0
      %v3600 = vadd.f32 %v3388, %v3599
      %v3601 = vpop.f32.mrf.mxu0
      %v3602 = vpop.f32.mrf.mxu0
      %v3603 = vadd.f32 %v3391, %v3602
      %v3604 = vpop.f32.mrf.mxu0
      %3605 = vmatprep.mubr.bf16.mxu0 0
      %3606 = vmatmul.mubr.bf16.gmra.mxu0 %v3483
      %v3607 = vpop.f32.mrf.mxu0
      %v3608 = vadd.f32 %v3396, %v3607
      %v3609 = vpop.f32.mrf.mxu0
      %v3610 = vpop.f32.mrf.mxu0
      %v3611 = vadd.f32 %v3399, %v3610
      %v3612 = vpop.f32.mrf.mxu0
      %3613 = vmatprep.mubr.bf16.mxu0 0
      %3614 = vmatmul.mubr.bf16.gmra.mxu0 %v3486
      %v3615 = vpop.f32.mrf.mxu0
      %v3616 = vadd.f32 %v3404, %v3615
      %v3617 = vpop.f32.mrf.mxu0
      %v3618 = vpop.f32.mrf.mxu0
      %v3619 = vadd.f32 %v3407, %v3618
      %v3620 = vpop.f32.mrf.mxu0
      %3621 = vmatprep.mubr.bf16.mxu0 0
      %3622 = vmatmul.mubr.bf16.gmra.mxu0 %v3489
      %v3623 = vpop.f32.mrf.mxu0
      %v3624 = vadd.f32 %v3412, %v3623
      %v3625 = vpop.f32.mrf.mxu0
      %v3626 = vpop.f32.mrf.mxu0
      %v3627 = vadd.f32 %v3415, %v3626
      %v3628 = vpop.f32.mrf.mxu0
      %3629 = vmatprep.mubr.bf16.mxu0 0
      %3630 = vmatmul.mubr.bf16.gmra.mxu0 %v3492
      %v3631 = vpop.f32.mrf.mxu0
      %v3632 = vadd.f32 %v3420, %v3631
      %v3633 = vpop.f32.mrf.mxu0
      %v3634 = vpop.f32.mrf.mxu0
      %v3635 = vadd.f32 %v3423, %v3634
      %v3636 = vpop.f32.mrf.mxu0
      %3637 = vmatprep.mubr.bf16.mxu0 0
      %3638 = vmatmul.mubr.bf16.gmra.mxu0 %v3495
      %v3639 = vpop.f32.mrf.mxu0
      %v3640 = vadd.f32 %v3428, %v3639
      %v3641 = vpop.f32.mrf.mxu0
      %v3642 = vpop.f32.mrf.mxu0
      %v3643 = vadd.f32 %v3431, %v3642
      %v3644 = vpop.f32.mrf.mxu0
      %3645 = vmatprep.mubr.bf16.mxu0 0
      %3646 = vmatmul.mubr.bf16.gmra.mxu0 %v3498
      %v3647 = vpop.f32.mrf.mxu0
      %v3648 = vadd.f32 %v3436, %v3647
      %v3649 = vpop.f32.mrf.mxu0
      %v3650 = vpop.f32.mrf.mxu0
      %v3651 = vadd.f32 %v3439, %v3650
      %v3652 = vpop.f32.mrf.mxu0
      %3653 = vmatprep.mubr.bf16.mxu0 0
      %3654 = vmatmul.mubr.bf16.gmra.mxu0 %v3501
      %v3655 = vpop.f32.mrf.mxu0
      %v3656 = vadd.f32 %v3444, %v3655
      %v3657 = vpop.f32.mrf.mxu0
      %v3658 = vpop.f32.mrf.mxu0
      %v3659 = vadd.f32 %v3447, %v3658
      %v3660 = vpop.f32.mrf.mxu0
      %3661 = vmatprep.mubr.bf16.mxu0 0
      %3662 = vmatmul.mubr.bf16.gmra.mxu0 %v3504
      %v3663 = vpop.f32.mrf.mxu0
      %v3664 = vadd.f32 %v3452, %v3663
      %v3665 = vpop.f32.mrf.mxu0
      %v3666 = vpop.f32.mrf.mxu0
      %v3667 = vadd.f32 %v3455, %v3666
      %v3668 = vpop.f32.mrf.mxu0
      %3669 = vdwg.mxu0
      %v3670 = vld [vmem:[#allocation3 + $0x2] sm:$0xff]
      %v3671 = vld [vmem:[#allocation3 + $0xa] sm:$0xff]
      %v3672 = vld [vmem:[#allocation3 + $0x1a] sm:$0xff]
      %v3673 = vld [vmem:[#allocation3 + $0x22] sm:$0xff]
      %v3674 = vld [vmem:[#allocation3 + $0x32] sm:$0xff]
      %v3675 = vld [vmem:[#allocation3 + $0x3a] sm:$0xff]
      %v3676 = vld [vmem:[#allocation3 + $0x4a] sm:$0xff]
      %v3677 = vld [vmem:[#allocation3 + $0x52] sm:$0xff]
      %v3678 = vld [vmem:[#allocation3 + $0x62] sm:$0xff]
      %v3679 = vld [vmem:[#allocation3 + $0x6a] sm:$0xff]
      %v3680 = vld [vmem:[#allocation3 + $0x7a] sm:$0xff]
      %v3681 = vld [vmem:[#allocation3 + $0x82] sm:$0xff]
      %v3682 = vld [vmem:[#allocation3 + $0x92] sm:$0xff]
      %v3683 = vld [vmem:[#allocation3 + $0x9a] sm:$0xff]
      %v3684 = vld [vmem:[#allocation3 + $0xaa] sm:$0xff]
      %v3685 = vld [vmem:[#allocation3 + $0xb2] sm:$0xff]
      %v3686 = vld [vmem:[#allocation3 + $0xc2] sm:$0xff]
      %v3687 = vld [vmem:[#allocation3 + $0xca] sm:$0xff]
      %v3688 = vld [vmem:[#allocation3 + $0xda] sm:$0xff]
      %v3689 = vld [vmem:[#allocation3 + $0xe2] sm:$0xff]
      %v3690 = vld [vmem:[#allocation3 + $0xf2] sm:$0xff]
      %v3691 = vld [vmem:[#allocation3 + $0xfa] sm:$0xff]
      %v3692 = vld [vmem:[#allocation3 + $0x10a] sm:$0xff]
      %v3693 = vld [vmem:[#allocation3 + $0x112] sm:$0xff]
      %v3694 = vld [vmem:[#allocation3 + $0x122] sm:$0xff]
      %v3695 = vld [vmem:[#allocation3 + $0x12a] sm:$0xff]
      %v3696 = vld [vmem:[#allocation3 + $0x13a] sm:$0xff]
      %v3697 = vld [vmem:[#allocation3 + $0x142] sm:$0xff]
      %v3698 = vld [vmem:[#allocation3 + $0x152] sm:$0xff]
      %v3699 = vld [vmem:[#allocation3 + $0x15a] sm:$0xff]
      %v3700 = vld [vmem:[#allocation3 + $0x16a] sm:$0xff]
      %v3701 = vld [vmem:[#allocation3 + $0x172] sm:$0xff]
      %v3702 = vpack.c.bf16 %v3671, %v3670
      %v3703 = vpack.c.bf16 %v3673, %v3672
      %v3704 = vpack.c.bf16 %v3675, %v3674
      %v3705 = vpack.c.bf16 %v3677, %v3676
      %v3706 = vpack.c.bf16 %v3679, %v3678
      %v3707 = vpack.c.bf16 %v3681, %v3680
      %v3708 = vpack.c.bf16 %v3683, %v3682
      %v3709 = vpack.c.bf16 %v3685, %v3684
      %v3710 = vpack.c.bf16 %v3687, %v3686
      %v3711 = vpack.c.bf16 %v3689, %v3688
      %v3712 = vpack.c.bf16 %v3691, %v3690
      %v3713 = vpack.c.bf16 %v3693, %v3692
      %v3714 = vpack.c.bf16 %v3695, %v3694
      %v3715 = vpack.c.bf16 %v3697, %v3696
      %v3716 = vpack.c.bf16 %v3699, %v3698
      %v3717 = vpack.c.bf16 %v3701, %v3700
      %s3718 = scalar_lea.vmem %s324, 8
      %v3719 = vld [vmem:[%s3718] sm:$0xf]
      %v3721 = vsel %vm596, %v3702, 0
      %v3724 = vsel %vm596, %v3703, 0
      %v3727 = vsel %vm596, %v3704, 0
      %v3730 = vsel %vm596, %v3705, 0
      %v3733 = vsel %vm596, %v3706, 0
      %v3736 = vsel %vm596, %v3707, 0
      %v3739 = vsel %vm596, %v3708, 0
      %v3742 = vsel %vm596, %v3709, 0
      %v3745 = vsel %vm596, %v3710, 0
      %v3748 = vsel %vm596, %v3711, 0
      %v3751 = vsel %vm596, %v3712, 0
      %v3754 = vsel %vm596, %v3713, 0
      %v3757 = vsel %vm596, %v3714, 0
      %v3760 = vsel %vm596, %v3715, 0
      %v3763 = vsel %vm596, %v3716, 0
      %v3766 = vsel %vm596, %v3717, 0
      %v3769 = vsel %vm645, %v3719, 0
      %3771 = vmatprep.subr.bf16.mxu0 0
      %3772 = vmatpush1.bf16.msra.mxu0 0
      %3773 = vmatprep.subr.bf16.mxu0 0
      %3774 = vmatpush1.bf16.msra.mxu0 0
      %3775 = vmatprep.subr.bf16.mxu0 0
      %3776 = vmatpush1.bf16.msra.mxu0 0
      %3777 = vmatprep.subr.bf16.mxu0 0
      %3778 = vmatpush1.bf16.msra.mxu0 0
      %3779 = vmatprep.subr.bf16.mxu0 0
      %3780 = vmatpush1.bf16.msra.mxu0 0
      %3781 = vmatprep.subr.bf16.mxu0 0
      %3782 = vmatpush1.bf16.msra.mxu0 0
      %3783 = vmatprep.subr.bf16.mxu0 0
      %3784 = vmatpush1.bf16.msra.mxu0 0
      %3785 = vmatprep.subr.bf16.mxu0 0
      %3786 = vmatpush1.bf16.msra.mxu0 %v3769
      %3787 = vmatprep.subr.bf16.mxu0 0
      %3788 = vmatpush2.bf16.msra.mxu0 0
      %3789 = vmatprep.subr.bf16.mxu0 0
      %3790 = vmatpush2.bf16.msra.mxu0 0
      %3791 = vmatprep.subr.bf16.mxu0 0
      %3792 = vmatpush2.bf16.msra.mxu0 0
      %3793 = vmatprep.subr.bf16.mxu0 0
      %3794 = vmatpush2.bf16.msra.mxu0 0
      %3795 = vmatprep.subr.bf16.mxu0 0
      %3796 = vmatpush2.bf16.msra.mxu0 0
      %3797 = vmatprep.subr.bf16.mxu0 0
      %3798 = vmatpush2.bf16.msra.mxu0 0
      %3799 = vmatprep.subr.bf16.mxu0 0
      %3800 = vmatpush2.bf16.msra.mxu0 0
      %3801 = vmatprep.subr.bf16.mxu0 0
      %3802 = vmatpush2.bf16.msra.mxu0 0
      %3803 = vmatprep.mubr.bf16.mxu0 0
      %3804 = vmatmul.mubr.bf16.gmra.mxu0 %v3721
      %v3805 = vpop.f32.mrf.mxu0
      %v3806 = vadd.f32 0.0, %v3805
      %v3807 = vpop.f32.mrf.mxu0
      %v3808 = vpop.f32.mrf.mxu0
      %v3809 = vadd.f32 0.0, %v3808
      %v3810 = vpop.f32.mrf.mxu0
      %3811 = vmatprep.mubr.bf16.mxu0 0
      %3812 = vmatmul.mubr.bf16.gmra.mxu0 %v3724
      %v3813 = vpop.f32.mrf.mxu0
      %v3814 = vadd.f32 0.0, %v3813
      %v3815 = vpop.f32.mrf.mxu0
      %v3816 = vpop.f32.mrf.mxu0
      %v3817 = vadd.f32 0.0, %v3816
      %v3818 = vpop.f32.mrf.mxu0
      %3819 = vmatprep.mubr.bf16.mxu0 0
      %3820 = vmatmul.mubr.bf16.gmra.mxu0 %v3727
      %v3821 = vpop.f32.mrf.mxu0
      %v3822 = vadd.f32 0.0, %v3821
      %v3823 = vpop.f32.mrf.mxu0
      %v3824 = vpop.f32.mrf.mxu0
      %v3825 = vadd.f32 0.0, %v3824
      %v3826 = vpop.f32.mrf.mxu0
      %3827 = vmatprep.mubr.bf16.mxu0 0
      %3828 = vmatmul.mubr.bf16.gmra.mxu0 %v3730
      %v3829 = vpop.f32.mrf.mxu0
      %v3830 = vadd.f32 0.0, %v3829
      %v3831 = vpop.f32.mrf.mxu0
      %v3832 = vpop.f32.mrf.mxu0
      %v3833 = vadd.f32 0.0, %v3832
      %v3834 = vpop.f32.mrf.mxu0
      %3835 = vmatprep.mubr.bf16.mxu0 0
      %3836 = vmatmul.mubr.bf16.gmra.mxu0 %v3733
      %v3837 = vpop.f32.mrf.mxu0
      %v3838 = vadd.f32 0.0, %v3837
      %v3839 = vpop.f32.mrf.mxu0
      %v3840 = vpop.f32.mrf.mxu0
      %v3841 = vadd.f32 0.0, %v3840
      %v3842 = vpop.f32.mrf.mxu0
      %3843 = vmatprep.mubr.bf16.mxu0 0
      %3844 = vmatmul.mubr.bf16.gmra.mxu0 %v3736
      %v3845 = vpop.f32.mrf.mxu0
      %v3846 = vadd.f32 0.0, %v3845
      %v3847 = vpop.f32.mrf.mxu0
      %v3848 = vpop.f32.mrf.mxu0
      %v3849 = vadd.f32 0.0, %v3848
      %v3850 = vpop.f32.mrf.mxu0
      %3851 = vmatprep.mubr.bf16.mxu0 0
      %3852 = vmatmul.mubr.bf16.gmra.mxu0 %v3739
      %v3853 = vpop.f32.mrf.mxu0
      %v3854 = vadd.f32 0.0, %v3853
      %v3855 = vpop.f32.mrf.mxu0
      %v3856 = vpop.f32.mrf.mxu0
      %v3857 = vadd.f32 0.0, %v3856
      %v3858 = vpop.f32.mrf.mxu0
      %3859 = vmatprep.mubr.bf16.mxu0 0
      %3860 = vmatmul.mubr.bf16.gmra.mxu0 %v3742
      %v3861 = vpop.f32.mrf.mxu0
      %v3862 = vadd.f32 0.0, %v3861
      %v3863 = vpop.f32.mrf.mxu0
      %v3864 = vpop.f32.mrf.mxu0
      %v3865 = vadd.f32 0.0, %v3864
      %v3866 = vpop.f32.mrf.mxu0
      %3867 = vmatprep.mubr.bf16.mxu0 0
      %3868 = vmatmul.mubr.bf16.gmra.mxu0 %v3745
      %v3869 = vpop.f32.mrf.mxu0
      %v3870 = vadd.f32 0.0, %v3869
      %v3871 = vpop.f32.mrf.mxu0
      %v3872 = vpop.f32.mrf.mxu0
      %v3873 = vadd.f32 0.0, %v3872
      %v3874 = vpop.f32.mrf.mxu0
      %3875 = vmatprep.mubr.bf16.mxu0 0
      %3876 = vmatmul.mubr.bf16.gmra.mxu0 %v3748
      %v3877 = vpop.f32.mrf.mxu0
      %v3878 = vadd.f32 0.0, %v3877
      %v3879 = vpop.f32.mrf.mxu0
      %v3880 = vpop.f32.mrf.mxu0
      %v3881 = vadd.f32 0.0, %v3880
      %v3882 = vpop.f32.mrf.mxu0
      %3883 = vmatprep.mubr.bf16.mxu0 0
      %3884 = vmatmul.mubr.bf16.gmra.mxu0 %v3751
      %v3885 = vpop.f32.mrf.mxu0
      %v3886 = vadd.f32 0.0, %v3885
      %v3887 = vpop.f32.mrf.mxu0
      %v3888 = vpop.f32.mrf.mxu0
      %v3889 = vadd.f32 0.0, %v3888
      %v3890 = vpop.f32.mrf.mxu0
      %3891 = vmatprep.mubr.bf16.mxu0 0
      %3892 = vmatmul.mubr.bf16.gmra.mxu0 %v3754
      %v3893 = vpop.f32.mrf.mxu0
      %v3894 = vadd.f32 0.0, %v3893
      %v3895 = vpop.f32.mrf.mxu0
      %v3896 = vpop.f32.mrf.mxu0
      %v3897 = vadd.f32 0.0, %v3896
      %v3898 = vpop.f32.mrf.mxu0
      %3899 = vmatprep.mubr.bf16.mxu0 0
      %3900 = vmatmul.mubr.bf16.gmra.mxu0 %v3757
      %v3901 = vpop.f32.mrf.mxu0
      %v3902 = vadd.f32 0.0, %v3901
      %v3903 = vpop.f32.mrf.mxu0
      %v3904 = vpop.f32.mrf.mxu0
      %v3905 = vadd.f32 0.0, %v3904
      %v3906 = vpop.f32.mrf.mxu0
      %3907 = vmatprep.mubr.bf16.mxu0 0
      %3908 = vmatmul.mubr.bf16.gmra.mxu0 %v3760
      %v3909 = vpop.f32.mrf.mxu0
      %v3910 = vadd.f32 0.0, %v3909
      %v3911 = vpop.f32.mrf.mxu0
      %v3912 = vpop.f32.mrf.mxu0
      %v3913 = vadd.f32 0.0, %v3912
      %v3914 = vpop.f32.mrf.mxu0
      %3915 = vmatprep.mubr.bf16.mxu0 0
      %3916 = vmatmul.mubr.bf16.gmra.mxu0 %v3763
      %v3917 = vpop.f32.mrf.mxu0
      %v3918 = vadd.f32 0.0, %v3917
      %v3919 = vpop.f32.mrf.mxu0
      %v3920 = vpop.f32.mrf.mxu0
      %v3921 = vadd.f32 0.0, %v3920
      %v3922 = vpop.f32.mrf.mxu0
      %3923 = vmatprep.mubr.bf16.mxu0 0
      %3924 = vmatmul.mubr.bf16.gmra.mxu0 %v3766
      %v3925 = vpop.f32.mrf.mxu0
      %v3926 = vadd.f32 0.0, %v3925
      %v3927 = vpop.f32.mrf.mxu0
      %v3928 = vpop.f32.mrf.mxu0
      %v3929 = vadd.f32 0.0, %v3928
      %v3930 = vpop.f32.mrf.mxu0
      %3931 = vdwg.mxu0
      %v3932 = vadd.f32 %v3544, %v3806
      %v3933 = vadd.f32 %v3547, %v3809
      %v3934 = vadd.f32 %v3552, %v3814
      %v3935 = vadd.f32 %v3555, %v3817
      %v3936 = vadd.f32 %v3560, %v3822
      %v3937 = vadd.f32 %v3563, %v3825
      %v3938 = vadd.f32 %v3568, %v3830
      %v3939 = vadd.f32 %v3571, %v3833
      %v3940 = vadd.f32 %v3576, %v3838
      %v3941 = vadd.f32 %v3579, %v3841
      %v3942 = vadd.f32 %v3584, %v3846
      %v3943 = vadd.f32 %v3587, %v3849
      %v3944 = vadd.f32 %v3592, %v3854
      %v3945 = vadd.f32 %v3595, %v3857
      %v3946 = vadd.f32 %v3600, %v3862
      %v3947 = vadd.f32 %v3603, %v3865
      %v3948 = vadd.f32 %v3608, %v3870
      %v3949 = vadd.f32 %v3611, %v3873
      %v3950 = vadd.f32 %v3616, %v3878
      %v3951 = vadd.f32 %v3619, %v3881
      %v3952 = vadd.f32 %v3624, %v3886
      %v3953 = vadd.f32 %v3627, %v3889
      %v3954 = vadd.f32 %v3632, %v3894
      %v3955 = vadd.f32 %v3635, %v3897
      %v3956 = vadd.f32 %v3640, %v3902
      %v3957 = vadd.f32 %v3643, %v3905
      %v3958 = vadd.f32 %v3648, %v3910
      %v3959 = vadd.f32 %v3651, %v3913
      %v3960 = vadd.f32 %v3656, %v3918
      %v3961 = vadd.f32 %v3659, %v3921
      %v3962 = vadd.f32 %v3664, %v3926
      %v3963 = vadd.f32 %v3667, %v3929
      %v3964 = vld [vmem:[%s3114] sm:$0xff]
      %v3965 = vld [vmem:[%s3114 + $0x8] sm:$0xff]
      %v3966 = vld [vmem:[%s3114 + $0x18] sm:$0xff]
      %v3967 = vld [vmem:[%s3114 + $0x20] sm:$0xff]
      %v3968 = vld [vmem:[%s3114 + $0x30] sm:$0xff]
      %v3969 = vld [vmem:[%s3114 + $0x38] sm:$0xff]
      %v3970 = vld [vmem:[%s3114 + $0x48] sm:$0xff]
      %v3971 = vld [vmem:[%s3114 + $0x50] sm:$0xff]
      %v3972 = vld [vmem:[%s3114 + $0x60] sm:$0xff]
      %v3973 = vld [vmem:[%s3114 + $0x68] sm:$0xff]
      %v3974 = vld [vmem:[%s3114 + $0x78] sm:$0xff]
      %v3975 = vld [vmem:[%s3114 + $0x80] sm:$0xff]
      %v3976 = vld [vmem:[%s3114 + $0x90] sm:$0xff]
      %v3977 = vld [vmem:[%s3114 + $0x98] sm:$0xff]
      %v3978 = vld [vmem:[%s3114 + $0xa8] sm:$0xff]
      %v3979 = vld [vmem:[%s3114 + $0xb0] sm:$0xff]
      %v3980 = vld [vmem:[%s3114 + $0xc0] sm:$0xff]
      %v3981 = vld [vmem:[%s3114 + $0xc8] sm:$0xff]
      %v3982 = vld [vmem:[%s3114 + $0xd8] sm:$0xff]
      %v3983 = vld [vmem:[%s3114 + $0xe0] sm:$0xff]
      %v3984 = vld [vmem:[%s3114 + $0xf0] sm:$0xff]
      %v3985 = vld [vmem:[%s3114 + $0xf8] sm:$0xff]
      %v3986 = vld [vmem:[%s3114 + $0x108] sm:$0xff]
      %v3987 = vld [vmem:[%s3114 + $0x110] sm:$0xff]
      %v3988 = vld [vmem:[%s3114 + $0x120] sm:$0xff]
      %v3989 = vld [vmem:[%s3114 + $0x128] sm:$0xff]
      %v3990 = vld [vmem:[%s3114 + $0x138] sm:$0xff]
      %v3991 = vld [vmem:[%s3114 + $0x140] sm:$0xff]
      %v3992 = vld [vmem:[%s3114 + $0x150] sm:$0xff]
      %v3993 = vld [vmem:[%s3114 + $0x158] sm:$0xff]
      %v3994 = vld [vmem:[%s3114 + $0x168] sm:$0xff]
      %v3995 = vld [vmem:[%s3114 + $0x170] sm:$0xff]
      %v3996 = vpack.c.bf16 %v3965, %v3964
      %v3997 = vpack.c.bf16 %v3967, %v3966
      %v3998 = vpack.c.bf16 %v3969, %v3968
      %v3999 = vpack.c.bf16 %v3971, %v3970
      %v4000 = vpack.c.bf16 %v3973, %v3972
      %v4001 = vpack.c.bf16 %v3975, %v3974
      %v4002 = vpack.c.bf16 %v3977, %v3976
      %v4003 = vpack.c.bf16 %v3979, %v3978
      %v4004 = vpack.c.bf16 %v3981, %v3980
      %v4005 = vpack.c.bf16 %v3983, %v3982
      %v4006 = vpack.c.bf16 %v3985, %v3984
      %v4007 = vpack.c.bf16 %v3987, %v3986
      %v4008 = vpack.c.bf16 %v3989, %v3988
      %v4009 = vpack.c.bf16 %v3991, %v3990
      %v4010 = vpack.c.bf16 %v3993, %v3992
      %v4011 = vpack.c.bf16 %v3995, %v3994
      %s4012 = scalar_lea.vmem %s324, 12
      %v4013 = vld [vmem:[%s4012] sm:$0xf]
      %v4015 = vsel %vm596, %v3996, 0
      %v4018 = vsel %vm596, %v3997, 0
      %v4021 = vsel %vm596, %v3998, 0
      %v4024 = vsel %vm596, %v3999, 0
      %v4027 = vsel %vm596, %v4000, 0
      %v4030 = vsel %vm596, %v4001, 0
      %v4033 = vsel %vm596, %v4002, 0
      %v4036 = vsel %vm596, %v4003, 0
      %v4039 = vsel %vm596, %v4004, 0
      %v4042 = vsel %vm596, %v4005, 0
      %v4045 = vsel %vm596, %v4006, 0
      %v4048 = vsel %vm596, %v4007, 0
      %v4051 = vsel %vm596, %v4008, 0
      %v4054 = vsel %vm596, %v4009, 0
      %v4057 = vsel %vm596, %v4010, 0
      %v4060 = vsel %vm596, %v4011, 0
      %v4063 = vsel %vm645, %v4013, 0
      %4065 = vmatprep.subr.bf16.mxu0 0
      %4066 = vmatpush1.bf16.msra.mxu0 0
      %4067 = vmatprep.subr.bf16.mxu0 0
      %4068 = vmatpush1.bf16.msra.mxu0 0
      %4069 = vmatprep.subr.bf16.mxu0 0
      %4070 = vmatpush1.bf16.msra.mxu0 0
      %4071 = vmatprep.subr.bf16.mxu0 0
      %4072 = vmatpush1.bf16.msra.mxu0 0
      %4073 = vmatprep.subr.bf16.mxu0 0
      %4074 = vmatpush1.bf16.msra.mxu0 0
      %4075 = vmatprep.subr.bf16.mxu0 0
      %4076 = vmatpush1.bf16.msra.mxu0 0
      %4077 = vmatprep.subr.bf16.mxu0 0
      %4078 = vmatpush1.bf16.msra.mxu0 0
      %4079 = vmatprep.subr.bf16.mxu0 0
      %4080 = vmatpush1.bf16.msra.mxu0 %v4063
      %4081 = vmatprep.subr.bf16.mxu0 0
      %4082 = vmatpush2.bf16.msra.mxu0 0
      %4083 = vmatprep.subr.bf16.mxu0 0
      %4084 = vmatpush2.bf16.msra.mxu0 0
      %4085 = vmatprep.subr.bf16.mxu0 0
      %4086 = vmatpush2.bf16.msra.mxu0 0
      %4087 = vmatprep.subr.bf16.mxu0 0
      %4088 = vmatpush2.bf16.msra.mxu0 0
      %4089 = vmatprep.subr.bf16.mxu0 0
      %4090 = vmatpush2.bf16.msra.mxu0 0
      %4091 = vmatprep.subr.bf16.mxu0 0
      %4092 = vmatpush2.bf16.msra.mxu0 0
      %4093 = vmatprep.subr.bf16.mxu0 0
      %4094 = vmatpush2.bf16.msra.mxu0 0
      %4095 = vmatprep.subr.bf16.mxu0 0
      %4096 = vmatpush2.bf16.msra.mxu0 0
      %4097 = vmatprep.mubr.bf16.mxu0 0
      %4098 = vmatmul.mubr.bf16.gmra.mxu0 %v4015
      %v4099 = vpop.f32.mrf.mxu0
      %v4100 = vadd.f32 0.0, %v4099
      %v4101 = vpop.f32.mrf.mxu0
      %v4102 = vpop.f32.mrf.mxu0
      %v4103 = vadd.f32 0.0, %v4102
      %v4104 = vpop.f32.mrf.mxu0
      %4105 = vmatprep.mubr.bf16.mxu0 0
      %4106 = vmatmul.mubr.bf16.gmra.mxu0 %v4018
      %v4107 = vpop.f32.mrf.mxu0
      %v4108 = vadd.f32 0.0, %v4107
      %v4109 = vpop.f32.mrf.mxu0
      %v4110 = vpop.f32.mrf.mxu0
      %v4111 = vadd.f32 0.0, %v4110
      %v4112 = vpop.f32.mrf.mxu0
      %4113 = vmatprep.mubr.bf16.mxu0 0
      %4114 = vmatmul.mubr.bf16.gmra.mxu0 %v4021
      %v4115 = vpop.f32.mrf.mxu0
      %v4116 = vadd.f32 0.0, %v4115
      %v4117 = vpop.f32.mrf.mxu0
      %v4118 = vpop.f32.mrf.mxu0
      %v4119 = vadd.f32 0.0, %v4118
      %v4120 = vpop.f32.mrf.mxu0
      %4121 = vmatprep.mubr.bf16.mxu0 0
      %4122 = vmatmul.mubr.bf16.gmra.mxu0 %v4024
      %v4123 = vpop.f32.mrf.mxu0
      %v4124 = vadd.f32 0.0, %v4123
      %v4125 = vpop.f32.mrf.mxu0
      %v4126 = vpop.f32.mrf.mxu0
      %v4127 = vadd.f32 0.0, %v4126
      %v4128 = vpop.f32.mrf.mxu0
      %4129 = vmatprep.mubr.bf16.mxu0 0
      %4130 = vmatmul.mubr.bf16.gmra.mxu0 %v4027
      %v4131 = vpop.f32.mrf.mxu0
      %v4132 = vadd.f32 0.0, %v4131
      %v4133 = vpop.f32.mrf.mxu0
      %v4134 = vpop.f32.mrf.mxu0
      %v4135 = vadd.f32 0.0, %v4134
      %v4136 = vpop.f32.mrf.mxu0
      %4137 = vmatprep.mubr.bf16.mxu0 0
      %4138 = vmatmul.mubr.bf16.gmra.mxu0 %v4030
      %v4139 = vpop.f32.mrf.mxu0
      %v4140 = vadd.f32 0.0, %v4139
      %v4141 = vpop.f32.mrf.mxu0
      %v4142 = vpop.f32.mrf.mxu0
      %v4143 = vadd.f32 0.0, %v4142
      %v4144 = vpop.f32.mrf.mxu0
      %4145 = vmatprep.mubr.bf16.mxu0 0
      %4146 = vmatmul.mubr.bf16.gmra.mxu0 %v4033
      %v4147 = vpop.f32.mrf.mxu0
      %v4148 = vadd.f32 0.0, %v4147
      %v4149 = vpop.f32.mrf.mxu0
      %v4150 = vpop.f32.mrf.mxu0
      %v4151 = vadd.f32 0.0, %v4150
      %v4152 = vpop.f32.mrf.mxu0
      %4153 = vmatprep.mubr.bf16.mxu0 0
      %4154 = vmatmul.mubr.bf16.gmra.mxu0 %v4036
      %v4155 = vpop.f32.mrf.mxu0
      %v4156 = vadd.f32 0.0, %v4155
      %v4157 = vpop.f32.mrf.mxu0
      %v4158 = vpop.f32.mrf.mxu0
      %v4159 = vadd.f32 0.0, %v4158
      %v4160 = vpop.f32.mrf.mxu0
      %4161 = vmatprep.mubr.bf16.mxu0 0
      %4162 = vmatmul.mubr.bf16.gmra.mxu0 %v4039
      %v4163 = vpop.f32.mrf.mxu0
      %v4164 = vadd.f32 0.0, %v4163
      %v4165 = vpop.f32.mrf.mxu0
      %v4166 = vpop.f32.mrf.mxu0
      %v4167 = vadd.f32 0.0, %v4166
      %v4168 = vpop.f32.mrf.mxu0
      %4169 = vmatprep.mubr.bf16.mxu0 0
      %4170 = vmatmul.mubr.bf16.gmra.mxu0 %v4042
      %v4171 = vpop.f32.mrf.mxu0
      %v4172 = vadd.f32 0.0, %v4171
      %v4173 = vpop.f32.mrf.mxu0
      %v4174 = vpop.f32.mrf.mxu0
      %v4175 = vadd.f32 0.0, %v4174
      %v4176 = vpop.f32.mrf.mxu0
      %4177 = vmatprep.mubr.bf16.mxu0 0
      %4178 = vmatmul.mubr.bf16.gmra.mxu0 %v4045
      %v4179 = vpop.f32.mrf.mxu0
      %v4180 = vadd.f32 0.0, %v4179
      %v4181 = vpop.f32.mrf.mxu0
      %v4182 = vpop.f32.mrf.mxu0
      %v4183 = vadd.f32 0.0, %v4182
      %v4184 = vpop.f32.mrf.mxu0
      %4185 = vmatprep.mubr.bf16.mxu0 0
      %4186 = vmatmul.mubr.bf16.gmra.mxu0 %v4048
      %v4187 = vpop.f32.mrf.mxu0
      %v4188 = vadd.f32 0.0, %v4187
      %v4189 = vpop.f32.mrf.mxu0
      %v4190 = vpop.f32.mrf.mxu0
      %v4191 = vadd.f32 0.0, %v4190
      %v4192 = vpop.f32.mrf.mxu0
      %4193 = vmatprep.mubr.bf16.mxu0 0
      %4194 = vmatmul.mubr.bf16.gmra.mxu0 %v4051
      %v4195 = vpop.f32.mrf.mxu0
      %v4196 = vadd.f32 0.0, %v4195
      %v4197 = vpop.f32.mrf.mxu0
      %v4198 = vpop.f32.mrf.mxu0
      %v4199 = vadd.f32 0.0, %v4198
      %v4200 = vpop.f32.mrf.mxu0
      %4201 = vmatprep.mubr.bf16.mxu0 0
      %4202 = vmatmul.mubr.bf16.gmra.mxu0 %v4054
      %v4203 = vpop.f32.mrf.mxu0
      %v4204 = vadd.f32 0.0, %v4203
      %v4205 = vpop.f32.mrf.mxu0
      %v4206 = vpop.f32.mrf.mxu0
      %v4207 = vadd.f32 0.0, %v4206
      %v4208 = vpop.f32.mrf.mxu0
      %4209 = vmatprep.mubr.bf16.mxu0 0
      %4210 = vmatmul.mubr.bf16.gmra.mxu0 %v4057
      %v4211 = vpop.f32.mrf.mxu0
      %v4212 = vadd.f32 0.0, %v4211
      %v4213 = vpop.f32.mrf.mxu0
      %v4214 = vpop.f32.mrf.mxu0
      %v4215 = vadd.f32 0.0, %v4214
      %v4216 = vpop.f32.mrf.mxu0
      %4217 = vmatprep.mubr.bf16.mxu0 0
      %4218 = vmatmul.mubr.bf16.gmra.mxu0 %v4060
      %v4219 = vpop.f32.mrf.mxu0
      %v4220 = vadd.f32 0.0, %v4219
      %v4221 = vpop.f32.mrf.mxu0
      %v4222 = vpop.f32.mrf.mxu0
      %v4223 = vadd.f32 0.0, %v4222
      %v4224 = vpop.f32.mrf.mxu0
      %4225 = vdwg.mxu0
      %v4226 = vadd.f32 %v3932, %v4100
      %v4227 = vadd.f32 %v3933, %v4103
      %v4228 = vadd.f32 %v3934, %v4108
      %v4229 = vadd.f32 %v3935, %v4111
      %v4230 = vadd.f32 %v3936, %v4116
      %v4231 = vadd.f32 %v3937, %v4119
      %v4232 = vadd.f32 %v3938, %v4124
      %v4233 = vadd.f32 %v3939, %v4127
      %v4234 = vadd.f32 %v3940, %v4132
      %v4235 = vadd.f32 %v3941, %v4135
      %v4236 = vadd.f32 %v3942, %v4140
      %v4237 = vadd.f32 %v3943, %v4143
      %v4238 = vadd.f32 %v3944, %v4148
      %v4239 = vadd.f32 %v3945, %v4151
      %v4240 = vadd.f32 %v3946, %v4156
      %v4241 = vadd.f32 %v3947, %v4159
      %v4242 = vadd.f32 %v3948, %v4164
      %v4243 = vadd.f32 %v3949, %v4167
      %v4244 = vadd.f32 %v3950, %v4172
      %v4245 = vadd.f32 %v3951, %v4175
      %v4246 = vadd.f32 %v3952, %v4180
      %v4247 = vadd.f32 %v3953, %v4183
      %v4248 = vadd.f32 %v3954, %v4188
      %v4249 = vadd.f32 %v3955, %v4191
      %v4250 = vadd.f32 %v3956, %v4196
      %v4251 = vadd.f32 %v3957, %v4199
      %v4252 = vadd.f32 %v3958, %v4204
      %v4253 = vadd.f32 %v3959, %v4207
      %v4254 = vadd.f32 %v3960, %v4212
      %v4255 = vadd.f32 %v3961, %v4215
      %v4256 = vadd.f32 %v3962, %v4220
      %v4257 = vadd.f32 %v3963, %v4223
      %v4258 = vld [vmem:[%s3114 + $0x1] sm:$0xff]
      %v4259 = vld [vmem:[%s3114 + $0x9] sm:$0xff]
      %v4260 = vld [vmem:[%s3114 + $0x19] sm:$0xff]
      %v4261 = vld [vmem:[%s3114 + $0x21] sm:$0xff]
      %v4262 = vld [vmem:[%s3114 + $0x31] sm:$0xff]
      %v4263 = vld [vmem:[%s3114 + $0x39] sm:$0xff]
      %v4264 = vld [vmem:[%s3114 + $0x49] sm:$0xff]
      %v4265 = vld [vmem:[%s3114 + $0x51] sm:$0xff]
      %v4266 = vld [vmem:[%s3114 + $0x61] sm:$0xff]
      %v4267 = vld [vmem:[%s3114 + $0x69] sm:$0xff]
      %v4268 = vld [vmem:[%s3114 + $0x79] sm:$0xff]
      %v4269 = vld [vmem:[%s3114 + $0x81] sm:$0xff]
      %v4270 = vld [vmem:[%s3114 + $0x91] sm:$0xff]
      %v4271 = vld [vmem:[%s3114 + $0x99] sm:$0xff]
      %v4272 = vld [vmem:[%s3114 + $0xa9] sm:$0xff]
      %v4273 = vld [vmem:[%s3114 + $0xb1] sm:$0xff]
      %v4274 = vld [vmem:[%s3114 + $0xc1] sm:$0xff]
      %v4275 = vld [vmem:[%s3114 + $0xc9] sm:$0xff]
      %v4276 = vld [vmem:[%s3114 + $0xd9] sm:$0xff]
      %v4277 = vld [vmem:[%s3114 + $0xe1] sm:$0xff]
      %v4278 = vld [vmem:[%s3114 + $0xf1] sm:$0xff]
      %v4279 = vld [vmem:[%s3114 + $0xf9] sm:$0xff]
      %v4280 = vld [vmem:[%s3114 + $0x109] sm:$0xff]
      %v4281 = vld [vmem:[%s3114 + $0x111] sm:$0xff]
      %v4282 = vld [vmem:[%s3114 + $0x121] sm:$0xff]
      %v4283 = vld [vmem:[%s3114 + $0x129] sm:$0xff]
      %v4284 = vld [vmem:[%s3114 + $0x139] sm:$0xff]
      %v4285 = vld [vmem:[%s3114 + $0x141] sm:$0xff]
      %v4286 = vld [vmem:[%s3114 + $0x151] sm:$0xff]
      %v4287 = vld [vmem:[%s3114 + $0x159] sm:$0xff]
      %v4288 = vld [vmem:[%s3114 + $0x169] sm:$0xff]
      %v4289 = vld [vmem:[%s3114 + $0x171] sm:$0xff]
      %v4290 = vpack.c.bf16 %v4259, %v4258
      %v4291 = vpack.c.bf16 %v4261, %v4260
      %v4292 = vpack.c.bf16 %v4263, %v4262
      %v4293 = vpack.c.bf16 %v4265, %v4264
      %v4294 = vpack.c.bf16 %v4267, %v4266
      %v4295 = vpack.c.bf16 %v4269, %v4268
      %v4296 = vpack.c.bf16 %v4271, %v4270
      %v4297 = vpack.c.bf16 %v4273, %v4272
      %v4298 = vpack.c.bf16 %v4275, %v4274
      %v4299 = vpack.c.bf16 %v4277, %v4276
      %v4300 = vpack.c.bf16 %v4279, %v4278
      %v4301 = vpack.c.bf16 %v4281, %v4280
      %v4302 = vpack.c.bf16 %v4283, %v4282
      %v4303 = vpack.c.bf16 %v4285, %v4284
      %v4304 = vpack.c.bf16 %v4287, %v4286
      %v4305 = vpack.c.bf16 %v4289, %v4288
      %s4306 = scalar_lea.vmem %s324, 16
      %v4307 = vld [vmem:[%s4306] sm:$0xf]
      %v4309 = vsel %vm596, %v4290, 0
      %v4312 = vsel %vm596, %v4291, 0
      %v4315 = vsel %vm596, %v4292, 0
      %v4318 = vsel %vm596, %v4293, 0
      %v4321 = vsel %vm596, %v4294, 0
      %v4324 = vsel %vm596, %v4295, 0
      %v4327 = vsel %vm596, %v4296, 0
      %v4330 = vsel %vm596, %v4297, 0
      %v4333 = vsel %vm596, %v4298, 0
      %v4336 = vsel %vm596, %v4299, 0
      %v4339 = vsel %vm596, %v4300, 0
      %v4342 = vsel %vm596, %v4301, 0
      %v4345 = vsel %vm596, %v4302, 0
      %v4348 = vsel %vm596, %v4303, 0
      %v4351 = vsel %vm596, %v4304, 0
      %v4354 = vsel %vm596, %v4305, 0
      %v4357 = vsel %vm645, %v4307, 0
      %4359 = vmatprep.subr.bf16.mxu0 0
      %4360 = vmatpush1.bf16.msra.mxu0 0
      %4361 = vmatprep.subr.bf16.mxu0 0
      %4362 = vmatpush1.bf16.msra.mxu0 0
      %4363 = vmatprep.subr.bf16.mxu0 0
      %4364 = vmatpush1.bf16.msra.mxu0 0
      %4365 = vmatprep.subr.bf16.mxu0 0
      %4366 = vmatpush1.bf16.msra.mxu0 0
      %4367 = vmatprep.subr.bf16.mxu0 0
      %4368 = vmatpush1.bf16.msra.mxu0 0
      %4369 = vmatprep.subr.bf16.mxu0 0
      %4370 = vmatpush1.bf16.msra.mxu0 0
      %4371 = vmatprep.subr.bf16.mxu0 0
      %4372 = vmatpush1.bf16.msra.mxu0 0
      %4373 = vmatprep.subr.bf16.mxu0 0
      %4374 = vmatpush1.bf16.msra.mxu0 %v4357
      %4375 = vmatprep.subr.bf16.mxu0 0
      %4376 = vmatpush2.bf16.msra.mxu0 0
      %4377 = vmatprep.subr.bf16.mxu0 0
      %4378 = vmatpush2.bf16.msra.mxu0 0
      %4379 = vmatprep.subr.bf16.mxu0 0
      %4380 = vmatpush2.bf16.msra.mxu0 0
      %4381 = vmatprep.subr.bf16.mxu0 0
      %4382 = vmatpush2.bf16.msra.mxu0 0
      %4383 = vmatprep.subr.bf16.mxu0 0
      %4384 = vmatpush2.bf16.msra.mxu0 0
      %4385 = vmatprep.subr.bf16.mxu0 0
      %4386 = vmatpush2.bf16.msra.mxu0 0
      %4387 = vmatprep.subr.bf16.mxu0 0
      %4388 = vmatpush2.bf16.msra.mxu0 0
      %4389 = vmatprep.subr.bf16.mxu0 0
      %4390 = vmatpush2.bf16.msra.mxu0 0
      %4391 = vmatprep.mubr.bf16.mxu0 0
      %4392 = vmatmul.mubr.bf16.gmra.mxu0 %v4309
      %v4393 = vpop.f32.mrf.mxu0
      %v4394 = vadd.f32 0.0, %v4393
      %v4395 = vpop.f32.mrf.mxu0
      %v4396 = vpop.f32.mrf.mxu0
      %v4397 = vadd.f32 0.0, %v4396
      %v4398 = vpop.f32.mrf.mxu0
      %4399 = vmatprep.mubr.bf16.mxu0 0
      %4400 = vmatmul.mubr.bf16.gmra.mxu0 %v4312
      %v4401 = vpop.f32.mrf.mxu0
      %v4402 = vadd.f32 0.0, %v4401
      %v4403 = vpop.f32.mrf.mxu0
      %v4404 = vpop.f32.mrf.mxu0
      %v4405 = vadd.f32 0.0, %v4404
      %v4406 = vpop.f32.mrf.mxu0
      %4407 = vmatprep.mubr.bf16.mxu0 0
      %4408 = vmatmul.mubr.bf16.gmra.mxu0 %v4315
      %v4409 = vpop.f32.mrf.mxu0
      %v4410 = vadd.f32 0.0, %v4409
      %v4411 = vpop.f32.mrf.mxu0
      %v4412 = vpop.f32.mrf.mxu0
      %v4413 = vadd.f32 0.0, %v4412
      %v4414 = vpop.f32.mrf.mxu0
      %4415 = vmatprep.mubr.bf16.mxu0 0
      %4416 = vmatmul.mubr.bf16.gmra.mxu0 %v4318
      %v4417 = vpop.f32.mrf.mxu0
      %v4418 = vadd.f32 0.0, %v4417
      %v4419 = vpop.f32.mrf.mxu0
      %v4420 = vpop.f32.mrf.mxu0
      %v4421 = vadd.f32 0.0, %v4420
      %v4422 = vpop.f32.mrf.mxu0
      %4423 = vmatprep.mubr.bf16.mxu0 0
      %4424 = vmatmul.mubr.bf16.gmra.mxu0 %v4321
      %v4425 = vpop.f32.mrf.mxu0
      %v4426 = vadd.f32 0.0, %v4425
      %v4427 = vpop.f32.mrf.mxu0
      %v4428 = vpop.f32.mrf.mxu0
      %v4429 = vadd.f32 0.0, %v4428
      %v4430 = vpop.f32.mrf.mxu0
      %4431 = vmatprep.mubr.bf16.mxu0 0
      %4432 = vmatmul.mubr.bf16.gmra.mxu0 %v4324
      %v4433 = vpop.f32.mrf.mxu0
      %v4434 = vadd.f32 0.0, %v4433
      %v4435 = vpop.f32.mrf.mxu0
      %v4436 = vpop.f32.mrf.mxu0
      %v4437 = vadd.f32 0.0, %v4436
      %v4438 = vpop.f32.mrf.mxu0
      %4439 = vmatprep.mubr.bf16.mxu0 0
      %4440 = vmatmul.mubr.bf16.gmra.mxu0 %v4327
      %v4441 = vpop.f32.mrf.mxu0
      %v4442 = vadd.f32 0.0, %v4441
      %v4443 = vpop.f32.mrf.mxu0
      %v4444 = vpop.f32.mrf.mxu0
      %v4445 = vadd.f32 0.0, %v4444
      %v4446 = vpop.f32.mrf.mxu0
      %4447 = vmatprep.mubr.bf16.mxu0 0
      %4448 = vmatmul.mubr.bf16.gmra.mxu0 %v4330
      %v4449 = vpop.f32.mrf.mxu0
      %v4450 = vadd.f32 0.0, %v4449
      %v4451 = vpop.f32.mrf.mxu0
      %v4452 = vpop.f32.mrf.mxu0
      %v4453 = vadd.f32 0.0, %v4452
      %v4454 = vpop.f32.mrf.mxu0
      %4455 = vmatprep.mubr.bf16.mxu0 0
      %4456 = vmatmul.mubr.bf16.gmra.mxu0 %v4333
      %v4457 = vpop.f32.mrf.mxu0
      %v4458 = vadd.f32 0.0, %v4457
      %v4459 = vpop.f32.mrf.mxu0
      %v4460 = vpop.f32.mrf.mxu0
      %v4461 = vadd.f32 0.0, %v4460
      %v4462 = vpop.f32.mrf.mxu0
      %4463 = vmatprep.mubr.bf16.mxu0 0
      %4464 = vmatmul.mubr.bf16.gmra.mxu0 %v4336
      %v4465 = vpop.f32.mrf.mxu0
      %v4466 = vadd.f32 0.0, %v4465
      %v4467 = vpop.f32.mrf.mxu0
      %v4468 = vpop.f32.mrf.mxu0
      %v4469 = vadd.f32 0.0, %v4468
      %v4470 = vpop.f32.mrf.mxu0
      %4471 = vmatprep.mubr.bf16.mxu0 0
      %4472 = vmatmul.mubr.bf16.gmra.mxu0 %v4339
      %v4473 = vpop.f32.mrf.mxu0
      %v4474 = vadd.f32 0.0, %v4473
      %v4475 = vpop.f32.mrf.mxu0
      %v4476 = vpop.f32.mrf.mxu0
      %v4477 = vadd.f32 0.0, %v4476
      %v4478 = vpop.f32.mrf.mxu0
      %4479 = vmatprep.mubr.bf16.mxu0 0
      %4480 = vmatmul.mubr.bf16.gmra.mxu0 %v4342
      %v4481 = vpop.f32.mrf.mxu0
      %v4482 = vadd.f32 0.0, %v4481
      %v4483 = vpop.f32.mrf.mxu0
      %v4484 = vpop.f32.mrf.mxu0
      %v4485 = vadd.f32 0.0, %v4484
      %v4486 = vpop.f32.mrf.mxu0
      %4487 = vmatprep.mubr.bf16.mxu0 0
      %4488 = vmatmul.mubr.bf16.gmra.mxu0 %v4345
      %v4489 = vpop.f32.mrf.mxu0
      %v4490 = vadd.f32 0.0, %v4489
      %v4491 = vpop.f32.mrf.mxu0
      %v4492 = vpop.f32.mrf.mxu0
      %v4493 = vadd.f32 0.0, %v4492
      %v4494 = vpop.f32.mrf.mxu0
      %4495 = vmatprep.mubr.bf16.mxu0 0
      %4496 = vmatmul.mubr.bf16.gmra.mxu0 %v4348
      %v4497 = vpop.f32.mrf.mxu0
      %v4498 = vadd.f32 0.0, %v4497
      %v4499 = vpop.f32.mrf.mxu0
      %v4500 = vpop.f32.mrf.mxu0
      %v4501 = vadd.f32 0.0, %v4500
      %v4502 = vpop.f32.mrf.mxu0
      %4503 = vmatprep.mubr.bf16.mxu0 0
      %4504 = vmatmul.mubr.bf16.gmra.mxu0 %v4351
      %v4505 = vpop.f32.mrf.mxu0
      %v4506 = vadd.f32 0.0, %v4505
      %v4507 = vpop.f32.mrf.mxu0
      %v4508 = vpop.f32.mrf.mxu0
      %v4509 = vadd.f32 0.0, %v4508
      %v4510 = vpop.f32.mrf.mxu0
      %4511 = vmatprep.mubr.bf16.mxu0 0
      %4512 = vmatmul.mubr.bf16.gmra.mxu0 %v4354
      %v4513 = vpop.f32.mrf.mxu0
      %v4514 = vadd.f32 0.0, %v4513
      %v4515 = vpop.f32.mrf.mxu0
      %v4516 = vpop.f32.mrf.mxu0
      %v4517 = vadd.f32 0.0, %v4516
      %v4518 = vpop.f32.mrf.mxu0
      %4519 = vdwg.mxu0
      %v4520 = vadd.f32 %v4226, %v4394
      %v4521 = vadd.f32 %v4227, %v4397
      %v4522 = vadd.f32 %v4228, %v4402
      %v4523 = vadd.f32 %v4229, %v4405
      %v4524 = vadd.f32 %v4230, %v4410
      %v4525 = vadd.f32 %v4231, %v4413
      %v4526 = vadd.f32 %v4232, %v4418
      %v4527 = vadd.f32 %v4233, %v4421
      %v4528 = vadd.f32 %v4234, %v4426
      %v4529 = vadd.f32 %v4235, %v4429
      %v4530 = vadd.f32 %v4236, %v4434
      %v4531 = vadd.f32 %v4237, %v4437
      %v4532 = vadd.f32 %v4238, %v4442
      %v4533 = vadd.f32 %v4239, %v4445
      %v4534 = vadd.f32 %v4240, %v4450
      %v4535 = vadd.f32 %v4241, %v4453
      %v4536 = vadd.f32 %v4242, %v4458
      %v4537 = vadd.f32 %v4243, %v4461
      %v4538 = vadd.f32 %v4244, %v4466
      %v4539 = vadd.f32 %v4245, %v4469
      %v4540 = vadd.f32 %v4246, %v4474
      %v4541 = vadd.f32 %v4247, %v4477
      %v4542 = vadd.f32 %v4248, %v4482
      %v4543 = vadd.f32 %v4249, %v4485
      %v4544 = vadd.f32 %v4250, %v4490
      %v4545 = vadd.f32 %v4251, %v4493
      %v4546 = vadd.f32 %v4252, %v4498
      %v4547 = vadd.f32 %v4253, %v4501
      %v4548 = vadd.f32 %v4254, %v4506
      %v4549 = vadd.f32 %v4255, %v4509
      %v4550 = vadd.f32 %v4256, %v4514
      %v4551 = vadd.f32 %v4257, %v4517
      %v4552 = vld [vmem:[%s3114 + $0x2] sm:$0xff]
      %v4553 = vld [vmem:[%s3114 + $0xa] sm:$0xff]
      %v4554 = vld [vmem:[%s3114 + $0x1a] sm:$0xff]
      %v4555 = vld [vmem:[%s3114 + $0x22] sm:$0xff]
      %v4556 = vld [vmem:[%s3114 + $0x32] sm:$0xff]
      %v4557 = vld [vmem:[%s3114 + $0x3a] sm:$0xff]
      %v4558 = vld [vmem:[%s3114 + $0x4a] sm:$0xff]
      %v4559 = vld [vmem:[%s3114 + $0x52] sm:$0xff]
      %v4560 = vld [vmem:[%s3114 + $0x62] sm:$0xff]
      %v4561 = vld [vmem:[%s3114 + $0x6a] sm:$0xff]
      %v4562 = vld [vmem:[%s3114 + $0x7a] sm:$0xff]
      %v4563 = vld [vmem:[%s3114 + $0x82] sm:$0xff]
      %v4564 = vld [vmem:[%s3114 + $0x92] sm:$0xff]
      %v4565 = vld [vmem:[%s3114 + $0x9a] sm:$0xff]
      %v4566 = vld [vmem:[%s3114 + $0xaa] sm:$0xff]
      %v4567 = vld [vmem:[%s3114 + $0xb2] sm:$0xff]
      %v4568 = vld [vmem:[%s3114 + $0xc2] sm:$0xff]
      %v4569 = vld [vmem:[%s3114 + $0xca] sm:$0xff]
      %v4570 = vld [vmem:[%s3114 + $0xda] sm:$0xff]
      %v4571 = vld [vmem:[%s3114 + $0xe2] sm:$0xff]
      %v4572 = vld [vmem:[%s3114 + $0xf2] sm:$0xff]
      %v4573 = vld [vmem:[%s3114 + $0xfa] sm:$0xff]
      %v4574 = vld [vmem:[%s3114 + $0x10a] sm:$0xff]
      %v4575 = vld [vmem:[%s3114 + $0x112] sm:$0xff]
      %v4576 = vld [vmem:[%s3114 + $0x122] sm:$0xff]
      %v4577 = vld [vmem:[%s3114 + $0x12a] sm:$0xff]
      %v4578 = vld [vmem:[%s3114 + $0x13a] sm:$0xff]
      %v4579 = vld [vmem:[%s3114 + $0x142] sm:$0xff]
      %v4580 = vld [vmem:[%s3114 + $0x152] sm:$0xff]
      %v4581 = vld [vmem:[%s3114 + $0x15a] sm:$0xff]
      %v4582 = vld [vmem:[%s3114 + $0x16a] sm:$0xff]
      %v4583 = vld [vmem:[%s3114 + $0x172] sm:$0xff]
      %v4584 = vpack.c.bf16 %v4553, %v4552
      %v4585 = vpack.c.bf16 %v4555, %v4554
      %v4586 = vpack.c.bf16 %v4557, %v4556
      %v4587 = vpack.c.bf16 %v4559, %v4558
      %v4588 = vpack.c.bf16 %v4561, %v4560
      %v4589 = vpack.c.bf16 %v4563, %v4562
      %v4590 = vpack.c.bf16 %v4565, %v4564
      %v4591 = vpack.c.bf16 %v4567, %v4566
      %v4592 = vpack.c.bf16 %v4569, %v4568
      %v4593 = vpack.c.bf16 %v4571, %v4570
      %v4594 = vpack.c.bf16 %v4573, %v4572
      %v4595 = vpack.c.bf16 %v4575, %v4574
      %v4596 = vpack.c.bf16 %v4577, %v4576
      %v4597 = vpack.c.bf16 %v4579, %v4578
      %v4598 = vpack.c.bf16 %v4581, %v4580
      %v4599 = vpack.c.bf16 %v4583, %v4582
      %s4600 = scalar_lea.vmem %s324, 20
      %v4601 = vld [vmem:[%s4600] sm:$0xf]
      %v4603 = vsel %vm596, %v4584, 0
      %v4606 = vsel %vm596, %v4585, 0
      %v4609 = vsel %vm596, %v4586, 0
      %v4612 = vsel %vm596, %v4587, 0
      %v4615 = vsel %vm596, %v4588, 0
      %v4618 = vsel %vm596, %v4589, 0
      %v4621 = vsel %vm596, %v4590, 0
      %v4624 = vsel %vm596, %v4591, 0
      %v4627 = vsel %vm596, %v4592, 0
      %v4630 = vsel %vm596, %v4593, 0
      %v4633 = vsel %vm596, %v4594, 0
      %v4636 = vsel %vm596, %v4595, 0
      %v4639 = vsel %vm596, %v4596, 0
      %v4642 = vsel %vm596, %v4597, 0
      %v4645 = vsel %vm596, %v4598, 0
      %v4648 = vsel %vm596, %v4599, 0
      %v4651 = vsel %vm645, %v4601, 0
      %4653 = vmatprep.subr.bf16.mxu0 0
      %4654 = vmatpush1.bf16.msra.mxu0 0
      %4655 = vmatprep.subr.bf16.mxu0 0
      %4656 = vmatpush1.bf16.msra.mxu0 0
      %4657 = vmatprep.subr.bf16.mxu0 0
      %4658 = vmatpush1.bf16.msra.mxu0 0
      %4659 = vmatprep.subr.bf16.mxu0 0
      %4660 = vmatpush1.bf16.msra.mxu0 0
      %4661 = vmatprep.subr.bf16.mxu0 0
      %4662 = vmatpush1.bf16.msra.mxu0 0
      %4663 = vmatprep.subr.bf16.mxu0 0
      %4664 = vmatpush1.bf16.msra.mxu0 0
      %4665 = vmatprep.subr.bf16.mxu0 0
      %4666 = vmatpush1.bf16.msra.mxu0 0
      %4667 = vmatprep.subr.bf16.mxu0 0
      %4668 = vmatpush1.bf16.msra.mxu0 %v4651
      %4669 = vmatprep.subr.bf16.mxu0 0
      %4670 = vmatpush2.bf16.msra.mxu0 0
      %4671 = vmatprep.subr.bf16.mxu0 0
      %4672 = vmatpush2.bf16.msra.mxu0 0
      %4673 = vmatprep.subr.bf16.mxu0 0
      %4674 = vmatpush2.bf16.msra.mxu0 0
      %4675 = vmatprep.subr.bf16.mxu0 0
      %4676 = vmatpush2.bf16.msra.mxu0 0
      %4677 = vmatprep.subr.bf16.mxu0 0
      %4678 = vmatpush2.bf16.msra.mxu0 0
      %4679 = vmatprep.subr.bf16.mxu0 0
      %4680 = vmatpush2.bf16.msra.mxu0 0
      %4681 = vmatprep.subr.bf16.mxu0 0
      %4682 = vmatpush2.bf16.msra.mxu0 0
      %4683 = vmatprep.subr.bf16.mxu0 0
      %4684 = vmatpush2.bf16.msra.mxu0 0
      %4685 = vmatprep.mubr.bf16.mxu0 0
      %4686 = vmatmul.mubr.bf16.gmra.mxu0 %v4603
      %v4687 = vpop.f32.mrf.mxu0
      %v4688 = vadd.f32 0.0, %v4687
      %v4689 = vpop.f32.mrf.mxu0
      %v4690 = vpop.f32.mrf.mxu0
      %v4691 = vadd.f32 0.0, %v4690
      %v4692 = vpop.f32.mrf.mxu0
      %4693 = vmatprep.mubr.bf16.mxu0 0
      %4694 = vmatmul.mubr.bf16.gmra.mxu0 %v4606
      %v4695 = vpop.f32.mrf.mxu0
      %v4696 = vadd.f32 0.0, %v4695
      %v4697 = vpop.f32.mrf.mxu0
      %v4698 = vpop.f32.mrf.mxu0
      %v4699 = vadd.f32 0.0, %v4698
      %v4700 = vpop.f32.mrf.mxu0
      %4701 = vmatprep.mubr.bf16.mxu0 0
      %4702 = vmatmul.mubr.bf16.gmra.mxu0 %v4609
      %v4703 = vpop.f32.mrf.mxu0
      %v4704 = vadd.f32 0.0, %v4703
      %v4705 = vpop.f32.mrf.mxu0
      %v4706 = vpop.f32.mrf.mxu0
      %v4707 = vadd.f32 0.0, %v4706
      %v4708 = vpop.f32.mrf.mxu0
      %4709 = vmatprep.mubr.bf16.mxu0 0
      %4710 = vmatmul.mubr.bf16.gmra.mxu0 %v4612
      %v4711 = vpop.f32.mrf.mxu0
      %v4712 = vadd.f32 0.0, %v4711
      %v4713 = vpop.f32.mrf.mxu0
      %v4714 = vpop.f32.mrf.mxu0
      %v4715 = vadd.f32 0.0, %v4714
      %v4716 = vpop.f32.mrf.mxu0
      %4717 = vmatprep.mubr.bf16.mxu0 0
      %4718 = vmatmul.mubr.bf16.gmra.mxu0 %v4615
      %v4719 = vpop.f32.mrf.mxu0
      %v4720 = vadd.f32 0.0, %v4719
      %v4721 = vpop.f32.mrf.mxu0
      %v4722 = vpop.f32.mrf.mxu0
      %v4723 = vadd.f32 0.0, %v4722
      %v4724 = vpop.f32.mrf.mxu0
      %4725 = vmatprep.mubr.bf16.mxu0 0
      %4726 = vmatmul.mubr.bf16.gmra.mxu0 %v4618
      %v4727 = vpop.f32.mrf.mxu0
      %v4728 = vadd.f32 0.0, %v4727
      %v4729 = vpop.f32.mrf.mxu0
      %v4730 = vpop.f32.mrf.mxu0
      %v4731 = vadd.f32 0.0, %v4730
      %v4732 = vpop.f32.mrf.mxu0
      %4733 = vmatprep.mubr.bf16.mxu0 0
      %4734 = vmatmul.mubr.bf16.gmra.mxu0 %v4621
      %v4735 = vpop.f32.mrf.mxu0
      %v4736 = vadd.f32 0.0, %v4735
      %v4737 = vpop.f32.mrf.mxu0
      %v4738 = vpop.f32.mrf.mxu0
      %v4739 = vadd.f32 0.0, %v4738
      %v4740 = vpop.f32.mrf.mxu0
      %4741 = vmatprep.mubr.bf16.mxu0 0
      %4742 = vmatmul.mubr.bf16.gmra.mxu0 %v4624
      %v4743 = vpop.f32.mrf.mxu0
      %v4744 = vadd.f32 0.0, %v4743
      %v4745 = vpop.f32.mrf.mxu0
      %v4746 = vpop.f32.mrf.mxu0
      %v4747 = vadd.f32 0.0, %v4746
      %v4748 = vpop.f32.mrf.mxu0
      %4749 = vmatprep.mubr.bf16.mxu0 0
      %4750 = vmatmul.mubr.bf16.gmra.mxu0 %v4627
      %v4751 = vpop.f32.mrf.mxu0
      %v4752 = vadd.f32 0.0, %v4751
      %v4753 = vpop.f32.mrf.mxu0
      %v4754 = vpop.f32.mrf.mxu0
      %v4755 = vadd.f32 0.0, %v4754
      %v4756 = vpop.f32.mrf.mxu0
      %4757 = vmatprep.mubr.bf16.mxu0 0
      %4758 = vmatmul.mubr.bf16.gmra.mxu0 %v4630
      %v4759 = vpop.f32.mrf.mxu0
      %v4760 = vadd.f32 0.0, %v4759
      %v4761 = vpop.f32.mrf.mxu0
      %v4762 = vpop.f32.mrf.mxu0
      %v4763 = vadd.f32 0.0, %v4762
      %v4764 = vpop.f32.mrf.mxu0
      %4765 = vmatprep.mubr.bf16.mxu0 0
      %4766 = vmatmul.mubr.bf16.gmra.mxu0 %v4633
      %v4767 = vpop.f32.mrf.mxu0
      %v4768 = vadd.f32 0.0, %v4767
      %v4769 = vpop.f32.mrf.mxu0
      %v4770 = vpop.f32.mrf.mxu0
      %v4771 = vadd.f32 0.0, %v4770
      %v4772 = vpop.f32.mrf.mxu0
      %4773 = vmatprep.mubr.bf16.mxu0 0
      %4774 = vmatmul.mubr.bf16.gmra.mxu0 %v4636
      %v4775 = vpop.f32.mrf.mxu0
      %v4776 = vadd.f32 0.0, %v4775
      %v4777 = vpop.f32.mrf.mxu0
      %v4778 = vpop.f32.mrf.mxu0
      %v4779 = vadd.f32 0.0, %v4778
      %v4780 = vpop.f32.mrf.mxu0
      %4781 = vmatprep.mubr.bf16.mxu0 0
      %4782 = vmatmul.mubr.bf16.gmra.mxu0 %v4639
      %v4783 = vpop.f32.mrf.mxu0
      %v4784 = vadd.f32 0.0, %v4783
      %v4785 = vpop.f32.mrf.mxu0
      %v4786 = vpop.f32.mrf.mxu0
      %v4787 = vadd.f32 0.0, %v4786
      %v4788 = vpop.f32.mrf.mxu0
      %4789 = vmatprep.mubr.bf16.mxu0 0
      %4790 = vmatmul.mubr.bf16.gmra.mxu0 %v4642
      %v4791 = vpop.f32.mrf.mxu0
      %v4792 = vadd.f32 0.0, %v4791
      %v4793 = vpop.f32.mrf.mxu0
      %v4794 = vpop.f32.mrf.mxu0
      %v4795 = vadd.f32 0.0, %v4794
      %v4796 = vpop.f32.mrf.mxu0
      %4797 = vmatprep.mubr.bf16.mxu0 0
      %4798 = vmatmul.mubr.bf16.gmra.mxu0 %v4645
      %v4799 = vpop.f32.mrf.mxu0
      %v4800 = vadd.f32 0.0, %v4799
      %v4801 = vpop.f32.mrf.mxu0
      %v4802 = vpop.f32.mrf.mxu0
      %v4803 = vadd.f32 0.0, %v4802
      %v4804 = vpop.f32.mrf.mxu0
      %4805 = vmatprep.mubr.bf16.mxu0 0
      %4806 = vmatmul.mubr.bf16.gmra.mxu0 %v4648
      %v4807 = vpop.f32.mrf.mxu0
      %v4808 = vadd.f32 0.0, %v4807
      %v4809 = vpop.f32.mrf.mxu0
      %v4810 = vpop.f32.mrf.mxu0
      %v4811 = vadd.f32 0.0, %v4810
      %v4812 = vpop.f32.mrf.mxu0
      %4813 = vdwg.mxu0
      %v4814 = vadd.f32 %v4520, %v4688
      %v4815 = vadd.f32 %v4521, %v4691
      %v4816 = vadd.f32 %v4522, %v4696
      %v4817 = vadd.f32 %v4523, %v4699
      %v4818 = vadd.f32 %v4524, %v4704
      %v4819 = vadd.f32 %v4525, %v4707
      %v4820 = vadd.f32 %v4526, %v4712
      %v4821 = vadd.f32 %v4527, %v4715
      %v4822 = vadd.f32 %v4528, %v4720
      %v4823 = vadd.f32 %v4529, %v4723
      %v4824 = vadd.f32 %v4530, %v4728
      %v4825 = vadd.f32 %v4531, %v4731
      %v4826 = vadd.f32 %v4532, %v4736
      %v4827 = vadd.f32 %v4533, %v4739
      %v4828 = vadd.f32 %v4534, %v4744
      %v4829 = vadd.f32 %v4535, %v4747
      %v4830 = vadd.f32 %v4536, %v4752
      %v4831 = vadd.f32 %v4537, %v4755
      %v4832 = vadd.f32 %v4538, %v4760
      %v4833 = vadd.f32 %v4539, %v4763
      %v4834 = vadd.f32 %v4540, %v4768
      %v4835 = vadd.f32 %v4541, %v4771
      %v4836 = vadd.f32 %v4542, %v4776
      %v4837 = vadd.f32 %v4543, %v4779
      %v4838 = vadd.f32 %v4544, %v4784
      %v4839 = vadd.f32 %v4545, %v4787
      %v4840 = vadd.f32 %v4546, %v4792
      %v4841 = vadd.f32 %v4547, %v4795
      %v4842 = vadd.f32 %v4548, %v4800
      %v4843 = vadd.f32 %v4549, %v4803
      %v4844 = vadd.f32 %v4550, %v4808
      %v4845 = vadd.f32 %v4551, %v4811
      %s4846 = scalar_lea.vmem [#allocation3], 48
      %v4847 = vld [vmem:[%s4846] sm:$0xff]
      %v4848 = vld [vmem:[%s4846 + $0x8] sm:$0xff]
      %v4849 = vld [vmem:[%s4846 + $0x18] sm:$0xff]
      %v4850 = vld [vmem:[%s4846 + $0x20] sm:$0xff]
      %v4851 = vld [vmem:[%s4846 + $0x30] sm:$0xff]
      %v4852 = vld [vmem:[%s4846 + $0x38] sm:$0xff]
      %v4853 = vld [vmem:[%s4846 + $0x48] sm:$0xff]
      %v4854 = vld [vmem:[%s4846 + $0x50] sm:$0xff]
      %v4855 = vld [vmem:[%s4846 + $0x60] sm:$0xff]
      %v4856 = vld [vmem:[%s4846 + $0x68] sm:$0xff]
      %v4857 = vld [vmem:[%s4846 + $0x78] sm:$0xff]
      %v4858 = vld [vmem:[%s4846 + $0x80] sm:$0xff]
      %v4859 = vld [vmem:[%s4846 + $0x90] sm:$0xff]
      %v4860 = vld [vmem:[%s4846 + $0x98] sm:$0xff]
      %v4861 = vld [vmem:[%s4846 + $0xa8] sm:$0xff]
      %v4862 = vld [vmem:[%s4846 + $0xb0] sm:$0xff]
      %v4863 = vld [vmem:[%s4846 + $0xc0] sm:$0xff]
      %v4864 = vld [vmem:[%s4846 + $0xc8] sm:$0xff]
      %v4865 = vld [vmem:[%s4846 + $0xd8] sm:$0xff]
      %v4866 = vld [vmem:[%s4846 + $0xe0] sm:$0xff]
      %v4867 = vld [vmem:[%s4846 + $0xf0] sm:$0xff]
      %v4868 = vld [vmem:[%s4846 + $0xf8] sm:$0xff]
      %v4869 = vld [vmem:[%s4846 + $0x108] sm:$0xff]
      %v4870 = vld [vmem:[%s4846 + $0x110] sm:$0xff]
      %v4871 = vld [vmem:[%s4846 + $0x120] sm:$0xff]
      %v4872 = vld [vmem:[%s4846 + $0x128] sm:$0xff]
      %v4873 = vld [vmem:[%s4846 + $0x138] sm:$0xff]
      %v4874 = vld [vmem:[%s4846 + $0x140] sm:$0xff]
      %v4875 = vld [vmem:[%s4846 + $0x150] sm:$0xff]
      %v4876 = vld [vmem:[%s4846 + $0x158] sm:$0xff]
      %v4877 = vld [vmem:[%s4846 + $0x168] sm:$0xff]
      %v4878 = vld [vmem:[%s4846 + $0x170] sm:$0xff]
      %v4879 = vpack.c.bf16 %v4848, %v4847
      %v4880 = vpack.c.bf16 %v4850, %v4849
      %v4881 = vpack.c.bf16 %v4852, %v4851
      %v4882 = vpack.c.bf16 %v4854, %v4853
      %v4883 = vpack.c.bf16 %v4856, %v4855
      %v4884 = vpack.c.bf16 %v4858, %v4857
      %v4885 = vpack.c.bf16 %v4860, %v4859
      %v4886 = vpack.c.bf16 %v4862, %v4861
      %v4887 = vpack.c.bf16 %v4864, %v4863
      %v4888 = vpack.c.bf16 %v4866, %v4865
      %v4889 = vpack.c.bf16 %v4868, %v4867
      %v4890 = vpack.c.bf16 %v4870, %v4869
      %v4891 = vpack.c.bf16 %v4872, %v4871
      %v4892 = vpack.c.bf16 %v4874, %v4873
      %v4893 = vpack.c.bf16 %v4876, %v4875
      %v4894 = vpack.c.bf16 %v4878, %v4877
      %s4895 = scalar_lea.vmem %s324, 24
      %v4896 = vld [vmem:[%s4895] sm:$0xf]
      %v4898 = vsel %vm596, %v4879, 0
      %v4901 = vsel %vm596, %v4880, 0
      %v4904 = vsel %vm596, %v4881, 0
      %v4907 = vsel %vm596, %v4882, 0
      %v4910 = vsel %vm596, %v4883, 0
      %v4913 = vsel %vm596, %v4884, 0
      %v4916 = vsel %vm596, %v4885, 0
      %v4919 = vsel %vm596, %v4886, 0
      %v4922 = vsel %vm596, %v4887, 0
      %v4925 = vsel %vm596, %v4888, 0
      %v4928 = vsel %vm596, %v4889, 0
      %v4931 = vsel %vm596, %v4890, 0
      %v4934 = vsel %vm596, %v4891, 0
      %v4937 = vsel %vm596, %v4892, 0
      %v4940 = vsel %vm596, %v4893, 0
      %v4943 = vsel %vm596, %v4894, 0
      %v4946 = vsel %vm645, %v4896, 0
      %4948 = vmatprep.subr.bf16.mxu0 0
      %4949 = vmatpush1.bf16.msra.mxu0 0
      %4950 = vmatprep.subr.bf16.mxu0 0
      %4951 = vmatpush1.bf16.msra.mxu0 0
      %4952 = vmatprep.subr.bf16.mxu0 0
      %4953 = vmatpush1.bf16.msra.mxu0 0
      %4954 = vmatprep.subr.bf16.mxu0 0
      %4955 = vmatpush1.bf16.msra.mxu0 0
      %4956 = vmatprep.subr.bf16.mxu0 0
      %4957 = vmatpush1.bf16.msra.mxu0 0
      %4958 = vmatprep.subr.bf16.mxu0 0
      %4959 = vmatpush1.bf16.msra.mxu0 0
      %4960 = vmatprep.subr.bf16.mxu0 0
      %4961 = vmatpush1.bf16.msra.mxu0 0
      %4962 = vmatprep.subr.bf16.mxu0 0
      %4963 = vmatpush1.bf16.msra.mxu0 %v4946
      %4964 = vmatprep.subr.bf16.mxu0 0
      %4965 = vmatpush2.bf16.msra.mxu0 0
      %4966 = vmatprep.subr.bf16.mxu0 0
      %4967 = vmatpush2.bf16.msra.mxu0 0
      %4968 = vmatprep.subr.bf16.mxu0 0
      %4969 = vmatpush2.bf16.msra.mxu0 0
      %4970 = vmatprep.subr.bf16.mxu0 0
      %4971 = vmatpush2.bf16.msra.mxu0 0
      %4972 = vmatprep.subr.bf16.mxu0 0
      %4973 = vmatpush2.bf16.msra.mxu0 0
      %4974 = vmatprep.subr.bf16.mxu0 0
      %4975 = vmatpush2.bf16.msra.mxu0 0
      %4976 = vmatprep.subr.bf16.mxu0 0
      %4977 = vmatpush2.bf16.msra.mxu0 0
      %4978 = vmatprep.subr.bf16.mxu0 0
      %4979 = vmatpush2.bf16.msra.mxu0 0
      %4980 = vmatprep.mubr.bf16.mxu0 0
      %4981 = vmatmul.mubr.bf16.gmra.mxu0 %v4898
      %v4982 = vpop.f32.mrf.mxu0
      %v4983 = vadd.f32 0.0, %v4982
      %v4984 = vpop.f32.mrf.mxu0
      %v4985 = vpop.f32.mrf.mxu0
      %v4986 = vadd.f32 0.0, %v4985
      %v4987 = vpop.f32.mrf.mxu0
      %4988 = vmatprep.mubr.bf16.mxu0 0
      %4989 = vmatmul.mubr.bf16.gmra.mxu0 %v4901
      %v4990 = vpop.f32.mrf.mxu0
      %v4991 = vadd.f32 0.0, %v4990
      %v4992 = vpop.f32.mrf.mxu0
      %v4993 = vpop.f32.mrf.mxu0
      %v4994 = vadd.f32 0.0, %v4993
      %v4995 = vpop.f32.mrf.mxu0
      %4996 = vmatprep.mubr.bf16.mxu0 0
      %4997 = vmatmul.mubr.bf16.gmra.mxu0 %v4904
      %v4998 = vpop.f32.mrf.mxu0
      %v4999 = vadd.f32 0.0, %v4998
      %v5000 = vpop.f32.mrf.mxu0
      %v5001 = vpop.f32.mrf.mxu0
      %v5002 = vadd.f32 0.0, %v5001
      %v5003 = vpop.f32.mrf.mxu0
      %5004 = vmatprep.mubr.bf16.mxu0 0
      %5005 = vmatmul.mubr.bf16.gmra.mxu0 %v4907
      %v5006 = vpop.f32.mrf.mxu0
      %v5007 = vadd.f32 0.0, %v5006
      %v5008 = vpop.f32.mrf.mxu0
      %v5009 = vpop.f32.mrf.mxu0
      %v5010 = vadd.f32 0.0, %v5009
      %v5011 = vpop.f32.mrf.mxu0
      %5012 = vmatprep.mubr.bf16.mxu0 0
      %5013 = vmatmul.mubr.bf16.gmra.mxu0 %v4910
      %v5014 = vpop.f32.mrf.mxu0
      %v5015 = vadd.f32 0.0, %v5014
      %v5016 = vpop.f32.mrf.mxu0
      %v5017 = vpop.f32.mrf.mxu0
      %v5018 = vadd.f32 0.0, %v5017
      %v5019 = vpop.f32.mrf.mxu0
      %5020 = vmatprep.mubr.bf16.mxu0 0
      %5021 = vmatmul.mubr.bf16.gmra.mxu0 %v4913
      %v5022 = vpop.f32.mrf.mxu0
      %v5023 = vadd.f32 0.0, %v5022
      %v5024 = vpop.f32.mrf.mxu0
      %v5025 = vpop.f32.mrf.mxu0
      %v5026 = vadd.f32 0.0, %v5025
      %v5027 = vpop.f32.mrf.mxu0
      %5028 = vmatprep.mubr.bf16.mxu0 0
      %5029 = vmatmul.mubr.bf16.gmra.mxu0 %v4916
      %v5030 = vpop.f32.mrf.mxu0
      %v5031 = vadd.f32 0.0, %v5030
      %v5032 = vpop.f32.mrf.mxu0
      %v5033 = vpop.f32.mrf.mxu0
      %v5034 = vadd.f32 0.0, %v5033
      %v5035 = vpop.f32.mrf.mxu0
      %5036 = vmatprep.mubr.bf16.mxu0 0
      %5037 = vmatmul.mubr.bf16.gmra.mxu0 %v4919
      %v5038 = vpop.f32.mrf.mxu0
      %v5039 = vadd.f32 0.0, %v5038
      %v5040 = vpop.f32.mrf.mxu0
      %v5041 = vpop.f32.mrf.mxu0
      %v5042 = vadd.f32 0.0, %v5041
      %v5043 = vpop.f32.mrf.mxu0
      %5044 = vmatprep.mubr.bf16.mxu0 0
      %5045 = vmatmul.mubr.bf16.gmra.mxu0 %v4922
      %v5046 = vpop.f32.mrf.mxu0
      %v5047 = vadd.f32 0.0, %v5046
      %v5048 = vpop.f32.mrf.mxu0
      %v5049 = vpop.f32.mrf.mxu0
      %v5050 = vadd.f32 0.0, %v5049
      %v5051 = vpop.f32.mrf.mxu0
      %5052 = vmatprep.mubr.bf16.mxu0 0
      %5053 = vmatmul.mubr.bf16.gmra.mxu0 %v4925
      %v5054 = vpop.f32.mrf.mxu0
      %v5055 = vadd.f32 0.0, %v5054
      %v5056 = vpop.f32.mrf.mxu0
      %v5057 = vpop.f32.mrf.mxu0
      %v5058 = vadd.f32 0.0, %v5057
      %v5059 = vpop.f32.mrf.mxu0
      %5060 = vmatprep.mubr.bf16.mxu0 0
      %5061 = vmatmul.mubr.bf16.gmra.mxu0 %v4928
      %v5062 = vpop.f32.mrf.mxu0
      %v5063 = vadd.f32 0.0, %v5062
      %v5064 = vpop.f32.mrf.mxu0
      %v5065 = vpop.f32.mrf.mxu0
      %v5066 = vadd.f32 0.0, %v5065
      %v5067 = vpop.f32.mrf.mxu0
      %5068 = vmatprep.mubr.bf16.mxu0 0
      %5069 = vmatmul.mubr.bf16.gmra.mxu0 %v4931
      %v5070 = vpop.f32.mrf.mxu0
      %v5071 = vadd.f32 0.0, %v5070
      %v5072 = vpop.f32.mrf.mxu0
      %v5073 = vpop.f32.mrf.mxu0
      %v5074 = vadd.f32 0.0, %v5073
      %v5075 = vpop.f32.mrf.mxu0
      %5076 = vmatprep.mubr.bf16.mxu0 0
      %5077 = vmatmul.mubr.bf16.gmra.mxu0 %v4934
      %v5078 = vpop.f32.mrf.mxu0
      %v5079 = vadd.f32 0.0, %v5078
      %v5080 = vpop.f32.mrf.mxu0
      %v5081 = vpop.f32.mrf.mxu0
      %v5082 = vadd.f32 0.0, %v5081
      %v5083 = vpop.f32.mrf.mxu0
      %5084 = vmatprep.mubr.bf16.mxu0 0
      %5085 = vmatmul.mubr.bf16.gmra.mxu0 %v4937
      %v5086 = vpop.f32.mrf.mxu0
      %v5087 = vadd.f32 0.0, %v5086
      %v5088 = vpop.f32.mrf.mxu0
      %v5089 = vpop.f32.mrf.mxu0
      %v5090 = vadd.f32 0.0, %v5089
      %v5091 = vpop.f32.mrf.mxu0
      %5092 = vmatprep.mubr.bf16.mxu0 0
      %5093 = vmatmul.mubr.bf16.gmra.mxu0 %v4940
      %v5094 = vpop.f32.mrf.mxu0
      %v5095 = vadd.f32 0.0, %v5094
      %v5096 = vpop.f32.mrf.mxu0
      %v5097 = vpop.f32.mrf.mxu0
      %v5098 = vadd.f32 0.0, %v5097
      %v5099 = vpop.f32.mrf.mxu0
      %5100 = vmatprep.mubr.bf16.mxu0 0
      %5101 = vmatmul.mubr.bf16.gmra.mxu0 %v4943
      %v5102 = vpop.f32.mrf.mxu0
      %v5103 = vadd.f32 0.0, %v5102
      %v5104 = vpop.f32.mrf.mxu0
      %v5105 = vpop.f32.mrf.mxu0
      %v5106 = vadd.f32 0.0, %v5105
      %v5107 = vpop.f32.mrf.mxu0
      %5108 = vdwg.mxu0
      %v5109 = vadd.f32 %v4814, %v4983
      %v5110 = vadd.f32 %v4815, %v4986
      %v5111 = vadd.f32 %v4816, %v4991
      %v5112 = vadd.f32 %v4817, %v4994
      %v5113 = vadd.f32 %v4818, %v4999
      %v5114 = vadd.f32 %v4819, %v5002
      %v5115 = vadd.f32 %v4820, %v5007
      %v5116 = vadd.f32 %v4821, %v5010
      %v5117 = vadd.f32 %v4822, %v5015
      %v5118 = vadd.f32 %v4823, %v5018
      %v5119 = vadd.f32 %v4824, %v5023
      %v5120 = vadd.f32 %v4825, %v5026
      %v5121 = vadd.f32 %v4826, %v5031
      %v5122 = vadd.f32 %v4827, %v5034
      %v5123 = vadd.f32 %v4828, %v5039
      %v5124 = vadd.f32 %v4829, %v5042
      %v5125 = vadd.f32 %v4830, %v5047
      %v5126 = vadd.f32 %v4831, %v5050
      %v5127 = vadd.f32 %v4832, %v5055
      %v5128 = vadd.f32 %v4833, %v5058
      %v5129 = vadd.f32 %v4834, %v5063
      %v5130 = vadd.f32 %v4835, %v5066
      %v5131 = vadd.f32 %v4836, %v5071
      %v5132 = vadd.f32 %v4837, %v5074
      %v5133 = vadd.f32 %v4838, %v5079
      %v5134 = vadd.f32 %v4839, %v5082
      %v5135 = vadd.f32 %v4840, %v5087
      %v5136 = vadd.f32 %v4841, %v5090
      %v5137 = vadd.f32 %v4842, %v5095
      %v5138 = vadd.f32 %v4843, %v5098
      %v5139 = vadd.f32 %v4844, %v5103
      %v5140 = vadd.f32 %v4845, %v5106
      %v5141 = vld [vmem:[%s4846 + $0x1] sm:$0xff]
      %v5142 = vld [vmem:[%s4846 + $0x9] sm:$0xff]
      %v5143 = vld [vmem:[%s4846 + $0x19] sm:$0xff]
      %v5144 = vld [vmem:[%s4846 + $0x21] sm:$0xff]
      %v5145 = vld [vmem:[%s4846 + $0x31] sm:$0xff]
      %v5146 = vld [vmem:[%s4846 + $0x39] sm:$0xff]
      %v5147 = vld [vmem:[%s4846 + $0x49] sm:$0xff]
      %v5148 = vld [vmem:[%s4846 + $0x51] sm:$0xff]
      %v5149 = vld [vmem:[%s4846 + $0x61] sm:$0xff]
      %v5150 = vld [vmem:[%s4846 + $0x69] sm:$0xff]
      %v5151 = vld [vmem:[%s4846 + $0x79] sm:$0xff]
      %v5152 = vld [vmem:[%s4846 + $0x81] sm:$0xff]
      %v5153 = vld [vmem:[%s4846 + $0x91] sm:$0xff]
      %v5154 = vld [vmem:[%s4846 + $0x99] sm:$0xff]
      %v5155 = vld [vmem:[%s4846 + $0xa9] sm:$0xff]
      %v5156 = vld [vmem:[%s4846 + $0xb1] sm:$0xff]
      %v5157 = vld [vmem:[%s4846 + $0xc1] sm:$0xff]
      %v5158 = vld [vmem:[%s4846 + $0xc9] sm:$0xff]
      %v5159 = vld [vmem:[%s4846 + $0xd9] sm:$0xff]
      %v5160 = vld [vmem:[%s4846 + $0xe1] sm:$0xff]
      %v5161 = vld [vmem:[%s4846 + $0xf1] sm:$0xff]
      %v5162 = vld [vmem:[%s4846 + $0xf9] sm:$0xff]
      %v5163 = vld [vmem:[%s4846 + $0x109] sm:$0xff]
      %v5164 = vld [vmem:[%s4846 + $0x111] sm:$0xff]
      %v5165 = vld [vmem:[%s4846 + $0x121] sm:$0xff]
      %v5166 = vld [vmem:[%s4846 + $0x129] sm:$0xff]
      %v5167 = vld [vmem:[%s4846 + $0x139] sm:$0xff]
      %v5168 = vld [vmem:[%s4846 + $0x141] sm:$0xff]
      %v5169 = vld [vmem:[%s4846 + $0x151] sm:$0xff]
      %v5170 = vld [vmem:[%s4846 + $0x159] sm:$0xff]
      %v5171 = vld [vmem:[%s4846 + $0x169] sm:$0xff]
      %v5172 = vld [vmem:[%s4846 + $0x171] sm:$0xff]
      %v5173 = vpack.c.bf16 %v5142, %v5141
      %v5174 = vpack.c.bf16 %v5144, %v5143
      %v5175 = vpack.c.bf16 %v5146, %v5145
      %v5176 = vpack.c.bf16 %v5148, %v5147
      %v5177 = vpack.c.bf16 %v5150, %v5149
      %v5178 = vpack.c.bf16 %v5152, %v5151
      %v5179 = vpack.c.bf16 %v5154, %v5153
      %v5180 = vpack.c.bf16 %v5156, %v5155
      %v5181 = vpack.c.bf16 %v5158, %v5157
      %v5182 = vpack.c.bf16 %v5160, %v5159
      %v5183 = vpack.c.bf16 %v5162, %v5161
      %v5184 = vpack.c.bf16 %v5164, %v5163
      %v5185 = vpack.c.bf16 %v5166, %v5165
      %v5186 = vpack.c.bf16 %v5168, %v5167
      %v5187 = vpack.c.bf16 %v5170, %v5169
      %v5188 = vpack.c.bf16 %v5172, %v5171
      %s5189 = scalar_lea.vmem %s324, 28
      %v5190 = vld [vmem:[%s5189] sm:$0xf]
      %v5192 = vsel %vm596, %v5173, 0
      %v5195 = vsel %vm596, %v5174, 0
      %v5198 = vsel %vm596, %v5175, 0
      %v5201 = vsel %vm596, %v5176, 0
      %v5204 = vsel %vm596, %v5177, 0
      %v5207 = vsel %vm596, %v5178, 0
      %v5210 = vsel %vm596, %v5179, 0
      %v5213 = vsel %vm596, %v5180, 0
      %v5216 = vsel %vm596, %v5181, 0
      %v5219 = vsel %vm596, %v5182, 0
      %v5222 = vsel %vm596, %v5183, 0
      %v5225 = vsel %vm596, %v5184, 0
      %v5228 = vsel %vm596, %v5185, 0
      %v5231 = vsel %vm596, %v5186, 0
      %v5234 = vsel %vm596, %v5187, 0
      %v5237 = vsel %vm596, %v5188, 0
      %v5240 = vsel %vm645, %v5190, 0
      %5242 = vmatprep.subr.bf16.mxu0 0
      %5243 = vmatpush1.bf16.msra.mxu0 0
      %5244 = vmatprep.subr.bf16.mxu0 0
      %5245 = vmatpush1.bf16.msra.mxu0 0
      %5246 = vmatprep.subr.bf16.mxu0 0
      %5247 = vmatpush1.bf16.msra.mxu0 0
      %5248 = vmatprep.subr.bf16.mxu0 0
      %5249 = vmatpush1.bf16.msra.mxu0 0
      %5250 = vmatprep.subr.bf16.mxu0 0
      %5251 = vmatpush1.bf16.msra.mxu0 0
      %5252 = vmatprep.subr.bf16.mxu0 0
      %5253 = vmatpush1.bf16.msra.mxu0 0
      %5254 = vmatprep.subr.bf16.mxu0 0
      %5255 = vmatpush1.bf16.msra.mxu0 0
      %5256 = vmatprep.subr.bf16.mxu0 0
      %5257 = vmatpush1.bf16.msra.mxu0 %v5240
      %5258 = vmatprep.subr.bf16.mxu0 0
      %5259 = vmatpush2.bf16.msra.mxu0 0
      %5260 = vmatprep.subr.bf16.mxu0 0
      %5261 = vmatpush2.bf16.msra.mxu0 0
      %5262 = vmatprep.subr.bf16.mxu0 0
      %5263 = vmatpush2.bf16.msra.mxu0 0
      %5264 = vmatprep.subr.bf16.mxu0 0
      %5265 = vmatpush2.bf16.msra.mxu0 0
      %5266 = vmatprep.subr.bf16.mxu0 0
      %5267 = vmatpush2.bf16.msra.mxu0 0
      %5268 = vmatprep.subr.bf16.mxu0 0
      %5269 = vmatpush2.bf16.msra.mxu0 0
      %5270 = vmatprep.subr.bf16.mxu0 0
      %5271 = vmatpush2.bf16.msra.mxu0 0
      %5272 = vmatprep.subr.bf16.mxu0 0
      %5273 = vmatpush2.bf16.msra.mxu0 0
      %5274 = vmatprep.mubr.bf16.mxu0 0
      %5275 = vmatmul.mubr.bf16.gmra.mxu0 %v5192
      %v5276 = vpop.f32.mrf.mxu0
      %v5277 = vadd.f32 0.0, %v5276
      %v5278 = vpop.f32.mrf.mxu0
      %v5279 = vpop.f32.mrf.mxu0
      %v5280 = vadd.f32 0.0, %v5279
      %v5281 = vpop.f32.mrf.mxu0
      %5282 = vmatprep.mubr.bf16.mxu0 0
      %5283 = vmatmul.mubr.bf16.gmra.mxu0 %v5195
      %v5284 = vpop.f32.mrf.mxu0
      %v5285 = vadd.f32 0.0, %v5284
      %v5286 = vpop.f32.mrf.mxu0
      %v5287 = vpop.f32.mrf.mxu0
      %v5288 = vadd.f32 0.0, %v5287
      %v5289 = vpop.f32.mrf.mxu0
      %5290 = vmatprep.mubr.bf16.mxu0 0
      %5291 = vmatmul.mubr.bf16.gmra.mxu0 %v5198
      %v5292 = vpop.f32.mrf.mxu0
      %v5293 = vadd.f32 0.0, %v5292
      %v5294 = vpop.f32.mrf.mxu0
      %v5295 = vpop.f32.mrf.mxu0
      %v5296 = vadd.f32 0.0, %v5295
      %v5297 = vpop.f32.mrf.mxu0
      %5298 = vmatprep.mubr.bf16.mxu0 0
      %5299 = vmatmul.mubr.bf16.gmra.mxu0 %v5201
      %v5300 = vpop.f32.mrf.mxu0
      %v5301 = vadd.f32 0.0, %v5300
      %v5302 = vpop.f32.mrf.mxu0
      %v5303 = vpop.f32.mrf.mxu0
      %v5304 = vadd.f32 0.0, %v5303
      %v5305 = vpop.f32.mrf.mxu0
      %5306 = vmatprep.mubr.bf16.mxu0 0
      %5307 = vmatmul.mubr.bf16.gmra.mxu0 %v5204
      %v5308 = vpop.f32.mrf.mxu0
      %v5309 = vadd.f32 0.0, %v5308
      %v5310 = vpop.f32.mrf.mxu0
      %v5311 = vpop.f32.mrf.mxu0
      %v5312 = vadd.f32 0.0, %v5311
      %v5313 = vpop.f32.mrf.mxu0
      %5314 = vmatprep.mubr.bf16.mxu0 0
      %5315 = vmatmul.mubr.bf16.gmra.mxu0 %v5207
      %v5316 = vpop.f32.mrf.mxu0
      %v5317 = vadd.f32 0.0, %v5316
      %v5318 = vpop.f32.mrf.mxu0
      %v5319 = vpop.f32.mrf.mxu0
      %v5320 = vadd.f32 0.0, %v5319
      %v5321 = vpop.f32.mrf.mxu0
      %5322 = vmatprep.mubr.bf16.mxu0 0
      %5323 = vmatmul.mubr.bf16.gmra.mxu0 %v5210
      %v5324 = vpop.f32.mrf.mxu0
      %v5325 = vadd.f32 0.0, %v5324
      %v5326 = vpop.f32.mrf.mxu0
      %v5327 = vpop.f32.mrf.mxu0
      %v5328 = vadd.f32 0.0, %v5327
      %v5329 = vpop.f32.mrf.mxu0
      %5330 = vmatprep.mubr.bf16.mxu0 0
      %5331 = vmatmul.mubr.bf16.gmra.mxu0 %v5213
      %v5332 = vpop.f32.mrf.mxu0
      %v5333 = vadd.f32 0.0, %v5332
      %v5334 = vpop.f32.mrf.mxu0
      %v5335 = vpop.f32.mrf.mxu0
      %v5336 = vadd.f32 0.0, %v5335
      %v5337 = vpop.f32.mrf.mxu0
      %5338 = vmatprep.mubr.bf16.mxu0 0
      %5339 = vmatmul.mubr.bf16.gmra.mxu0 %v5216
      %v5340 = vpop.f32.mrf.mxu0
      %v5341 = vadd.f32 0.0, %v5340
      %v5342 = vpop.f32.mrf.mxu0
      %v5343 = vpop.f32.mrf.mxu0
      %v5344 = vadd.f32 0.0, %v5343
      %v5345 = vpop.f32.mrf.mxu0
      %5346 = vmatprep.mubr.bf16.mxu0 0
      %5347 = vmatmul.mubr.bf16.gmra.mxu0 %v5219
      %v5348 = vpop.f32.mrf.mxu0
      %v5349 = vadd.f32 0.0, %v5348
      %v5350 = vpop.f32.mrf.mxu0
      %v5351 = vpop.f32.mrf.mxu0
      %v5352 = vadd.f32 0.0, %v5351
      %v5353 = vpop.f32.mrf.mxu0
      %5354 = vmatprep.mubr.bf16.mxu0 0
      %5355 = vmatmul.mubr.bf16.gmra.mxu0 %v5222
      %v5356 = vpop.f32.mrf.mxu0
      %v5357 = vadd.f32 0.0, %v5356
      %v5358 = vpop.f32.mrf.mxu0
      %v5359 = vpop.f32.mrf.mxu0
      %v5360 = vadd.f32 0.0, %v5359
      %v5361 = vpop.f32.mrf.mxu0
      %5362 = vmatprep.mubr.bf16.mxu0 0
      %5363 = vmatmul.mubr.bf16.gmra.mxu0 %v5225
      %v5364 = vpop.f32.mrf.mxu0
      %v5365 = vadd.f32 0.0, %v5364
      %v5366 = vpop.f32.mrf.mxu0
      %v5367 = vpop.f32.mrf.mxu0
      %v5368 = vadd.f32 0.0, %v5367
      %v5369 = vpop.f32.mrf.mxu0
      %5370 = vmatprep.mubr.bf16.mxu0 0
      %5371 = vmatmul.mubr.bf16.gmra.mxu0 %v5228
      %v5372 = vpop.f32.mrf.mxu0
      %v5373 = vadd.f32 0.0, %v5372
      %v5374 = vpop.f32.mrf.mxu0
      %v5375 = vpop.f32.mrf.mxu0
      %v5376 = vadd.f32 0.0, %v5375
      %v5377 = vpop.f32.mrf.mxu0
      %5378 = vmatprep.mubr.bf16.mxu0 0
      %5379 = vmatmul.mubr.bf16.gmra.mxu0 %v5231
      %v5380 = vpop.f32.mrf.mxu0
      %v5381 = vadd.f32 0.0, %v5380
      %v5382 = vpop.f32.mrf.mxu0
      %v5383 = vpop.f32.mrf.mxu0
      %v5384 = vadd.f32 0.0, %v5383
      %v5385 = vpop.f32.mrf.mxu0
      %5386 = vmatprep.mubr.bf16.mxu0 0
      %5387 = vmatmul.mubr.bf16.gmra.mxu0 %v5234
      %v5388 = vpop.f32.mrf.mxu0
      %v5389 = vadd.f32 0.0, %v5388
      %v5390 = vpop.f32.mrf.mxu0
      %v5391 = vpop.f32.mrf.mxu0
      %v5392 = vadd.f32 0.0, %v5391
      %v5393 = vpop.f32.mrf.mxu0
      %5394 = vmatprep.mubr.bf16.mxu0 0
      %5395 = vmatmul.mubr.bf16.gmra.mxu0 %v5237
      %v5396 = vpop.f32.mrf.mxu0
      %v5397 = vadd.f32 0.0, %v5396
      %v5398 = vpop.f32.mrf.mxu0
      %v5399 = vpop.f32.mrf.mxu0
      %v5400 = vadd.f32 0.0, %v5399
      %v5401 = vpop.f32.mrf.mxu0
      %5402 = vdwg.mxu0
      %v5403 = vadd.f32 %v5109, %v5277
      %v5404 = vadd.f32 %v5110, %v5280
      %v5405 = vadd.f32 %v5111, %v5285
      %v5406 = vadd.f32 %v5112, %v5288
      %v5407 = vadd.f32 %v5113, %v5293
      %v5408 = vadd.f32 %v5114, %v5296
      %v5409 = vadd.f32 %v5115, %v5301
      %v5410 = vadd.f32 %v5116, %v5304
      %v5411 = vadd.f32 %v5117, %v5309
      %v5412 = vadd.f32 %v5118, %v5312
      %v5413 = vadd.f32 %v5119, %v5317
      %v5414 = vadd.f32 %v5120, %v5320
      %v5415 = vadd.f32 %v5121, %v5325
      %v5416 = vadd.f32 %v5122, %v5328
      %v5417 = vadd.f32 %v5123, %v5333
      %v5418 = vadd.f32 %v5124, %v5336
      %v5419 = vadd.f32 %v5125, %v5341
      %v5420 = vadd.f32 %v5126, %v5344
      %v5421 = vadd.f32 %v5127, %v5349
      %v5422 = vadd.f32 %v5128, %v5352
      %v5423 = vadd.f32 %v5129, %v5357
      %v5424 = vadd.f32 %v5130, %v5360
      %v5425 = vadd.f32 %v5131, %v5365
      %v5426 = vadd.f32 %v5132, %v5368
      %v5427 = vadd.f32 %v5133, %v5373
      %v5428 = vadd.f32 %v5134, %v5376
      %v5429 = vadd.f32 %v5135, %v5381
      %v5430 = vadd.f32 %v5136, %v5384
      %v5431 = vadd.f32 %v5137, %v5389
      %v5432 = vadd.f32 %v5138, %v5392
      %v5433 = vadd.f32 %v5139, %v5397
      %v5434 = vadd.f32 %v5140, %v5400
      %v5435 = vld [vmem:[%s4846 + $0x2] sm:$0xff]
      %v5436 = vld [vmem:[%s4846 + $0xa] sm:$0xff]
      %v5437 = vld [vmem:[%s4846 + $0x1a] sm:$0xff]
      %v5438 = vld [vmem:[%s4846 + $0x22] sm:$0xff]
      %v5439 = vld [vmem:[%s4846 + $0x32] sm:$0xff]
      %v5440 = vld [vmem:[%s4846 + $0x3a] sm:$0xff]
      %v5441 = vld [vmem:[%s4846 + $0x4a] sm:$0xff]
      %v5442 = vld [vmem:[%s4846 + $0x52] sm:$0xff]
      %v5443 = vld [vmem:[%s4846 + $0x62] sm:$0xff]
      %v5444 = vld [vmem:[%s4846 + $0x6a] sm:$0xff]
      %v5445 = vld [vmem:[%s4846 + $0x7a] sm:$0xff]
      %v5446 = vld [vmem:[%s4846 + $0x82] sm:$0xff]
      %v5447 = vld [vmem:[%s4846 + $0x92] sm:$0xff]
      %v5448 = vld [vmem:[%s4846 + $0x9a] sm:$0xff]
      %v5449 = vld [vmem:[%s4846 + $0xaa] sm:$0xff]
      %v5450 = vld [vmem:[%s4846 + $0xb2] sm:$0xff]
      %v5451 = vld [vmem:[%s4846 + $0xc2] sm:$0xff]
      %v5452 = vld [vmem:[%s4846 + $0xca] sm:$0xff]
      %v5453 = vld [vmem:[%s4846 + $0xda] sm:$0xff]
      %v5454 = vld [vmem:[%s4846 + $0xe2] sm:$0xff]
      %v5455 = vld [vmem:[%s4846 + $0xf2] sm:$0xff]
      %v5456 = vld [vmem:[%s4846 + $0xfa] sm:$0xff]
      %v5457 = vld [vmem:[%s4846 + $0x10a] sm:$0xff]
      %v5458 = vld [vmem:[%s4846 + $0x112] sm:$0xff]
      %v5459 = vld [vmem:[%s4846 + $0x122] sm:$0xff]
      %v5460 = vld [vmem:[%s4846 + $0x12a] sm:$0xff]
      %v5461 = vld [vmem:[%s4846 + $0x13a] sm:$0xff]
      %v5462 = vld [vmem:[%s4846 + $0x142] sm:$0xff]
      %v5463 = vld [vmem:[%s4846 + $0x152] sm:$0xff]
      %v5464 = vld [vmem:[%s4846 + $0x15a] sm:$0xff]
      %v5465 = vld [vmem:[%s4846 + $0x16a] sm:$0xff]
      %v5466 = vld [vmem:[%s4846 + $0x172] sm:$0xff]
      %v5467 = vpack.c.bf16 %v5436, %v5435
      %v5468 = vpack.c.bf16 %v5438, %v5437
      %v5469 = vpack.c.bf16 %v5440, %v5439
      %v5470 = vpack.c.bf16 %v5442, %v5441
      %v5471 = vpack.c.bf16 %v5444, %v5443
      %v5472 = vpack.c.bf16 %v5446, %v5445
      %v5473 = vpack.c.bf16 %v5448, %v5447
      %v5474 = vpack.c.bf16 %v5450, %v5449
      %v5475 = vpack.c.bf16 %v5452, %v5451
      %v5476 = vpack.c.bf16 %v5454, %v5453
      %v5477 = vpack.c.bf16 %v5456, %v5455
      %v5478 = vpack.c.bf16 %v5458, %v5457
      %v5479 = vpack.c.bf16 %v5460, %v5459
      %v5480 = vpack.c.bf16 %v5462, %v5461
      %v5481 = vpack.c.bf16 %v5464, %v5463
      %v5482 = vpack.c.bf16 %v5466, %v5465
      %s5483 = scalar_lea.vmem %s324, 32
      %v5484 = vld [vmem:[%s5483] sm:$0xf]
      %v5486 = vsel %vm596, %v5467, 0
      %v5489 = vsel %vm596, %v5468, 0
      %v5492 = vsel %vm596, %v5469, 0
      %v5495 = vsel %vm596, %v5470, 0
      %v5498 = vsel %vm596, %v5471, 0
      %v5501 = vsel %vm596, %v5472, 0
      %v5504 = vsel %vm596, %v5473, 0
      %v5507 = vsel %vm596, %v5474, 0
      %v5510 = vsel %vm596, %v5475, 0
      %v5513 = vsel %vm596, %v5476, 0
      %v5516 = vsel %vm596, %v5477, 0
      %v5519 = vsel %vm596, %v5478, 0
      %v5522 = vsel %vm596, %v5479, 0
      %v5525 = vsel %vm596, %v5480, 0
      %v5528 = vsel %vm596, %v5481, 0
      %v5531 = vsel %vm596, %v5482, 0
      %v5534 = vsel %vm645, %v5484, 0
      %5536 = vmatprep.subr.bf16.mxu0 0
      %5537 = vmatpush1.bf16.msra.mxu0 0
      %5538 = vmatprep.subr.bf16.mxu0 0
      %5539 = vmatpush1.bf16.msra.mxu0 0
      %5540 = vmatprep.subr.bf16.mxu0 0
      %5541 = vmatpush1.bf16.msra.mxu0 0
      %5542 = vmatprep.subr.bf16.mxu0 0
      %5543 = vmatpush1.bf16.msra.mxu0 0
      %5544 = vmatprep.subr.bf16.mxu0 0
      %5545 = vmatpush1.bf16.msra.mxu0 0
      %5546 = vmatprep.subr.bf16.mxu0 0
      %5547 = vmatpush1.bf16.msra.mxu0 0
      %5548 = vmatprep.subr.bf16.mxu0 0
      %5549 = vmatpush1.bf16.msra.mxu0 0
      %5550 = vmatprep.subr.bf16.mxu0 0
      %5551 = vmatpush1.bf16.msra.mxu0 %v5534
      %5552 = vmatprep.subr.bf16.mxu0 0
      %5553 = vmatpush2.bf16.msra.mxu0 0
      %5554 = vmatprep.subr.bf16.mxu0 0
      %5555 = vmatpush2.bf16.msra.mxu0 0
      %5556 = vmatprep.subr.bf16.mxu0 0
      %5557 = vmatpush2.bf16.msra.mxu0 0
      %5558 = vmatprep.subr.bf16.mxu0 0
      %5559 = vmatpush2.bf16.msra.mxu0 0
      %5560 = vmatprep.subr.bf16.mxu0 0
      %5561 = vmatpush2.bf16.msra.mxu0 0
      %5562 = vmatprep.subr.bf16.mxu0 0
      %5563 = vmatpush2.bf16.msra.mxu0 0
      %5564 = vmatprep.subr.bf16.mxu0 0
      %5565 = vmatpush2.bf16.msra.mxu0 0
      %5566 = vmatprep.subr.bf16.mxu0 0
      %5567 = vmatpush2.bf16.msra.mxu0 0
      %5568 = vmatprep.mubr.bf16.mxu0 0
      %5569 = vmatmul.mubr.bf16.gmra.mxu0 %v5486
      %v5570 = vpop.f32.mrf.mxu0
      %v5571 = vadd.f32 0.0, %v5570
      %v5572 = vpop.f32.mrf.mxu0
      %v5573 = vpop.f32.mrf.mxu0
      %v5574 = vadd.f32 0.0, %v5573
      %v5575 = vpop.f32.mrf.mxu0
      %5576 = vmatprep.mubr.bf16.mxu0 0
      %5577 = vmatmul.mubr.bf16.gmra.mxu0 %v5489
      %v5578 = vpop.f32.mrf.mxu0
      %v5579 = vadd.f32 0.0, %v5578
      %v5580 = vpop.f32.mrf.mxu0
      %v5581 = vpop.f32.mrf.mxu0
      %v5582 = vadd.f32 0.0, %v5581
      %v5583 = vpop.f32.mrf.mxu0
      %5584 = vmatprep.mubr.bf16.mxu0 0
      %5585 = vmatmul.mubr.bf16.gmra.mxu0 %v5492
      %v5586 = vpop.f32.mrf.mxu0
      %v5587 = vadd.f32 0.0, %v5586
      %v5588 = vpop.f32.mrf.mxu0
      %v5589 = vpop.f32.mrf.mxu0
      %v5590 = vadd.f32 0.0, %v5589
      %v5591 = vpop.f32.mrf.mxu0
      %5592 = vmatprep.mubr.bf16.mxu0 0
      %5593 = vmatmul.mubr.bf16.gmra.mxu0 %v5495
      %v5594 = vpop.f32.mrf.mxu0
      %v5595 = vadd.f32 0.0, %v5594
      %v5596 = vpop.f32.mrf.mxu0
      %v5597 = vpop.f32.mrf.mxu0
      %v5598 = vadd.f32 0.0, %v5597
      %v5599 = vpop.f32.mrf.mxu0
      %5600 = vmatprep.mubr.bf16.mxu0 0
      %5601 = vmatmul.mubr.bf16.gmra.mxu0 %v5498
      %v5602 = vpop.f32.mrf.mxu0
      %v5603 = vadd.f32 0.0, %v5602
      %v5604 = vpop.f32.mrf.mxu0
      %v5605 = vpop.f32.mrf.mxu0
      %v5606 = vadd.f32 0.0, %v5605
      %v5607 = vpop.f32.mrf.mxu0
      %5608 = vmatprep.mubr.bf16.mxu0 0
      %5609 = vmatmul.mubr.bf16.gmra.mxu0 %v5501
      %v5610 = vpop.f32.mrf.mxu0
      %v5611 = vadd.f32 0.0, %v5610
      %v5612 = vpop.f32.mrf.mxu0
      %v5613 = vpop.f32.mrf.mxu0
      %v5614 = vadd.f32 0.0, %v5613
      %v5615 = vpop.f32.mrf.mxu0
      %5616 = vmatprep.mubr.bf16.mxu0 0
      %5617 = vmatmul.mubr.bf16.gmra.mxu0 %v5504
      %v5618 = vpop.f32.mrf.mxu0
      %v5619 = vadd.f32 0.0, %v5618
      %v5620 = vpop.f32.mrf.mxu0
      %v5621 = vpop.f32.mrf.mxu0
      %v5622 = vadd.f32 0.0, %v5621
      %v5623 = vpop.f32.mrf.mxu0
      %5624 = vmatprep.mubr.bf16.mxu0 0
      %5625 = vmatmul.mubr.bf16.gmra.mxu0 %v5507
      %v5626 = vpop.f32.mrf.mxu0
      %v5627 = vadd.f32 0.0, %v5626
      %v5628 = vpop.f32.mrf.mxu0
      %v5629 = vpop.f32.mrf.mxu0
      %v5630 = vadd.f32 0.0, %v5629
      %v5631 = vpop.f32.mrf.mxu0
      %5632 = vmatprep.mubr.bf16.mxu0 0
      %5633 = vmatmul.mubr.bf16.gmra.mxu0 %v5510
      %v5634 = vpop.f32.mrf.mxu0
      %v5635 = vadd.f32 0.0, %v5634
      %v5636 = vpop.f32.mrf.mxu0
      %v5637 = vpop.f32.mrf.mxu0
      %v5638 = vadd.f32 0.0, %v5637
      %v5639 = vpop.f32.mrf.mxu0
      %5640 = vmatprep.mubr.bf16.mxu0 0
      %5641 = vmatmul.mubr.bf16.gmra.mxu0 %v5513
      %v5642 = vpop.f32.mrf.mxu0
      %v5643 = vadd.f32 0.0, %v5642
      %v5644 = vpop.f32.mrf.mxu0
      %v5645 = vpop.f32.mrf.mxu0
      %v5646 = vadd.f32 0.0, %v5645
      %v5647 = vpop.f32.mrf.mxu0
      %5648 = vmatprep.mubr.bf16.mxu0 0
      %5649 = vmatmul.mubr.bf16.gmra.mxu0 %v5516
      %v5650 = vpop.f32.mrf.mxu0
      %v5651 = vadd.f32 0.0, %v5650
      %v5652 = vpop.f32.mrf.mxu0
      %v5653 = vpop.f32.mrf.mxu0
      %v5654 = vadd.f32 0.0, %v5653
      %v5655 = vpop.f32.mrf.mxu0
      %5656 = vmatprep.mubr.bf16.mxu0 0
      %5657 = vmatmul.mubr.bf16.gmra.mxu0 %v5519
      %v5658 = vpop.f32.mrf.mxu0
      %v5659 = vadd.f32 0.0, %v5658
      %v5660 = vpop.f32.mrf.mxu0
      %v5661 = vpop.f32.mrf.mxu0
      %v5662 = vadd.f32 0.0, %v5661
      %v5663 = vpop.f32.mrf.mxu0
      %5664 = vmatprep.mubr.bf16.mxu0 0
      %5665 = vmatmul.mubr.bf16.gmra.mxu0 %v5522
      %v5666 = vpop.f32.mrf.mxu0
      %v5667 = vadd.f32 0.0, %v5666
      %v5668 = vpop.f32.mrf.mxu0
      %v5669 = vpop.f32.mrf.mxu0
      %v5670 = vadd.f32 0.0, %v5669
      %v5671 = vpop.f32.mrf.mxu0
      %5672 = vmatprep.mubr.bf16.mxu0 0
      %5673 = vmatmul.mubr.bf16.gmra.mxu0 %v5525
      %v5674 = vpop.f32.mrf.mxu0
      %v5675 = vadd.f32 0.0, %v5674
      %v5676 = vpop.f32.mrf.mxu0
      %v5677 = vpop.f32.mrf.mxu0
      %v5678 = vadd.f32 0.0, %v5677
      %v5679 = vpop.f32.mrf.mxu0
      %5680 = vmatprep.mubr.bf16.mxu0 0
      %5681 = vmatmul.mubr.bf16.gmra.mxu0 %v5528
      %v5682 = vpop.f32.mrf.mxu0
      %v5683 = vadd.f32 0.0, %v5682
      %v5684 = vpop.f32.mrf.mxu0
      %v5685 = vpop.f32.mrf.mxu0
      %v5686 = vadd.f32 0.0, %v5685
      %v5687 = vpop.f32.mrf.mxu0
      %5688 = vmatprep.mubr.bf16.mxu0 0
      %5689 = vmatmul.mubr.bf16.gmra.mxu0 %v5531
      %v5690 = vpop.f32.mrf.mxu0
      %v5691 = vadd.f32 0.0, %v5690
      %v5692 = vpop.f32.mrf.mxu0
      %v5693 = vpop.f32.mrf.mxu0
      %v5694 = vadd.f32 0.0, %v5693
      %v5695 = vpop.f32.mrf.mxu0
      %5696 = vdwg.mxu0
      %v5697 = vadd.f32 %v5403, %v5571
      %v5698 = vadd.f32 %v5404, %v5574
      %v5699 = vadd.f32 %v5405, %v5579
      %v5700 = vadd.f32 %v5406, %v5582
      %v5701 = vadd.f32 %v5407, %v5587
      %v5702 = vadd.f32 %v5408, %v5590
      %v5703 = vadd.f32 %v5409, %v5595
      %v5704 = vadd.f32 %v5410, %v5598
      %v5705 = vadd.f32 %v5411, %v5603
      %v5706 = vadd.f32 %v5412, %v5606
      %v5707 = vadd.f32 %v5413, %v5611
      %v5708 = vadd.f32 %v5414, %v5614
      %v5709 = vadd.f32 %v5415, %v5619
      %v5710 = vadd.f32 %v5416, %v5622
      %v5711 = vadd.f32 %v5417, %v5627
      %v5712 = vadd.f32 %v5418, %v5630
      %v5713 = vadd.f32 %v5419, %v5635
      %v5714 = vadd.f32 %v5420, %v5638
      %v5715 = vadd.f32 %v5421, %v5643
      %v5716 = vadd.f32 %v5422, %v5646
      %v5717 = vadd.f32 %v5423, %v5651
      %v5718 = vadd.f32 %v5424, %v5654
      %v5719 = vadd.f32 %v5425, %v5659
      %v5720 = vadd.f32 %v5426, %v5662
      %v5721 = vadd.f32 %v5427, %v5667
      %v5722 = vadd.f32 %v5428, %v5670
      %v5723 = vadd.f32 %v5429, %v5675
      %v5724 = vadd.f32 %v5430, %v5678
      %v5725 = vadd.f32 %v5431, %v5683
      %v5726 = vadd.f32 %v5432, %v5686
      %v5727 = vadd.f32 %v5433, %v5691
      %v5728 = vadd.f32 %v5434, %v5694
      %v5729 = vsel %vm596, %v5697, 0.0
      %v5730 = vsel %vm596, %v5698, 0.0
      %v5731 = vadd.f32 %v5729, %v5730
      %v5732 = vsel %vm596, %v5699, 0.0
      %v5733 = vadd.f32 %v5731, %v5732
      %v5734 = vsel %vm596, %v5700, 0.0
      %v5735 = vadd.f32 %v5733, %v5734
      %v5736 = vsel %vm596, %v5701, 0.0
      %v5737 = vadd.f32 %v5735, %v5736
      %v5738 = vsel %vm596, %v5702, 0.0
      %v5739 = vadd.f32 %v5737, %v5738
      %v5740 = vsel %vm596, %v5703, 0.0
      %v5741 = vadd.f32 %v5739, %v5740
      %v5742 = vsel %vm596, %v5704, 0.0
      %v5743 = vadd.f32 %v5741, %v5742
      %v5744 = vsel %vm596, %v5705, 0.0
      %v5745 = vadd.f32 %v5743, %v5744
      %v5746 = vsel %vm596, %v5706, 0.0
      %v5747 = vadd.f32 %v5745, %v5746
      %v5748 = vsel %vm596, %v5707, 0.0
      %v5749 = vadd.f32 %v5747, %v5748
      %v5750 = vsel %vm596, %v5708, 0.0
      %v5751 = vadd.f32 %v5749, %v5750
      %v5752 = vsel %vm596, %v5709, 0.0
      %v5753 = vadd.f32 %v5751, %v5752
      %v5754 = vsel %vm596, %v5710, 0.0
      %v5755 = vadd.f32 %v5753, %v5754
      %v5756 = vsel %vm596, %v5711, 0.0
      %v5757 = vadd.f32 %v5755, %v5756
      %v5758 = vsel %vm596, %v5712, 0.0
      %v5759 = vadd.f32 %v5757, %v5758
      %v5760 = vsel %vm596, %v5713, 0.0
      %v5761 = vadd.f32 %v5759, %v5760
      %v5762 = vsel %vm596, %v5714, 0.0
      %v5763 = vadd.f32 %v5761, %v5762
      %v5764 = vsel %vm596, %v5715, 0.0
      %v5765 = vadd.f32 %v5763, %v5764
      %v5766 = vsel %vm596, %v5716, 0.0
      %v5767 = vadd.f32 %v5765, %v5766
      %v5768 = vsel %vm596, %v5717, 0.0
      %v5769 = vadd.f32 %v5767, %v5768
      %v5770 = vsel %vm596, %v5718, 0.0
      %v5771 = vadd.f32 %v5769, %v5770
      %v5772 = vsel %vm596, %v5719, 0.0
      %v5773 = vadd.f32 %v5771, %v5772
      %v5774 = vsel %vm596, %v5720, 0.0
      %v5775 = vadd.f32 %v5773, %v5774
      %v5776 = vsel %vm596, %v5721, 0.0
      %v5777 = vadd.f32 %v5775, %v5776
      %v5778 = vsel %vm596, %v5722, 0.0
      %v5779 = vadd.f32 %v5777, %v5778
      %v5780 = vsel %vm596, %v5723, 0.0
      %v5781 = vadd.f32 %v5779, %v5780
      %v5782 = vsel %vm596, %v5724, 0.0
      %v5783 = vadd.f32 %v5781, %v5782
      %v5784 = vsel %vm596, %v5725, 0.0
      %v5785 = vadd.f32 %v5783, %v5784
      %v5786 = vsel %vm596, %v5726, 0.0
      %v5787 = vadd.f32 %v5785, %v5786
      %v5788 = vsel %vm596, %v5727, 0.0
      %v5789 = vadd.f32 %v5787, %v5788
      %v5790 = vsel %vm596, %v5728, 0.0
      %v5791 = vadd.f32 %v5789, %v5790
      %v5792 = vrot.slane %v5791, 4
      %v5793 = vadd.f32 %v5791, %v5792
      %v5794 = vrot.slane %v5793, 2
      %v5795 = vadd.f32 %v5793, %v5794
      %v5796 = vrot.slane %v5795, 1
      %v5797 = vadd.f32 %v5795, %v5796
      %v5798 = vrcp.pop 256.0
      %v5799 = vmul.f32 %v5797, %v5798
      %v5800 = vld [vmem:[%s328] sm:$0xff]
      %v5802 = vsel %vm596, %v5799, 0
      %5804 = vmatprep.subr.mxu0 0.0
      %5805 = vmatpush1.msra.mxu0 0.0
      %5806 = vmatprep.subr.mxu0 0.0
      %5807 = vmatpush1.msra.mxu0 0.0
      %5808 = vmatprep.subr.mxu0 0.0
      %5809 = vmatpush1.msra.mxu0 0.0
      %5810 = vmatprep.subr.mxu0 0.0
      %5811 = vmatpush1.msra.mxu0 0.0
      %5812 = vmatprep.subr.mxu0 0.0
      %5813 = vmatpush1.msra.mxu0 0.0
      %5814 = vmatprep.subr.mxu0 0.0
      %5815 = vmatpush1.msra.mxu0 0.0
      %5816 = vmatprep.subr.mxu0 0.0
      %5817 = vmatpush1.msra.mxu0 0.0
      %5818 = vmatprep.subr.mxu0 0.0
      %5819 = vmatpush1.msra.mxu0 0.0
      %5820 = vmatprep.subr.mxu0 0.0
      %5821 = vmatpush1.msra.mxu0 0.0
      %5822 = vmatprep.subr.mxu0 0.0
      %5823 = vmatpush1.msra.mxu0 0.0
      %5824 = vmatprep.subr.mxu0 0.0
      %5825 = vmatpush1.msra.mxu0 0.0
      %5826 = vmatprep.subr.mxu0 0.0
      %5827 = vmatpush1.msra.mxu0 0.0
      %5828 = vmatprep.subr.mxu0 0.0
      %5829 = vmatpush1.msra.mxu0 0.0
      %5830 = vmatprep.subr.mxu0 0.0
      %5831 = vmatpush1.msra.mxu0 0.0
      %5832 = vmatprep.subr.mxu0 0.0
      %5833 = vmatpush1.msra.mxu0 0.0
      %5834 = vmatprep.subr.mxu0 0.0
      %5835 = vmatpush1.msra.mxu0 %v5800
      %5836 = vmatprep.subr.mxu0 0.0
      %5837 = vmatpush2.msra.mxu0 0.0
      %5838 = vmatprep.subr.mxu0 0.0
      %5839 = vmatpush2.msra.mxu0 0.0
      %5840 = vmatprep.subr.mxu0 0.0
      %5841 = vmatpush2.msra.mxu0 0.0
      %5842 = vmatprep.subr.mxu0 0.0
      %5843 = vmatpush2.msra.mxu0 0.0
      %5844 = vmatprep.subr.mxu0 0.0
      %5845 = vmatpush2.msra.mxu0 0.0
      %5846 = vmatprep.subr.mxu0 0.0
      %5847 = vmatpush2.msra.mxu0 0.0
      %5848 = vmatprep.subr.mxu0 0.0
      %5849 = vmatpush2.msra.mxu0 0.0
      %5850 = vmatprep.subr.mxu0 0.0
      %5851 = vmatpush2.msra.mxu0 0.0
      %5852 = vmatprep.subr.mxu0 0.0
      %5853 = vmatpush2.msra.mxu0 0.0
      %5854 = vmatprep.subr.mxu0 0.0
      %5855 = vmatpush2.msra.mxu0 0.0
      %5856 = vmatprep.subr.mxu0 0.0
      %5857 = vmatpush2.msra.mxu0 0.0
      %5858 = vmatprep.subr.mxu0 0.0
      %5859 = vmatpush2.msra.mxu0 0.0
      %5860 = vmatprep.subr.mxu0 0.0
      %5861 = vmatpush2.msra.mxu0 0.0
      %5862 = vmatprep.subr.mxu0 0.0
      %5863 = vmatpush2.msra.mxu0 0.0
      %5864 = vmatprep.subr.mxu0 0.0
      %5865 = vmatpush2.msra.mxu0 0.0
      %5866 = vmatprep.subr.mxu0 0.0
      %5867 = vmatpush2.msra.mxu0 0.0
      %5868 = vmatprep.mubr.f32.mxu0 0.0
      %5869 = vmatmul.mubr.f32.gmra.mxu0 %v5802
      %v5870 = vpop.f32.mrf.mxu0
      %v5871 = vadd.f32 0.0, %v5870
      %v5872 = vpop.f32.mrf.mxu0
      %5873 = vdwg.mxu0
      %v5874 = vmax.f32 %v5871, 0.0
      %v5875 = vld [vmem:[%s332] sm:$0x3]
      %vm5876 = vcmask 15360
      %v5878 = vsel %vm5876, %v5874, 0
      %vm5880 = vcmask 1041408
      %v5882 = vsel %vm5880, %v5875, 0
      %5884 = vmatprep.subr.mxu0 0.0
      %5885 = vmatpush1.msra.mxu0 0.0
      %5886 = vmatprep.subr.mxu0 0.0
      %5887 = vmatpush1.msra.mxu0 0.0
      %5888 = vmatprep.subr.mxu0 0.0
      %5889 = vmatpush1.msra.mxu0 0.0
      %5890 = vmatprep.subr.mxu0 0.0
      %5891 = vmatpush1.msra.mxu0 0.0
      %5892 = vmatprep.subr.mxu0 0.0
      %5893 = vmatpush1.msra.mxu0 0.0
      %5894 = vmatprep.subr.mxu0 0.0
      %5895 = vmatpush1.msra.mxu0 0.0
      %5896 = vmatprep.subr.mxu0 0.0
      %5897 = vmatpush1.msra.mxu0 0.0
      %5898 = vmatprep.subr.mxu0 0.0
      %5899 = vmatpush1.msra.mxu0 0.0
      %5900 = vmatprep.subr.mxu0 0.0
      %5901 = vmatpush1.msra.mxu0 0.0
      %5902 = vmatprep.subr.mxu0 0.0
      %5903 = vmatpush1.msra.mxu0 0.0
      %5904 = vmatprep.subr.mxu0 0.0
      %5905 = vmatpush1.msra.mxu0 0.0
      %5906 = vmatprep.subr.mxu0 0.0
      %5907 = vmatpush1.msra.mxu0 0.0
      %5908 = vmatprep.subr.mxu0 0.0
      %5909 = vmatpush1.msra.mxu0 0.0
      %5910 = vmatprep.subr.mxu0 0.0
      %5911 = vmatpush1.msra.mxu0 0.0
      %5912 = vmatprep.subr.mxu0 0.0
      %5913 = vmatpush1.msra.mxu0 0.0
      %5914 = vmatprep.subr.mxu0 0.0
      %5915 = vmatpush1.msra.mxu0 %v5882
      %5916 = vmatprep.subr.mxu0 0.0
      %5917 = vmatpush2.msra.mxu0 0.0
      %5918 = vmatprep.subr.mxu0 0.0
      %5919 = vmatpush2.msra.mxu0 0.0
      %5920 = vmatprep.subr.mxu0 0.0
      %5921 = vmatpush2.msra.mxu0 0.0
      %5922 = vmatprep.subr.mxu0 0.0
      %5923 = vmatpush2.msra.mxu0 0.0
      %5924 = vmatprep.subr.mxu0 0.0
      %5925 = vmatpush2.msra.mxu0 0.0
      %5926 = vmatprep.subr.mxu0 0.0
      %5927 = vmatpush2.msra.mxu0 0.0
      %5928 = vmatprep.subr.mxu0 0.0
      %5929 = vmatpush2.msra.mxu0 0.0
      %5930 = vmatprep.subr.mxu0 0.0
      %5931 = vmatpush2.msra.mxu0 0.0
      %5932 = vmatprep.subr.mxu0 0.0
      %5933 = vmatpush2.msra.mxu0 0.0
      %5934 = vmatprep.subr.mxu0 0.0
      %5935 = vmatpush2.msra.mxu0 0.0
      %5936 = vmatprep.subr.mxu0 0.0
      %5937 = vmatpush2.msra.mxu0 0.0
      %5938 = vmatprep.subr.mxu0 0.0
      %5939 = vmatpush2.msra.mxu0 0.0
      %5940 = vmatprep.subr.mxu0 0.0
      %5941 = vmatpush2.msra.mxu0 0.0
      %5942 = vmatprep.subr.mxu0 0.0
      %5943 = vmatpush2.msra.mxu0 0.0
      %5944 = vmatprep.subr.mxu0 0.0
      %5945 = vmatpush2.msra.mxu0 0.0
      %5946 = vmatprep.subr.mxu0 0.0
      %5947 = vmatpush2.msra.mxu0 0.0
      %5948 = vmatprep.mubr.f32.mxu0 0.0
      %5949 = vmatmul.mubr.f32.gmra.mxu0 %v5878
      %v5950 = vpop.f32.mrf.mxu0
      %v5951 = vadd.f32 0.0, %v5950
      %v5952 = vpop.f32.mrf.mxu0
      %5953 = vdwg.mxu0
      %v5954 = vxor.u32 %v5951, 2147483648
      %v5955 = vmul.f32 %v5954, 1.442695
      %v5956 = vpow.pop %v5955
      %v5957 = vadd.f32 %v5956, 1.0
      %v5958 = vrcp.pop %v5957
      %v5959 = vmul.f32 1.0, %v5958
      %v5960 = vld [vmem:[%s1316 + $0x1] sm:$0xff]
      %v5961 = vld [vmem:[%s1316 + $0x9] sm:$0xff]
      %v5962 = vld [vmem:[%s1316 + $0x19] sm:$0xff]
      %v5963 = vld [vmem:[%s1316 + $0x21] sm:$0xff]
      %v5964 = vld [vmem:[%s1316 + $0x31] sm:$0xff]
      %v5965 = vld [vmem:[%s1316 + $0x39] sm:$0xff]
      %v5966 = vld [vmem:[%s1316 + $0x49] sm:$0xff]
      %v5967 = vld [vmem:[%s1316 + $0x51] sm:$0xff]
      %v5968 = vld [vmem:[%s1316 + $0x61] sm:$0xff]
      %v5969 = vld [vmem:[%s1316 + $0x69] sm:$0xff]
      %v5970 = vld [vmem:[%s1316 + $0x79] sm:$0xff]
      %v5971 = vld [vmem:[%s1316 + $0x81] sm:$0xff]
      %v5972 = vld [vmem:[%s1316 + $0x91] sm:$0xff]
      %v5973 = vld [vmem:[%s1316 + $0x99] sm:$0xff]
      %v5974 = vld [vmem:[%s1316 + $0xa9] sm:$0xff]
      %v5975 = vld [vmem:[%s1316 + $0xb1] sm:$0xff]
      %v5976 = vld [vmem:[%s1316 + $0xc1] sm:$0xff]
      %v5977 = vld [vmem:[%s1316 + $0xc9] sm:$0xff]
      %v5978 = vld [vmem:[%s1316 + $0xd9] sm:$0xff]
      %v5979 = vld [vmem:[%s1316 + $0xe1] sm:$0xff]
      %v5980 = vld [vmem:[%s1316 + $0xf1] sm:$0xff]
      %v5981 = vld [vmem:[%s1316 + $0xf9] sm:$0xff]
      %v5982 = vld [vmem:[%s1316 + $0x109] sm:$0xff]
      %v5983 = vld [vmem:[%s1316 + $0x111] sm:$0xff]
      %v5984 = vld [vmem:[%s1316 + $0x121] sm:$0xff]
      %v5985 = vld [vmem:[%s1316 + $0x129] sm:$0xff]
      %v5986 = vld [vmem:[%s1316 + $0x139] sm:$0xff]
      %v5987 = vld [vmem:[%s1316 + $0x141] sm:$0xff]
      %v5988 = vld [vmem:[%s1316 + $0x151] sm:$0xff]
      %v5989 = vld [vmem:[%s1316 + $0x159] sm:$0xff]
      %v5990 = vld [vmem:[%s1316 + $0x169] sm:$0xff]
      %v5991 = vld [vmem:[%s1316 + $0x171] sm:$0xff]
      %v5992 = vlaneseq
      %v5993 = vshrl.u32 %v5992, 7
      %v5994 = vsub.s32 0, %v5993
      %v5995 = vrot.slane %v5959, %v5994
      %v5996 = vmul.f32 %v5697, %v5995
      %v5997 = vmul.f32 %v5698, %v5995
      %v5998 = vmul.f32 %v5699, %v5995
      %v5999 = vmul.f32 %v5700, %v5995
      %v6000 = vmul.f32 %v5701, %v5995
      %v6001 = vmul.f32 %v5702, %v5995
      %v6002 = vmul.f32 %v5703, %v5995
      %v6003 = vmul.f32 %v5704, %v5995
      %v6004 = vmul.f32 %v5705, %v5995
      %v6005 = vmul.f32 %v5706, %v5995
      %v6006 = vmul.f32 %v5707, %v5995
      %v6007 = vmul.f32 %v5708, %v5995
      %v6008 = vmul.f32 %v5709, %v5995
      %v6009 = vmul.f32 %v5710, %v5995
      %v6010 = vmul.f32 %v5711, %v5995
      %v6011 = vmul.f32 %v5712, %v5995
      %v6012 = vmul.f32 %v5713, %v5995
      %v6013 = vmul.f32 %v5714, %v5995
      %v6014 = vmul.f32 %v5715, %v5995
      %v6015 = vmul.f32 %v5716, %v5995
      %v6016 = vmul.f32 %v5717, %v5995
      %v6017 = vmul.f32 %v5718, %v5995
      %v6018 = vmul.f32 %v5719, %v5995
      %v6019 = vmul.f32 %v5720, %v5995
      %v6020 = vmul.f32 %v5721, %v5995
      %v6021 = vmul.f32 %v5722, %v5995
      %v6022 = vmul.f32 %v5723, %v5995
      %v6023 = vmul.f32 %v5724, %v5995
      %v6024 = vmul.f32 %v5725, %v5995
      %v6025 = vmul.f32 %v5726, %v5995
      %v6026 = vmul.f32 %v5727, %v5995
      %v6027 = vmul.f32 %v5728, %v5995
      %v6028 = vadd.f32 %v5996, %v5960
      %v6029 = vadd.f32 %v5997, %v5961
      %v6030 = vadd.f32 %v5998, %v5962
      %v6031 = vadd.f32 %v5999, %v5963
      %v6032 = vadd.f32 %v6000, %v5964
      %v6033 = vadd.f32 %v6001, %v5965
      %v6034 = vadd.f32 %v6002, %v5966
      %v6035 = vadd.f32 %v6003, %v5967
      %v6036 = vadd.f32 %v6004, %v5968
      %v6037 = vadd.f32 %v6005, %v5969
      %v6038 = vadd.f32 %v6006, %v5970
      %v6039 = vadd.f32 %v6007, %v5971
      %v6040 = vadd.f32 %v6008, %v5972
      %v6041 = vadd.f32 %v6009, %v5973
      %v6042 = vadd.f32 %v6010, %v5974
      %v6043 = vadd.f32 %v6011, %v5975
      %v6044 = vadd.f32 %v6012, %v5976
      %v6045 = vadd.f32 %v6013, %v5977
      %v6046 = vadd.f32 %v6014, %v5978
      %v6047 = vadd.f32 %v6015, %v5979
      %v6048 = vadd.f32 %v6016, %v5980
      %v6049 = vadd.f32 %v6017, %v5981
      %v6050 = vadd.f32 %v6018, %v5982
      %v6051 = vadd.f32 %v6019, %v5983
      %v6052 = vadd.f32 %v6020, %v5984
      %v6053 = vadd.f32 %v6021, %v5985
      %v6054 = vadd.f32 %v6022, %v5986
      %v6055 = vadd.f32 %v6023, %v5987
      %v6056 = vadd.f32 %v6024, %v5988
      %v6057 = vadd.f32 %v6025, %v5989
      %v6058 = vadd.f32 %v6026, %v5990
      %v6059 = vadd.f32 %v6027, %v5991
      %6060 = vst.msk [vmem:[%s1316 + $0x1] sm:$0xff] %vm596, %v6028
      %6061 = vst.msk [vmem:[%s1316 + $0x9] sm:$0xff] %vm596, %v6029
      %6062 = vst.msk [vmem:[%s1316 + $0x19] sm:$0xff] %vm596, %v6030
      %6063 = vst.msk [vmem:[%s1316 + $0x21] sm:$0xff] %vm596, %v6031
      %6064 = vst.msk [vmem:[%s1316 + $0x31] sm:$0xff] %vm596, %v6032
      %6065 = vst.msk [vmem:[%s1316 + $0x39] sm:$0xff] %vm596, %v6033
      %6066 = vst.msk [vmem:[%s1316 + $0x49] sm:$0xff] %vm596, %v6034
      %6067 = vst.msk [vmem:[%s1316 + $0x51] sm:$0xff] %vm596, %v6035
      %6068 = vst.msk [vmem:[%s1316 + $0x61] sm:$0xff] %vm596, %v6036
      %6069 = vst.msk [vmem:[%s1316 + $0x69] sm:$0xff] %vm596, %v6037
      %6070 = vst.msk [vmem:[%s1316 + $0x79] sm:$0xff] %vm596, %v6038
      %6071 = vst.msk [vmem:[%s1316 + $0x81] sm:$0xff] %vm596, %v6039
      %6072 = vst.msk [vmem:[%s1316 + $0x91] sm:$0xff] %vm596, %v6040
      %6073 = vst.msk [vmem:[%s1316 + $0x99] sm:$0xff] %vm596, %v6041
      %6074 = vst.msk [vmem:[%s1316 + $0xa9] sm:$0xff] %vm596, %v6042
      %6075 = vst.msk [vmem:[%s1316 + $0xb1] sm:$0xff] %vm596, %v6043
      %6076 = vst.msk [vmem:[%s1316 + $0xc1] sm:$0xff] %vm596, %v6044
      %6077 = vst.msk [vmem:[%s1316 + $0xc9] sm:$0xff] %vm596, %v6045
      %6078 = vst.msk [vmem:[%s1316 + $0xd9] sm:$0xff] %vm596, %v6046
      %6079 = vst.msk [vmem:[%s1316 + $0xe1] sm:$0xff] %vm596, %v6047
      %6080 = vst.msk [vmem:[%s1316 + $0xf1] sm:$0xff] %vm596, %v6048
      %6081 = vst.msk [vmem:[%s1316 + $0xf9] sm:$0xff] %vm596, %v6049
      %6082 = vst.msk [vmem:[%s1316 + $0x109] sm:$0xff] %vm596, %v6050
      %6083 = vst.msk [vmem:[%s1316 + $0x111] sm:$0xff] %vm596, %v6051
      %6084 = vst.msk [vmem:[%s1316 + $0x121] sm:$0xff] %vm596, %v6052
      %6085 = vst.msk [vmem:[%s1316 + $0x129] sm:$0xff] %vm596, %v6053
      %6086 = vst.msk [vmem:[%s1316 + $0x139] sm:$0xff] %vm596, %v6054
      %6087 = vst.msk [vmem:[%s1316 + $0x141] sm:$0xff] %vm596, %v6055
      %6088 = vst.msk [vmem:[%s1316 + $0x151] sm:$0xff] %vm596, %v6056
      %6089 = vst.msk [vmem:[%s1316 + $0x159] sm:$0xff] %vm596, %v6057
      %6090 = vst.msk [vmem:[%s1316 + $0x169] sm:$0xff] %vm596, %v6058
      %6091 = vst.msk [vmem:[%s1316 + $0x171] sm:$0xff] %vm596, %v6059
      %p6092 = scmp.eq.s32.totalorder %s22, 1
      // Predicated region
      $region49: #{tpu_custom_call.1} parent=43 // pred_check
        %p6093 = pneg %p6092
      $region50: #{tpu_custom_call.1} parent=43 // pred_check_branch
        %6095 = sbr.rel (%p6093) target = $region52
      $region51: #{tpu_custom_call.1} parent=43 // pred_region
        %v6096 = vld [vmem:[%s1316 + $0x1] sm:$0xff]
        %v6097 = vld [vmem:[%s1316 + $0x9] sm:$0xff]
        %v6098 = vld [vmem:[%s1316 + $0x19] sm:$0xff]
        %v6099 = vld [vmem:[%s1316 + $0x21] sm:$0xff]
        %v6100 = vld [vmem:[%s1316 + $0x31] sm:$0xff]
        %v6101 = vld [vmem:[%s1316 + $0x39] sm:$0xff]
        %v6102 = vld [vmem:[%s1316 + $0x49] sm:$0xff]
        %v6103 = vld [vmem:[%s1316 + $0x51] sm:$0xff]
        %v6104 = vld [vmem:[%s1316 + $0x61] sm:$0xff]
        %v6105 = vld [vmem:[%s1316 + $0x69] sm:$0xff]
        %v6106 = vld [vmem:[%s1316 + $0x79] sm:$0xff]
        %v6107 = vld [vmem:[%s1316 + $0x81] sm:$0xff]
        %v6108 = vld [vmem:[%s1316 + $0x91] sm:$0xff]
        %v6109 = vld [vmem:[%s1316 + $0x99] sm:$0xff]
        %v6110 = vld [vmem:[%s1316 + $0xa9] sm:$0xff]
        %v6111 = vld [vmem:[%s1316 + $0xb1] sm:$0xff]
        %v6112 = vld [vmem:[%s1316 + $0xc1] sm:$0xff]
        %v6113 = vld [vmem:[%s1316 + $0xc9] sm:$0xff]
        %v6114 = vld [vmem:[%s1316 + $0xd9] sm:$0xff]
        %v6115 = vld [vmem:[%s1316 + $0xe1] sm:$0xff]
        %v6116 = vld [vmem:[%s1316 + $0xf1] sm:$0xff]
        %v6117 = vld [vmem:[%s1316 + $0xf9] sm:$0xff]
        %v6118 = vld [vmem:[%s1316 + $0x109] sm:$0xff]
        %v6119 = vld [vmem:[%s1316 + $0x111] sm:$0xff]
        %v6120 = vld [vmem:[%s1316 + $0x121] sm:$0xff]
        %v6121 = vld [vmem:[%s1316 + $0x129] sm:$0xff]
        %v6122 = vld [vmem:[%s1316 + $0x139] sm:$0xff]
        %v6123 = vld [vmem:[%s1316 + $0x141] sm:$0xff]
        %v6124 = vld [vmem:[%s1316 + $0x151] sm:$0xff]
        %v6125 = vld [vmem:[%s1316 + $0x159] sm:$0xff]
        %v6126 = vld [vmem:[%s1316 + $0x169] sm:$0xff]
        %v6127 = vld [vmem:[%s1316 + $0x171] sm:$0xff]
        %v6128 = vpack.c.bf16 %v6097, %v6096
        %v6129 = vpack.c.bf16 %v6099, %v6098
        %v6130 = vpack.c.bf16 %v6101, %v6100
        %v6131 = vpack.c.bf16 %v6103, %v6102
        %v6132 = vpack.c.bf16 %v6105, %v6104
        %v6133 = vpack.c.bf16 %v6107, %v6106
        %v6134 = vpack.c.bf16 %v6109, %v6108
        %v6135 = vpack.c.bf16 %v6111, %v6110
        %v6136 = vpack.c.bf16 %v6113, %v6112
        %v6137 = vpack.c.bf16 %v6115, %v6114
        %v6138 = vpack.c.bf16 %v6117, %v6116
        %v6139 = vpack.c.bf16 %v6119, %v6118
        %v6140 = vpack.c.bf16 %v6121, %v6120
        %v6141 = vpack.c.bf16 %v6123, %v6122
        %v6142 = vpack.c.bf16 %v6125, %v6124
        %v6143 = vpack.c.bf16 %v6127, %v6126
        %v6144 = vld [vmem:[%s5] sm:$0xf]
        %v6146 = vsel %vm596, %v6128, 0
        %v6149 = vsel %vm596, %v6129, 0
        %v6152 = vsel %vm596, %v6130, 0
        %v6155 = vsel %vm596, %v6131, 0
        %v6158 = vsel %vm596, %v6132, 0
        %v6161 = vsel %vm596, %v6133, 0
        %v6164 = vsel %vm596, %v6134, 0
        %v6167 = vsel %vm596, %v6135, 0
        %v6170 = vsel %vm596, %v6136, 0
        %v6173 = vsel %vm596, %v6137, 0
        %v6176 = vsel %vm596, %v6138, 0
        %v6179 = vsel %vm596, %v6139, 0
        %v6182 = vsel %vm596, %v6140, 0
        %v6185 = vsel %vm596, %v6141, 0
        %v6188 = vsel %vm596, %v6142, 0
        %v6191 = vsel %vm596, %v6143, 0
        %v6194 = vsel %vm645, %v6144, 0
        %6196 = vmatprep.subr.bf16.mxu0 0
        %6197 = vmatpush1.bf16.msra.mxu0 0
        %6198 = vmatprep.subr.bf16.mxu0 0
        %6199 = vmatpush1.bf16.msra.mxu0 0
        %6200 = vmatprep.subr.bf16.mxu0 0
        %6201 = vmatpush1.bf16.msra.mxu0 0
        %6202 = vmatprep.subr.bf16.mxu0 0
        %6203 = vmatpush1.bf16.msra.mxu0 0
        %6204 = vmatprep.subr.bf16.mxu0 0
        %6205 = vmatpush1.bf16.msra.mxu0 0
        %6206 = vmatprep.subr.bf16.mxu0 0
        %6207 = vmatpush1.bf16.msra.mxu0 0
        %6208 = vmatprep.subr.bf16.mxu0 0
        %6209 = vmatpush1.bf16.msra.mxu0 0
        %6210 = vmatprep.subr.bf16.mxu0 0
        %6211 = vmatpush1.bf16.msra.mxu0 %v6194
        %6212 = vmatprep.subr.bf16.mxu0 0
        %6213 = vmatpush2.bf16.msra.mxu0 0
        %6214 = vmatprep.subr.bf16.mxu0 0
        %6215 = vmatpush2.bf16.msra.mxu0 0
        %6216 = vmatprep.subr.bf16.mxu0 0
        %6217 = vmatpush2.bf16.msra.mxu0 0
        %6218 = vmatprep.subr.bf16.mxu0 0
        %6219 = vmatpush2.bf16.msra.mxu0 0
        %6220 = vmatprep.subr.bf16.mxu0 0
        %6221 = vmatpush2.bf16.msra.mxu0 0
        %6222 = vmatprep.subr.bf16.mxu0 0
        %6223 = vmatpush2.bf16.msra.mxu0 0
        %6224 = vmatprep.subr.bf16.mxu0 0
        %6225 = vmatpush2.bf16.msra.mxu0 0
        %6226 = vmatprep.subr.bf16.mxu0 0
        %6227 = vmatpush2.bf16.msra.mxu0 0
        %6228 = vmatprep.mubr.bf16.mxu0 0
        %6229 = vmatmul.mubr.bf16.gmra.mxu0 %v6146
        %v6230 = vpop.f32.mrf.mxu0
        %v6231 = vadd.f32 0.0, %v6230
        %v6232 = vpop.f32.mrf.mxu0
        %v6233 = vpop.f32.mrf.mxu0
        %v6234 = vadd.f32 0.0, %v6233
        %v6235 = vpop.f32.mrf.mxu0
        %6236 = vmatprep.mubr.bf16.mxu0 0
        %6237 = vmatmul.mubr.bf16.gmra.mxu0 %v6149
        %v6238 = vpop.f32.mrf.mxu0
        %v6239 = vadd.f32 0.0, %v6238
        %v6240 = vpop.f32.mrf.mxu0
        %v6241 = vpop.f32.mrf.mxu0
        %v6242 = vadd.f32 0.0, %v6241
        %v6243 = vpop.f32.mrf.mxu0
        %6244 = vmatprep.mubr.bf16.mxu0 0
        %6245 = vmatmul.mubr.bf16.gmra.mxu0 %v6152
        %v6246 = vpop.f32.mrf.mxu0
        %v6247 = vadd.f32 0.0, %v6246
        %v6248 = vpop.f32.mrf.mxu0
        %v6249 = vpop.f32.mrf.mxu0
        %v6250 = vadd.f32 0.0, %v6249
        %v6251 = vpop.f32.mrf.mxu0
        %6252 = vmatprep.mubr.bf16.mxu0 0
        %6253 = vmatmul.mubr.bf16.gmra.mxu0 %v6155
        %v6254 = vpop.f32.mrf.mxu0
        %v6255 = vadd.f32 0.0, %v6254
        %v6256 = vpop.f32.mrf.mxu0
        %v6257 = vpop.f32.mrf.mxu0
        %v6258 = vadd.f32 0.0, %v6257
        %v6259 = vpop.f32.mrf.mxu0
        %6260 = vmatprep.mubr.bf16.mxu0 0
        %6261 = vmatmul.mubr.bf16.gmra.mxu0 %v6158
        %v6262 = vpop.f32.mrf.mxu0
        %v6263 = vadd.f32 0.0, %v6262
        %v6264 = vpop.f32.mrf.mxu0
        %v6265 = vpop.f32.mrf.mxu0
        %v6266 = vadd.f32 0.0, %v6265
        %v6267 = vpop.f32.mrf.mxu0
        %6268 = vmatprep.mubr.bf16.mxu0 0
        %6269 = vmatmul.mubr.bf16.gmra.mxu0 %v6161
        %v6270 = vpop.f32.mrf.mxu0
        %v6271 = vadd.f32 0.0, %v6270
        %v6272 = vpop.f32.mrf.mxu0
        %v6273 = vpop.f32.mrf.mxu0
        %v6274 = vadd.f32 0.0, %v6273
        %v6275 = vpop.f32.mrf.mxu0
        %6276 = vmatprep.mubr.bf16.mxu0 0
        %6277 = vmatmul.mubr.bf16.gmra.mxu0 %v6164
        %v6278 = vpop.f32.mrf.mxu0
        %v6279 = vadd.f32 0.0, %v6278
        %v6280 = vpop.f32.mrf.mxu0
        %v6281 = vpop.f32.mrf.mxu0
        %v6282 = vadd.f32 0.0, %v6281
        %v6283 = vpop.f32.mrf.mxu0
        %6284 = vmatprep.mubr.bf16.mxu0 0
        %6285 = vmatmul.mubr.bf16.gmra.mxu0 %v6167
        %v6286 = vpop.f32.mrf.mxu0
        %v6287 = vadd.f32 0.0, %v6286
        %v6288 = vpop.f32.mrf.mxu0
        %v6289 = vpop.f32.mrf.mxu0
        %v6290 = vadd.f32 0.0, %v6289
        %v6291 = vpop.f32.mrf.mxu0
        %6292 = vmatprep.mubr.bf16.mxu0 0
        %6293 = vmatmul.mubr.bf16.gmra.mxu0 %v6170
        %v6294 = vpop.f32.mrf.mxu0
        %v6295 = vadd.f32 0.0, %v6294
        %v6296 = vpop.f32.mrf.mxu0
        %v6297 = vpop.f32.mrf.mxu0
        %v6298 = vadd.f32 0.0, %v6297
        %v6299 = vpop.f32.mrf.mxu0
        %6300 = vmatprep.mubr.bf16.mxu0 0
        %6301 = vmatmul.mubr.bf16.gmra.mxu0 %v6173
        %v6302 = vpop.f32.mrf.mxu0
        %v6303 = vadd.f32 0.0, %v6302
        %v6304 = vpop.f32.mrf.mxu0
        %v6305 = vpop.f32.mrf.mxu0
        %v6306 = vadd.f32 0.0, %v6305
        %v6307 = vpop.f32.mrf.mxu0
        %6308 = vmatprep.mubr.bf16.mxu0 0
        %6309 = vmatmul.mubr.bf16.gmra.mxu0 %v6176
        %v6310 = vpop.f32.mrf.mxu0
        %v6311 = vadd.f32 0.0, %v6310
        %v6312 = vpop.f32.mrf.mxu0
        %v6313 = vpop.f32.mrf.mxu0
        %v6314 = vadd.f32 0.0, %v6313
        %v6315 = vpop.f32.mrf.mxu0
        %6316 = vmatprep.mubr.bf16.mxu0 0
        %6317 = vmatmul.mubr.bf16.gmra.mxu0 %v6179
        %v6318 = vpop.f32.mrf.mxu0
        %v6319 = vadd.f32 0.0, %v6318
        %v6320 = vpop.f32.mrf.mxu0
        %v6321 = vpop.f32.mrf.mxu0
        %v6322 = vadd.f32 0.0, %v6321
        %v6323 = vpop.f32.mrf.mxu0
        %6324 = vmatprep.mubr.bf16.mxu0 0
        %6325 = vmatmul.mubr.bf16.gmra.mxu0 %v6182
        %v6326 = vpop.f32.mrf.mxu0
        %v6327 = vadd.f32 0.0, %v6326
        %v6328 = vpop.f32.mrf.mxu0
        %v6329 = vpop.f32.mrf.mxu0
        %v6330 = vadd.f32 0.0, %v6329
        %v6331 = vpop.f32.mrf.mxu0
        %6332 = vmatprep.mubr.bf16.mxu0 0
        %6333 = vmatmul.mubr.bf16.gmra.mxu0 %v6185
        %v6334 = vpop.f32.mrf.mxu0
        %v6335 = vadd.f32 0.0, %v6334
        %v6336 = vpop.f32.mrf.mxu0
        %v6337 = vpop.f32.mrf.mxu0
        %v6338 = vadd.f32 0.0, %v6337
        %v6339 = vpop.f32.mrf.mxu0
        %6340 = vmatprep.mubr.bf16.mxu0 0
        %6341 = vmatmul.mubr.bf16.gmra.mxu0 %v6188
        %v6342 = vpop.f32.mrf.mxu0
        %v6343 = vadd.f32 0.0, %v6342
        %v6344 = vpop.f32.mrf.mxu0
        %v6345 = vpop.f32.mrf.mxu0
        %v6346 = vadd.f32 0.0, %v6345
        %v6347 = vpop.f32.mrf.mxu0
        %6348 = vmatprep.mubr.bf16.mxu0 0
        %6349 = vmatmul.mubr.bf16.gmra.mxu0 %v6191
        %v6350 = vpop.f32.mrf.mxu0
        %v6351 = vadd.f32 0.0, %v6350
        %v6352 = vpop.f32.mrf.mxu0
        %v6353 = vpop.f32.mrf.mxu0
        %v6354 = vadd.f32 0.0, %v6353
        %v6355 = vpop.f32.mrf.mxu0
        %6356 = vdwg.mxu0
        %v6357 = vld [vmem:[%s314] sm:$0xff]
        %v6358 = vld [vmem:[%s314 + $0x8] sm:$0xff]
        %v6359 = vld [vmem:[%s314 + $0x10] sm:$0xff]
        %v6360 = vld [vmem:[%s314 + $0x18] sm:$0xff]
        %v6361 = vld [vmem:[%s314 + $0x20] sm:$0xff]
        %v6362 = vld [vmem:[%s314 + $0x28] sm:$0xff]
        %v6363 = vld [vmem:[%s314 + $0x30] sm:$0xff]
        %v6364 = vld [vmem:[%s314 + $0x38] sm:$0xff]
        %v6365 = vld [vmem:[%s314 + $0x40] sm:$0xff]
        %v6366 = vld [vmem:[%s314 + $0x48] sm:$0xff]
        %v6367 = vld [vmem:[%s314 + $0x50] sm:$0xff]
        %v6368 = vld [vmem:[%s314 + $0x58] sm:$0xff]
        %v6369 = vld [vmem:[%s314 + $0x60] sm:$0xff]
        %v6370 = vld [vmem:[%s314 + $0x68] sm:$0xff]
        %v6371 = vld [vmem:[%s314 + $0x70] sm:$0xff]
        %v6372 = vld [vmem:[%s314 + $0x78] sm:$0xff]
        %v6373 = vld [vmem:[%s314 + $0x80] sm:$0xff]
        %v6374 = vld [vmem:[%s314 + $0x88] sm:$0xff]
        %v6375 = vld [vmem:[%s314 + $0x90] sm:$0xff]
        %v6376 = vld [vmem:[%s314 + $0x98] sm:$0xff]
        %v6377 = vld [vmem:[%s314 + $0xa0] sm:$0xff]
        %v6378 = vld [vmem:[%s314 + $0xa8] sm:$0xff]
        %v6379 = vld [vmem:[%s314 + $0xb0] sm:$0xff]
        %v6380 = vld [vmem:[%s314 + $0xb8] sm:$0xff]
        %v6381 = vld [vmem:[%s314 + $0xc0] sm:$0xff]
        %v6382 = vld [vmem:[%s314 + $0xc8] sm:$0xff]
        %v6383 = vld [vmem:[%s314 + $0xd0] sm:$0xff]
        %v6384 = vld [vmem:[%s314 + $0xd8] sm:$0xff]
        %v6385 = vld [vmem:[%s314 + $0xe0] sm:$0xff]
        %v6386 = vld [vmem:[%s314 + $0xe8] sm:$0xff]
        %v6387 = vld [vmem:[%s314 + $0xf0] sm:$0xff]
        %v6388 = vld [vmem:[%s314 + $0xf8] sm:$0xff]
        %v6389 = vadd.f32 %v6231, %v6357
        %v6390 = vadd.f32 %v6234, %v6358
        %v6391 = vadd.f32 %v6239, %v6359
        %v6392 = vadd.f32 %v6242, %v6360
        %v6393 = vadd.f32 %v6247, %v6361
        %v6394 = vadd.f32 %v6250, %v6362
        %v6395 = vadd.f32 %v6255, %v6363
        %v6396 = vadd.f32 %v6258, %v6364
        %v6397 = vadd.f32 %v6263, %v6365
        %v6398 = vadd.f32 %v6266, %v6366
        %v6399 = vadd.f32 %v6271, %v6367
        %v6400 = vadd.f32 %v6274, %v6368
        %v6401 = vadd.f32 %v6279, %v6369
        %v6402 = vadd.f32 %v6282, %v6370
        %v6403 = vadd.f32 %v6287, %v6371
        %v6404 = vadd.f32 %v6290, %v6372
        %v6405 = vadd.f32 %v6295, %v6373
        %v6406 = vadd.f32 %v6298, %v6374
        %v6407 = vadd.f32 %v6303, %v6375
        %v6408 = vadd.f32 %v6306, %v6376
        %v6409 = vadd.f32 %v6311, %v6377
        %v6410 = vadd.f32 %v6314, %v6378
        %v6411 = vadd.f32 %v6319, %v6379
        %v6412 = vadd.f32 %v6322, %v6380
        %v6413 = vadd.f32 %v6327, %v6381
        %v6414 = vadd.f32 %v6330, %v6382
        %v6415 = vadd.f32 %v6335, %v6383
        %v6416 = vadd.f32 %v6338, %v6384
        %v6417 = vadd.f32 %v6343, %v6385
        %v6418 = vadd.f32 %v6346, %v6386
        %v6419 = vadd.f32 %v6351, %v6387
        %v6420 = vadd.f32 %v6354, %v6388
        %6421 = vst.msk [vmem:[%s337] sm:$0xff] %vm596, %v6389
        %6422 = vst.msk [vmem:[%s337 + $0x8] sm:$0xff] %vm596, %v6390
        %6423 = vst.msk [vmem:[%s337 + $0x10] sm:$0xff] %vm596, %v6391
        %6424 = vst.msk [vmem:[%s337 + $0x18] sm:$0xff] %vm596, %v6392
        %6425 = vst.msk [vmem:[%s337 + $0x20] sm:$0xff] %vm596, %v6393
        %6426 = vst.msk [vmem:[%s337 + $0x28] sm:$0xff] %vm596, %v6394
        %6427 = vst.msk [vmem:[%s337 + $0x30] sm:$0xff] %vm596, %v6395
        %6428 = vst.msk [vmem:[%s337 + $0x38] sm:$0xff] %vm596, %v6396
        %6429 = vst.msk [vmem:[%s337 + $0x40] sm:$0xff] %vm596, %v6397
        %6430 = vst.msk [vmem:[%s337 + $0x48] sm:$0xff] %vm596, %v6398
        %6431 = vst.msk [vmem:[%s337 + $0x50] sm:$0xff] %vm596, %v6399
        %6432 = vst.msk [vmem:[%s337 + $0x58] sm:$0xff] %vm596, %v6400
        %6433 = vst.msk [vmem:[%s337 + $0x60] sm:$0xff] %vm596, %v6401
        %6434 = vst.msk [vmem:[%s337 + $0x68] sm:$0xff] %vm596, %v6402
        %6435 = vst.msk [vmem:[%s337 + $0x70] sm:$0xff] %vm596, %v6403
        %6436 = vst.msk [vmem:[%s337 + $0x78] sm:$0xff] %vm596, %v6404
        %6437 = vst.msk [vmem:[%s337 + $0x80] sm:$0xff] %vm596, %v6405
        %6438 = vst.msk [vmem:[%s337 + $0x88] sm:$0xff] %vm596, %v6406
        %6439 = vst.msk [vmem:[%s337 + $0x90] sm:$0xff] %vm596, %v6407
        %6440 = vst.msk [vmem:[%s337 + $0x98] sm:$0xff] %vm596, %v6408
        %6441 = vst.msk [vmem:[%s337 + $0xa0] sm:$0xff] %vm596, %v6409
        %6442 = vst.msk [vmem:[%s337 + $0xa8] sm:$0xff] %vm596, %v6410
        %6443 = vst.msk [vmem:[%s337 + $0xb0] sm:$0xff] %vm596, %v6411
        %6444 = vst.msk [vmem:[%s337 + $0xb8] sm:$0xff] %vm596, %v6412
        %6445 = vst.msk [vmem:[%s337 + $0xc0] sm:$0xff] %vm596, %v6413
        %6446 = vst.msk [vmem:[%s337 + $0xc8] sm:$0xff] %vm596, %v6414
        %6447 = vst.msk [vmem:[%s337 + $0xd0] sm:$0xff] %vm596, %v6415
        %6448 = vst.msk [vmem:[%s337 + $0xd8] sm:$0xff] %vm596, %v6416
        %6449 = vst.msk [vmem:[%s337 + $0xe0] sm:$0xff] %vm596, %v6417
        %6450 = vst.msk [vmem:[%s337 + $0xe8] sm:$0xff] %vm596, %v6418
        %6451 = vst.msk [vmem:[%s337 + $0xf0] sm:$0xff] %vm596, %v6419
        %6452 = vst.msk [vmem:[%s337 + $0xf8] sm:$0xff] %vm596, %v6420
      $region52: #{tpu_custom_call.1} parent=43 // pred_fallthru
        _
      %p6453 = scmp.lt.s32.totalorder %s21, 1
      %s6454 = scalar_select %p6453, %s21, 1
      %s6455 = smul.addr %s6454, 32
      %s6456 = smul.addr %s6455, 8
      %s6457 = scalar_lea.vmem %s6, %s6456
      // Predicated region
      $region53: #{tpu_custom_call.1} parent=43 // pred_check
        %p6458 = pneg %p198
      $region54: #{tpu_custom_call.1} parent=43 // pred_check_branch
        %6460 = sbr.rel (%p6458) target = $region56
      $region55: #{tpu_custom_call.1} parent=43 // pred_region
        _
      $region56: #{tpu_custom_call.1} parent=43 // pred_fallthru
        _
    $region44: #{tpu_custom_call.1} parent=5 // pred_fallthru
      _
    %p6461 = scmp.le.s32.totalorder 2, %s12
    // Predicated region
    $region57: #{tpu_custom_call.1} parent=5 // pred_check
      %p6462 = pneg %p6461
    $region58: #{tpu_custom_call.1} parent=5 // pred_check_branch
      %6464 = sbr.rel (%p6462) target = $region60
    $region59: #{tpu_custom_call.1} parent=5 // pred_region
      %s6465 = ssub.s32 %s12, 2
      // Predicated region
      $region61: #{tpu_custom_call.1} parent=59 // pred_check
        %p6466 = pneg %p204
      $region62: #{tpu_custom_call.1} parent=59 // pred_check_branch
        %6468 = sbr.rel (%p6466) target = $region64
      $region63: #{tpu_custom_call.1} parent=59 // pred_region
        %p6469 = scmp.lt.s32.totalorder %s23, 1
        %s6470 = scalar_select %p6469, %s23, 1
        %s6471 = smul.addr %s6470, 32
        %s6472 = smul.addr %s6471, 8
        %s6473 = scalar_lea.vmem %s6, %s6472
      $region64: #{tpu_custom_call.1} parent=59 // pred_fallthru
        _
    $region60: #{tpu_custom_call.1} parent=5 // pred_fallthru
      _
  $region6: #{tpu_custom_call.1} parent=0 // loop_footer
    %s16 = sadd.s32 1, %s12
  $region7: #{tpu_custom_call.1} parent=0 // loop_footer_branch
    %11 = sbr.rel target = $region3
  $region8: #{tpu_custom_call.1} parent=0 // loop_exit
    _

</llo_original>
